<compile_context>
chip_gen: v7x
topology: tpu7x:2x2x1
jax: 0.10.0
libtpu: 0.0.40
codegen_flags: <defaults>
</compile_context>

<pallas_src>
import functools

import numpy as np

import jax
import jax.numpy as jnp
from jax.experimental import pallas as pl
from jax.experimental.pallas import tpu as pltpu

EPS = 1e-15
_MS_WEIGHTS = (0.0448, 0.2856, 0.3001, 0.2363, 0.1333)
_LEVELS = 5


# ----------------------------------------------------------------------------
# Host-side (numpy, static-shape) construction of the small matmul operands.
# ----------------------------------------------------------------------------
def _gaussian_1d(win, sigma=1.5):
    x = np.arange(win, dtype=np.float64)
    g = np.exp(-((x - win // 2) ** 2) / (2.0 * sigma ** 2))
    g = g / (g.sum() + EPS)
    return g.astype(np.float32)


def _conv_matrix(n, win, g):
    """(n, n-win+1) band matrix: (x @ M)[j] = sum_i g[i] * x[j+i]  (VALID conv)."""
    n_out = n - win + 1
    m = np.zeros((n, n_out), dtype=np.float32)
    for j in range(n_out):
        m[j:j + win, j] = g
    return m


def _pool_matrix(n):
    """(n, n//2) matrix: (x @ M)[j] = 0.5 * (x[2j] + x[2j+1])  (2x avg-pool)."""
    n_out = n // 2
    m = np.zeros((n, n_out), dtype=np.float32)
    for j in range(n_out):
        m[2 * j, j] = 0.5
        m[2 * j + 1, j] = 0.5
    return m


def _block_diag(block, count):
    r, c = block.shape
    out = np.zeros((count * r, count * c), dtype=np.float32)
    for i in range(count):
        out[i * r:(i + 1) * r, i * c:(i + 1) * c] = block
    return out


# ----------------------------------------------------------------------------
# Pallas kernel: all 5 MS-SSIM levels fused.
# ----------------------------------------------------------------------------
def _msssim_kernel(*refs, levels):
    x1_ref, x2_ref = refs[0], refs[1]
    conv_refs = refs[2:2 + 2 * levels]                      # ghT_blk, gw per level
    pool_refs = refs[2 + 2 * levels:-1]                     # phT_blk, pw per level
    out_ref = refs[-1]                                      # (levels, 2) in SMEM

    x1 = x1_ref[...]                                        # (B*C*H, W) f32
    x2 = x2_ref[...]

    for lvl in range(levels):
        ghT = conv_refs[2 * lvl][...]                       # (bc*h_out, bc*h)
        gw = conv_refs[2 * lvl + 1][...]                    # (w, w_out)
        n_map = int(ghT.shape[0]) * int(gw.shape[1])        # bc*h_out*w_out
        inv_n = 1.0 / float(n_map)

        # Dynamic range L (PyTorch heuristic), recomputed from the current-level img1.
        max1 = jnp.max(x1)
        min1 = jnp.min(x1)
        l_val = (jnp.where(max1 > 128.0, 255.0, 1.0)
                 - jnp.where(min1 < -0.5, -1.0, 0.0))
        c1 = (0.01 * l_val) ** 2
        c2 = (0.03 * l_val) ** 2

        def conv(z, ghT=ghT, gw=gw):
            # Separable depthwise Gaussian conv as two MXU matmuls.
            t = jnp.dot(ghT, z, preferred_element_type=jnp.float32)
            return jnp.dot(t, gw, preferred_element_type=jnp.float32)

        mu1 = conv(x1)
        mu2 = conv(x2)
        mu1_sq = mu1 * mu1
        mu2_sq = mu2 * mu2
        mu1_mu2 = mu1 * mu2
        sigma1_sq = conv(x1 * x1) - mu1_sq
        sigma2_sq = conv(x2 * x2) - mu2_sq
        sigma12 = conv(x1 * x2) - mu1_mu2

        v1 = 2.0 * sigma12 + c2
        v2 = sigma1_sq + sigma2_sq + c2
        cs = jnp.sum(v1 / v2) * inv_n + EPS                 # mean(v1/v2 + eps)
        ssim_map = (2.0 * mu1_mu2 + c1) * v1 / ((mu1_sq + mu2_sq + c1) * v2 + EPS)
        sim = jnp.sum(ssim_map) * inv_n                     # ssim_map.mean()

        out_ref[lvl, 0] = sim
        out_ref[lvl, 1] = cs

        if lvl < levels - 1:
            # Fused 2x2 avg-pool (F.avg_pool2d(img, (2,2))) for the next level.
            phT = pool_refs[2 * lvl][...]                   # (bc*h//2, bc*h)
            pw = pool_refs[2 * lvl + 1][...]                # (w, w//2)
            x1 = jnp.dot(jnp.dot(phT, x1, preferred_element_type=jnp.float32),
                         pw, preferred_element_type=jnp.float32)
            x2 = jnp.dot(jnp.dot(phT, x2, preferred_element_type=jnp.float32),
                         pw, preferred_element_type=jnp.float32)


# ----------------------------------------------------------------------------
# Wrapper.
# ----------------------------------------------------------------------------
@functools.partial(jax.jit, static_argnames=("window_size",))
def msssim_pallas(img1, img2, window_size=11):
    """MS-SSIM(img1, img2) matching MSSSIM(window_size, size_average=True)."""
    B, C, H, W = img1.shape
    bc = B * C
    if H < 16 or W < 16:
        raise ValueError("MS-SSIM with 5 levels requires H, W >= 16")

    # Lane-dense flat layout: each of the B*C planes is an (H, W) row block.
    x1 = img1.astype(jnp.float32).reshape(bc * H, W)
    x2 = img2.astype(jnp.float32).reshape(bc * H, W)

    conv_mats, pool_mats = [], []
    h, w = H, W
    for lvl in range(_LEVELS):
        win = min(window_size, h, w)
        g = _gaussian_1d(win)
        conv_mats.append(_block_diag(_conv_matrix(h, win, g).T, bc))  # (bc*h_out, bc*h)
        conv_mats.append(_conv_matrix(w, win, g))                     # (w, w_out)
        if lvl < _LEVELS - 1:
            pool_mats.append(_block_diag(_pool_matrix(h).T, bc))      # (bc*h//2, bc*h)
            pool_mats.append(_pool_matrix(w))                         # (w, w//2)
            h //= 2
            w //= 2

    mats = [jnp.asarray(m) for m in conv_mats + pool_mats]

    in_specs = [pl.BlockSpec((bc * H, W), lambda i: (0, 0)),
                pl.BlockSpec((bc * H, W), lambda i: (0, 0))]
    in_specs += [pl.BlockSpec(m.shape, lambda i: (0, 0)) for m in mats]

    stats = pl.pallas_call(
        functools.partial(_msssim_kernel, levels=_LEVELS),
        grid=(1,),
        out_shape=jax.ShapeDtypeStruct((_LEVELS, 2), jnp.float32),
        in_specs=in_specs,
        out_specs=pl.BlockSpec((_LEVELS, 2), lambda i: (0, 0),
                               memory_space=pltpu.SMEM),
    )(x1, x2, *mats)

    # normalize=True ("simple") branch + weighted geometric combine (10 scalars).
    weights = jnp.asarray(_MS_WEIGHTS, dtype=jnp.float32)
    ssims = (stats[:, 0] + 1.0) * 0.5
    mcs = (stats[:, 1] + 1.0) * 0.5
    pow1 = mcs ** weights
    pow2 = ssims ** weights
    return jnp.prod(pow1[:-1] * pow2[-1])


# ----------------------------------------------------------------------------
# Pure-JAX reference (independent: full 2-D depthwise conv via lax.conv).
# ----------------------------------------------------------------------------
def _ref_ssim(img1, img2, window_size):
    _, C, H, W = img1.shape
    win = min(window_size, H, W)
    g = _gaussian_1d(win)
    w2d = np.outer(g, g).astype(np.float32)
    kernel = jnp.asarray(np.tile(w2d[None, None], (C, 1, 1, 1)))

    def conv(x):
        return jax.lax.conv_general_dilated(
            x, kernel, window_strides=(1, 1), padding="VALID",
            dimension_numbers=("NCHW", "OIHW", "NCHW"),
            feature_group_count=C, precision=jax.lax.Precision.HIGHEST)

    L = (jnp.where(jnp.max(img1) > 128.0, 255.0, 1.0)
         - jnp.where(jnp.min(img1) < -0.5, -1.0, 0.0))
    mu1 = conv(img1)
    mu2 = conv(img2)
    mu1_sq = mu1 * mu1
    mu2_sq = mu2 * mu2
    mu1_mu2 = mu1 * mu2
    sigma1_sq = conv(img1 * img1) - mu1_sq
    sigma2_sq = conv(img2 * img2) - mu2_sq
    sigma12 = conv(img1 * img2) - mu1_mu2
    C1 = (0.01 * L) ** 2
    C2 = (0.03 * L) ** 2
    v1 = 2.0 * sigma12 + C2
    v2 = sigma1_sq + sigma2_sq + C2
    cs = jnp.mean(v1 / v2 + EPS)
    ssim_map = (2.0 * mu1_mu2 + C1) * v1 / ((mu1_sq + mu2_sq + C1) * v2 + EPS)
    return jnp.mean(ssim_map), cs


def _ref_msssim(img1, img2, window_size=11):
    weights = jnp.asarray(_MS_WEIGHTS, dtype=jnp.float32)
    sims, css = [], []
    for _ in range(_LEVELS):
        s, c = _ref_ssim(img1, img2, window_size)
        sims.append(s)
        css.append(c)
        B, C, H, W = img1.shape
        img1 = img1.reshape(B, C, H // 2, 2, W // 2, 2).mean(axis=(3, 5))
        img2 = img2.reshape(B, C, H // 2, 2, W // 2, 2).mean(axis=(3, 5))
    ssims = (jnp.stack(sims) + 1.0) / 2.0
    mcs = (jnp.stack(css) + 1.0) / 2.0
    pow1 = mcs ** weights
    pow2 = ssims ** weights
    return jnp.prod(pow1[:-1] * pow2[-1])


if __name__ == "__main__":
    key = jax.random.PRNGKey(0)
    k1, k2 = jax.random.split(key)

    B, C, H, W = 2, 3, 32, 32  # NCHW images in [0, 1]
    img1 = jax.random.uniform(k1, (B, C, H, W), dtype=jnp.float32)
    noise = 0.1 * jax.random.normal(k2, (B, C, H, W), dtype=jnp.float32)
    img2 = jnp.clip(img1 + noise, 0.0, 1.0)

    out = msssim_pallas(img1, img2)
    out = jax.block_until_ready(out)

    ref = _ref_msssim(img1, img2)
    # Tolerance allows for MXU f32-pass differences between the in-kernel
    # separable-matmul conv and XLA's 2-D convolution.
    assert jnp.isfinite(out), out
    assert jnp.allclose(out, ref, rtol=5e-3, atol=5e-3), (out, ref)

    print("KERNEL_OK")
</pallas_src>

<mosaic_0001>
module attributes {stable_mosaic.version = 11 : i64} {
  func.func @_msssim_kernel(%arg0: i32, %arg1: memref<192x32xf32, #tpu.memory_space<vmem>>, %arg2: memref<192x32xf32, #tpu.memory_space<vmem>>, %arg3: memref<132x192xf32, #tpu.memory_space<vmem>>, %arg4: memref<32x22xf32, #tpu.memory_space<vmem>>, %arg5: memref<36x96xf32, #tpu.memory_space<vmem>>, %arg6: memref<16x6xf32, #tpu.memory_space<vmem>>, %arg7: memref<6x48xf32, #tpu.memory_space<vmem>>, %arg8: memref<8x1xf32, #tpu.memory_space<vmem>>, %arg9: memref<6x24xf32, #tpu.memory_space<vmem>>, %arg10: memref<4x1xf32, #tpu.memory_space<vmem>>, %arg11: memref<6x12xf32, #tpu.memory_space<vmem>>, %arg12: memref<2x1xf32, #tpu.memory_space<vmem>>, %arg13: memref<96x192xf32, #tpu.memory_space<vmem>>, %arg14: memref<32x16xf32, #tpu.memory_space<vmem>>, %arg15: memref<48x96xf32, #tpu.memory_space<vmem>>, %arg16: memref<16x8xf32, #tpu.memory_space<vmem>>, %arg17: memref<24x48xf32, #tpu.memory_space<vmem>>, %arg18: memref<8x4xf32, #tpu.memory_space<vmem>>, %arg19: memref<12x24xf32, #tpu.memory_space<vmem>>, %arg20: memref<4x2xf32, #tpu.memory_space<vmem>>, %arg21: memref<5x2xf32, #tpu.memory_space<smem>>) attributes {dimension_semantics = [#tpu.dimension_semantics<arbitrary>], iteration_bounds = array<i64: 1>, scalar_prefetch = 0 : i64, scratch_operands = 0 : i64, tpu.core_type = #tpu.core_type<tc>, window_params = [{pipeline_mode = #tpu.pipeline_mode<synchronous>, transform_indices = @transform_0, window_bounds = array<i64: 192, 32>}, {pipeline_mode = #tpu.pipeline_mode<synchronous>, transform_indices = @transform_1, window_bounds = array<i64: 192, 32>}, {pipeline_mode = #tpu.pipeline_mode<synchronous>, transform_indices = @transform_2, window_bounds = array<i64: 132, 192>}, {pipeline_mode = #tpu.pipeline_mode<synchronous>, transform_indices = @transform_3, window_bounds = array<i64: 32, 22>}, {pipeline_mode = #tpu.pipeline_mode<synchronous>, transform_indices = @transform_4, window_bounds = array<i64: 36, 96>}, {pipeline_mode = #tpu.pipeline_mode<synchronous>, transform_indices = @transform_5, window_bounds = array<i64: 16, 6>}, {pipeline_mode = #tpu.pipeline_mode<synchronous>, transform_indices = @transform_6, window_bounds = array<i64: 6, 48>}, {pipeline_mode = #tpu.pipeline_mode<synchronous>, transform_indices = @transform_7, window_bounds = array<i64: 8, 1>}, {pipeline_mode = #tpu.pipeline_mode<synchronous>, transform_indices = @transform_8, window_bounds = array<i64: 6, 24>}, {pipeline_mode = #tpu.pipeline_mode<synchronous>, transform_indices = @transform_9, window_bounds = array<i64: 4, 1>}, {pipeline_mode = #tpu.pipeline_mode<synchronous>, transform_indices = @transform_10, window_bounds = array<i64: 6, 12>}, {pipeline_mode = #tpu.pipeline_mode<synchronous>, transform_indices = @transform_11, window_bounds = array<i64: 2, 1>}, {pipeline_mode = #tpu.pipeline_mode<synchronous>, transform_indices = @transform_12, window_bounds = array<i64: 96, 192>}, {pipeline_mode = #tpu.pipeline_mode<synchronous>, transform_indices = @transform_13, window_bounds = array<i64: 32, 16>}, {pipeline_mode = #tpu.pipeline_mode<synchronous>, transform_indices = @transform_14, window_bounds = array<i64: 48, 96>}, {pipeline_mode = #tpu.pipeline_mode<synchronous>, transform_indices = @transform_15, window_bounds = array<i64: 16, 8>}, {pipeline_mode = #tpu.pipeline_mode<synchronous>, transform_indices = @transform_16, window_bounds = array<i64: 24, 48>}, {pipeline_mode = #tpu.pipeline_mode<synchronous>, transform_indices = @transform_17, window_bounds = array<i64: 8, 4>}, {pipeline_mode = #tpu.pipeline_mode<synchronous>, transform_indices = @transform_18, window_bounds = array<i64: 12, 24>}, {pipeline_mode = #tpu.pipeline_mode<synchronous>, transform_indices = @transform_19, window_bounds = array<i64: 4, 2>}, {transform_indices = @transform_20, window_bounds = array<i64: 5, 2>}]} {
    %c0 = arith.constant 0 : index
    %c0_0 = arith.constant 0 : index
    %0 = vector.load %arg1[%c0, %c0_0] : memref<192x32xf32, #tpu.memory_space<vmem>>, vector<192x32xf32>
    %c0_1 = arith.constant 0 : index
    %c0_2 = arith.constant 0 : index
    %1 = vector.load %arg2[%c0_1, %c0_2] : memref<192x32xf32, #tpu.memory_space<vmem>>, vector<192x32xf32>
    %c0_3 = arith.constant 0 : index
    %c0_4 = arith.constant 0 : index
    %2 = vector.load %arg3[%c0_3, %c0_4] : memref<132x192xf32, #tpu.memory_space<vmem>>, vector<132x192xf32>
    %c0_5 = arith.constant 0 : index
    %c0_6 = arith.constant 0 : index
    %3 = vector.load %arg4[%c0_5, %c0_6] : memref<32x22xf32, #tpu.memory_space<vmem>>, vector<32x22xf32>
    %4 = vector.shape_cast %0 : vector<192x32xf32> to vector<1x192x32xf32>
    %cst = arith.constant dense<0xFF800000> : vector<1xf32>
    %5 = vector.multi_reduction <maximumf>, %4, %cst [1, 2] : vector<1x192x32xf32> to vector<1xf32>
    %6 = vector.shape_cast %5 : vector<1xf32> to vector<1x1x1xf32>
    %7 = vector.extract %6[0, 0, 0] : f32 from vector<1x1x1xf32>
    %8 = vector.shape_cast %0 : vector<192x32xf32> to vector<1x192x32xf32>
    %cst_7 = arith.constant dense<0x7F800000> : vector<1xf32>
    %9 = vector.multi_reduction <minimumf>, %8, %cst_7 [1, 2] : vector<1x192x32xf32> to vector<1xf32>
    %10 = vector.shape_cast %9 : vector<1xf32> to vector<1x1x1xf32>
    %11 = vector.extract %10[0, 0, 0] : f32 from vector<1x1x1xf32>
    %cst_8 = arith.constant 1.280000e+02 : f32
    %12 = arith.cmpf ogt, %7, %cst_8 : f32
    %cst_9 = arith.constant 2.550000e+02 : f32
    %cst_10 = arith.constant 1.000000e+00 : f32
    %13 = arith.select %12, %cst_9, %cst_10 : f32
    %cst_11 = arith.constant -5.000000e-01 : f32
    %14 = arith.cmpf olt, %11, %cst_11 : f32
    %cst_12 = arith.constant -1.000000e+00 : f32
    %cst_13 = arith.constant 0.000000e+00 : f32
    %15 = arith.select %14, %cst_12, %cst_13 : f32
    %16 = arith.subf %13, %15 : f32
    %cst_14 = arith.constant 0.00999999977 : f32
    %17 = arith.mulf %cst_14, %16 : f32
    %18 = arith.mulf %17, %17 : f32
    %cst_15 = arith.constant 3.000000e-02 : f32
    %19 = arith.mulf %cst_15, %16 : f32
    %20 = arith.mulf %19, %19 : f32
    %cst_16 = arith.constant dense<0.000000e+00> : vector<132x32xf32>
    %21 = tpu.matmul %2, %0, %cst_16 {dimension_numbers = #tpu.dot_dimension_numbers<[1], [0], [0], [1], [0, 0, 1, 1], [], []>} : vector<132x192xf32>, vector<192x32xf32>, vector<132x32xf32> -> vector<132x32xf32>
    %cst_17 = arith.constant dense<0.000000e+00> : vector<132x22xf32>
    %22 = tpu.matmul %21, %3, %cst_17 {dimension_numbers = #tpu.dot_dimension_numbers<[1], [0], [0], [1], [0, 0, 1, 1], [], []>} : vector<132x32xf32>, vector<32x22xf32>, vector<132x22xf32> -> vector<132x22xf32>
    %cst_18 = arith.constant dense<0.000000e+00> : vector<132x32xf32>
    %23 = tpu.matmul %2, %1, %cst_18 {dimension_numbers = #tpu.dot_dimension_numbers<[1], [0], [0], [1], [0, 0, 1, 1], [], []>} : vector<132x192xf32>, vector<192x32xf32>, vector<132x32xf32> -> vector<132x32xf32>
    %cst_19 = arith.constant dense<0.000000e+00> : vector<132x22xf32>
    %24 = tpu.matmul %23, %3, %cst_19 {dimension_numbers = #tpu.dot_dimension_numbers<[1], [0], [0], [1], [0, 0, 1, 1], [], []>} : vector<132x32xf32>, vector<32x22xf32>, vector<132x22xf32> -> vector<132x22xf32>
    %25 = arith.mulf %22, %22 : vector<132x22xf32>
    %26 = arith.mulf %24, %24 : vector<132x22xf32>
    %27 = arith.mulf %22, %24 : vector<132x22xf32>
    %28 = arith.mulf %0, %0 : vector<192x32xf32>
    %cst_20 = arith.constant dense<0.000000e+00> : vector<132x32xf32>
    %29 = tpu.matmul %2, %28, %cst_20 {dimension_numbers = #tpu.dot_dimension_numbers<[1], [0], [0], [1], [0, 0, 1, 1], [], []>} : vector<132x192xf32>, vector<192x32xf32>, vector<132x32xf32> -> vector<132x32xf32>
    %cst_21 = arith.constant dense<0.000000e+00> : vector<132x22xf32>
    %30 = tpu.matmul %29, %3, %cst_21 {dimension_numbers = #tpu.dot_dimension_numbers<[1], [0], [0], [1], [0, 0, 1, 1], [], []>} : vector<132x32xf32>, vector<32x22xf32>, vector<132x22xf32> -> vector<132x22xf32>
    %31 = arith.subf %30, %25 : vector<132x22xf32>
    %32 = arith.mulf %1, %1 : vector<192x32xf32>
    %cst_22 = arith.constant dense<0.000000e+00> : vector<132x32xf32>
    %33 = tpu.matmul %2, %32, %cst_22 {dimension_numbers = #tpu.dot_dimension_numbers<[1], [0], [0], [1], [0, 0, 1, 1], [], []>} : vector<132x192xf32>, vector<192x32xf32>, vector<132x32xf32> -> vector<132x32xf32>
    %cst_23 = arith.constant dense<0.000000e+00> : vector<132x22xf32>
    %34 = tpu.matmul %33, %3, %cst_23 {dimension_numbers = #tpu.dot_dimension_numbers<[1], [0], [0], [1], [0, 0, 1, 1], [], []>} : vector<132x32xf32>, vector<32x22xf32>, vector<132x22xf32> -> vector<132x22xf32>
    %35 = arith.subf %34, %26 : vector<132x22xf32>
    %36 = arith.mulf %0, %1 : vector<192x32xf32>
    %cst_24 = arith.constant dense<0.000000e+00> : vector<132x32xf32>
    %37 = tpu.matmul %2, %36, %cst_24 {dimension_numbers = #tpu.dot_dimension_numbers<[1], [0], [0], [1], [0, 0, 1, 1], [], []>} : vector<132x192xf32>, vector<192x32xf32>, vector<132x32xf32> -> vector<132x32xf32>
    %cst_25 = arith.constant dense<0.000000e+00> : vector<132x22xf32>
    %38 = tpu.matmul %37, %3, %cst_25 {dimension_numbers = #tpu.dot_dimension_numbers<[1], [0], [0], [1], [0, 0, 1, 1], [], []>} : vector<132x32xf32>, vector<32x22xf32>, vector<132x22xf32> -> vector<132x22xf32>
    %39 = arith.subf %38, %27 : vector<132x22xf32>
    %cst_26 = arith.constant 2.000000e+00 : f32
    %40 = vector.broadcast %cst_26 : f32 to vector<132x22xf32>
    %41 = arith.mulf %40, %39 : vector<132x22xf32>
    %42 = vector.broadcast %20 : f32 to vector<132x22xf32>
    %43 = arith.addf %41, %42 : vector<132x22xf32>
    %44 = arith.addf %31, %35 : vector<132x22xf32>
    %45 = vector.broadcast %20 : f32 to vector<132x22xf32>
    %46 = arith.addf %44, %45 : vector<132x22xf32>
    %47 = arith.divf %43, %46 : vector<132x22xf32>
    %48 = vector.shape_cast %47 : vector<132x22xf32> to vector<1x132x22xf32>
    %cst_27 = arith.constant dense<0.000000e+00> : vector<1xf32>
    %49 = vector.multi_reduction <add>, %48, %cst_27 [1, 2] : vector<1x132x22xf32> to vector<1xf32>
    %50 = vector.shape_cast %49 : vector<1xf32> to vector<1x1x1xf32>
    %51 = vector.extract %50[0, 0, 0] : f32 from vector<1x1x1xf32>
    %cst_28 = arith.constant 3.44352622E-4 : f32
    %52 = arith.mulf %51, %cst_28 : f32
    %cst_29 = arith.constant 1.000000e-15 : f32
    %53 = arith.addf %52, %cst_29 : f32
    %cst_30 = arith.constant 2.000000e+00 : f32
    %54 = vector.broadcast %cst_30 : f32 to vector<132x22xf32>
    %55 = arith.mulf %54, %27 : vector<132x22xf32>
    %56 = vector.broadcast %18 : f32 to vector<132x22xf32>
    %57 = arith.addf %55, %56 : vector<132x22xf32>
    %58 = arith.mulf %57, %43 : vector<132x22xf32>
    %59 = arith.addf %25, %26 : vector<132x22xf32>
    %60 = vector.broadcast %18 : f32 to vector<132x22xf32>
    %61 = arith.addf %59, %60 : vector<132x22xf32>
    %62 = arith.mulf %61, %46 : vector<132x22xf32>
    %cst_31 = arith.constant 1.000000e-15 : f32
    %63 = vector.broadcast %cst_31 : f32 to vector<132x22xf32>
    %64 = arith.addf %62, %63 : vector<132x22xf32>
    %65 = arith.divf %58, %64 : vector<132x22xf32>
    %66 = vector.shape_cast %65 : vector<132x22xf32> to vector<1x132x22xf32>
    %cst_32 = arith.constant dense<0.000000e+00> : vector<1xf32>
    %67 = vector.multi_reduction <add>, %66, %cst_32 [1, 2] : vector<1x132x22xf32> to vector<1xf32>
    %68 = vector.shape_cast %67 : vector<1xf32> to vector<1x1x1xf32>
    %69 = vector.extract %68[0, 0, 0] : f32 from vector<1x1x1xf32>
    %cst_33 = arith.constant 3.44352622E-4 : f32
    %70 = arith.mulf %69, %cst_33 : f32
    %c0_34 = arith.constant 0 : index
    %c0_35 = arith.constant 0 : index
    %71 = memref.load %arg21[%c0_34, %c0_35] : memref<5x2xf32, #tpu.memory_space<smem>>
    memref.store %70, %arg21[%c0_34, %c0_35] : memref<5x2xf32, #tpu.memory_space<smem>>
    %c0_36 = arith.constant 0 : index
    %c1 = arith.constant 1 : index
    %72 = memref.load %arg21[%c0_36, %c1] : memref<5x2xf32, #tpu.memory_space<smem>>
    memref.store %53, %arg21[%c0_36, %c1] : memref<5x2xf32, #tpu.memory_space<smem>>
    %c0_37 = arith.constant 0 : index
    %c0_38 = arith.constant 0 : index
    %73 = vector.load %arg13[%c0_37, %c0_38] : memref<96x192xf32, #tpu.memory_space<vmem>>, vector<96x192xf32>
    %c0_39 = arith.constant 0 : index
    %c0_40 = arith.constant 0 : index
    %74 = vector.load %arg14[%c0_39, %c0_40] : memref<32x16xf32, #tpu.memory_space<vmem>>, vector<32x16xf32>
    %cst_41 = arith.constant dense<0.000000e+00> : vector<96x32xf32>
    %75 = tpu.matmul %73, %0, %cst_41 {dimension_numbers = #tpu.dot_dimension_numbers<[1], [0], [0], [1], [0, 0, 1, 1], [], []>} : vector<96x192xf32>, vector<192x32xf32>, vector<96x32xf32> -> vector<96x32xf32>
    %cst_42 = arith.constant dense<0.000000e+00> : vector<96x16xf32>
    %76 = tpu.matmul %75, %74, %cst_42 {dimension_numbers = #tpu.dot_dimension_numbers<[1], [0], [0], [1], [0, 0, 1, 1], [], []>} : vector<96x32xf32>, vector<32x16xf32>, vector<96x16xf32> -> vector<96x16xf32>
    %cst_43 = arith.constant dense<0.000000e+00> : vector<96x32xf32>
    %77 = tpu.matmul %73, %1, %cst_43 {dimension_numbers = #tpu.dot_dimension_numbers<[1], [0], [0], [1], [0, 0, 1, 1], [], []>} : vector<96x192xf32>, vector<192x32xf32>, vector<96x32xf32> -> vector<96x32xf32>
    %cst_44 = arith.constant dense<0.000000e+00> : vector<96x16xf32>
    %78 = tpu.matmul %77, %74, %cst_44 {dimension_numbers = #tpu.dot_dimension_numbers<[1], [0], [0], [1], [0, 0, 1, 1], [], []>} : vector<96x32xf32>, vector<32x16xf32>, vector<96x16xf32> -> vector<96x16xf32>
    %c0_45 = arith.constant 0 : index
    %c0_46 = arith.constant 0 : index
    %79 = vector.load %arg5[%c0_45, %c0_46] : memref<36x96xf32, #tpu.memory_space<vmem>>, vector<36x96xf32>
    %c0_47 = arith.constant 0 : index
    %c0_48 = arith.constant 0 : index
    %80 = vector.load %arg6[%c0_47, %c0_48] : memref<16x6xf32, #tpu.memory_space<vmem>>, vector<16x6xf32>
    %81 = vector.shape_cast %76 : vector<96x16xf32> to vector<1x96x16xf32>
    %cst_49 = arith.constant dense<0xFF800000> : vector<1xf32>
    %82 = vector.multi_reduction <maximumf>, %81, %cst_49 [1, 2] : vector<1x96x16xf32> to vector<1xf32>
    %83 = vector.shape_cast %82 : vector<1xf32> to vector<1x1x1xf32>
    %84 = vector.extract %83[0, 0, 0] : f32 from vector<1x1x1xf32>
    %85 = vector.shape_cast %76 : vector<96x16xf32> to vector<1x96x16xf32>
    %cst_50 = arith.constant dense<0x7F800000> : vector<1xf32>
    %86 = vector.multi_reduction <minimumf>, %85, %cst_50 [1, 2] : vector<1x96x16xf32> to vector<1xf32>
    %87 = vector.shape_cast %86 : vector<1xf32> to vector<1x1x1xf32>
    %88 = vector.extract %87[0, 0, 0] : f32 from vector<1x1x1xf32>
    %cst_51 = arith.constant 1.280000e+02 : f32
    %89 = arith.cmpf ogt, %84, %cst_51 : f32
    %cst_52 = arith.constant 2.550000e+02 : f32
    %cst_53 = arith.constant 1.000000e+00 : f32
    %90 = arith.select %89, %cst_52, %cst_53 : f32
    %cst_54 = arith.constant -5.000000e-01 : f32
    %91 = arith.cmpf olt, %88, %cst_54 : f32
    %cst_55 = arith.constant -1.000000e+00 : f32
    %cst_56 = arith.constant 0.000000e+00 : f32
    %92 = arith.select %91, %cst_55, %cst_56 : f32
    %93 = arith.subf %90, %92 : f32
    %cst_57 = arith.constant 0.00999999977 : f32
    %94 = arith.mulf %cst_57, %93 : f32
    %95 = arith.mulf %94, %94 : f32
    %cst_58 = arith.constant 3.000000e-02 : f32
    %96 = arith.mulf %cst_58, %93 : f32
    %97 = arith.mulf %96, %96 : f32
    %cst_59 = arith.constant dense<0.000000e+00> : vector<36x16xf32>
    %98 = tpu.matmul %79, %76, %cst_59 {dimension_numbers = #tpu.dot_dimension_numbers<[1], [0], [0], [1], [0, 0, 1, 1], [], []>} : vector<36x96xf32>, vector<96x16xf32>, vector<36x16xf32> -> vector<36x16xf32>
    %cst_60 = arith.constant dense<0.000000e+00> : vector<36x6xf32>
    %99 = tpu.matmul %98, %80, %cst_60 {dimension_numbers = #tpu.dot_dimension_numbers<[1], [0], [0], [1], [0, 0, 1, 1], [], []>} : vector<36x16xf32>, vector<16x6xf32>, vector<36x6xf32> -> vector<36x6xf32>
    %cst_61 = arith.constant dense<0.000000e+00> : vector<36x16xf32>
    %100 = tpu.matmul %79, %78, %cst_61 {dimension_numbers = #tpu.dot_dimension_numbers<[1], [0], [0], [1], [0, 0, 1, 1], [], []>} : vector<36x96xf32>, vector<96x16xf32>, vector<36x16xf32> -> vector<36x16xf32>
    %cst_62 = arith.constant dense<0.000000e+00> : vector<36x6xf32>
    %101 = tpu.matmul %100, %80, %cst_62 {dimension_numbers = #tpu.dot_dimension_numbers<[1], [0], [0], [1], [0, 0, 1, 1], [], []>} : vector<36x16xf32>, vector<16x6xf32>, vector<36x6xf32> -> vector<36x6xf32>
    %102 = arith.mulf %99, %99 : vector<36x6xf32>
    %103 = arith.mulf %101, %101 : vector<36x6xf32>
    %104 = arith.mulf %99, %101 : vector<36x6xf32>
    %105 = arith.mulf %76, %76 : vector<96x16xf32>
    %cst_63 = arith.constant dense<0.000000e+00> : vector<36x16xf32>
    %106 = tpu.matmul %79, %105, %cst_63 {dimension_numbers = #tpu.dot_dimension_numbers<[1], [0], [0], [1], [0, 0, 1, 1], [], []>} : vector<36x96xf32>, vector<96x16xf32>, vector<36x16xf32> -> vector<36x16xf32>
    %cst_64 = arith.constant dense<0.000000e+00> : vector<36x6xf32>
    %107 = tpu.matmul %106, %80, %cst_64 {dimension_numbers = #tpu.dot_dimension_numbers<[1], [0], [0], [1], [0, 0, 1, 1], [], []>} : vector<36x16xf32>, vector<16x6xf32>, vector<36x6xf32> -> vector<36x6xf32>
    %108 = arith.subf %107, %102 : vector<36x6xf32>
    %109 = arith.mulf %78, %78 : vector<96x16xf32>
    %cst_65 = arith.constant dense<0.000000e+00> : vector<36x16xf32>
    %110 = tpu.matmul %79, %109, %cst_65 {dimension_numbers = #tpu.dot_dimension_numbers<[1], [0], [0], [1], [0, 0, 1, 1], [], []>} : vector<36x96xf32>, vector<96x16xf32>, vector<36x16xf32> -> vector<36x16xf32>
    %cst_66 = arith.constant dense<0.000000e+00> : vector<36x6xf32>
    %111 = tpu.matmul %110, %80, %cst_66 {dimension_numbers = #tpu.dot_dimension_numbers<[1], [0], [0], [1], [0, 0, 1, 1], [], []>} : vector<36x16xf32>, vector<16x6xf32>, vector<36x6xf32> -> vector<36x6xf32>
    %112 = arith.subf %111, %103 : vector<36x6xf32>
    %113 = arith.mulf %76, %78 : vector<96x16xf32>
    %cst_67 = arith.constant dense<0.000000e+00> : vector<36x16xf32>
    %114 = tpu.matmul %79, %113, %cst_67 {dimension_numbers = #tpu.dot_dimension_numbers<[1], [0], [0], [1], [0, 0, 1, 1], [], []>} : vector<36x96xf32>, vector<96x16xf32>, vector<36x16xf32> -> vector<36x16xf32>
    %cst_68 = arith.constant dense<0.000000e+00> : vector<36x6xf32>
    %115 = tpu.matmul %114, %80, %cst_68 {dimension_numbers = #tpu.dot_dimension_numbers<[1], [0], [0], [1], [0, 0, 1, 1], [], []>} : vector<36x16xf32>, vector<16x6xf32>, vector<36x6xf32> -> vector<36x6xf32>
    %116 = arith.subf %115, %104 : vector<36x6xf32>
    %cst_69 = arith.constant 2.000000e+00 : f32
    %117 = vector.broadcast %cst_69 : f32 to vector<36x6xf32>
    %118 = arith.mulf %117, %116 : vector<36x6xf32>
    %119 = vector.broadcast %97 : f32 to vector<36x6xf32>
    %120 = arith.addf %118, %119 : vector<36x6xf32>
    %121 = arith.addf %108, %112 : vector<36x6xf32>
    %122 = vector.broadcast %97 : f32 to vector<36x6xf32>
    %123 = arith.addf %121, %122 : vector<36x6xf32>
    %124 = arith.divf %120, %123 : vector<36x6xf32>
    %125 = vector.shape_cast %124 : vector<36x6xf32> to vector<1x36x6xf32>
    %cst_70 = arith.constant dense<0.000000e+00> : vector<1xf32>
    %126 = vector.multi_reduction <add>, %125, %cst_70 [1, 2] : vector<1x36x6xf32> to vector<1xf32>
    %127 = vector.shape_cast %126 : vector<1xf32> to vector<1x1x1xf32>
    %128 = vector.extract %127[0, 0, 0] : f32 from vector<1x1x1xf32>
    %cst_71 = arith.constant 0.00462962966 : f32
    %129 = arith.mulf %128, %cst_71 : f32
    %cst_72 = arith.constant 1.000000e-15 : f32
    %130 = arith.addf %129, %cst_72 : f32
    %cst_73 = arith.constant 2.000000e+00 : f32
    %131 = vector.broadcast %cst_73 : f32 to vector<36x6xf32>
    %132 = arith.mulf %131, %104 : vector<36x6xf32>
    %133 = vector.broadcast %95 : f32 to vector<36x6xf32>
    %134 = arith.addf %132, %133 : vector<36x6xf32>
    %135 = arith.mulf %134, %120 : vector<36x6xf32>
    %136 = arith.addf %102, %103 : vector<36x6xf32>
    %137 = vector.broadcast %95 : f32 to vector<36x6xf32>
    %138 = arith.addf %136, %137 : vector<36x6xf32>
    %139 = arith.mulf %138, %123 : vector<36x6xf32>
    %cst_74 = arith.constant 1.000000e-15 : f32
    %140 = vector.broadcast %cst_74 : f32 to vector<36x6xf32>
    %141 = arith.addf %139, %140 : vector<36x6xf32>
    %142 = arith.divf %135, %141 : vector<36x6xf32>
    %143 = vector.shape_cast %142 : vector<36x6xf32> to vector<1x36x6xf32>
    %cst_75 = arith.constant dense<0.000000e+00> : vector<1xf32>
    %144 = vector.multi_reduction <add>, %143, %cst_75 [1, 2] : vector<1x36x6xf32> to vector<1xf32>
    %145 = vector.shape_cast %144 : vector<1xf32> to vector<1x1x1xf32>
    %146 = vector.extract %145[0, 0, 0] : f32 from vector<1x1x1xf32>
    %cst_76 = arith.constant 0.00462962966 : f32
    %147 = arith.mulf %146, %cst_76 : f32
    %c1_77 = arith.constant 1 : index
    %c0_78 = arith.constant 0 : index
    %148 = memref.load %arg21[%c1_77, %c0_78] : memref<5x2xf32, #tpu.memory_space<smem>>
    memref.store %147, %arg21[%c1_77, %c0_78] : memref<5x2xf32, #tpu.memory_space<smem>>
    %c1_79 = arith.constant 1 : index
    %c1_80 = arith.constant 1 : index
    %149 = memref.load %arg21[%c1_79, %c1_80] : memref<5x2xf32, #tpu.memory_space<smem>>
    memref.store %130, %arg21[%c1_79, %c1_80] : memref<5x2xf32, #tpu.memory_space<smem>>
    %c0_81 = arith.constant 0 : index
    %c0_82 = arith.constant 0 : index
    %150 = vector.load %arg15[%c0_81, %c0_82] : memref<48x96xf32, #tpu.memory_space<vmem>>, vector<48x96xf32>
    %c0_83 = arith.constant 0 : index
    %c0_84 = arith.constant 0 : index
    %151 = vector.load %arg16[%c0_83, %c0_84] : memref<16x8xf32, #tpu.memory_space<vmem>>, vector<16x8xf32>
    %cst_85 = arith.constant dense<0.000000e+00> : vector<48x16xf32>
    %152 = tpu.matmul %150, %76, %cst_85 {dimension_numbers = #tpu.dot_dimension_numbers<[1], [0], [0], [1], [0, 0, 1, 1], [], []>} : vector<48x96xf32>, vector<96x16xf32>, vector<48x16xf32> -> vector<48x16xf32>
    %cst_86 = arith.constant dense<0.000000e+00> : vector<48x8xf32>
    %153 = tpu.matmul %152, %151, %cst_86 {dimension_numbers = #tpu.dot_dimension_numbers<[1], [0], [0], [1], [0, 0, 1, 1], [], []>} : vector<48x16xf32>, vector<16x8xf32>, vector<48x8xf32> -> vector<48x8xf32>
    %cst_87 = arith.constant dense<0.000000e+00> : vector<48x16xf32>
    %154 = tpu.matmul %150, %78, %cst_87 {dimension_numbers = #tpu.dot_dimension_numbers<[1], [0], [0], [1], [0, 0, 1, 1], [], []>} : vector<48x96xf32>, vector<96x16xf32>, vector<48x16xf32> -> vector<48x16xf32>
    %cst_88 = arith.constant dense<0.000000e+00> : vector<48x8xf32>
    %155 = tpu.matmul %154, %151, %cst_88 {dimension_numbers = #tpu.dot_dimension_numbers<[1], [0], [0], [1], [0, 0, 1, 1], [], []>} : vector<48x16xf32>, vector<16x8xf32>, vector<48x8xf32> -> vector<48x8xf32>
    %c0_89 = arith.constant 0 : index
    %c0_90 = arith.constant 0 : index
    %156 = vector.load %arg7[%c0_89, %c0_90] : memref<6x48xf32, #tpu.memory_space<vmem>>, vector<6x48xf32>
    %c0_91 = arith.constant 0 : index
    %c0_92 = arith.constant 0 : index
    %157 = vector.load %arg8[%c0_91, %c0_92] : memref<8x1xf32, #tpu.memory_space<vmem>>, vector<8x1xf32>
    %158 = vector.shape_cast %153 : vector<48x8xf32> to vector<1x48x8xf32>
    %cst_93 = arith.constant dense<0xFF800000> : vector<1xf32>
    %159 = vector.multi_reduction <maximumf>, %158, %cst_93 [1, 2] : vector<1x48x8xf32> to vector<1xf32>
    %160 = vector.shape_cast %159 : vector<1xf32> to vector<1x1x1xf32>
    %161 = vector.extract %160[0, 0, 0] : f32 from vector<1x1x1xf32>
    %162 = vector.shape_cast %153 : vector<48x8xf32> to vector<1x48x8xf32>
    %cst_94 = arith.constant dense<0x7F800000> : vector<1xf32>
    %163 = vector.multi_reduction <minimumf>, %162, %cst_94 [1, 2] : vector<1x48x8xf32> to vector<1xf32>
    %164 = vector.shape_cast %163 : vector<1xf32> to vector<1x1x1xf32>
    %165 = vector.extract %164[0, 0, 0] : f32 from vector<1x1x1xf32>
    %cst_95 = arith.constant 1.280000e+02 : f32
    %166 = arith.cmpf ogt, %161, %cst_95 : f32
    %cst_96 = arith.constant 2.550000e+02 : f32
    %cst_97 = arith.constant 1.000000e+00 : f32
    %167 = arith.select %166, %cst_96, %cst_97 : f32
    %cst_98 = arith.constant -5.000000e-01 : f32
    %168 = arith.cmpf olt, %165, %cst_98 : f32
    %cst_99 = arith.constant -1.000000e+00 : f32
    %cst_100 = arith.constant 0.000000e+00 : f32
    %169 = arith.select %168, %cst_99, %cst_100 : f32
    %170 = arith.subf %167, %169 : f32
    %cst_101 = arith.constant 0.00999999977 : f32
    %171 = arith.mulf %cst_101, %170 : f32
    %172 = arith.mulf %171, %171 : f32
    %cst_102 = arith.constant 3.000000e-02 : f32
    %173 = arith.mulf %cst_102, %170 : f32
    %174 = arith.mulf %173, %173 : f32
    %cst_103 = arith.constant dense<0.000000e+00> : vector<6x8xf32>
    %175 = tpu.matmul %156, %153, %cst_103 {dimension_numbers = #tpu.dot_dimension_numbers<[1], [0], [0], [1], [0, 0, 1, 1], [], []>} : vector<6x48xf32>, vector<48x8xf32>, vector<6x8xf32> -> vector<6x8xf32>
    %cst_104 = arith.constant dense<0.000000e+00> : vector<6x1xf32>
    %176 = tpu.matmul %175, %157, %cst_104 {dimension_numbers = #tpu.dot_dimension_numbers<[1], [0], [0], [1], [0, 0, 1, 1], [], []>} : vector<6x8xf32>, vector<8x1xf32>, vector<6x1xf32> -> vector<6x1xf32>
    %cst_105 = arith.constant dense<0.000000e+00> : vector<6x8xf32>
    %177 = tpu.matmul %156, %155, %cst_105 {dimension_numbers = #tpu.dot_dimension_numbers<[1], [0], [0], [1], [0, 0, 1, 1], [], []>} : vector<6x48xf32>, vector<48x8xf32>, vector<6x8xf32> -> vector<6x8xf32>
    %cst_106 = arith.constant dense<0.000000e+00> : vector<6x1xf32>
    %178 = tpu.matmul %177, %157, %cst_106 {dimension_numbers = #tpu.dot_dimension_numbers<[1], [0], [0], [1], [0, 0, 1, 1], [], []>} : vector<6x8xf32>, vector<8x1xf32>, vector<6x1xf32> -> vector<6x1xf32>
    %179 = arith.mulf %176, %176 : vector<6x1xf32>
    %180 = arith.mulf %178, %178 : vector<6x1xf32>
    %181 = arith.mulf %176, %178 : vector<6x1xf32>
    %182 = arith.mulf %153, %153 : vector<48x8xf32>
    %cst_107 = arith.constant dense<0.000000e+00> : vector<6x8xf32>
    %183 = tpu.matmul %156, %182, %cst_107 {dimension_numbers = #tpu.dot_dimension_numbers<[1], [0], [0], [1], [0, 0, 1, 1], [], []>} : vector<6x48xf32>, vector<48x8xf32>, vector<6x8xf32> -> vector<6x8xf32>
    %cst_108 = arith.constant dense<0.000000e+00> : vector<6x1xf32>
    %184 = tpu.matmul %183, %157, %cst_108 {dimension_numbers = #tpu.dot_dimension_numbers<[1], [0], [0], [1], [0, 0, 1, 1], [], []>} : vector<6x8xf32>, vector<8x1xf32>, vector<6x1xf32> -> vector<6x1xf32>
    %185 = arith.subf %184, %179 : vector<6x1xf32>
    %186 = arith.mulf %155, %155 : vector<48x8xf32>
    %cst_109 = arith.constant dense<0.000000e+00> : vector<6x8xf32>
    %187 = tpu.matmul %156, %186, %cst_109 {dimension_numbers = #tpu.dot_dimension_numbers<[1], [0], [0], [1], [0, 0, 1, 1], [], []>} : vector<6x48xf32>, vector<48x8xf32>, vector<6x8xf32> -> vector<6x8xf32>
    %cst_110 = arith.constant dense<0.000000e+00> : vector<6x1xf32>
    %188 = tpu.matmul %187, %157, %cst_110 {dimension_numbers = #tpu.dot_dimension_numbers<[1], [0], [0], [1], [0, 0, 1, 1], [], []>} : vector<6x8xf32>, vector<8x1xf32>, vector<6x1xf32> -> vector<6x1xf32>
    %189 = arith.subf %188, %180 : vector<6x1xf32>
    %190 = arith.mulf %153, %155 : vector<48x8xf32>
    %cst_111 = arith.constant dense<0.000000e+00> : vector<6x8xf32>
    %191 = tpu.matmul %156, %190, %cst_111 {dimension_numbers = #tpu.dot_dimension_numbers<[1], [0], [0], [1], [0, 0, 1, 1], [], []>} : vector<6x48xf32>, vector<48x8xf32>, vector<6x8xf32> -> vector<6x8xf32>
    %cst_112 = arith.constant dense<0.000000e+00> : vector<6x1xf32>
    %192 = tpu.matmul %191, %157, %cst_112 {dimension_numbers = #tpu.dot_dimension_numbers<[1], [0], [0], [1], [0, 0, 1, 1], [], []>} : vector<6x8xf32>, vector<8x1xf32>, vector<6x1xf32> -> vector<6x1xf32>
    %193 = arith.subf %192, %181 : vector<6x1xf32>
    %cst_113 = arith.constant 2.000000e+00 : f32
    %194 = vector.broadcast %cst_113 : f32 to vector<6x1xf32>
    %195 = arith.mulf %194, %193 : vector<6x1xf32>
    %196 = vector.broadcast %174 : f32 to vector<6x1xf32>
    %197 = arith.addf %195, %196 : vector<6x1xf32>
    %198 = arith.addf %185, %189 : vector<6x1xf32>
    %199 = vector.broadcast %174 : f32 to vector<6x1xf32>
    %200 = arith.addf %198, %199 : vector<6x1xf32>
    %201 = arith.divf %197, %200 : vector<6x1xf32>
    %202 = vector.shape_cast %201 : vector<6x1xf32> to vector<1x6x1xf32>
    %cst_114 = arith.constant dense<0.000000e+00> : vector<1xf32>
    %203 = vector.multi_reduction <add>, %202, %cst_114 [1, 2] : vector<1x6x1xf32> to vector<1xf32>
    %204 = vector.shape_cast %203 : vector<1xf32> to vector<1x1x1xf32>
    %205 = vector.extract %204[0, 0, 0] : f32 from vector<1x1x1xf32>
    %cst_115 = arith.constant 0.166666672 : f32
    %206 = arith.mulf %205, %cst_115 : f32
    %cst_116 = arith.constant 1.000000e-15 : f32
    %207 = arith.addf %206, %cst_116 : f32
    %cst_117 = arith.constant 2.000000e+00 : f32
    %208 = vector.broadcast %cst_117 : f32 to vector<6x1xf32>
    %209 = arith.mulf %208, %181 : vector<6x1xf32>
    %210 = vector.broadcast %172 : f32 to vector<6x1xf32>
    %211 = arith.addf %209, %210 : vector<6x1xf32>
    %212 = arith.mulf %211, %197 : vector<6x1xf32>
    %213 = arith.addf %179, %180 : vector<6x1xf32>
    %214 = vector.broadcast %172 : f32 to vector<6x1xf32>
    %215 = arith.addf %213, %214 : vector<6x1xf32>
    %216 = arith.mulf %215, %200 : vector<6x1xf32>
    %cst_118 = arith.constant 1.000000e-15 : f32
    %217 = vector.broadcast %cst_118 : f32 to vector<6x1xf32>
    %218 = arith.addf %216, %217 : vector<6x1xf32>
    %219 = arith.divf %212, %218 : vector<6x1xf32>
    %220 = vector.shape_cast %219 : vector<6x1xf32> to vector<1x6x1xf32>
    %cst_119 = arith.constant dense<0.000000e+00> : vector<1xf32>
    %221 = vector.multi_reduction <add>, %220, %cst_119 [1, 2] : vector<1x6x1xf32> to vector<1xf32>
    %222 = vector.shape_cast %221 : vector<1xf32> to vector<1x1x1xf32>
    %223 = vector.extract %222[0, 0, 0] : f32 from vector<1x1x1xf32>
    %cst_120 = arith.constant 0.166666672 : f32
    %224 = arith.mulf %223, %cst_120 : f32
    %c2 = arith.constant 2 : index
    %c0_121 = arith.constant 0 : index
    %225 = memref.load %arg21[%c2, %c0_121] : memref<5x2xf32, #tpu.memory_space<smem>>
    memref.store %224, %arg21[%c2, %c0_121] : memref<5x2xf32, #tpu.memory_space<smem>>
    %c2_122 = arith.constant 2 : index
    %c1_123 = arith.constant 1 : index
    %226 = memref.load %arg21[%c2_122, %c1_123] : memref<5x2xf32, #tpu.memory_space<smem>>
    memref.store %207, %arg21[%c2_122, %c1_123] : memref<5x2xf32, #tpu.memory_space<smem>>
    %c0_124 = arith.constant 0 : index
    %c0_125 = arith.constant 0 : index
    %227 = vector.load %arg17[%c0_124, %c0_125] : memref<24x48xf32, #tpu.memory_space<vmem>>, vector<24x48xf32>
    %c0_126 = arith.constant 0 : index
    %c0_127 = arith.constant 0 : index
    %228 = vector.load %arg18[%c0_126, %c0_127] : memref<8x4xf32, #tpu.memory_space<vmem>>, vector<8x4xf32>
    %cst_128 = arith.constant dense<0.000000e+00> : vector<24x8xf32>
    %229 = tpu.matmul %227, %153, %cst_128 {dimension_numbers = #tpu.dot_dimension_numbers<[1], [0], [0], [1], [0, 0, 1, 1], [], []>} : vector<24x48xf32>, vector<48x8xf32>, vector<24x8xf32> -> vector<24x8xf32>
    %cst_129 = arith.constant dense<0.000000e+00> : vector<24x4xf32>
    %230 = tpu.matmul %229, %228, %cst_129 {dimension_numbers = #tpu.dot_dimension_numbers<[1], [0], [0], [1], [0, 0, 1, 1], [], []>} : vector<24x8xf32>, vector<8x4xf32>, vector<24x4xf32> -> vector<24x4xf32>
    %cst_130 = arith.constant dense<0.000000e+00> : vector<24x8xf32>
    %231 = tpu.matmul %227, %155, %cst_130 {dimension_numbers = #tpu.dot_dimension_numbers<[1], [0], [0], [1], [0, 0, 1, 1], [], []>} : vector<24x48xf32>, vector<48x8xf32>, vector<24x8xf32> -> vector<24x8xf32>
    %cst_131 = arith.constant dense<0.000000e+00> : vector<24x4xf32>
    %232 = tpu.matmul %231, %228, %cst_131 {dimension_numbers = #tpu.dot_dimension_numbers<[1], [0], [0], [1], [0, 0, 1, 1], [], []>} : vector<24x8xf32>, vector<8x4xf32>, vector<24x4xf32> -> vector<24x4xf32>
    %c0_132 = arith.constant 0 : index
    %c0_133 = arith.constant 0 : index
    %233 = vector.load %arg9[%c0_132, %c0_133] : memref<6x24xf32, #tpu.memory_space<vmem>>, vector<6x24xf32>
    %c0_134 = arith.constant 0 : index
    %c0_135 = arith.constant 0 : index
    %234 = vector.load %arg10[%c0_134, %c0_135] : memref<4x1xf32, #tpu.memory_space<vmem>>, vector<4x1xf32>
    %235 = vector.shape_cast %230 : vector<24x4xf32> to vector<1x24x4xf32>
    %cst_136 = arith.constant dense<0xFF800000> : vector<1xf32>
    %236 = vector.multi_reduction <maximumf>, %235, %cst_136 [1, 2] : vector<1x24x4xf32> to vector<1xf32>
    %237 = vector.shape_cast %236 : vector<1xf32> to vector<1x1x1xf32>
    %238 = vector.extract %237[0, 0, 0] : f32 from vector<1x1x1xf32>
    %239 = vector.shape_cast %230 : vector<24x4xf32> to vector<1x24x4xf32>
    %cst_137 = arith.constant dense<0x7F800000> : vector<1xf32>
    %240 = vector.multi_reduction <minimumf>, %239, %cst_137 [1, 2] : vector<1x24x4xf32> to vector<1xf32>
    %241 = vector.shape_cast %240 : vector<1xf32> to vector<1x1x1xf32>
    %242 = vector.extract %241[0, 0, 0] : f32 from vector<1x1x1xf32>
    %cst_138 = arith.constant 1.280000e+02 : f32
    %243 = arith.cmpf ogt, %238, %cst_138 : f32
    %cst_139 = arith.constant 2.550000e+02 : f32
    %cst_140 = arith.constant 1.000000e+00 : f32
    %244 = arith.select %243, %cst_139, %cst_140 : f32
    %cst_141 = arith.constant -5.000000e-01 : f32
    %245 = arith.cmpf olt, %242, %cst_141 : f32
    %cst_142 = arith.constant -1.000000e+00 : f32
    %cst_143 = arith.constant 0.000000e+00 : f32
    %246 = arith.select %245, %cst_142, %cst_143 : f32
    %247 = arith.subf %244, %246 : f32
    %cst_144 = arith.constant 0.00999999977 : f32
    %248 = arith.mulf %cst_144, %247 : f32
    %249 = arith.mulf %248, %248 : f32
    %cst_145 = arith.constant 3.000000e-02 : f32
    %250 = arith.mulf %cst_145, %247 : f32
    %251 = arith.mulf %250, %250 : f32
    %cst_146 = arith.constant dense<0.000000e+00> : vector<6x4xf32>
    %252 = tpu.matmul %233, %230, %cst_146 {dimension_numbers = #tpu.dot_dimension_numbers<[1], [0], [0], [1], [0, 0, 1, 1], [], []>} : vector<6x24xf32>, vector<24x4xf32>, vector<6x4xf32> -> vector<6x4xf32>
    %cst_147 = arith.constant dense<0.000000e+00> : vector<6x1xf32>
    %253 = tpu.matmul %252, %234, %cst_147 {dimension_numbers = #tpu.dot_dimension_numbers<[1], [0], [0], [1], [0, 0, 1, 1], [], []>} : vector<6x4xf32>, vector<4x1xf32>, vector<6x1xf32> -> vector<6x1xf32>
    %cst_148 = arith.constant dense<0.000000e+00> : vector<6x4xf32>
    %254 = tpu.matmul %233, %232, %cst_148 {dimension_numbers = #tpu.dot_dimension_numbers<[1], [0], [0], [1], [0, 0, 1, 1], [], []>} : vector<6x24xf32>, vector<24x4xf32>, vector<6x4xf32> -> vector<6x4xf32>
    %cst_149 = arith.constant dense<0.000000e+00> : vector<6x1xf32>
    %255 = tpu.matmul %254, %234, %cst_149 {dimension_numbers = #tpu.dot_dimension_numbers<[1], [0], [0], [1], [0, 0, 1, 1], [], []>} : vector<6x4xf32>, vector<4x1xf32>, vector<6x1xf32> -> vector<6x1xf32>
    %256 = arith.mulf %253, %253 : vector<6x1xf32>
    %257 = arith.mulf %255, %255 : vector<6x1xf32>
    %258 = arith.mulf %253, %255 : vector<6x1xf32>
    %259 = arith.mulf %230, %230 : vector<24x4xf32>
    %cst_150 = arith.constant dense<0.000000e+00> : vector<6x4xf32>
    %260 = tpu.matmul %233, %259, %cst_150 {dimension_numbers = #tpu.dot_dimension_numbers<[1], [0], [0], [1], [0, 0, 1, 1], [], []>} : vector<6x24xf32>, vector<24x4xf32>, vector<6x4xf32> -> vector<6x4xf32>
    %cst_151 = arith.constant dense<0.000000e+00> : vector<6x1xf32>
    %261 = tpu.matmul %260, %234, %cst_151 {dimension_numbers = #tpu.dot_dimension_numbers<[1], [0], [0], [1], [0, 0, 1, 1], [], []>} : vector<6x4xf32>, vector<4x1xf32>, vector<6x1xf32> -> vector<6x1xf32>
    %262 = arith.subf %261, %256 : vector<6x1xf32>
    %263 = arith.mulf %232, %232 : vector<24x4xf32>
    %cst_152 = arith.constant dense<0.000000e+00> : vector<6x4xf32>
    %264 = tpu.matmul %233, %263, %cst_152 {dimension_numbers = #tpu.dot_dimension_numbers<[1], [0], [0], [1], [0, 0, 1, 1], [], []>} : vector<6x24xf32>, vector<24x4xf32>, vector<6x4xf32> -> vector<6x4xf32>
    %cst_153 = arith.constant dense<0.000000e+00> : vector<6x1xf32>
    %265 = tpu.matmul %264, %234, %cst_153 {dimension_numbers = #tpu.dot_dimension_numbers<[1], [0], [0], [1], [0, 0, 1, 1], [], []>} : vector<6x4xf32>, vector<4x1xf32>, vector<6x1xf32> -> vector<6x1xf32>
    %266 = arith.subf %265, %257 : vector<6x1xf32>
    %267 = arith.mulf %230, %232 : vector<24x4xf32>
    %cst_154 = arith.constant dense<0.000000e+00> : vector<6x4xf32>
    %268 = tpu.matmul %233, %267, %cst_154 {dimension_numbers = #tpu.dot_dimension_numbers<[1], [0], [0], [1], [0, 0, 1, 1], [], []>} : vector<6x24xf32>, vector<24x4xf32>, vector<6x4xf32> -> vector<6x4xf32>
    %cst_155 = arith.constant dense<0.000000e+00> : vector<6x1xf32>
    %269 = tpu.matmul %268, %234, %cst_155 {dimension_numbers = #tpu.dot_dimension_numbers<[1], [0], [0], [1], [0, 0, 1, 1], [], []>} : vector<6x4xf32>, vector<4x1xf32>, vector<6x1xf32> -> vector<6x1xf32>
    %270 = arith.subf %269, %258 : vector<6x1xf32>
    %cst_156 = arith.constant 2.000000e+00 : f32
    %271 = vector.broadcast %cst_156 : f32 to vector<6x1xf32>
    %272 = arith.mulf %271, %270 : vector<6x1xf32>
    %273 = vector.broadcast %251 : f32 to vector<6x1xf32>
    %274 = arith.addf %272, %273 : vector<6x1xf32>
    %275 = arith.addf %262, %266 : vector<6x1xf32>
    %276 = vector.broadcast %251 : f32 to vector<6x1xf32>
    %277 = arith.addf %275, %276 : vector<6x1xf32>
    %278 = arith.divf %274, %277 : vector<6x1xf32>
    %279 = vector.shape_cast %278 : vector<6x1xf32> to vector<1x6x1xf32>
    %cst_157 = arith.constant dense<0.000000e+00> : vector<1xf32>
    %280 = vector.multi_reduction <add>, %279, %cst_157 [1, 2] : vector<1x6x1xf32> to vector<1xf32>
    %281 = vector.shape_cast %280 : vector<1xf32> to vector<1x1x1xf32>
    %282 = vector.extract %281[0, 0, 0] : f32 from vector<1x1x1xf32>
    %cst_158 = arith.constant 0.166666672 : f32
    %283 = arith.mulf %282, %cst_158 : f32
    %cst_159 = arith.constant 1.000000e-15 : f32
    %284 = arith.addf %283, %cst_159 : f32
    %cst_160 = arith.constant 2.000000e+00 : f32
    %285 = vector.broadcast %cst_160 : f32 to vector<6x1xf32>
    %286 = arith.mulf %285, %258 : vector<6x1xf32>
    %287 = vector.broadcast %249 : f32 to vector<6x1xf32>
    %288 = arith.addf %286, %287 : vector<6x1xf32>
    %289 = arith.mulf %288, %274 : vector<6x1xf32>
    %290 = arith.addf %256, %257 : vector<6x1xf32>
    %291 = vector.broadcast %249 : f32 to vector<6x1xf32>
    %292 = arith.addf %290, %291 : vector<6x1xf32>
    %293 = arith.mulf %292, %277 : vector<6x1xf32>
    %cst_161 = arith.constant 1.000000e-15 : f32
    %294 = vector.broadcast %cst_161 : f32 to vector<6x1xf32>
    %295 = arith.addf %293, %294 : vector<6x1xf32>
    %296 = arith.divf %289, %295 : vector<6x1xf32>
    %297 = vector.shape_cast %296 : vector<6x1xf32> to vector<1x6x1xf32>
    %cst_162 = arith.constant dense<0.000000e+00> : vector<1xf32>
    %298 = vector.multi_reduction <add>, %297, %cst_162 [1, 2] : vector<1x6x1xf32> to vector<1xf32>
    %299 = vector.shape_cast %298 : vector<1xf32> to vector<1x1x1xf32>
    %300 = vector.extract %299[0, 0, 0] : f32 from vector<1x1x1xf32>
    %cst_163 = arith.constant 0.166666672 : f32
    %301 = arith.mulf %300, %cst_163 : f32
    %c3 = arith.constant 3 : index
    %c0_164 = arith.constant 0 : index
    %302 = memref.load %arg21[%c3, %c0_164] : memref<5x2xf32, #tpu.memory_space<smem>>
    memref.store %301, %arg21[%c3, %c0_164] : memref<5x2xf32, #tpu.memory_space<smem>>
    %c3_165 = arith.constant 3 : index
    %c1_166 = arith.constant 1 : index
    %303 = memref.load %arg21[%c3_165, %c1_166] : memref<5x2xf32, #tpu.memory_space<smem>>
    memref.store %284, %arg21[%c3_165, %c1_166] : memref<5x2xf32, #tpu.memory_space<smem>>
    %c0_167 = arith.constant 0 : index
    %c0_168 = arith.constant 0 : index
    %304 = vector.load %arg19[%c0_167, %c0_168] : memref<12x24xf32, #tpu.memory_space<vmem>>, vector<12x24xf32>
    %c0_169 = arith.constant 0 : index
    %c0_170 = arith.constant 0 : index
    %305 = vector.load %arg20[%c0_169, %c0_170] : memref<4x2xf32, #tpu.memory_space<vmem>>, vector<4x2xf32>
    %cst_171 = arith.constant dense<0.000000e+00> : vector<12x4xf32>
    %306 = tpu.matmul %304, %230, %cst_171 {dimension_numbers = #tpu.dot_dimension_numbers<[1], [0], [0], [1], [0, 0, 1, 1], [], []>} : vector<12x24xf32>, vector<24x4xf32>, vector<12x4xf32> -> vector<12x4xf32>
    %cst_172 = arith.constant dense<0.000000e+00> : vector<12x2xf32>
    %307 = tpu.matmul %306, %305, %cst_172 {dimension_numbers = #tpu.dot_dimension_numbers<[1], [0], [0], [1], [0, 0, 1, 1], [], []>} : vector<12x4xf32>, vector<4x2xf32>, vector<12x2xf32> -> vector<12x2xf32>
    %cst_173 = arith.constant dense<0.000000e+00> : vector<12x4xf32>
    %308 = tpu.matmul %304, %232, %cst_173 {dimension_numbers = #tpu.dot_dimension_numbers<[1], [0], [0], [1], [0, 0, 1, 1], [], []>} : vector<12x24xf32>, vector<24x4xf32>, vector<12x4xf32> -> vector<12x4xf32>
    %cst_174 = arith.constant dense<0.000000e+00> : vector<12x2xf32>
    %309 = tpu.matmul %308, %305, %cst_174 {dimension_numbers = #tpu.dot_dimension_numbers<[1], [0], [0], [1], [0, 0, 1, 1], [], []>} : vector<12x4xf32>, vector<4x2xf32>, vector<12x2xf32> -> vector<12x2xf32>
    %c0_175 = arith.constant 0 : index
    %c0_176 = arith.constant 0 : index
    %310 = vector.load %arg11[%c0_175, %c0_176] : memref<6x12xf32, #tpu.memory_space<vmem>>, vector<6x12xf32>
    %c0_177 = arith.constant 0 : index
    %c0_178 = arith.constant 0 : index
    %311 = vector.load %arg12[%c0_177, %c0_178] : memref<2x1xf32, #tpu.memory_space<vmem>>, vector<2x1xf32>
    %312 = vector.shape_cast %307 : vector<12x2xf32> to vector<1x12x2xf32>
    %cst_179 = arith.constant dense<0xFF800000> : vector<1xf32>
    %313 = vector.multi_reduction <maximumf>, %312, %cst_179 [1, 2] : vector<1x12x2xf32> to vector<1xf32>
    %314 = vector.shape_cast %313 : vector<1xf32> to vector<1x1x1xf32>
    %315 = vector.extract %314[0, 0, 0] : f32 from vector<1x1x1xf32>
    %316 = vector.shape_cast %307 : vector<12x2xf32> to vector<1x12x2xf32>
    %cst_180 = arith.constant dense<0x7F800000> : vector<1xf32>
    %317 = vector.multi_reduction <minimumf>, %316, %cst_180 [1, 2] : vector<1x12x2xf32> to vector<1xf32>
    %318 = vector.shape_cast %317 : vector<1xf32> to vector<1x1x1xf32>
    %319 = vector.extract %318[0, 0, 0] : f32 from vector<1x1x1xf32>
    %cst_181 = arith.constant 1.280000e+02 : f32
    %320 = arith.cmpf ogt, %315, %cst_181 : f32
    %cst_182 = arith.constant 2.550000e+02 : f32
    %cst_183 = arith.constant 1.000000e+00 : f32
    %321 = arith.select %320, %cst_182, %cst_183 : f32
    %cst_184 = arith.constant -5.000000e-01 : f32
    %322 = arith.cmpf olt, %319, %cst_184 : f32
    %cst_185 = arith.constant -1.000000e+00 : f32
    %cst_186 = arith.constant 0.000000e+00 : f32
    %323 = arith.select %322, %cst_185, %cst_186 : f32
    %324 = arith.subf %321, %323 : f32
    %cst_187 = arith.constant 0.00999999977 : f32
    %325 = arith.mulf %cst_187, %324 : f32
    %326 = arith.mulf %325, %325 : f32
    %cst_188 = arith.constant 3.000000e-02 : f32
    %327 = arith.mulf %cst_188, %324 : f32
    %328 = arith.mulf %327, %327 : f32
    %cst_189 = arith.constant dense<0.000000e+00> : vector<6x2xf32>
    %329 = tpu.matmul %310, %307, %cst_189 {dimension_numbers = #tpu.dot_dimension_numbers<[1], [0], [0], [1], [0, 0, 1, 1], [], []>} : vector<6x12xf32>, vector<12x2xf32>, vector<6x2xf32> -> vector<6x2xf32>
    %cst_190 = arith.constant dense<0.000000e+00> : vector<6x1xf32>
    %330 = tpu.matmul %329, %311, %cst_190 {dimension_numbers = #tpu.dot_dimension_numbers<[1], [0], [0], [1], [0, 0, 1, 1], [], []>} : vector<6x2xf32>, vector<2x1xf32>, vector<6x1xf32> -> vector<6x1xf32>
    %cst_191 = arith.constant dense<0.000000e+00> : vector<6x2xf32>
    %331 = tpu.matmul %310, %309, %cst_191 {dimension_numbers = #tpu.dot_dimension_numbers<[1], [0], [0], [1], [0, 0, 1, 1], [], []>} : vector<6x12xf32>, vector<12x2xf32>, vector<6x2xf32> -> vector<6x2xf32>
    %cst_192 = arith.constant dense<0.000000e+00> : vector<6x1xf32>
    %332 = tpu.matmul %331, %311, %cst_192 {dimension_numbers = #tpu.dot_dimension_numbers<[1], [0], [0], [1], [0, 0, 1, 1], [], []>} : vector<6x2xf32>, vector<2x1xf32>, vector<6x1xf32> -> vector<6x1xf32>
    %333 = arith.mulf %330, %330 : vector<6x1xf32>
    %334 = arith.mulf %332, %332 : vector<6x1xf32>
    %335 = arith.mulf %330, %332 : vector<6x1xf32>
    %336 = arith.mulf %307, %307 : vector<12x2xf32>
    %cst_193 = arith.constant dense<0.000000e+00> : vector<6x2xf32>
    %337 = tpu.matmul %310, %336, %cst_193 {dimension_numbers = #tpu.dot_dimension_numbers<[1], [0], [0], [1], [0, 0, 1, 1], [], []>} : vector<6x12xf32>, vector<12x2xf32>, vector<6x2xf32> -> vector<6x2xf32>
    %cst_194 = arith.constant dense<0.000000e+00> : vector<6x1xf32>
    %338 = tpu.matmul %337, %311, %cst_194 {dimension_numbers = #tpu.dot_dimension_numbers<[1], [0], [0], [1], [0, 0, 1, 1], [], []>} : vector<6x2xf32>, vector<2x1xf32>, vector<6x1xf32> -> vector<6x1xf32>
    %339 = arith.subf %338, %333 : vector<6x1xf32>
    %340 = arith.mulf %309, %309 : vector<12x2xf32>
    %cst_195 = arith.constant dense<0.000000e+00> : vector<6x2xf32>
    %341 = tpu.matmul %310, %340, %cst_195 {dimension_numbers = #tpu.dot_dimension_numbers<[1], [0], [0], [1], [0, 0, 1, 1], [], []>} : vector<6x12xf32>, vector<12x2xf32>, vector<6x2xf32> -> vector<6x2xf32>
    %cst_196 = arith.constant dense<0.000000e+00> : vector<6x1xf32>
    %342 = tpu.matmul %341, %311, %cst_196 {dimension_numbers = #tpu.dot_dimension_numbers<[1], [0], [0], [1], [0, 0, 1, 1], [], []>} : vector<6x2xf32>, vector<2x1xf32>, vector<6x1xf32> -> vector<6x1xf32>
    %343 = arith.subf %342, %334 : vector<6x1xf32>
    %344 = arith.mulf %307, %309 : vector<12x2xf32>
    %cst_197 = arith.constant dense<0.000000e+00> : vector<6x2xf32>
    %345 = tpu.matmul %310, %344, %cst_197 {dimension_numbers = #tpu.dot_dimension_numbers<[1], [0], [0], [1], [0, 0, 1, 1], [], []>} : vector<6x12xf32>, vector<12x2xf32>, vector<6x2xf32> -> vector<6x2xf32>
    %cst_198 = arith.constant dense<0.000000e+00> : vector<6x1xf32>
    %346 = tpu.matmul %345, %311, %cst_198 {dimension_numbers = #tpu.dot_dimension_numbers<[1], [0], [0], [1], [0, 0, 1, 1], [], []>} : vector<6x2xf32>, vector<2x1xf32>, vector<6x1xf32> -> vector<6x1xf32>
    %347 = arith.subf %346, %335 : vector<6x1xf32>
    %cst_199 = arith.constant 2.000000e+00 : f32
    %348 = vector.broadcast %cst_199 : f32 to vector<6x1xf32>
    %349 = arith.mulf %348, %347 : vector<6x1xf32>
    %350 = vector.broadcast %328 : f32 to vector<6x1xf32>
    %351 = arith.addf %349, %350 : vector<6x1xf32>
    %352 = arith.addf %339, %343 : vector<6x1xf32>
    %353 = vector.broadcast %328 : f32 to vector<6x1xf32>
    %354 = arith.addf %352, %353 : vector<6x1xf32>
    %355 = arith.divf %351, %354 : vector<6x1xf32>
    %356 = vector.shape_cast %355 : vector<6x1xf32> to vector<1x6x1xf32>
    %cst_200 = arith.constant dense<0.000000e+00> : vector<1xf32>
    %357 = vector.multi_reduction <add>, %356, %cst_200 [1, 2] : vector<1x6x1xf32> to vector<1xf32>
    %358 = vector.shape_cast %357 : vector<1xf32> to vector<1x1x1xf32>
    %359 = vector.extract %358[0, 0, 0] : f32 from vector<1x1x1xf32>
    %cst_201 = arith.constant 0.166666672 : f32
    %360 = arith.mulf %359, %cst_201 : f32
    %cst_202 = arith.constant 1.000000e-15 : f32
    %361 = arith.addf %360, %cst_202 : f32
    %cst_203 = arith.constant 2.000000e+00 : f32
    %362 = vector.broadcast %cst_203 : f32 to vector<6x1xf32>
    %363 = arith.mulf %362, %335 : vector<6x1xf32>
    %364 = vector.broadcast %326 : f32 to vector<6x1xf32>
    %365 = arith.addf %363, %364 : vector<6x1xf32>
    %366 = arith.mulf %365, %351 : vector<6x1xf32>
    %367 = arith.addf %333, %334 : vector<6x1xf32>
    %368 = vector.broadcast %326 : f32 to vector<6x1xf32>
    %369 = arith.addf %367, %368 : vector<6x1xf32>
    %370 = arith.mulf %369, %354 : vector<6x1xf32>
    %cst_204 = arith.constant 1.000000e-15 : f32
    %371 = vector.broadcast %cst_204 : f32 to vector<6x1xf32>
    %372 = arith.addf %370, %371 : vector<6x1xf32>
    %373 = arith.divf %366, %372 : vector<6x1xf32>
    %374 = vector.shape_cast %373 : vector<6x1xf32> to vector<1x6x1xf32>
    %cst_205 = arith.constant dense<0.000000e+00> : vector<1xf32>
    %375 = vector.multi_reduction <add>, %374, %cst_205 [1, 2] : vector<1x6x1xf32> to vector<1xf32>
    %376 = vector.shape_cast %375 : vector<1xf32> to vector<1x1x1xf32>
    %377 = vector.extract %376[0, 0, 0] : f32 from vector<1x1x1xf32>
    %cst_206 = arith.constant 0.166666672 : f32
    %378 = arith.mulf %377, %cst_206 : f32
    %c4 = arith.constant 4 : index
    %c0_207 = arith.constant 0 : index
    %379 = memref.load %arg21[%c4, %c0_207] : memref<5x2xf32, #tpu.memory_space<smem>>
    memref.store %378, %arg21[%c4, %c0_207] : memref<5x2xf32, #tpu.memory_space<smem>>
    %c4_208 = arith.constant 4 : index
    %c1_209 = arith.constant 1 : index
    %380 = memref.load %arg21[%c4_208, %c1_209] : memref<5x2xf32, #tpu.memory_space<smem>>
    memref.store %361, %arg21[%c4_208, %c1_209] : memref<5x2xf32, #tpu.memory_space<smem>>
    return
  }
  func.func @transform_0(%arg0: i32) -> (i32, i32) {
    %c0_i32 = arith.constant 0 : i32
    %c0_i32_0 = arith.constant 0 : i32
    %c0_i32_1 = arith.constant 0 : i32
    return %c0_i32, %c0_i32_0 : i32, i32
  }
  func.func @transform_1(%arg0: i32) -> (i32, i32) {
    %c0_i32 = arith.constant 0 : i32
    %c0_i32_0 = arith.constant 0 : i32
    %c0_i32_1 = arith.constant 0 : i32
    return %c0_i32, %c0_i32_0 : i32, i32
  }
  func.func @transform_2(%arg0: i32) -> (i32, i32) {
    %c0_i32 = arith.constant 0 : i32
    %c0_i32_0 = arith.constant 0 : i32
    %c0_i32_1 = arith.constant 0 : i32
    return %c0_i32, %c0_i32_0 : i32, i32
  }
  func.func @transform_3(%arg0: i32) -> (i32, i32) {
    %c0_i32 = arith.constant 0 : i32
    %c0_i32_0 = arith.constant 0 : i32
    %c0_i32_1 = arith.constant 0 : i32
    return %c0_i32, %c0_i32_0 : i32, i32
  }
  func.func @transform_4(%arg0: i32) -> (i32, i32) {
    %c0_i32 = arith.constant 0 : i32
    %c0_i32_0 = arith.constant 0 : i32
    %c0_i32_1 = arith.constant 0 : i32
    return %c0_i32, %c0_i32_0 : i32, i32
  }
  func.func @transform_5(%arg0: i32) -> (i32, i32) {
    %c0_i32 = arith.constant 0 : i32
    %c0_i32_0 = arith.constant 0 : i32
    %c0_i32_1 = arith.constant 0 : i32
    return %c0_i32, %c0_i32_0 : i32, i32
  }
  func.func @transform_6(%arg0: i32) -> (i32, i32) {
    %c0_i32 = arith.constant 0 : i32
    %c0_i32_0 = arith.constant 0 : i32
    %c0_i32_1 = arith.constant 0 : i32
    return %c0_i32, %c0_i32_0 : i32, i32
  }
  func.func @transform_7(%arg0: i32) -> (i32, i32) {
    %c0_i32 = arith.constant 0 : i32
    %c0_i32_0 = arith.constant 0 : i32
    %c0_i32_1 = arith.constant 0 : i32
    return %c0_i32, %c0_i32_0 : i32, i32
  }
  func.func @transform_8(%arg0: i32) -> (i32, i32) {
    %c0_i32 = arith.constant 0 : i32
    %c0_i32_0 = arith.constant 0 : i32
    %c0_i32_1 = arith.constant 0 : i32
    return %c0_i32, %c0_i32_0 : i32, i32
  }
  func.func @transform_9(%arg0: i32) -> (i32, i32) {
    %c0_i32 = arith.constant 0 : i32
    %c0_i32_0 = arith.constant 0 : i32
    %c0_i32_1 = arith.constant 0 : i32
    return %c0_i32, %c0_i32_0 : i32, i32
  }
  func.func @transform_10(%arg0: i32) -> (i32, i32) {
    %c0_i32 = arith.constant 0 : i32
    %c0_i32_0 = arith.constant 0 : i32
    %c0_i32_1 = arith.constant 0 : i32
    return %c0_i32, %c0_i32_0 : i32, i32
  }
  func.func @transform_11(%arg0: i32) -> (i32, i32) {
    %c0_i32 = arith.constant 0 : i32
    %c0_i32_0 = arith.constant 0 : i32
    %c0_i32_1 = arith.constant 0 : i32
    return %c0_i32, %c0_i32_0 : i32, i32
  }
  func.func @transform_12(%arg0: i32) -> (i32, i32) {
    %c0_i32 = arith.constant 0 : i32
    %c0_i32_0 = arith.constant 0 : i32
    %c0_i32_1 = arith.constant 0 : i32
    return %c0_i32, %c0_i32_0 : i32, i32
  }
  func.func @transform_13(%arg0: i32) -> (i32, i32) {
    %c0_i32 = arith.constant 0 : i32
    %c0_i32_0 = arith.constant 0 : i32
    %c0_i32_1 = arith.constant 0 : i32
    return %c0_i32, %c0_i32_0 : i32, i32
  }
  func.func @transform_14(%arg0: i32) -> (i32, i32) {
    %c0_i32 = arith.constant 0 : i32
    %c0_i32_0 = arith.constant 0 : i32
    %c0_i32_1 = arith.constant 0 : i32
    return %c0_i32, %c0_i32_0 : i32, i32
  }
  func.func @transform_15(%arg0: i32) -> (i32, i32) {
    %c0_i32 = arith.constant 0 : i32
    %c0_i32_0 = arith.constant 0 : i32
    %c0_i32_1 = arith.constant 0 : i32
    return %c0_i32, %c0_i32_0 : i32, i32
  }
  func.func @transform_16(%arg0: i32) -> (i32, i32) {
    %c0_i32 = arith.constant 0 : i32
    %c0_i32_0 = arith.constant 0 : i32
    %c0_i32_1 = arith.constant 0 : i32
    return %c0_i32, %c0_i32_0 : i32, i32
  }
  func.func @transform_17(%arg0: i32) -> (i32, i32) {
    %c0_i32 = arith.constant 0 : i32
    %c0_i32_0 = arith.constant 0 : i32
    %c0_i32_1 = arith.constant 0 : i32
    return %c0_i32, %c0_i32_0 : i32, i32
  }
  func.func @transform_18(%arg0: i32) -> (i32, i32) {
    %c0_i32 = arith.constant 0 : i32
    %c0_i32_0 = arith.constant 0 : i32
    %c0_i32_1 = arith.constant 0 : i32
    return %c0_i32, %c0_i32_0 : i32, i32
  }
  func.func @transform_19(%arg0: i32) -> (i32, i32) {
    %c0_i32 = arith.constant 0 : i32
    %c0_i32_0 = arith.constant 0 : i32
    %c0_i32_1 = arith.constant 0 : i32
    return %c0_i32, %c0_i32_0 : i32, i32
  }
  func.func @transform_20(%arg0: i32) -> (i32, i32) {
    %c0_i32 = arith.constant 0 : i32
    %c0_i32_0 = arith.constant 0 : i32
    %c0_i32_1 = arith.constant 0 : i32
    return %c0_i32, %c0_i32_0 : i32, i32
  }
}

</mosaic_0001>

<llo_original>
// kernel: msssim_pallas.1
$region0: #{msssim_pallas.1}
  #allocation0 [shape = 'u32[]', space=smem, size = 0x4, offset = 0x4, fixed_abs, tag = 'smem constant byte address 0x4 - core index']
  #allocation1 [shape = 'u32[144,128]{1,0:T(1,128)}', space=vmem, size = 0x12000, scoped, tag = 'internal scratch']
  %s0 = inlined_call_operand.hbm [shape: f32[192,32], index: 0, kind: input, shape index: {}]
  %s1 = inlined_call_operand.hbm [shape: f32[192,32], index: 1, kind: input, shape index: {}]
  %s2 = inlined_call_operand.hbm [shape: f32[132,192], index: 2, kind: input, shape index: {}]
  %s3 = inlined_call_operand.hbm [shape: f32[32,22], index: 3, kind: input, shape index: {}]
  %s4 = inlined_call_operand.hbm [shape: f32[36,96], index: 4, kind: input, shape index: {}]
  %s5 = inlined_call_operand.hbm [shape: f32[16,6], index: 5, kind: input, shape index: {}]
  %s6 = inlined_call_operand.hbm [shape: f32[6,48], index: 6, kind: input, shape index: {}]
  %s7 = inlined_call_operand.hbm [shape: f32[8,1], index: 7, kind: input, shape index: {}]
  %s8 = inlined_call_operand.hbm [shape: f32[6,24], index: 8, kind: input, shape index: {}]
  %s9 = inlined_call_operand.hbm [shape: f32[4,1], index: 9, kind: input, shape index: {}]
  %s10 = inlined_call_operand.hbm [shape: f32[6,12], index: 10, kind: input, shape index: {}]
  %s11 = inlined_call_operand.hbm [shape: f32[2,1], index: 11, kind: input, shape index: {}]
  %s12 = inlined_call_operand.hbm [shape: f32[96,192], index: 12, kind: input, shape index: {}]
  %s13 = inlined_call_operand.hbm [shape: f32[32,16], index: 13, kind: input, shape index: {}]
  %s14 = inlined_call_operand.vmem [shape: f32[48,96], index: 14, kind: input, shape index: {}]
  %s15 = inlined_call_operand.hbm [shape: f32[16,8], index: 15, kind: input, shape index: {}]
  %s16 = inlined_call_operand.hbm [shape: f32[24,48], index: 16, kind: input, shape index: {}]
  %s17 = inlined_call_operand.vmem [shape: f32[8,4], index: 17, kind: input, shape index: {}]
  %s18 = inlined_call_operand.vmem [shape: f32[12,24], index: 18, kind: input, shape index: {}]
  %s19 = inlined_call_operand.vmem [shape: f32[4,2], index: 19, kind: input, shape index: {}]
  %s20 = inlined_call_operand.vmem [shape: f32[5,2], index: 20, kind: output, shape index: {}]
  %s21 = sld [smem:[#allocation0]]
  $region154: #{msssim_pallas.1} parent=0
    _
  %s23 = ssub.s32 1, %s21
  %s24 = scalar_select 0, %s23, %s21
  $region1: #{msssim_pallas.1} parent=0
    #allocation2 [shape = 'u8[98304]{0}', space=vmem, size = 0x18000, scoped, tag = 'input window, operand 0, single buffered']
    #allocation3 [shape = 's32[1]{0}', space=sflag, size = 0x4, scoped, tag = 'scoped memory for msssim_pallas.1']
    #allocation4 [shape = 's32[1]{0}', space=sflag, size = 0x4, scoped, tag = 'scoped memory for msssim_pallas.1']
    #allocation5 [shape = 'u8[98304]{0}', space=vmem, size = 0x18000, scoped, tag = 'input window, operand 1, single buffered']
    #allocation6 [shape = 's32[1]{0}', space=sflag, size = 0x4, scoped, tag = 'scoped memory for msssim_pallas.1']
    #allocation7 [shape = 'u8[139264]{0}', space=vmem, size = 0x22000, scoped, tag = 'input window, operand 2, single buffered']
    #allocation8 [shape = 'u8[16384]{0}', space=vmem, size = 0x4000, scoped, tag = 'input window, operand 3, single buffered']
    #allocation9 [shape = 's32[1]{0}', space=sflag, size = 0x4, scoped, tag = 'scoped memory for msssim_pallas.1']
    #allocation10 [shape = 'u8[20480]{0}', space=vmem, size = 0x5000, scoped, tag = 'input window, operand 4, single buffered']
    #allocation11 [shape = 'u8[8192]{0}', space=vmem, size = 0x2000, scoped, tag = 'input window, operand 5, single buffered']
    #allocation12 [shape = 's32[1]{0}', space=sflag, size = 0x4, scoped, tag = 'scoped memory for msssim_pallas.1']
    #allocation13 [shape = 'u8[4096]{0}', space=vmem, size = 0x1000, scoped, tag = 'input window, operand 6, single buffered']
    #allocation14 [shape = 'u8[4096]{0}', space=vmem, size = 0x1000, scoped, tag = 'input window, operand 7, single buffered']
    #allocation15 [shape = 's32[1]{0}', space=sflag, size = 0x4, scoped, tag = 'scoped memory for msssim_pallas.1']
    #allocation16 [shape = 'u8[4096]{0}', space=vmem, size = 0x1000, scoped, tag = 'input window, operand 8, single buffered']
    #allocation17 [shape = 'u8[2048]{0}', space=vmem, size = 0x800, scoped, tag = 'input window, operand 9, single buffered']
    #allocation18 [shape = 's32[1]{0}', space=sflag, size = 0x4, scoped, tag = 'scoped memory for msssim_pallas.1']
    #allocation19 [shape = 'u8[4096]{0}', space=vmem, size = 0x1000, scoped, tag = 'input window, operand 10, single buffered']
    #allocation20 [shape = 'u8[1024]{0}', space=vmem, size = 0x400, scoped, tag = 'input window, operand 11, single buffered']
    #allocation21 [shape = 's32[1]{0}', space=sflag, size = 0x4, scoped, tag = 'scoped memory for msssim_pallas.1']
    #allocation22 [shape = 'u8[98304]{0}', space=vmem, size = 0x18000, scoped, tag = 'input window, operand 12, single buffered']
    #allocation23 [shape = 'u8[16384]{0}', space=vmem, size = 0x4000, scoped, tag = 'input window, operand 13, single buffered']
    #allocation24 [shape = 's32[1]{0}', space=sflag, size = 0x4, scoped, tag = 'scoped memory for msssim_pallas.1']
    #allocation25 [shape = 'u8[8192]{0}', space=vmem, size = 0x2000, scoped, tag = 'input window, operand 15, single buffered']
    #allocation26 [shape = 'u8[12288]{0}', space=vmem, size = 0x3000, scoped, tag = 'input window, operand 16, single buffered']
    #allocation27 [shape = 's32[1]{0}', space=sflag, size = 0x4, scoped, tag = 'scoped memory for msssim_pallas.1']
    #allocation28 [shape = 'u8[4096]{0}', space=smem, size = 0x1000, scoped, tag = 'output window, operand 0, single buffered']
    %25 = vsyncpa [#allocation3], 0
    %26 = vsyncpa [#allocation6], 0
    %27 = vsyncpa [#allocation9], 0
    %28 = vsyncpa [#allocation12], 0
    %29 = vsyncpa [#allocation15], 0
    %30 = vsyncpa [#allocation18], 0
    %31 = vsyncpa [#allocation21], 0
    %32 = vsyncpa [#allocation24], 0
    %33 = vsyncpa [#allocation27], 0
    %34 = vsyncpa [#allocation4], 0
    // Predicated region
    $region2: #{msssim_pallas.1} parent=1 // pred_check
      _
    $region3: #{msssim_pallas.1} parent=1 // pred_check_branch
      %36 = sbr.rel (0) target = $region5
    $region4: #{msssim_pallas.1} parent=1 // pred_region
      %s38 = ssub.s32 3072, 3072
      %39 = vsyncadd [#allocation3], %s38
      %s40 = sshll.u32 [#allocation2], 4
      %s41 = int_to_ptr.vmem [resolvable:$true] %s40
      %46 = dma.hbm_to_vmem [thread:$0]  %s0, 3072, %s41, [#allocation3], 128, 128, 8
    $region5: #{msssim_pallas.1} parent=1 // pred_fallthru
      _
    // Predicated region
    $region6: #{msssim_pallas.1} parent=1 // pred_check
      _
    $region7: #{msssim_pallas.1} parent=1 // pred_check_branch
      %48 = sbr.rel (0) target = $region9
    $region8: #{msssim_pallas.1} parent=1 // pred_region
      %s50 = ssub.s32 3072, 3072
      %51 = vsyncadd [#allocation6], %s50
      %s52 = sshll.u32 [#allocation5], 4
      %s53 = int_to_ptr.vmem [resolvable:$true] %s52
      %58 = dma.hbm_to_vmem [thread:$0]  %s1, 3072, %s53, [#allocation6], 128, 128, 8
    $region9: #{msssim_pallas.1} parent=1 // pred_fallthru
      _
    // Predicated region
    $region10: #{msssim_pallas.1} parent=1 // pred_check
      _
    $region11: #{msssim_pallas.1} parent=1 // pred_check_branch
      %60 = sbr.rel (0) target = $region13
    $region12: #{msssim_pallas.1} parent=1 // pred_region
      %s62 = ssub.s32 4352, 4352
      %63 = vsyncadd [#allocation6], %s62
      %s64 = sshll.u32 [#allocation7], 4
      %s65 = int_to_ptr.vmem [resolvable:$true] %s64
      %70 = dma.hbm_to_vmem [thread:$0]  %s2, 4352, %s65, [#allocation6], 256, 256, 16
    $region13: #{msssim_pallas.1} parent=1 // pred_fallthru
      _
    // Predicated region
    $region14: #{msssim_pallas.1} parent=1 // pred_check
      _
    $region15: #{msssim_pallas.1} parent=1 // pred_check_branch
      %72 = sbr.rel (0) target = $region17
    $region16: #{msssim_pallas.1} parent=1 // pred_region
      %s74 = ssub.s32 512, 512
      %75 = vsyncadd [#allocation9], %s74
      %s76 = sshll.u32 [#allocation8], 4
      %s77 = int_to_ptr.vmem [resolvable:$true] %s76
      %82 = dma.hbm_to_vmem [thread:$0]  %s3, 512, %s77, [#allocation9], 128, 128, 8
    $region17: #{msssim_pallas.1} parent=1 // pred_fallthru
      _
    // Predicated region
    $region18: #{msssim_pallas.1} parent=1 // pred_check
      _
    $region19: #{msssim_pallas.1} parent=1 // pred_check_branch
      %84 = sbr.rel (0) target = $region21
    $region20: #{msssim_pallas.1} parent=1 // pred_region
      %s86 = ssub.s32 640, 640
      %87 = vsyncadd [#allocation9], %s86
      %s88 = sshll.u32 [#allocation10], 4
      %s89 = int_to_ptr.vmem [resolvable:$true] %s88
      %94 = dma.hbm_to_vmem [thread:$0]  %s4, 640, %s89, [#allocation9], 128, 128, 8
    $region21: #{msssim_pallas.1} parent=1 // pred_fallthru
      _
    // Predicated region
    $region22: #{msssim_pallas.1} parent=1 // pred_check
      _
    $region23: #{msssim_pallas.1} parent=1 // pred_check_branch
      %96 = sbr.rel (0) target = $region25
    $region24: #{msssim_pallas.1} parent=1 // pred_region
      %s98 = ssub.s32 256, 256
      %99 = vsyncadd [#allocation12], %s98
      %s100 = sshll.u32 [#allocation11], 4
      %s101 = int_to_ptr.vmem [resolvable:$true] %s100
      %106 = dma.hbm_to_vmem [thread:$0]  %s5, 256, %s101, [#allocation12], 128, 128, 8
    $region25: #{msssim_pallas.1} parent=1 // pred_fallthru
      _
    // Predicated region
    $region26: #{msssim_pallas.1} parent=1 // pred_check
      _
    $region27: #{msssim_pallas.1} parent=1 // pred_check_branch
      %108 = sbr.rel (0) target = $region29
    $region28: #{msssim_pallas.1} parent=1 // pred_region
      %s110 = ssub.s32 128, 128
      %111 = vsyncadd [#allocation12], %s110
      %s113 = sshll.u32 [#allocation13], 4
      %s114 = int_to_ptr.vmem [resolvable:$true] %s113
      %116 = dma.hbm_to_vmem [thread:$0]  %s6, 128, %s114, [#allocation12]
    $region29: #{msssim_pallas.1} parent=1 // pred_fallthru
      _
    // Predicated region
    $region30: #{msssim_pallas.1} parent=1 // pred_check
      _
    $region31: #{msssim_pallas.1} parent=1 // pred_check_branch
      %118 = sbr.rel (0) target = $region33
    $region32: #{msssim_pallas.1} parent=1 // pred_region
      %s120 = ssub.s32 128, 128
      %121 = vsyncadd [#allocation15], %s120
      %s123 = sshll.u32 [#allocation14], 4
      %s124 = int_to_ptr.vmem [resolvable:$true] %s123
      %126 = dma.hbm_to_vmem [thread:$0]  %s7, 128, %s124, [#allocation15]
    $region33: #{msssim_pallas.1} parent=1 // pred_fallthru
      _
    // Predicated region
    $region34: #{msssim_pallas.1} parent=1 // pred_check
      _
    $region35: #{msssim_pallas.1} parent=1 // pred_check_branch
      %128 = sbr.rel (0) target = $region37
    $region36: #{msssim_pallas.1} parent=1 // pred_region
      %s130 = ssub.s32 128, 128
      %131 = vsyncadd [#allocation15], %s130
      %s133 = sshll.u32 [#allocation16], 4
      %s134 = int_to_ptr.vmem [resolvable:$true] %s133
      %136 = dma.hbm_to_vmem [thread:$0]  %s8, 128, %s134, [#allocation15]
    $region37: #{msssim_pallas.1} parent=1 // pred_fallthru
      _
    // Predicated region
    $region38: #{msssim_pallas.1} parent=1 // pred_check
      _
    $region39: #{msssim_pallas.1} parent=1 // pred_check_branch
      %138 = sbr.rel (0) target = $region41
    $region40: #{msssim_pallas.1} parent=1 // pred_region
      %s140 = ssub.s32 64, 64
      %141 = vsyncadd [#allocation18], %s140
      %s143 = sshll.u32 [#allocation17], 4
      %s144 = int_to_ptr.vmem [resolvable:$true] %s143
      %146 = dma.hbm_to_vmem [thread:$0]  %s9, 64, %s144, [#allocation18]
    $region41: #{msssim_pallas.1} parent=1 // pred_fallthru
      _
    // Predicated region
    $region42: #{msssim_pallas.1} parent=1 // pred_check
      _
    $region43: #{msssim_pallas.1} parent=1 // pred_check_branch
      %148 = sbr.rel (0) target = $region45
    $region44: #{msssim_pallas.1} parent=1 // pred_region
      %s150 = ssub.s32 128, 128
      %151 = vsyncadd [#allocation18], %s150
      %s153 = sshll.u32 [#allocation19], 4
      %s154 = int_to_ptr.vmem [resolvable:$true] %s153
      %156 = dma.hbm_to_vmem [thread:$0]  %s10, 128, %s154, [#allocation18]
    $region45: #{msssim_pallas.1} parent=1 // pred_fallthru
      _
    // Predicated region
    $region46: #{msssim_pallas.1} parent=1 // pred_check
      _
    $region47: #{msssim_pallas.1} parent=1 // pred_check_branch
      %158 = sbr.rel (0) target = $region49
    $region48: #{msssim_pallas.1} parent=1 // pred_region
      %s160 = ssub.s32 32, 32
      %161 = vsyncadd [#allocation21], %s160
      %s163 = sshll.u32 [#allocation20], 4
      %s164 = int_to_ptr.vmem [resolvable:$true] %s163
      %166 = dma.hbm_to_vmem [thread:$0]  %s11, 32, %s164, [#allocation21]
    $region49: #{msssim_pallas.1} parent=1 // pred_fallthru
      _
    // Predicated region
    $region50: #{msssim_pallas.1} parent=1 // pred_check
      _
    $region51: #{msssim_pallas.1} parent=1 // pred_check_branch
      %168 = sbr.rel (0) target = $region53
    $region52: #{msssim_pallas.1} parent=1 // pred_region
      %s170 = ssub.s32 3072, 3072
      %171 = vsyncadd [#allocation21], %s170
      %s172 = sshll.u32 [#allocation22], 4
      %s173 = int_to_ptr.vmem [resolvable:$true] %s172
      %178 = dma.hbm_to_vmem [thread:$0]  %s12, 3072, %s173, [#allocation21], 256, 256, 16
    $region53: #{msssim_pallas.1} parent=1 // pred_fallthru
      _
    // Predicated region
    $region54: #{msssim_pallas.1} parent=1 // pred_check
      _
    $region55: #{msssim_pallas.1} parent=1 // pred_check_branch
      %180 = sbr.rel (0) target = $region57
    $region56: #{msssim_pallas.1} parent=1 // pred_region
      %s182 = ssub.s32 512, 512
      %183 = vsyncadd [#allocation24], %s182
      %s184 = sshll.u32 [#allocation23], 4
      %s185 = int_to_ptr.vmem [resolvable:$true] %s184
      %190 = dma.hbm_to_vmem [thread:$0]  %s13, 512, %s185, [#allocation24], 128, 128, 8
    $region57: #{msssim_pallas.1} parent=1 // pred_fallthru
      _
    // Predicated region
    $region58: #{msssim_pallas.1} parent=1 // pred_check
      _
    $region59: #{msssim_pallas.1} parent=1 // pred_check_branch
      %192 = sbr.rel (0) target = $region61
    $region60: #{msssim_pallas.1} parent=1 // pred_region
      _
    $region61: #{msssim_pallas.1} parent=1 // pred_fallthru
      _
    // Predicated region
    $region62: #{msssim_pallas.1} parent=1 // pred_check
      _
    $region63: #{msssim_pallas.1} parent=1 // pred_check_branch
      %194 = sbr.rel (0) target = $region65
    $region64: #{msssim_pallas.1} parent=1 // pred_region
      %s196 = ssub.s32 256, 256
      %197 = vsyncadd [#allocation24], %s196
      %s198 = sshll.u32 [#allocation25], 4
      %s199 = int_to_ptr.vmem [resolvable:$true] %s198
      %204 = dma.hbm_to_vmem [thread:$0]  %s15, 256, %s199, [#allocation24], 128, 128, 8
    $region65: #{msssim_pallas.1} parent=1 // pred_fallthru
      _
    // Predicated region
    $region66: #{msssim_pallas.1} parent=1 // pred_check
      _
    $region67: #{msssim_pallas.1} parent=1 // pred_check_branch
      %206 = sbr.rel (0) target = $region69
    $region68: #{msssim_pallas.1} parent=1 // pred_region
      %s208 = ssub.s32 384, 384
      %209 = vsyncadd [#allocation27], %s208
      %s210 = sshll.u32 [#allocation26], 4
      %s211 = int_to_ptr.vmem [resolvable:$true] %s210
      %216 = dma.hbm_to_vmem [thread:$0]  %s16, 384, %s211, [#allocation27], 128, 128, 8
    $region69: #{msssim_pallas.1} parent=1 // pred_fallthru
      _
    // Predicated region
    $region70: #{msssim_pallas.1} parent=1 // pred_check
      _
    $region71: #{msssim_pallas.1} parent=1 // pred_check_branch
      %218 = sbr.rel (0) target = $region73
    $region72: #{msssim_pallas.1} parent=1 // pred_region
      _
    $region73: #{msssim_pallas.1} parent=1 // pred_fallthru
      _
    // Predicated region
    $region74: #{msssim_pallas.1} parent=1 // pred_check
      _
    $region75: #{msssim_pallas.1} parent=1 // pred_check_branch
      %220 = sbr.rel (0) target = $region77
    $region76: #{msssim_pallas.1} parent=1 // pred_region
      _
    $region77: #{msssim_pallas.1} parent=1 // pred_fallthru
      _
    // Predicated region
    $region78: #{msssim_pallas.1} parent=1 // pred_check
      _
    $region79: #{msssim_pallas.1} parent=1 // pred_check_branch
      %222 = sbr.rel (0) target = $region81
    $region80: #{msssim_pallas.1} parent=1 // pred_region
      _
    $region81: #{msssim_pallas.1} parent=1 // pred_fallthru
      _
    // Predicated region
    $region82: #{msssim_pallas.1} parent=1 // pred_check
      _
    $region83: #{msssim_pallas.1} parent=1 // pred_check_branch
      %224 = sbr.rel (0) target = $region85
    $region84: #{msssim_pallas.1} parent=1 // pred_region
      %225 = dma.done [#allocation3], 3072
    $region85: #{msssim_pallas.1} parent=1 // pred_fallthru
      _
    // Predicated region
    $region86: #{msssim_pallas.1} parent=1 // pred_check
      _
    $region87: #{msssim_pallas.1} parent=1 // pred_check_branch
      %227 = sbr.rel (0) target = $region89
    $region88: #{msssim_pallas.1} parent=1 // pred_region
      %228 = dma.done [#allocation6], 3072
    $region89: #{msssim_pallas.1} parent=1 // pred_fallthru
      _
    // Predicated region
    $region90: #{msssim_pallas.1} parent=1 // pred_check
      _
    $region91: #{msssim_pallas.1} parent=1 // pred_check_branch
      %230 = sbr.rel (0) target = $region93
    $region92: #{msssim_pallas.1} parent=1 // pred_region
      %231 = dma.done [#allocation6], 4352
    $region93: #{msssim_pallas.1} parent=1 // pred_fallthru
      _
    // Predicated region
    $region94: #{msssim_pallas.1} parent=1 // pred_check
      _
    $region95: #{msssim_pallas.1} parent=1 // pred_check_branch
      %233 = sbr.rel (0) target = $region97
    $region96: #{msssim_pallas.1} parent=1 // pred_region
      %234 = dma.done [#allocation9], 512
    $region97: #{msssim_pallas.1} parent=1 // pred_fallthru
      _
    // Predicated region
    $region98: #{msssim_pallas.1} parent=1 // pred_check
      _
    $region99: #{msssim_pallas.1} parent=1 // pred_check_branch
      %236 = sbr.rel (0) target = $region101
    $region100: #{msssim_pallas.1} parent=1 // pred_region
      %237 = dma.done [#allocation9], 640
    $region101: #{msssim_pallas.1} parent=1 // pred_fallthru
      _
    // Predicated region
    $region102: #{msssim_pallas.1} parent=1 // pred_check
      _
    $region103: #{msssim_pallas.1} parent=1 // pred_check_branch
      %239 = sbr.rel (0) target = $region105
    $region104: #{msssim_pallas.1} parent=1 // pred_region
      %240 = dma.done [#allocation12], 256
    $region105: #{msssim_pallas.1} parent=1 // pred_fallthru
      _
    // Predicated region
    $region106: #{msssim_pallas.1} parent=1 // pred_check
      _
    $region107: #{msssim_pallas.1} parent=1 // pred_check_branch
      %242 = sbr.rel (0) target = $region109
    $region108: #{msssim_pallas.1} parent=1 // pred_region
      %243 = dma.done [#allocation12], 128
    $region109: #{msssim_pallas.1} parent=1 // pred_fallthru
      _
    // Predicated region
    $region110: #{msssim_pallas.1} parent=1 // pred_check
      _
    $region111: #{msssim_pallas.1} parent=1 // pred_check_branch
      %245 = sbr.rel (0) target = $region113
    $region112: #{msssim_pallas.1} parent=1 // pred_region
      %246 = dma.done [#allocation15], 128
    $region113: #{msssim_pallas.1} parent=1 // pred_fallthru
      _
    // Predicated region
    $region114: #{msssim_pallas.1} parent=1 // pred_check
      _
    $region115: #{msssim_pallas.1} parent=1 // pred_check_branch
      %248 = sbr.rel (0) target = $region117
    $region116: #{msssim_pallas.1} parent=1 // pred_region
      %249 = dma.done [#allocation15], 128
    $region117: #{msssim_pallas.1} parent=1 // pred_fallthru
      _
    // Predicated region
    $region118: #{msssim_pallas.1} parent=1 // pred_check
      _
    $region119: #{msssim_pallas.1} parent=1 // pred_check_branch
      %251 = sbr.rel (0) target = $region121
    $region120: #{msssim_pallas.1} parent=1 // pred_region
      %252 = dma.done [#allocation18], 64
    $region121: #{msssim_pallas.1} parent=1 // pred_fallthru
      _
    // Predicated region
    $region122: #{msssim_pallas.1} parent=1 // pred_check
      _
    $region123: #{msssim_pallas.1} parent=1 // pred_check_branch
      %254 = sbr.rel (0) target = $region125
    $region124: #{msssim_pallas.1} parent=1 // pred_region
      %255 = dma.done [#allocation18], 128
    $region125: #{msssim_pallas.1} parent=1 // pred_fallthru
      _
    // Predicated region
    $region126: #{msssim_pallas.1} parent=1 // pred_check
      _
    $region127: #{msssim_pallas.1} parent=1 // pred_check_branch
      %257 = sbr.rel (0) target = $region129
    $region128: #{msssim_pallas.1} parent=1 // pred_region
      %258 = dma.done [#allocation21], 32
    $region129: #{msssim_pallas.1} parent=1 // pred_fallthru
      _
    // Predicated region
    $region130: #{msssim_pallas.1} parent=1 // pred_check
      _
    $region131: #{msssim_pallas.1} parent=1 // pred_check_branch
      %260 = sbr.rel (0) target = $region133
    $region132: #{msssim_pallas.1} parent=1 // pred_region
      %261 = dma.done [#allocation21], 3072
    $region133: #{msssim_pallas.1} parent=1 // pred_fallthru
      _
    // Predicated region
    $region134: #{msssim_pallas.1} parent=1 // pred_check
      _
    $region135: #{msssim_pallas.1} parent=1 // pred_check_branch
      %263 = sbr.rel (0) target = $region137
    $region136: #{msssim_pallas.1} parent=1 // pred_region
      %264 = dma.done [#allocation24], 512
    $region137: #{msssim_pallas.1} parent=1 // pred_fallthru
      _
    // Predicated region
    $region138: #{msssim_pallas.1} parent=1 // pred_check
      _
    $region139: #{msssim_pallas.1} parent=1 // pred_check_branch
      %266 = sbr.rel (0) target = $region141
    $region140: #{msssim_pallas.1} parent=1 // pred_region
      %267 = dma.done [#allocation24], 256
    $region141: #{msssim_pallas.1} parent=1 // pred_fallthru
      _
    // Predicated region
    $region142: #{msssim_pallas.1} parent=1 // pred_check
      _
    $region143: #{msssim_pallas.1} parent=1 // pred_check_branch
      %269 = sbr.rel (0) target = $region145
    $region144: #{msssim_pallas.1} parent=1 // pred_region
      %270 = dma.done [#allocation27], 384
    $region145: #{msssim_pallas.1} parent=1 // pred_fallthru
      _
    %v271 = vld [vmem:[#allocation2] sm:$0xff]
    %v272 = vld [vmem:[#allocation2 + $0x8] sm:$0xff]
    %v273 = vld [vmem:[#allocation2 + $0x10] sm:$0xff]
    %v274 = vld [vmem:[#allocation2 + $0x18] sm:$0xff]
    %v275 = vld [vmem:[#allocation2 + $0x20] sm:$0xff]
    %v276 = vld [vmem:[#allocation2 + $0x28] sm:$0xff]
    %v277 = vld [vmem:[#allocation2 + $0x30] sm:$0xff]
    %v278 = vld [vmem:[#allocation2 + $0x38] sm:$0xff]
    %v279 = vld [vmem:[#allocation2 + $0x40] sm:$0xff]
    %v280 = vld [vmem:[#allocation2 + $0x48] sm:$0xff]
    %v281 = vld [vmem:[#allocation2 + $0x50] sm:$0xff]
    %v282 = vld [vmem:[#allocation2 + $0x58] sm:$0xff]
    %v283 = vld [vmem:[#allocation2 + $0x60] sm:$0xff]
    %v284 = vld [vmem:[#allocation2 + $0x68] sm:$0xff]
    %v285 = vld [vmem:[#allocation2 + $0x70] sm:$0xff]
    %v286 = vld [vmem:[#allocation2 + $0x78] sm:$0xff]
    %v287 = vld [vmem:[#allocation2 + $0x80] sm:$0xff]
    %v288 = vld [vmem:[#allocation2 + $0x88] sm:$0xff]
    %v289 = vld [vmem:[#allocation2 + $0x90] sm:$0xff]
    %v290 = vld [vmem:[#allocation2 + $0x98] sm:$0xff]
    %v291 = vld [vmem:[#allocation2 + $0xa0] sm:$0xff]
    %v292 = vld [vmem:[#allocation2 + $0xa8] sm:$0xff]
    %v293 = vld [vmem:[#allocation2 + $0xb0] sm:$0xff]
    %v294 = vld [vmem:[#allocation2 + $0xb8] sm:$0xff]
    %v295 = vld [vmem:[#allocation5] sm:$0xff]
    %v296 = vld [vmem:[#allocation5 + $0x8] sm:$0xff]
    %v297 = vld [vmem:[#allocation5 + $0x10] sm:$0xff]
    %v298 = vld [vmem:[#allocation5 + $0x18] sm:$0xff]
    %v299 = vld [vmem:[#allocation5 + $0x20] sm:$0xff]
    %v300 = vld [vmem:[#allocation5 + $0x28] sm:$0xff]
    %v301 = vld [vmem:[#allocation5 + $0x30] sm:$0xff]
    %v302 = vld [vmem:[#allocation5 + $0x38] sm:$0xff]
    %v303 = vld [vmem:[#allocation5 + $0x40] sm:$0xff]
    %v304 = vld [vmem:[#allocation5 + $0x48] sm:$0xff]
    %v305 = vld [vmem:[#allocation5 + $0x50] sm:$0xff]
    %v306 = vld [vmem:[#allocation5 + $0x58] sm:$0xff]
    %v307 = vld [vmem:[#allocation5 + $0x60] sm:$0xff]
    %v308 = vld [vmem:[#allocation5 + $0x68] sm:$0xff]
    %v309 = vld [vmem:[#allocation5 + $0x70] sm:$0xff]
    %v310 = vld [vmem:[#allocation5 + $0x78] sm:$0xff]
    %v311 = vld [vmem:[#allocation5 + $0x80] sm:$0xff]
    %v312 = vld [vmem:[#allocation5 + $0x88] sm:$0xff]
    %v313 = vld [vmem:[#allocation5 + $0x90] sm:$0xff]
    %v314 = vld [vmem:[#allocation5 + $0x98] sm:$0xff]
    %v315 = vld [vmem:[#allocation5 + $0xa0] sm:$0xff]
    %v316 = vld [vmem:[#allocation5 + $0xa8] sm:$0xff]
    %v317 = vld [vmem:[#allocation5 + $0xb0] sm:$0xff]
    %v318 = vld [vmem:[#allocation5 + $0xb8] sm:$0xff]
    %v319 = vld [vmem:[#allocation7] sm:$0xff]
    %v320 = vld [vmem:[#allocation7 + $0x8] sm:$0xff]
    %v321 = vld [vmem:[#allocation7 + $0x10] sm:$0xff]
    %v322 = vld [vmem:[#allocation7 + $0x18] sm:$0xff]
    %v323 = vld [vmem:[#allocation7 + $0x20] sm:$0xff]
    %v324 = vld [vmem:[#allocation7 + $0x28] sm:$0xff]
    %v325 = vld [vmem:[#allocation7 + $0x30] sm:$0xff]
    %v326 = vld [vmem:[#allocation7 + $0x38] sm:$0xff]
    %v327 = vld [vmem:[#allocation7 + $0x40] sm:$0xff]
    %v328 = vld [vmem:[#allocation7 + $0x48] sm:$0xff]
    %v329 = vld [vmem:[#allocation7 + $0x50] sm:$0xff]
    %v330 = vld [vmem:[#allocation7 + $0x58] sm:$0xff]
    %v331 = vld [vmem:[#allocation7 + $0x60] sm:$0xff]
    %v332 = vld [vmem:[#allocation7 + $0x68] sm:$0xff]
    %v333 = vld [vmem:[#allocation7 + $0x70] sm:$0xff]
    %v334 = vld [vmem:[#allocation7 + $0x78] sm:$0xff]
    %v335 = vld [vmem:[#allocation7 + $0x80] sm:$0xff]
    %v336 = vld [vmem:[#allocation7 + $0x88] sm:$0xff]
    %v337 = vld [vmem:[#allocation7 + $0x90] sm:$0xff]
    %v338 = vld [vmem:[#allocation7 + $0x98] sm:$0xff]
    %v339 = vld [vmem:[#allocation7 + $0xa0] sm:$0xff]
    %v340 = vld [vmem:[#allocation7 + $0xa8] sm:$0xff]
    %v341 = vld [vmem:[#allocation7 + $0xb0] sm:$0xff]
    %v342 = vld [vmem:[#allocation7 + $0xb8] sm:$0xff]
    %v343 = vld [vmem:[#allocation7 + $0xc0] sm:$0xff]
    %v344 = vld [vmem:[#allocation7 + $0xc8] sm:$0xff]
    %v345 = vld [vmem:[#allocation7 + $0xd0] sm:$0xff]
    %v346 = vld [vmem:[#allocation7 + $0xd8] sm:$0xff]
    %v347 = vld [vmem:[#allocation7 + $0xe0] sm:$0xff]
    %v348 = vld [vmem:[#allocation7 + $0xe8] sm:$0xff]
    %v349 = vld [vmem:[#allocation7 + $0xf0] sm:$0xff]
    %v350 = vld [vmem:[#allocation7 + $0xf8] sm:$0xff]
    %v351 = vld [vmem:[#allocation7 + $0x100] sm:$0xf]
    %v352 = vld [vmem:[#allocation7 + $0x108] sm:$0xf]
    %v353 = vld [vmem:[#allocation8] sm:$0xff]
    %v354 = vld [vmem:[#allocation8 + $0x8] sm:$0xff]
    %v355 = vld [vmem:[#allocation8 + $0x10] sm:$0xff]
    %v356 = vld [vmem:[#allocation8 + $0x18] sm:$0xff]
    %vm357 = vcmask 261120
    %v358 = vsel %vm357, %v271, -inf
    %v359 = vsel %vm357, %v272, -inf
    %v360 = vsel %vm357, %v273, -inf
    %v361 = vsel %vm357, %v274, -inf
    %v362 = vsel %vm357, %v275, -inf
    %v363 = vmax.f32 %v358, %v362
    %v364 = vsel %vm357, %v276, -inf
    %v365 = vmax.f32 %v359, %v364
    %v366 = vsel %vm357, %v277, -inf
    %v367 = vmax.f32 %v360, %v366
    %v368 = vsel %vm357, %v278, -inf
    %v369 = vmax.f32 %v361, %v368
    %v370 = vsel %vm357, %v279, -inf
    %v371 = vmax.f32 %v363, %v370
    %v372 = vsel %vm357, %v280, -inf
    %v373 = vmax.f32 %v365, %v372
    %v374 = vsel %vm357, %v281, -inf
    %v375 = vmax.f32 %v367, %v374
    %v376 = vsel %vm357, %v282, -inf
    %v377 = vmax.f32 %v369, %v376
    %v378 = vsel %vm357, %v283, -inf
    %v379 = vmax.f32 %v371, %v378
    %v380 = vsel %vm357, %v284, -inf
    %v381 = vmax.f32 %v373, %v380
    %v382 = vsel %vm357, %v285, -inf
    %v383 = vmax.f32 %v375, %v382
    %v384 = vsel %vm357, %v286, -inf
    %v385 = vmax.f32 %v377, %v384
    %v386 = vsel %vm357, %v287, -inf
    %v387 = vmax.f32 %v379, %v386
    %v388 = vsel %vm357, %v288, -inf
    %v389 = vmax.f32 %v381, %v388
    %v390 = vsel %vm357, %v289, -inf
    %v391 = vmax.f32 %v383, %v390
    %v392 = vsel %vm357, %v290, -inf
    %v393 = vmax.f32 %v385, %v392
    %v394 = vsel %vm357, %v291, -inf
    %v395 = vmax.f32 %v387, %v394
    %v396 = vsel %vm357, %v292, -inf
    %v397 = vmax.f32 %v389, %v396
    %v398 = vsel %vm357, %v293, -inf
    %v399 = vmax.f32 %v391, %v398
    %v400 = vsel %vm357, %v294, -inf
    %v401 = vmax.f32 %v393, %v400
    %v402 = vmax.f32 %v395, %v397
    %v403 = vmax.f32 %v399, %v401
    %v404 = vmax.f32 %v402, %v403
    %405 = vmax.xlane.f32.xlu0 %v404
    %v406 = vpop.xlane.xlu0 %405
    %v407 = vrot.slane %v406, 4
    %v408 = vmax.f32 %v406, %v407
    %v409 = vrot.slane %v408, 2
    %v410 = vmax.f32 %v408, %v409
    %v411 = vrot.slane %v410, 1
    %v412 = vmax.f32 %v410, %v411
    %s413 = vtos %v412
    %v414 = vsel %vm357, %v271, inf
    %v415 = vsel %vm357, %v272, inf
    %v416 = vsel %vm357, %v273, inf
    %v417 = vsel %vm357, %v274, inf
    %v418 = vsel %vm357, %v275, inf
    %v419 = vmin.f32 %v414, %v418
    %v420 = vsel %vm357, %v276, inf
    %v421 = vmin.f32 %v415, %v420
    %v422 = vsel %vm357, %v277, inf
    %v423 = vmin.f32 %v416, %v422
    %v424 = vsel %vm357, %v278, inf
    %v425 = vmin.f32 %v417, %v424
    %v426 = vsel %vm357, %v279, inf
    %v427 = vmin.f32 %v419, %v426
    %v428 = vsel %vm357, %v280, inf
    %v429 = vmin.f32 %v421, %v428
    %v430 = vsel %vm357, %v281, inf
    %v431 = vmin.f32 %v423, %v430
    %v432 = vsel %vm357, %v282, inf
    %v433 = vmin.f32 %v425, %v432
    %v434 = vsel %vm357, %v283, inf
    %v435 = vmin.f32 %v427, %v434
    %v436 = vsel %vm357, %v284, inf
    %v437 = vmin.f32 %v429, %v436
    %v438 = vsel %vm357, %v285, inf
    %v439 = vmin.f32 %v431, %v438
    %v440 = vsel %vm357, %v286, inf
    %v441 = vmin.f32 %v433, %v440
    %v442 = vsel %vm357, %v287, inf
    %v443 = vmin.f32 %v435, %v442
    %v444 = vsel %vm357, %v288, inf
    %v445 = vmin.f32 %v437, %v444
    %v446 = vsel %vm357, %v289, inf
    %v447 = vmin.f32 %v439, %v446
    %v448 = vsel %vm357, %v290, inf
    %v449 = vmin.f32 %v441, %v448
    %v450 = vsel %vm357, %v291, inf
    %v451 = vmin.f32 %v443, %v450
    %v452 = vsel %vm357, %v292, inf
    %v453 = vmin.f32 %v445, %v452
    %v454 = vsel %vm357, %v293, inf
    %v455 = vmin.f32 %v447, %v454
    %v456 = vsel %vm357, %v294, inf
    %v457 = vmin.f32 %v449, %v456
    %v458 = vmin.f32 %v451, %v453
    %v459 = vmin.f32 %v455, %v457
    %v460 = vmin.f32 %v458, %v459
    %461 = vmin.xlane.f32.xlu0 %v460
    %v462 = vpop.xlane.xlu0 %461
    %v463 = vrot.slane %v462, 4
    %v464 = vmin.f32 %v462, %v463
    %v465 = vrot.slane %v464, 2
    %v466 = vmin.f32 %v464, %v465
    %v467 = vrot.slane %v466, 1
    %v468 = vmin.f32 %v466, %v467
    %s469 = vtos %v468
    %p470 = scmp.gt.f32.partialorder %s413, 128.0
    %s471 = scalar_select %p470, 255.0, 1.0
    %p472 = scmp.lt.f32.partialorder %s469, -0.5
    %s473 = scalar_select %p472, -1.0, 0.0
    %s474 = ssub.f32 %s471, %s473
    %s475 = smul.f32 %s474, 0.01
    %s476 = smul.f32 %s475, %s475
    %s477 = smul.f32 %s474, 0.03
    %s478 = smul.f32 %s477, %s477
    %vm479 = vcmask 523264
    %v481 = vsel %vm479, %v320, 0
    %v484 = vsel %vm479, %v322, 0
    %v487 = vsel %vm479, %v324, 0
    %v490 = vsel %vm479, %v326, 0
    %v493 = vsel %vm479, %v328, 0
    %v496 = vsel %vm479, %v330, 0
    %v499 = vsel %vm479, %v332, 0
    %v502 = vsel %vm479, %v334, 0
    %v505 = vsel %vm479, %v336, 0
    %v508 = vsel %vm479, %v338, 0
    %v511 = vsel %vm479, %v340, 0
    %v514 = vsel %vm479, %v342, 0
    %v517 = vsel %vm479, %v344, 0
    %v520 = vsel %vm479, %v346, 0
    %v523 = vsel %vm479, %v348, 0
    %v526 = vsel %vm479, %v350, 0
    %v529 = vsel %vm479, %v352, 0
    %531 = vmatprep.subr.mxu0 0.0
    %532 = vmatpush1.msra.mxu0 %v271
    %533 = vmatprep.subr.mxu0 0.0
    %534 = vmatpush1.msra.mxu0 %v272
    %535 = vmatprep.subr.mxu0 0.0
    %536 = vmatpush1.msra.mxu0 %v273
    %537 = vmatprep.subr.mxu0 0.0
    %538 = vmatpush1.msra.mxu0 %v274
    %539 = vmatprep.subr.mxu0 0.0
    %540 = vmatpush1.msra.mxu0 %v275
    %541 = vmatprep.subr.mxu0 0.0
    %542 = vmatpush1.msra.mxu0 %v276
    %543 = vmatprep.subr.mxu0 0.0
    %544 = vmatpush1.msra.mxu0 %v277
    %545 = vmatprep.subr.mxu0 0.0
    %546 = vmatpush1.msra.mxu0 %v278
    %547 = vmatprep.subr.mxu0 0.0
    %548 = vmatpush1.msra.mxu0 %v279
    %549 = vmatprep.subr.mxu0 0.0
    %550 = vmatpush1.msra.mxu0 %v280
    %551 = vmatprep.subr.mxu0 0.0
    %552 = vmatpush1.msra.mxu0 %v281
    %553 = vmatprep.subr.mxu0 0.0
    %554 = vmatpush1.msra.mxu0 %v282
    %555 = vmatprep.subr.mxu0 0.0
    %556 = vmatpush1.msra.mxu0 %v283
    %557 = vmatprep.subr.mxu0 0.0
    %558 = vmatpush1.msra.mxu0 %v284
    %559 = vmatprep.subr.mxu0 0.0
    %560 = vmatpush1.msra.mxu0 %v285
    %561 = vmatprep.subr.mxu0 0.0
    %562 = vmatpush1.msra.mxu0 %v286
    %563 = vmatprep.subr.mxu0 0.0
    %564 = vmatpush1.msra.mxu0 %v287
    %565 = vmatprep.subr.mxu0 0.0
    %566 = vmatpush1.msra.mxu0 %v288
    %567 = vmatprep.subr.mxu0 0.0
    %568 = vmatpush1.msra.mxu0 %v289
    %569 = vmatprep.subr.mxu0 0.0
    %570 = vmatpush1.msra.mxu0 %v290
    %571 = vmatprep.subr.mxu0 0.0
    %572 = vmatpush1.msra.mxu0 %v291
    %573 = vmatprep.subr.mxu0 0.0
    %574 = vmatpush1.msra.mxu0 %v292
    %575 = vmatprep.subr.mxu0 0.0
    %576 = vmatpush1.msra.mxu0 %v293
    %577 = vmatprep.subr.mxu0 0.0
    %578 = vmatpush1.msra.mxu0 %v294
    %579 = vmatprep.subr.mxu0 0.0
    %580 = vmatpush1.msra.mxu0 0.0
    %581 = vmatprep.subr.mxu0 0.0
    %582 = vmatpush1.msra.mxu0 0.0
    %583 = vmatprep.subr.mxu0 0.0
    %584 = vmatpush1.msra.mxu0 0.0
    %585 = vmatprep.subr.mxu0 0.0
    %586 = vmatpush1.msra.mxu0 0.0
    %587 = vmatprep.subr.mxu0 0.0
    %588 = vmatpush1.msra.mxu0 0.0
    %589 = vmatprep.subr.mxu0 0.0
    %590 = vmatpush1.msra.mxu0 0.0
    %591 = vmatprep.subr.mxu0 0.0
    %592 = vmatpush1.msra.mxu0 0.0
    %593 = vmatprep.subr.mxu0 0.0
    %594 = vmatpush1.msra.mxu0 0.0
    %595 = vmatprep.mubr.f32.mxu0 %v481
    %596 = vmatmul.mubr.f32.gmra.mrb[0].mxu0 %v319
    %v597 = vpop.f32.mrb[0].mxu0
    %v598 = vadd.f32 0.0, %v597
    %v599 = vpop.f32.mrb[0].mxu0
    %600 = vmatprep.mubr.f32.mxu0 %v484
    %601 = vmatmul.mubr.f32.gmra.mrb[0].mxu0 %v321
    %v602 = vpop.f32.mrb[0].mxu0
    %v603 = vadd.f32 0.0, %v602
    %v604 = vpop.f32.mrb[0].mxu0
    %605 = vmatprep.mubr.f32.mxu0 %v487
    %606 = vmatmul.mubr.f32.gmra.mrb[0].mxu0 %v323
    %v607 = vpop.f32.mrb[0].mxu0
    %v608 = vadd.f32 0.0, %v607
    %v609 = vpop.f32.mrb[0].mxu0
    %610 = vmatprep.mubr.f32.mxu0 %v490
    %611 = vmatmul.mubr.f32.gmra.mrb[0].mxu0 %v325
    %v612 = vpop.f32.mrb[0].mxu0
    %v613 = vadd.f32 0.0, %v612
    %v614 = vpop.f32.mrb[0].mxu0
    %615 = vmatprep.mubr.f32.mxu0 %v493
    %616 = vmatmul.mubr.f32.gmra.mrb[0].mxu0 %v327
    %v617 = vpop.f32.mrb[0].mxu0
    %v618 = vadd.f32 0.0, %v617
    %v619 = vpop.f32.mrb[0].mxu0
    %620 = vmatprep.mubr.f32.mxu0 %v496
    %621 = vmatmul.mubr.f32.gmra.mrb[0].mxu0 %v329
    %v622 = vpop.f32.mrb[0].mxu0
    %v623 = vadd.f32 0.0, %v622
    %v624 = vpop.f32.mrb[0].mxu0
    %625 = vmatprep.mubr.f32.mxu0 %v499
    %626 = vmatmul.mubr.f32.gmra.mrb[0].mxu0 %v331
    %v627 = vpop.f32.mrb[0].mxu0
    %v628 = vadd.f32 0.0, %v627
    %v629 = vpop.f32.mrb[0].mxu0
    %630 = vmatprep.mubr.f32.mxu0 %v502
    %631 = vmatmul.mubr.f32.gmra.mrb[0].mxu0 %v333
    %v632 = vpop.f32.mrb[0].mxu0
    %v633 = vadd.f32 0.0, %v632
    %v634 = vpop.f32.mrb[0].mxu0
    %635 = vmatprep.mubr.f32.mxu0 %v505
    %636 = vmatmul.mubr.f32.gmra.mrb[0].mxu0 %v335
    %v637 = vpop.f32.mrb[0].mxu0
    %v638 = vadd.f32 0.0, %v637
    %v639 = vpop.f32.mrb[0].mxu0
    %640 = vmatprep.mubr.f32.mxu0 %v508
    %641 = vmatmul.mubr.f32.gmra.mrb[0].mxu0 %v337
    %v642 = vpop.f32.mrb[0].mxu0
    %v643 = vadd.f32 0.0, %v642
    %v644 = vpop.f32.mrb[0].mxu0
    %645 = vmatprep.mubr.f32.mxu0 %v511
    %646 = vmatmul.mubr.f32.gmra.mrb[0].mxu0 %v339
    %v647 = vpop.f32.mrb[0].mxu0
    %v648 = vadd.f32 0.0, %v647
    %v649 = vpop.f32.mrb[0].mxu0
    %650 = vmatprep.mubr.f32.mxu0 %v514
    %651 = vmatmul.mubr.f32.gmra.mrb[0].mxu0 %v341
    %v652 = vpop.f32.mrb[0].mxu0
    %v653 = vadd.f32 0.0, %v652
    %v654 = vpop.f32.mrb[0].mxu0
    %655 = vmatprep.mubr.f32.mxu0 %v517
    %656 = vmatmul.mubr.f32.gmra.mrb[0].mxu0 %v343
    %v657 = vpop.f32.mrb[0].mxu0
    %v658 = vadd.f32 0.0, %v657
    %v659 = vpop.f32.mrb[0].mxu0
    %660 = vmatprep.mubr.f32.mxu0 %v520
    %661 = vmatmul.mubr.f32.gmra.mrb[0].mxu0 %v345
    %v662 = vpop.f32.mrb[0].mxu0
    %v663 = vadd.f32 0.0, %v662
    %v664 = vpop.f32.mrb[0].mxu0
    %665 = vmatprep.mubr.f32.mxu0 %v523
    %666 = vmatmul.mubr.f32.gmra.mrb[0].mxu0 %v347
    %v667 = vpop.f32.mrb[0].mxu0
    %v668 = vadd.f32 0.0, %v667
    %v669 = vpop.f32.mrb[0].mxu0
    %670 = vmatprep.mubr.f32.mxu0 %v526
    %671 = vmatmul.mubr.f32.gmra.mrb[0].mxu0 %v349
    %v672 = vpop.f32.mrb[0].mxu0
    %v673 = vadd.f32 0.0, %v672
    %v674 = vpop.f32.mrb[0].mxu0
    %675 = vmatprep.mubr.f32.mxu0 %v529
    %676 = vmatmul.mubr.f32.gmra.mrb[0].mxu0 %v351
    %v677 = vpop.f32.mrb[0].mxu0
    %v678 = vadd.f32 0.0, %v677
    %v679 = vpop.f32.mrb[0].mxu0
    %680 = vdwg.mxu0
    %v682 = vsel %vm357, %v598, 0
    %v685 = vsel %vm357, %v603, 0
    %v688 = vsel %vm357, %v608, 0
    %v691 = vsel %vm357, %v613, 0
    %v694 = vsel %vm357, %v618, 0
    %v697 = vsel %vm357, %v623, 0
    %v700 = vsel %vm357, %v628, 0
    %v703 = vsel %vm357, %v633, 0
    %v706 = vsel %vm357, %v638, 0
    %v709 = vsel %vm357, %v643, 0
    %v712 = vsel %vm357, %v648, 0
    %v715 = vsel %vm357, %v653, 0
    %v718 = vsel %vm357, %v658, 0
    %v721 = vsel %vm357, %v663, 0
    %v724 = vsel %vm357, %v668, 0
    %v727 = vsel %vm357, %v673, 0
    %v730 = vsel %vm357, %v678, 0
    %732 = vmatprep.subr.mxu0 0.0
    %733 = vmatpush1.msra.mxu0 %v353
    %734 = vmatprep.subr.mxu0 0.0
    %735 = vmatpush1.msra.mxu0 %v354
    %736 = vmatprep.subr.mxu0 0.0
    %737 = vmatpush1.msra.mxu0 %v355
    %738 = vmatprep.subr.mxu0 0.0
    %739 = vmatpush1.msra.mxu0 %v356
    %740 = vmatprep.subr.mxu0 0.0
    %741 = vmatpush1.msra.mxu0 0.0
    %742 = vmatprep.subr.mxu0 0.0
    %743 = vmatpush1.msra.mxu0 0.0
    %744 = vmatprep.subr.mxu0 0.0
    %745 = vmatpush1.msra.mxu0 0.0
    %746 = vmatprep.subr.mxu0 0.0
    %747 = vmatpush1.msra.mxu0 0.0
    %748 = vmatprep.subr.mxu0 0.0
    %749 = vmatpush1.msra.mxu0 0.0
    %750 = vmatprep.subr.mxu0 0.0
    %751 = vmatpush1.msra.mxu0 0.0
    %752 = vmatprep.subr.mxu0 0.0
    %753 = vmatpush1.msra.mxu0 0.0
    %754 = vmatprep.subr.mxu0 0.0
    %755 = vmatpush1.msra.mxu0 0.0
    %756 = vmatprep.subr.mxu0 0.0
    %757 = vmatpush1.msra.mxu0 0.0
    %758 = vmatprep.subr.mxu0 0.0
    %759 = vmatpush1.msra.mxu0 0.0
    %760 = vmatprep.subr.mxu0 0.0
    %761 = vmatpush1.msra.mxu0 0.0
    %762 = vmatprep.subr.mxu0 0.0
    %763 = vmatpush1.msra.mxu0 0.0
    %764 = vmatprep.subr.mxu0 0.0
    %765 = vmatpush1.msra.mxu0 0.0
    %766 = vmatprep.subr.mxu0 0.0
    %767 = vmatpush1.msra.mxu0 0.0
    %768 = vmatprep.subr.mxu0 0.0
    %769 = vmatpush1.msra.mxu0 0.0
    %770 = vmatprep.subr.mxu0 0.0
    %771 = vmatpush1.msra.mxu0 0.0
    %772 = vmatprep.subr.mxu0 0.0
    %773 = vmatpush1.msra.mxu0 0.0
    %774 = vmatprep.subr.mxu0 0.0
    %775 = vmatpush1.msra.mxu0 0.0
    %776 = vmatprep.subr.mxu0 0.0
    %777 = vmatpush1.msra.mxu0 0.0
    %778 = vmatprep.subr.mxu0 0.0
    %779 = vmatpush1.msra.mxu0 0.0
    %780 = vmatprep.subr.mxu0 0.0
    %781 = vmatpush1.msra.mxu0 0.0
    %782 = vmatprep.subr.mxu0 0.0
    %783 = vmatpush1.msra.mxu0 0.0
    %784 = vmatprep.subr.mxu0 0.0
    %785 = vmatpush1.msra.mxu0 0.0
    %786 = vmatprep.subr.mxu0 0.0
    %787 = vmatpush1.msra.mxu0 0.0
    %788 = vmatprep.subr.mxu0 0.0
    %789 = vmatpush1.msra.mxu0 0.0
    %790 = vmatprep.subr.mxu0 0.0
    %791 = vmatpush1.msra.mxu0 0.0
    %792 = vmatprep.subr.mxu0 0.0
    %793 = vmatpush1.msra.mxu0 0.0
    %794 = vmatprep.subr.mxu0 0.0
    %795 = vmatpush1.msra.mxu0 0.0
    %796 = vmatprep.mubr.f32.mxu0 0.0
    %797 = vmatmul.mubr.f32.gmra.mrb[0].mxu0 %v682
    %v798 = vpop.f32.mrb[0].mxu0
    %v799 = vadd.f32 0.0, %v798
    %v800 = vpop.f32.mrb[0].mxu0
    %801 = vmatprep.mubr.f32.mxu0 0.0
    %802 = vmatmul.mubr.f32.gmra.mrb[0].mxu0 %v685
    %v803 = vpop.f32.mrb[0].mxu0
    %v804 = vadd.f32 0.0, %v803
    %v805 = vpop.f32.mrb[0].mxu0
    %806 = vmatprep.mubr.f32.mxu0 0.0
    %807 = vmatmul.mubr.f32.gmra.mrb[0].mxu0 %v688
    %v808 = vpop.f32.mrb[0].mxu0
    %v809 = vadd.f32 0.0, %v808
    %v810 = vpop.f32.mrb[0].mxu0
    %811 = vmatprep.mubr.f32.mxu0 0.0
    %812 = vmatmul.mubr.f32.gmra.mrb[0].mxu0 %v691
    %v813 = vpop.f32.mrb[0].mxu0
    %v814 = vadd.f32 0.0, %v813
    %v815 = vpop.f32.mrb[0].mxu0
    %816 = vmatprep.mubr.f32.mxu0 0.0
    %817 = vmatmul.mubr.f32.gmra.mrb[0].mxu0 %v694
    %v818 = vpop.f32.mrb[0].mxu0
    %v819 = vadd.f32 0.0, %v818
    %v820 = vpop.f32.mrb[0].mxu0
    %821 = vmatprep.mubr.f32.mxu0 0.0
    %822 = vmatmul.mubr.f32.gmra.mrb[0].mxu0 %v697
    %v823 = vpop.f32.mrb[0].mxu0
    %v824 = vadd.f32 0.0, %v823
    %v825 = vpop.f32.mrb[0].mxu0
    %826 = vmatprep.mubr.f32.mxu0 0.0
    %827 = vmatmul.mubr.f32.gmra.mrb[0].mxu0 %v700
    %v828 = vpop.f32.mrb[0].mxu0
    %v829 = vadd.f32 0.0, %v828
    %v830 = vpop.f32.mrb[0].mxu0
    %831 = vmatprep.mubr.f32.mxu0 0.0
    %832 = vmatmul.mubr.f32.gmra.mrb[0].mxu0 %v703
    %v833 = vpop.f32.mrb[0].mxu0
    %v834 = vadd.f32 0.0, %v833
    %v835 = vpop.f32.mrb[0].mxu0
    %836 = vmatprep.mubr.f32.mxu0 0.0
    %837 = vmatmul.mubr.f32.gmra.mrb[0].mxu0 %v706
    %v838 = vpop.f32.mrb[0].mxu0
    %v839 = vadd.f32 0.0, %v838
    %v840 = vpop.f32.mrb[0].mxu0
    %841 = vmatprep.mubr.f32.mxu0 0.0
    %842 = vmatmul.mubr.f32.gmra.mrb[0].mxu0 %v709
    %v843 = vpop.f32.mrb[0].mxu0
    %v844 = vadd.f32 0.0, %v843
    %v845 = vpop.f32.mrb[0].mxu0
    %846 = vmatprep.mubr.f32.mxu0 0.0
    %847 = vmatmul.mubr.f32.gmra.mrb[0].mxu0 %v712
    %v848 = vpop.f32.mrb[0].mxu0
    %v849 = vadd.f32 0.0, %v848
    %v850 = vpop.f32.mrb[0].mxu0
    %851 = vmatprep.mubr.f32.mxu0 0.0
    %852 = vmatmul.mubr.f32.gmra.mrb[0].mxu0 %v715
    %v853 = vpop.f32.mrb[0].mxu0
    %v854 = vadd.f32 0.0, %v853
    %v855 = vpop.f32.mrb[0].mxu0
    %856 = vmatprep.mubr.f32.mxu0 0.0
    %857 = vmatmul.mubr.f32.gmra.mrb[0].mxu0 %v718
    %v858 = vpop.f32.mrb[0].mxu0
    %v859 = vadd.f32 0.0, %v858
    %v860 = vpop.f32.mrb[0].mxu0
    %861 = vmatprep.mubr.f32.mxu0 0.0
    %862 = vmatmul.mubr.f32.gmra.mrb[0].mxu0 %v721
    %v863 = vpop.f32.mrb[0].mxu0
    %v864 = vadd.f32 0.0, %v863
    %v865 = vpop.f32.mrb[0].mxu0
    %866 = vmatprep.mubr.f32.mxu0 0.0
    %867 = vmatmul.mubr.f32.gmra.mrb[0].mxu0 %v724
    %v868 = vpop.f32.mrb[0].mxu0
    %v869 = vadd.f32 0.0, %v868
    %v870 = vpop.f32.mrb[0].mxu0
    %871 = vmatprep.mubr.f32.mxu0 0.0
    %872 = vmatmul.mubr.f32.gmra.mrb[0].mxu0 %v727
    %v873 = vpop.f32.mrb[0].mxu0
    %v874 = vadd.f32 0.0, %v873
    %v875 = vpop.f32.mrb[0].mxu0
    %876 = vmatprep.mubr.f32.mxu0 0.0
    %877 = vmatmul.mubr.f32.gmra.mrb[0].mxu0 %v730
    %v878 = vpop.f32.mrb[0].mxu0
    %v879 = vadd.f32 0.0, %v878
    %v880 = vpop.f32.mrb[0].mxu0
    %881 = vdwg.mxu0
    %882 = vmatprep.subr.mxu0 0.0
    %883 = vmatpush1.msra.mxu0 %v295
    %884 = vmatprep.subr.mxu0 0.0
    %885 = vmatpush1.msra.mxu0 %v296
    %886 = vmatprep.subr.mxu0 0.0
    %887 = vmatpush1.msra.mxu0 %v297
    %888 = vmatprep.subr.mxu0 0.0
    %889 = vmatpush1.msra.mxu0 %v298
    %890 = vmatprep.subr.mxu0 0.0
    %891 = vmatpush1.msra.mxu0 %v299
    %892 = vmatprep.subr.mxu0 0.0
    %893 = vmatpush1.msra.mxu0 %v300
    %894 = vmatprep.subr.mxu0 0.0
    %895 = vmatpush1.msra.mxu0 %v301
    %896 = vmatprep.subr.mxu0 0.0
    %897 = vmatpush1.msra.mxu0 %v302
    %898 = vmatprep.subr.mxu0 0.0
    %899 = vmatpush1.msra.mxu0 %v303
    %900 = vmatprep.subr.mxu0 0.0
    %901 = vmatpush1.msra.mxu0 %v304
    %902 = vmatprep.subr.mxu0 0.0
    %903 = vmatpush1.msra.mxu0 %v305
    %904 = vmatprep.subr.mxu0 0.0
    %905 = vmatpush1.msra.mxu0 %v306
    %906 = vmatprep.subr.mxu0 0.0
    %907 = vmatpush1.msra.mxu0 %v307
    %908 = vmatprep.subr.mxu0 0.0
    %909 = vmatpush1.msra.mxu0 %v308
    %910 = vmatprep.subr.mxu0 0.0
    %911 = vmatpush1.msra.mxu0 %v309
    %912 = vmatprep.subr.mxu0 0.0
    %913 = vmatpush1.msra.mxu0 %v310
    %914 = vmatprep.subr.mxu0 0.0
    %915 = vmatpush1.msra.mxu0 %v311
    %916 = vmatprep.subr.mxu0 0.0
    %917 = vmatpush1.msra.mxu0 %v312
    %918 = vmatprep.subr.mxu0 0.0
    %919 = vmatpush1.msra.mxu0 %v313
    %920 = vmatprep.subr.mxu0 0.0
    %921 = vmatpush1.msra.mxu0 %v314
    %922 = vmatprep.subr.mxu0 0.0
    %923 = vmatpush1.msra.mxu0 %v315
    %924 = vmatprep.subr.mxu0 0.0
    %925 = vmatpush1.msra.mxu0 %v316
    %926 = vmatprep.subr.mxu0 0.0
    %927 = vmatpush1.msra.mxu0 %v317
    %928 = vmatprep.subr.mxu0 0.0
    %929 = vmatpush1.msra.mxu0 %v318
    %930 = vmatprep.subr.mxu0 0.0
    %931 = vmatpush1.msra.mxu0 0.0
    %932 = vmatprep.subr.mxu0 0.0
    %933 = vmatpush1.msra.mxu0 0.0
    %934 = vmatprep.subr.mxu0 0.0
    %935 = vmatpush1.msra.mxu0 0.0
    %936 = vmatprep.subr.mxu0 0.0
    %937 = vmatpush1.msra.mxu0 0.0
    %938 = vmatprep.subr.mxu0 0.0
    %939 = vmatpush1.msra.mxu0 0.0
    %940 = vmatprep.subr.mxu0 0.0
    %941 = vmatpush1.msra.mxu0 0.0
    %942 = vmatprep.subr.mxu0 0.0
    %943 = vmatpush1.msra.mxu0 0.0
    %944 = vmatprep.subr.mxu0 0.0
    %945 = vmatpush1.msra.mxu0 0.0
    %946 = vmatprep.mubr.f32.mxu0 %v481
    %947 = vmatmul.mubr.f32.gmra.mrb[0].mxu0 %v319
    %v948 = vpop.f32.mrb[0].mxu0
    %v949 = vadd.f32 0.0, %v948
    %v950 = vpop.f32.mrb[0].mxu0
    %951 = vmatprep.mubr.f32.mxu0 %v484
    %952 = vmatmul.mubr.f32.gmra.mrb[0].mxu0 %v321
    %v953 = vpop.f32.mrb[0].mxu0
    %v954 = vadd.f32 0.0, %v953
    %v955 = vpop.f32.mrb[0].mxu0
    %956 = vmatprep.mubr.f32.mxu0 %v487
    %957 = vmatmul.mubr.f32.gmra.mrb[0].mxu0 %v323
    %v958 = vpop.f32.mrb[0].mxu0
    %v959 = vadd.f32 0.0, %v958
    %v960 = vpop.f32.mrb[0].mxu0
    %961 = vmatprep.mubr.f32.mxu0 %v490
    %962 = vmatmul.mubr.f32.gmra.mrb[0].mxu0 %v325
    %v963 = vpop.f32.mrb[0].mxu0
    %v964 = vadd.f32 0.0, %v963
    %v965 = vpop.f32.mrb[0].mxu0
    %966 = vmatprep.mubr.f32.mxu0 %v493
    %967 = vmatmul.mubr.f32.gmra.mrb[0].mxu0 %v327
    %v968 = vpop.f32.mrb[0].mxu0
    %v969 = vadd.f32 0.0, %v968
    %v970 = vpop.f32.mrb[0].mxu0
    %971 = vmatprep.mubr.f32.mxu0 %v496
    %972 = vmatmul.mubr.f32.gmra.mrb[0].mxu0 %v329
    %v973 = vpop.f32.mrb[0].mxu0
    %v974 = vadd.f32 0.0, %v973
    %v975 = vpop.f32.mrb[0].mxu0
    %976 = vmatprep.mubr.f32.mxu0 %v499
    %977 = vmatmul.mubr.f32.gmra.mrb[0].mxu0 %v331
    %v978 = vpop.f32.mrb[0].mxu0
    %v979 = vadd.f32 0.0, %v978
    %v980 = vpop.f32.mrb[0].mxu0
    %981 = vmatprep.mubr.f32.mxu0 %v502
    %982 = vmatmul.mubr.f32.gmra.mrb[0].mxu0 %v333
    %v983 = vpop.f32.mrb[0].mxu0
    %v984 = vadd.f32 0.0, %v983
    %v985 = vpop.f32.mrb[0].mxu0
    %986 = vmatprep.mubr.f32.mxu0 %v505
    %987 = vmatmul.mubr.f32.gmra.mrb[0].mxu0 %v335
    %v988 = vpop.f32.mrb[0].mxu0
    %v989 = vadd.f32 0.0, %v988
    %v990 = vpop.f32.mrb[0].mxu0
    %991 = vmatprep.mubr.f32.mxu0 %v508
    %992 = vmatmul.mubr.f32.gmra.mrb[0].mxu0 %v337
    %v993 = vpop.f32.mrb[0].mxu0
    %v994 = vadd.f32 0.0, %v993
    %v995 = vpop.f32.mrb[0].mxu0
    %996 = vmatprep.mubr.f32.mxu0 %v511
    %997 = vmatmul.mubr.f32.gmra.mrb[0].mxu0 %v339
    %v998 = vpop.f32.mrb[0].mxu0
    %v999 = vadd.f32 0.0, %v998
    %v1000 = vpop.f32.mrb[0].mxu0
    %1001 = vmatprep.mubr.f32.mxu0 %v514
    %1002 = vmatmul.mubr.f32.gmra.mrb[0].mxu0 %v341
    %v1003 = vpop.f32.mrb[0].mxu0
    %v1004 = vadd.f32 0.0, %v1003
    %v1005 = vpop.f32.mrb[0].mxu0
    %1006 = vmatprep.mubr.f32.mxu0 %v517
    %1007 = vmatmul.mubr.f32.gmra.mrb[0].mxu0 %v343
    %v1008 = vpop.f32.mrb[0].mxu0
    %v1009 = vadd.f32 0.0, %v1008
    %v1010 = vpop.f32.mrb[0].mxu0
    %1011 = vmatprep.mubr.f32.mxu0 %v520
    %1012 = vmatmul.mubr.f32.gmra.mrb[0].mxu0 %v345
    %v1013 = vpop.f32.mrb[0].mxu0
    %v1014 = vadd.f32 0.0, %v1013
    %v1015 = vpop.f32.mrb[0].mxu0
    %1016 = vmatprep.mubr.f32.mxu0 %v523
    %1017 = vmatmul.mubr.f32.gmra.mrb[0].mxu0 %v347
    %v1018 = vpop.f32.mrb[0].mxu0
    %v1019 = vadd.f32 0.0, %v1018
    %v1020 = vpop.f32.mrb[0].mxu0
    %1021 = vmatprep.mubr.f32.mxu0 %v526
    %1022 = vmatmul.mubr.f32.gmra.mrb[0].mxu0 %v349
    %v1023 = vpop.f32.mrb[0].mxu0
    %v1024 = vadd.f32 0.0, %v1023
    %v1025 = vpop.f32.mrb[0].mxu0
    %1026 = vmatprep.mubr.f32.mxu0 %v529
    %1027 = vmatmul.mubr.f32.gmra.mrb[0].mxu0 %v351
    %v1028 = vpop.f32.mrb[0].mxu0
    %v1029 = vadd.f32 0.0, %v1028
    %v1030 = vpop.f32.mrb[0].mxu0
    %1031 = vdwg.mxu0
    %v1033 = vsel %vm357, %v949, 0
    %v1036 = vsel %vm357, %v954, 0
    %v1039 = vsel %vm357, %v959, 0
    %v1042 = vsel %vm357, %v964, 0
    %v1045 = vsel %vm357, %v969, 0
    %v1048 = vsel %vm357, %v974, 0
    %v1051 = vsel %vm357, %v979, 0
    %v1054 = vsel %vm357, %v984, 0
    %v1057 = vsel %vm357, %v989, 0
    %v1060 = vsel %vm357, %v994, 0
    %v1063 = vsel %vm357, %v999, 0
    %v1066 = vsel %vm357, %v1004, 0
    %v1069 = vsel %vm357, %v1009, 0
    %v1072 = vsel %vm357, %v1014, 0
    %v1075 = vsel %vm357, %v1019, 0
    %v1078 = vsel %vm357, %v1024, 0
    %v1081 = vsel %vm357, %v1029, 0
    %1083 = vmatprep.subr.mxu0 0.0
    %1084 = vmatpush1.msra.mxu0 %v353
    %1085 = vmatprep.subr.mxu0 0.0
    %1086 = vmatpush1.msra.mxu0 %v354
    %1087 = vmatprep.subr.mxu0 0.0
    %1088 = vmatpush1.msra.mxu0 %v355
    %1089 = vmatprep.subr.mxu0 0.0
    %1090 = vmatpush1.msra.mxu0 %v356
    %1091 = vmatprep.subr.mxu0 0.0
    %1092 = vmatpush1.msra.mxu0 0.0
    %1093 = vmatprep.subr.mxu0 0.0
    %1094 = vmatpush1.msra.mxu0 0.0
    %1095 = vmatprep.subr.mxu0 0.0
    %1096 = vmatpush1.msra.mxu0 0.0
    %1097 = vmatprep.subr.mxu0 0.0
    %1098 = vmatpush1.msra.mxu0 0.0
    %1099 = vmatprep.subr.mxu0 0.0
    %1100 = vmatpush1.msra.mxu0 0.0
    %1101 = vmatprep.subr.mxu0 0.0
    %1102 = vmatpush1.msra.mxu0 0.0
    %1103 = vmatprep.subr.mxu0 0.0
    %1104 = vmatpush1.msra.mxu0 0.0
    %1105 = vmatprep.subr.mxu0 0.0
    %1106 = vmatpush1.msra.mxu0 0.0
    %1107 = vmatprep.subr.mxu0 0.0
    %1108 = vmatpush1.msra.mxu0 0.0
    %1109 = vmatprep.subr.mxu0 0.0
    %1110 = vmatpush1.msra.mxu0 0.0
    %1111 = vmatprep.subr.mxu0 0.0
    %1112 = vmatpush1.msra.mxu0 0.0
    %1113 = vmatprep.subr.mxu0 0.0
    %1114 = vmatpush1.msra.mxu0 0.0
    %1115 = vmatprep.subr.mxu0 0.0
    %1116 = vmatpush1.msra.mxu0 0.0
    %1117 = vmatprep.subr.mxu0 0.0
    %1118 = vmatpush1.msra.mxu0 0.0
    %1119 = vmatprep.subr.mxu0 0.0
    %1120 = vmatpush1.msra.mxu0 0.0
    %1121 = vmatprep.subr.mxu0 0.0
    %1122 = vmatpush1.msra.mxu0 0.0
    %1123 = vmatprep.subr.mxu0 0.0
    %1124 = vmatpush1.msra.mxu0 0.0
    %1125 = vmatprep.subr.mxu0 0.0
    %1126 = vmatpush1.msra.mxu0 0.0
    %1127 = vmatprep.subr.mxu0 0.0
    %1128 = vmatpush1.msra.mxu0 0.0
    %1129 = vmatprep.subr.mxu0 0.0
    %1130 = vmatpush1.msra.mxu0 0.0
    %1131 = vmatprep.subr.mxu0 0.0
    %1132 = vmatpush1.msra.mxu0 0.0
    %1133 = vmatprep.subr.mxu0 0.0
    %1134 = vmatpush1.msra.mxu0 0.0
    %1135 = vmatprep.subr.mxu0 0.0
    %1136 = vmatpush1.msra.mxu0 0.0
    %1137 = vmatprep.subr.mxu0 0.0
    %1138 = vmatpush1.msra.mxu0 0.0
    %1139 = vmatprep.subr.mxu0 0.0
    %1140 = vmatpush1.msra.mxu0 0.0
    %1141 = vmatprep.subr.mxu0 0.0
    %1142 = vmatpush1.msra.mxu0 0.0
    %1143 = vmatprep.subr.mxu0 0.0
    %1144 = vmatpush1.msra.mxu0 0.0
    %1145 = vmatprep.subr.mxu0 0.0
    %1146 = vmatpush1.msra.mxu0 0.0
    %1147 = vmatprep.mubr.f32.mxu0 0.0
    %1148 = vmatmul.mubr.f32.gmra.mrb[0].mxu0 %v1033
    %v1149 = vpop.f32.mrb[0].mxu0
    %v1150 = vadd.f32 0.0, %v1149
    %v1151 = vpop.f32.mrb[0].mxu0
    %1152 = vmatprep.mubr.f32.mxu0 0.0
    %1153 = vmatmul.mubr.f32.gmra.mrb[0].mxu0 %v1036
    %v1154 = vpop.f32.mrb[0].mxu0
    %v1155 = vadd.f32 0.0, %v1154
    %v1156 = vpop.f32.mrb[0].mxu0
    %1157 = vmatprep.mubr.f32.mxu0 0.0
    %1158 = vmatmul.mubr.f32.gmra.mrb[0].mxu0 %v1039
    %v1159 = vpop.f32.mrb[0].mxu0
    %v1160 = vadd.f32 0.0, %v1159
    %v1161 = vpop.f32.mrb[0].mxu0
    %1162 = vmatprep.mubr.f32.mxu0 0.0
    %1163 = vmatmul.mubr.f32.gmra.mrb[0].mxu0 %v1042
    %v1164 = vpop.f32.mrb[0].mxu0
    %v1165 = vadd.f32 0.0, %v1164
    %v1166 = vpop.f32.mrb[0].mxu0
    %1167 = vmatprep.mubr.f32.mxu0 0.0
    %1168 = vmatmul.mubr.f32.gmra.mrb[0].mxu0 %v1045
    %v1169 = vpop.f32.mrb[0].mxu0
    %v1170 = vadd.f32 0.0, %v1169
    %v1171 = vpop.f32.mrb[0].mxu0
    %1172 = vmatprep.mubr.f32.mxu0 0.0
    %1173 = vmatmul.mubr.f32.gmra.mrb[0].mxu0 %v1048
    %v1174 = vpop.f32.mrb[0].mxu0
    %v1175 = vadd.f32 0.0, %v1174
    %v1176 = vpop.f32.mrb[0].mxu0
    %1177 = vmatprep.mubr.f32.mxu0 0.0
    %1178 = vmatmul.mubr.f32.gmra.mrb[0].mxu0 %v1051
    %v1179 = vpop.f32.mrb[0].mxu0
    %v1180 = vadd.f32 0.0, %v1179
    %v1181 = vpop.f32.mrb[0].mxu0
    %1182 = vmatprep.mubr.f32.mxu0 0.0
    %1183 = vmatmul.mubr.f32.gmra.mrb[0].mxu0 %v1054
    %v1184 = vpop.f32.mrb[0].mxu0
    %v1185 = vadd.f32 0.0, %v1184
    %v1186 = vpop.f32.mrb[0].mxu0
    %1187 = vmatprep.mubr.f32.mxu0 0.0
    %1188 = vmatmul.mubr.f32.gmra.mrb[0].mxu0 %v1057
    %v1189 = vpop.f32.mrb[0].mxu0
    %v1190 = vadd.f32 0.0, %v1189
    %v1191 = vpop.f32.mrb[0].mxu0
    %1192 = vmatprep.mubr.f32.mxu0 0.0
    %1193 = vmatmul.mubr.f32.gmra.mrb[0].mxu0 %v1060
    %v1194 = vpop.f32.mrb[0].mxu0
    %v1195 = vadd.f32 0.0, %v1194
    %v1196 = vpop.f32.mrb[0].mxu0
    %1197 = vmatprep.mubr.f32.mxu0 0.0
    %1198 = vmatmul.mubr.f32.gmra.mrb[0].mxu0 %v1063
    %v1199 = vpop.f32.mrb[0].mxu0
    %v1200 = vadd.f32 0.0, %v1199
    %v1201 = vpop.f32.mrb[0].mxu0
    %1202 = vmatprep.mubr.f32.mxu0 0.0
    %1203 = vmatmul.mubr.f32.gmra.mrb[0].mxu0 %v1066
    %v1204 = vpop.f32.mrb[0].mxu0
    %v1205 = vadd.f32 0.0, %v1204
    %v1206 = vpop.f32.mrb[0].mxu0
    %1207 = vmatprep.mubr.f32.mxu0 0.0
    %1208 = vmatmul.mubr.f32.gmra.mrb[0].mxu0 %v1069
    %v1209 = vpop.f32.mrb[0].mxu0
    %v1210 = vadd.f32 0.0, %v1209
    %v1211 = vpop.f32.mrb[0].mxu0
    %1212 = vmatprep.mubr.f32.mxu0 0.0
    %1213 = vmatmul.mubr.f32.gmra.mrb[0].mxu0 %v1072
    %v1214 = vpop.f32.mrb[0].mxu0
    %v1215 = vadd.f32 0.0, %v1214
    %v1216 = vpop.f32.mrb[0].mxu0
    %1217 = vmatprep.mubr.f32.mxu0 0.0
    %1218 = vmatmul.mubr.f32.gmra.mrb[0].mxu0 %v1075
    %v1219 = vpop.f32.mrb[0].mxu0
    %v1220 = vadd.f32 0.0, %v1219
    %v1221 = vpop.f32.mrb[0].mxu0
    %1222 = vmatprep.mubr.f32.mxu0 0.0
    %1223 = vmatmul.mubr.f32.gmra.mrb[0].mxu0 %v1078
    %v1224 = vpop.f32.mrb[0].mxu0
    %v1225 = vadd.f32 0.0, %v1224
    %v1226 = vpop.f32.mrb[0].mxu0
    %1227 = vmatprep.mubr.f32.mxu0 0.0
    %1228 = vmatmul.mubr.f32.gmra.mrb[0].mxu0 %v1081
    %v1229 = vpop.f32.mrb[0].mxu0
    %v1230 = vadd.f32 0.0, %v1229
    %v1231 = vpop.f32.mrb[0].mxu0
    %1232 = vdwg.mxu0
    %v1233 = vmul.f32 %v799, %v799
    %v1234 = vmul.f32 %v804, %v804
    %v1235 = vmul.f32 %v809, %v809
    %v1236 = vmul.f32 %v814, %v814
    %v1237 = vmul.f32 %v819, %v819
    %v1238 = vmul.f32 %v824, %v824
    %v1239 = vmul.f32 %v829, %v829
    %v1240 = vmul.f32 %v834, %v834
    %v1241 = vmul.f32 %v839, %v839
    %v1242 = vmul.f32 %v844, %v844
    %v1243 = vmul.f32 %v849, %v849
    %v1244 = vmul.f32 %v854, %v854
    %v1245 = vmul.f32 %v859, %v859
    %v1246 = vmul.f32 %v864, %v864
    %v1247 = vmul.f32 %v869, %v869
    %v1248 = vmul.f32 %v874, %v874
    %v1249 = vmul.f32 %v879, %v879
    %v1250 = vmul.f32 %v1150, %v1150
    %v1251 = vmul.f32 %v1155, %v1155
    %v1252 = vmul.f32 %v1160, %v1160
    %v1253 = vmul.f32 %v1165, %v1165
    %v1254 = vmul.f32 %v1170, %v1170
    %v1255 = vmul.f32 %v1175, %v1175
    %v1256 = vmul.f32 %v1180, %v1180
    %v1257 = vmul.f32 %v1185, %v1185
    %v1258 = vmul.f32 %v1190, %v1190
    %v1259 = vmul.f32 %v1195, %v1195
    %v1260 = vmul.f32 %v1200, %v1200
    %v1261 = vmul.f32 %v1205, %v1205
    %v1262 = vmul.f32 %v1210, %v1210
    %v1263 = vmul.f32 %v1215, %v1215
    %v1264 = vmul.f32 %v1220, %v1220
    %v1265 = vmul.f32 %v1225, %v1225
    %v1266 = vmul.f32 %v1230, %v1230
    %v1267 = vmul.f32 %v799, %v1150
    %v1268 = vmul.f32 %v804, %v1155
    %v1269 = vmul.f32 %v809, %v1160
    %v1270 = vmul.f32 %v814, %v1165
    %v1271 = vmul.f32 %v819, %v1170
    %v1272 = vmul.f32 %v824, %v1175
    %v1273 = vmul.f32 %v829, %v1180
    %v1274 = vmul.f32 %v834, %v1185
    %v1275 = vmul.f32 %v839, %v1190
    %v1276 = vmul.f32 %v844, %v1195
    %v1277 = vmul.f32 %v849, %v1200
    %v1278 = vmul.f32 %v854, %v1205
    %v1279 = vmul.f32 %v859, %v1210
    %v1280 = vmul.f32 %v864, %v1215
    %v1281 = vmul.f32 %v869, %v1220
    %v1282 = vmul.f32 %v874, %v1225
    %v1283 = vmul.f32 %v879, %v1230
    %v1284 = vmul.f32 %v271, %v271
    %v1285 = vmul.f32 %v272, %v272
    %v1286 = vmul.f32 %v273, %v273
    %v1287 = vmul.f32 %v274, %v274
    %v1288 = vmul.f32 %v275, %v275
    %v1289 = vmul.f32 %v276, %v276
    %v1290 = vmul.f32 %v277, %v277
    %v1291 = vmul.f32 %v278, %v278
    %v1292 = vmul.f32 %v279, %v279
    %v1293 = vmul.f32 %v280, %v280
    %v1294 = vmul.f32 %v281, %v281
    %v1295 = vmul.f32 %v282, %v282
    %v1296 = vmul.f32 %v283, %v283
    %v1297 = vmul.f32 %v284, %v284
    %v1298 = vmul.f32 %v285, %v285
    %v1299 = vmul.f32 %v286, %v286
    %v1300 = vmul.f32 %v287, %v287
    %v1301 = vmul.f32 %v288, %v288
    %v1302 = vmul.f32 %v289, %v289
    %v1303 = vmul.f32 %v290, %v290
    %v1304 = vmul.f32 %v291, %v291
    %v1305 = vmul.f32 %v292, %v292
    %v1306 = vmul.f32 %v293, %v293
    %v1307 = vmul.f32 %v294, %v294
    %1308 = vmatprep.subr.mxu0 0.0
    %1309 = vmatpush1.msra.mxu0 %v1284
    %1310 = vmatprep.subr.mxu0 0.0
    %1311 = vmatpush1.msra.mxu0 %v1285
    %1312 = vmatprep.subr.mxu0 0.0
    %1313 = vmatpush1.msra.mxu0 %v1286
    %1314 = vmatprep.subr.mxu0 0.0
    %1315 = vmatpush1.msra.mxu0 %v1287
    %1316 = vmatprep.subr.mxu0 0.0
    %1317 = vmatpush1.msra.mxu0 %v1288
    %1318 = vmatprep.subr.mxu0 0.0
    %1319 = vmatpush1.msra.mxu0 %v1289
    %1320 = vmatprep.subr.mxu0 0.0
    %1321 = vmatpush1.msra.mxu0 %v1290
    %1322 = vmatprep.subr.mxu0 0.0
    %1323 = vmatpush1.msra.mxu0 %v1291
    %1324 = vmatprep.subr.mxu0 0.0
    %1325 = vmatpush1.msra.mxu0 %v1292
    %1326 = vmatprep.subr.mxu0 0.0
    %1327 = vmatpush1.msra.mxu0 %v1293
    %1328 = vmatprep.subr.mxu0 0.0
    %1329 = vmatpush1.msra.mxu0 %v1294
    %1330 = vmatprep.subr.mxu0 0.0
    %1331 = vmatpush1.msra.mxu0 %v1295
    %1332 = vmatprep.subr.mxu0 0.0
    %1333 = vmatpush1.msra.mxu0 %v1296
    %1334 = vmatprep.subr.mxu0 0.0
    %1335 = vmatpush1.msra.mxu0 %v1297
    %1336 = vmatprep.subr.mxu0 0.0
    %1337 = vmatpush1.msra.mxu0 %v1298
    %1338 = vmatprep.subr.mxu0 0.0
    %1339 = vmatpush1.msra.mxu0 %v1299
    %1340 = vmatprep.subr.mxu0 0.0
    %1341 = vmatpush1.msra.mxu0 %v1300
    %1342 = vmatprep.subr.mxu0 0.0
    %1343 = vmatpush1.msra.mxu0 %v1301
    %1344 = vmatprep.subr.mxu0 0.0
    %1345 = vmatpush1.msra.mxu0 %v1302
    %1346 = vmatprep.subr.mxu0 0.0
    %1347 = vmatpush1.msra.mxu0 %v1303
    %1348 = vmatprep.subr.mxu0 0.0
    %1349 = vmatpush1.msra.mxu0 %v1304
    %1350 = vmatprep.subr.mxu0 0.0
    %1351 = vmatpush1.msra.mxu0 %v1305
    %1352 = vmatprep.subr.mxu0 0.0
    %1353 = vmatpush1.msra.mxu0 %v1306
    %1354 = vmatprep.subr.mxu0 0.0
    %1355 = vmatpush1.msra.mxu0 %v1307
    %1356 = vmatprep.subr.mxu0 0.0
    %1357 = vmatpush1.msra.mxu0 0.0
    %1358 = vmatprep.subr.mxu0 0.0
    %1359 = vmatpush1.msra.mxu0 0.0
    %1360 = vmatprep.subr.mxu0 0.0
    %1361 = vmatpush1.msra.mxu0 0.0
    %1362 = vmatprep.subr.mxu0 0.0
    %1363 = vmatpush1.msra.mxu0 0.0
    %1364 = vmatprep.subr.mxu0 0.0
    %1365 = vmatpush1.msra.mxu0 0.0
    %1366 = vmatprep.subr.mxu0 0.0
    %1367 = vmatpush1.msra.mxu0 0.0
    %1368 = vmatprep.subr.mxu0 0.0
    %1369 = vmatpush1.msra.mxu0 0.0
    %1370 = vmatprep.subr.mxu0 0.0
    %1371 = vmatpush1.msra.mxu0 0.0
    %1372 = vmatprep.mubr.f32.mxu0 %v481
    %1373 = vmatmul.mubr.f32.gmra.mrb[0].mxu0 %v319
    %v1374 = vpop.f32.mrb[0].mxu0
    %v1375 = vadd.f32 0.0, %v1374
    %v1376 = vpop.f32.mrb[0].mxu0
    %1377 = vmatprep.mubr.f32.mxu0 %v484
    %1378 = vmatmul.mubr.f32.gmra.mrb[0].mxu0 %v321
    %v1379 = vpop.f32.mrb[0].mxu0
    %v1380 = vadd.f32 0.0, %v1379
    %v1381 = vpop.f32.mrb[0].mxu0
    %1382 = vmatprep.mubr.f32.mxu0 %v487
    %1383 = vmatmul.mubr.f32.gmra.mrb[0].mxu0 %v323
    %v1384 = vpop.f32.mrb[0].mxu0
    %v1385 = vadd.f32 0.0, %v1384
    %v1386 = vpop.f32.mrb[0].mxu0
    %1387 = vmatprep.mubr.f32.mxu0 %v490
    %1388 = vmatmul.mubr.f32.gmra.mrb[0].mxu0 %v325
    %v1389 = vpop.f32.mrb[0].mxu0
    %v1390 = vadd.f32 0.0, %v1389
    %v1391 = vpop.f32.mrb[0].mxu0
    %1392 = vmatprep.mubr.f32.mxu0 %v493
    %1393 = vmatmul.mubr.f32.gmra.mrb[0].mxu0 %v327
    %v1394 = vpop.f32.mrb[0].mxu0
    %v1395 = vadd.f32 0.0, %v1394
    %v1396 = vpop.f32.mrb[0].mxu0
    %1397 = vmatprep.mubr.f32.mxu0 %v496
    %1398 = vmatmul.mubr.f32.gmra.mrb[0].mxu0 %v329
    %v1399 = vpop.f32.mrb[0].mxu0
    %v1400 = vadd.f32 0.0, %v1399
    %v1401 = vpop.f32.mrb[0].mxu0
    %1402 = vmatprep.mubr.f32.mxu0 %v499
    %1403 = vmatmul.mubr.f32.gmra.mrb[0].mxu0 %v331
    %v1404 = vpop.f32.mrb[0].mxu0
    %v1405 = vadd.f32 0.0, %v1404
    %v1406 = vpop.f32.mrb[0].mxu0
    %1407 = vmatprep.mubr.f32.mxu0 %v502
    %1408 = vmatmul.mubr.f32.gmra.mrb[0].mxu0 %v333
    %v1409 = vpop.f32.mrb[0].mxu0
    %v1410 = vadd.f32 0.0, %v1409
    %v1411 = vpop.f32.mrb[0].mxu0
    %1412 = vmatprep.mubr.f32.mxu0 %v505
    %1413 = vmatmul.mubr.f32.gmra.mrb[0].mxu0 %v335
    %v1414 = vpop.f32.mrb[0].mxu0
    %v1415 = vadd.f32 0.0, %v1414
    %v1416 = vpop.f32.mrb[0].mxu0
    %1417 = vmatprep.mubr.f32.mxu0 %v508
    %1418 = vmatmul.mubr.f32.gmra.mrb[0].mxu0 %v337
    %v1419 = vpop.f32.mrb[0].mxu0
    %v1420 = vadd.f32 0.0, %v1419
    %v1421 = vpop.f32.mrb[0].mxu0
    %1422 = vmatprep.mubr.f32.mxu0 %v511
    %1423 = vmatmul.mubr.f32.gmra.mrb[0].mxu0 %v339
    %v1424 = vpop.f32.mrb[0].mxu0
    %v1425 = vadd.f32 0.0, %v1424
    %v1426 = vpop.f32.mrb[0].mxu0
    %1427 = vmatprep.mubr.f32.mxu0 %v514
    %1428 = vmatmul.mubr.f32.gmra.mrb[0].mxu0 %v341
    %v1429 = vpop.f32.mrb[0].mxu0
    %v1430 = vadd.f32 0.0, %v1429
    %v1431 = vpop.f32.mrb[0].mxu0
    %1432 = vmatprep.mubr.f32.mxu0 %v517
    %1433 = vmatmul.mubr.f32.gmra.mrb[0].mxu0 %v343
    %v1434 = vpop.f32.mrb[0].mxu0
    %v1435 = vadd.f32 0.0, %v1434
    %v1436 = vpop.f32.mrb[0].mxu0
    %1437 = vmatprep.mubr.f32.mxu0 %v520
    %1438 = vmatmul.mubr.f32.gmra.mrb[0].mxu0 %v345
    %v1439 = vpop.f32.mrb[0].mxu0
    %v1440 = vadd.f32 0.0, %v1439
    %v1441 = vpop.f32.mrb[0].mxu0
    %1442 = vmatprep.mubr.f32.mxu0 %v523
    %1443 = vmatmul.mubr.f32.gmra.mrb[0].mxu0 %v347
    %v1444 = vpop.f32.mrb[0].mxu0
    %v1445 = vadd.f32 0.0, %v1444
    %v1446 = vpop.f32.mrb[0].mxu0
    %1447 = vmatprep.mubr.f32.mxu0 %v526
    %1448 = vmatmul.mubr.f32.gmra.mrb[0].mxu0 %v349
    %v1449 = vpop.f32.mrb[0].mxu0
    %v1450 = vadd.f32 0.0, %v1449
    %v1451 = vpop.f32.mrb[0].mxu0
    %1452 = vmatprep.mubr.f32.mxu0 %v529
    %1453 = vmatmul.mubr.f32.gmra.mrb[0].mxu0 %v351
    %v1454 = vpop.f32.mrb[0].mxu0
    %v1455 = vadd.f32 0.0, %v1454
    %v1456 = vpop.f32.mrb[0].mxu0
    %1457 = vdwg.mxu0
    %v1459 = vsel %vm357, %v1375, 0
    %v1462 = vsel %vm357, %v1380, 0
    %v1465 = vsel %vm357, %v1385, 0
    %v1468 = vsel %vm357, %v1390, 0
    %v1471 = vsel %vm357, %v1395, 0
    %v1474 = vsel %vm357, %v1400, 0
    %v1477 = vsel %vm357, %v1405, 0
    %v1480 = vsel %vm357, %v1410, 0
    %v1483 = vsel %vm357, %v1415, 0
    %v1486 = vsel %vm357, %v1420, 0
    %v1489 = vsel %vm357, %v1425, 0
    %v1492 = vsel %vm357, %v1430, 0
    %v1495 = vsel %vm357, %v1435, 0
    %v1498 = vsel %vm357, %v1440, 0
    %v1501 = vsel %vm357, %v1445, 0
    %v1504 = vsel %vm357, %v1450, 0
    %v1507 = vsel %vm357, %v1455, 0
    %1509 = vmatprep.subr.mxu0 0.0
    %1510 = vmatpush1.msra.mxu0 %v353
    %1511 = vmatprep.subr.mxu0 0.0
    %1512 = vmatpush1.msra.mxu0 %v354
    %1513 = vmatprep.subr.mxu0 0.0
    %1514 = vmatpush1.msra.mxu0 %v355
    %1515 = vmatprep.subr.mxu0 0.0
    %1516 = vmatpush1.msra.mxu0 %v356
    %1517 = vmatprep.subr.mxu0 0.0
    %1518 = vmatpush1.msra.mxu0 0.0
    %1519 = vmatprep.subr.mxu0 0.0
    %1520 = vmatpush1.msra.mxu0 0.0
    %1521 = vmatprep.subr.mxu0 0.0
    %1522 = vmatpush1.msra.mxu0 0.0
    %1523 = vmatprep.subr.mxu0 0.0
    %1524 = vmatpush1.msra.mxu0 0.0
    %1525 = vmatprep.subr.mxu0 0.0
    %1526 = vmatpush1.msra.mxu0 0.0
    %1527 = vmatprep.subr.mxu0 0.0
    %1528 = vmatpush1.msra.mxu0 0.0
    %1529 = vmatprep.subr.mxu0 0.0
    %1530 = vmatpush1.msra.mxu0 0.0
    %1531 = vmatprep.subr.mxu0 0.0
    %1532 = vmatpush1.msra.mxu0 0.0
    %1533 = vmatprep.subr.mxu0 0.0
    %1534 = vmatpush1.msra.mxu0 0.0
    %1535 = vmatprep.subr.mxu0 0.0
    %1536 = vmatpush1.msra.mxu0 0.0
    %1537 = vmatprep.subr.mxu0 0.0
    %1538 = vmatpush1.msra.mxu0 0.0
    %1539 = vmatprep.subr.mxu0 0.0
    %1540 = vmatpush1.msra.mxu0 0.0
    %1541 = vmatprep.subr.mxu0 0.0
    %1542 = vmatpush1.msra.mxu0 0.0
    %1543 = vmatprep.subr.mxu0 0.0
    %1544 = vmatpush1.msra.mxu0 0.0
    %1545 = vmatprep.subr.mxu0 0.0
    %1546 = vmatpush1.msra.mxu0 0.0
    %1547 = vmatprep.subr.mxu0 0.0
    %1548 = vmatpush1.msra.mxu0 0.0
    %1549 = vmatprep.subr.mxu0 0.0
    %1550 = vmatpush1.msra.mxu0 0.0
    %1551 = vmatprep.subr.mxu0 0.0
    %1552 = vmatpush1.msra.mxu0 0.0
    %1553 = vmatprep.subr.mxu0 0.0
    %1554 = vmatpush1.msra.mxu0 0.0
    %1555 = vmatprep.subr.mxu0 0.0
    %1556 = vmatpush1.msra.mxu0 0.0
    %1557 = vmatprep.subr.mxu0 0.0
    %1558 = vmatpush1.msra.mxu0 0.0
    %1559 = vmatprep.subr.mxu0 0.0
    %1560 = vmatpush1.msra.mxu0 0.0
    %1561 = vmatprep.subr.mxu0 0.0
    %1562 = vmatpush1.msra.mxu0 0.0
    %1563 = vmatprep.subr.mxu0 0.0
    %1564 = vmatpush1.msra.mxu0 0.0
    %1565 = vmatprep.subr.mxu0 0.0
    %1566 = vmatpush1.msra.mxu0 0.0
    %1567 = vmatprep.subr.mxu0 0.0
    %1568 = vmatpush1.msra.mxu0 0.0
    %1569 = vmatprep.subr.mxu0 0.0
    %1570 = vmatpush1.msra.mxu0 0.0
    %1571 = vmatprep.subr.mxu0 0.0
    %1572 = vmatpush1.msra.mxu0 0.0
    %1573 = vmatprep.mubr.f32.mxu0 0.0
    %1574 = vmatmul.mubr.f32.gmra.mrb[0].mxu0 %v1459
    %v1575 = vpop.f32.mrb[0].mxu0
    %v1576 = vadd.f32 0.0, %v1575
    %v1577 = vpop.f32.mrb[0].mxu0
    %1578 = vmatprep.mubr.f32.mxu0 0.0
    %1579 = vmatmul.mubr.f32.gmra.mrb[0].mxu0 %v1462
    %v1580 = vpop.f32.mrb[0].mxu0
    %v1581 = vadd.f32 0.0, %v1580
    %v1582 = vpop.f32.mrb[0].mxu0
    %1583 = vmatprep.mubr.f32.mxu0 0.0
    %1584 = vmatmul.mubr.f32.gmra.mrb[0].mxu0 %v1465
    %v1585 = vpop.f32.mrb[0].mxu0
    %v1586 = vadd.f32 0.0, %v1585
    %v1587 = vpop.f32.mrb[0].mxu0
    %1588 = vmatprep.mubr.f32.mxu0 0.0
    %1589 = vmatmul.mubr.f32.gmra.mrb[0].mxu0 %v1468
    %v1590 = vpop.f32.mrb[0].mxu0
    %v1591 = vadd.f32 0.0, %v1590
    %v1592 = vpop.f32.mrb[0].mxu0
    %1593 = vmatprep.mubr.f32.mxu0 0.0
    %1594 = vmatmul.mubr.f32.gmra.mrb[0].mxu0 %v1471
    %v1595 = vpop.f32.mrb[0].mxu0
    %v1596 = vadd.f32 0.0, %v1595
    %v1597 = vpop.f32.mrb[0].mxu0
    %1598 = vmatprep.mubr.f32.mxu0 0.0
    %1599 = vmatmul.mubr.f32.gmra.mrb[0].mxu0 %v1474
    %v1600 = vpop.f32.mrb[0].mxu0
    %v1601 = vadd.f32 0.0, %v1600
    %v1602 = vpop.f32.mrb[0].mxu0
    %1603 = vmatprep.mubr.f32.mxu0 0.0
    %1604 = vmatmul.mubr.f32.gmra.mrb[0].mxu0 %v1477
    %v1605 = vpop.f32.mrb[0].mxu0
    %v1606 = vadd.f32 0.0, %v1605
    %v1607 = vpop.f32.mrb[0].mxu0
    %1608 = vmatprep.mubr.f32.mxu0 0.0
    %1609 = vmatmul.mubr.f32.gmra.mrb[0].mxu0 %v1480
    %v1610 = vpop.f32.mrb[0].mxu0
    %v1611 = vadd.f32 0.0, %v1610
    %v1612 = vpop.f32.mrb[0].mxu0
    %1613 = vmatprep.mubr.f32.mxu0 0.0
    %1614 = vmatmul.mubr.f32.gmra.mrb[0].mxu0 %v1483
    %v1615 = vpop.f32.mrb[0].mxu0
    %v1616 = vadd.f32 0.0, %v1615
    %v1617 = vpop.f32.mrb[0].mxu0
    %1618 = vmatprep.mubr.f32.mxu0 0.0
    %1619 = vmatmul.mubr.f32.gmra.mrb[0].mxu0 %v1486
    %v1620 = vpop.f32.mrb[0].mxu0
    %v1621 = vadd.f32 0.0, %v1620
    %v1622 = vpop.f32.mrb[0].mxu0
    %1623 = vmatprep.mubr.f32.mxu0 0.0
    %1624 = vmatmul.mubr.f32.gmra.mrb[0].mxu0 %v1489
    %v1625 = vpop.f32.mrb[0].mxu0
    %v1626 = vadd.f32 0.0, %v1625
    %v1627 = vpop.f32.mrb[0].mxu0
    %1628 = vmatprep.mubr.f32.mxu0 0.0
    %1629 = vmatmul.mubr.f32.gmra.mrb[0].mxu0 %v1492
    %v1630 = vpop.f32.mrb[0].mxu0
    %v1631 = vadd.f32 0.0, %v1630
    %v1632 = vpop.f32.mrb[0].mxu0
    %1633 = vmatprep.mubr.f32.mxu0 0.0
    %1634 = vmatmul.mubr.f32.gmra.mrb[0].mxu0 %v1495
    %v1635 = vpop.f32.mrb[0].mxu0
    %v1636 = vadd.f32 0.0, %v1635
    %v1637 = vpop.f32.mrb[0].mxu0
    %1638 = vmatprep.mubr.f32.mxu0 0.0
    %1639 = vmatmul.mubr.f32.gmra.mrb[0].mxu0 %v1498
    %v1640 = vpop.f32.mrb[0].mxu0
    %v1641 = vadd.f32 0.0, %v1640
    %v1642 = vpop.f32.mrb[0].mxu0
    %1643 = vmatprep.mubr.f32.mxu0 0.0
    %1644 = vmatmul.mubr.f32.gmra.mrb[0].mxu0 %v1501
    %v1645 = vpop.f32.mrb[0].mxu0
    %v1646 = vadd.f32 0.0, %v1645
    %v1647 = vpop.f32.mrb[0].mxu0
    %1648 = vmatprep.mubr.f32.mxu0 0.0
    %1649 = vmatmul.mubr.f32.gmra.mrb[0].mxu0 %v1504
    %v1650 = vpop.f32.mrb[0].mxu0
    %v1651 = vadd.f32 0.0, %v1650
    %v1652 = vpop.f32.mrb[0].mxu0
    %1653 = vmatprep.mubr.f32.mxu0 0.0
    %1654 = vmatmul.mubr.f32.gmra.mrb[0].mxu0 %v1507
    %v1655 = vpop.f32.mrb[0].mxu0
    %v1656 = vadd.f32 0.0, %v1655
    %v1657 = vpop.f32.mrb[0].mxu0
    %1658 = vdwg.mxu0
    %v1659 = vsub.f32 %v1576, %v1233
    %v1660 = vsub.f32 %v1581, %v1234
    %v1661 = vsub.f32 %v1586, %v1235
    %v1662 = vsub.f32 %v1591, %v1236
    %v1663 = vsub.f32 %v1596, %v1237
    %v1664 = vsub.f32 %v1601, %v1238
    %v1665 = vsub.f32 %v1606, %v1239
    %v1666 = vsub.f32 %v1611, %v1240
    %v1667 = vsub.f32 %v1616, %v1241
    %v1668 = vsub.f32 %v1621, %v1242
    %v1669 = vsub.f32 %v1626, %v1243
    %v1670 = vsub.f32 %v1631, %v1244
    %v1671 = vsub.f32 %v1636, %v1245
    %v1672 = vsub.f32 %v1641, %v1246
    %v1673 = vsub.f32 %v1646, %v1247
    %v1674 = vsub.f32 %v1651, %v1248
    %v1675 = vsub.f32 %v1656, %v1249
    %v1676 = vmul.f32 %v295, %v295
    %v1677 = vmul.f32 %v296, %v296
    %v1678 = vmul.f32 %v297, %v297
    %v1679 = vmul.f32 %v298, %v298
    %v1680 = vmul.f32 %v299, %v299
    %v1681 = vmul.f32 %v300, %v300
    %v1682 = vmul.f32 %v301, %v301
    %v1683 = vmul.f32 %v302, %v302
    %v1684 = vmul.f32 %v303, %v303
    %v1685 = vmul.f32 %v304, %v304
    %v1686 = vmul.f32 %v305, %v305
    %v1687 = vmul.f32 %v306, %v306
    %v1688 = vmul.f32 %v307, %v307
    %v1689 = vmul.f32 %v308, %v308
    %v1690 = vmul.f32 %v309, %v309
    %v1691 = vmul.f32 %v310, %v310
    %v1692 = vmul.f32 %v311, %v311
    %v1693 = vmul.f32 %v312, %v312
    %v1694 = vmul.f32 %v313, %v313
    %v1695 = vmul.f32 %v314, %v314
    %v1696 = vmul.f32 %v315, %v315
    %v1697 = vmul.f32 %v316, %v316
    %v1698 = vmul.f32 %v317, %v317
    %v1699 = vmul.f32 %v318, %v318
    %1700 = vmatprep.subr.mxu0 0.0
    %1701 = vmatpush1.msra.mxu0 %v1676
    %1702 = vmatprep.subr.mxu0 0.0
    %1703 = vmatpush1.msra.mxu0 %v1677
    %1704 = vmatprep.subr.mxu0 0.0
    %1705 = vmatpush1.msra.mxu0 %v1678
    %1706 = vmatprep.subr.mxu0 0.0
    %1707 = vmatpush1.msra.mxu0 %v1679
    %1708 = vmatprep.subr.mxu0 0.0
    %1709 = vmatpush1.msra.mxu0 %v1680
    %1710 = vmatprep.subr.mxu0 0.0
    %1711 = vmatpush1.msra.mxu0 %v1681
    %1712 = vmatprep.subr.mxu0 0.0
    %1713 = vmatpush1.msra.mxu0 %v1682
    %1714 = vmatprep.subr.mxu0 0.0
    %1715 = vmatpush1.msra.mxu0 %v1683
    %1716 = vmatprep.subr.mxu0 0.0
    %1717 = vmatpush1.msra.mxu0 %v1684
    %1718 = vmatprep.subr.mxu0 0.0
    %1719 = vmatpush1.msra.mxu0 %v1685
    %1720 = vmatprep.subr.mxu0 0.0
    %1721 = vmatpush1.msra.mxu0 %v1686
    %1722 = vmatprep.subr.mxu0 0.0
    %1723 = vmatpush1.msra.mxu0 %v1687
    %1724 = vmatprep.subr.mxu0 0.0
    %1725 = vmatpush1.msra.mxu0 %v1688
    %1726 = vmatprep.subr.mxu0 0.0
    %1727 = vmatpush1.msra.mxu0 %v1689
    %1728 = vmatprep.subr.mxu0 0.0
    %1729 = vmatpush1.msra.mxu0 %v1690
    %1730 = vmatprep.subr.mxu0 0.0
    %1731 = vmatpush1.msra.mxu0 %v1691
    %1732 = vmatprep.subr.mxu0 0.0
    %1733 = vmatpush1.msra.mxu0 %v1692
    %1734 = vmatprep.subr.mxu0 0.0
    %1735 = vmatpush1.msra.mxu0 %v1693
    %1736 = vmatprep.subr.mxu0 0.0
    %1737 = vmatpush1.msra.mxu0 %v1694
    %1738 = vmatprep.subr.mxu0 0.0
    %1739 = vmatpush1.msra.mxu0 %v1695
    %1740 = vmatprep.subr.mxu0 0.0
    %1741 = vmatpush1.msra.mxu0 %v1696
    %1742 = vmatprep.subr.mxu0 0.0
    %1743 = vmatpush1.msra.mxu0 %v1697
    %1744 = vmatprep.subr.mxu0 0.0
    %1745 = vmatpush1.msra.mxu0 %v1698
    %1746 = vmatprep.subr.mxu0 0.0
    %1747 = vmatpush1.msra.mxu0 %v1699
    %1748 = vmatprep.subr.mxu0 0.0
    %1749 = vmatpush1.msra.mxu0 0.0
    %1750 = vmatprep.subr.mxu0 0.0
    %1751 = vmatpush1.msra.mxu0 0.0
    %1752 = vmatprep.subr.mxu0 0.0
    %1753 = vmatpush1.msra.mxu0 0.0
    %1754 = vmatprep.subr.mxu0 0.0
    %1755 = vmatpush1.msra.mxu0 0.0
    %1756 = vmatprep.subr.mxu0 0.0
    %1757 = vmatpush1.msra.mxu0 0.0
    %1758 = vmatprep.subr.mxu0 0.0
    %1759 = vmatpush1.msra.mxu0 0.0
    %1760 = vmatprep.subr.mxu0 0.0
    %1761 = vmatpush1.msra.mxu0 0.0
    %1762 = vmatprep.subr.mxu0 0.0
    %1763 = vmatpush1.msra.mxu0 0.0
    %1764 = vmatprep.mubr.f32.mxu0 %v481
    %1765 = vmatmul.mubr.f32.gmra.mrb[0].mxu0 %v319
    %v1766 = vpop.f32.mrb[0].mxu0
    %v1767 = vadd.f32 0.0, %v1766
    %v1768 = vpop.f32.mrb[0].mxu0
    %1769 = vmatprep.mubr.f32.mxu0 %v484
    %1770 = vmatmul.mubr.f32.gmra.mrb[0].mxu0 %v321
    %v1771 = vpop.f32.mrb[0].mxu0
    %v1772 = vadd.f32 0.0, %v1771
    %v1773 = vpop.f32.mrb[0].mxu0
    %1774 = vmatprep.mubr.f32.mxu0 %v487
    %1775 = vmatmul.mubr.f32.gmra.mrb[0].mxu0 %v323
    %v1776 = vpop.f32.mrb[0].mxu0
    %v1777 = vadd.f32 0.0, %v1776
    %v1778 = vpop.f32.mrb[0].mxu0
    %1779 = vmatprep.mubr.f32.mxu0 %v490
    %1780 = vmatmul.mubr.f32.gmra.mrb[0].mxu0 %v325
    %v1781 = vpop.f32.mrb[0].mxu0
    %v1782 = vadd.f32 0.0, %v1781
    %v1783 = vpop.f32.mrb[0].mxu0
    %1784 = vmatprep.mubr.f32.mxu0 %v493
    %1785 = vmatmul.mubr.f32.gmra.mrb[0].mxu0 %v327
    %v1786 = vpop.f32.mrb[0].mxu0
    %v1787 = vadd.f32 0.0, %v1786
    %v1788 = vpop.f32.mrb[0].mxu0
    %1789 = vmatprep.mubr.f32.mxu0 %v496
    %1790 = vmatmul.mubr.f32.gmra.mrb[0].mxu0 %v329
    %v1791 = vpop.f32.mrb[0].mxu0
    %v1792 = vadd.f32 0.0, %v1791
    %v1793 = vpop.f32.mrb[0].mxu0
    %1794 = vmatprep.mubr.f32.mxu0 %v499
    %1795 = vmatmul.mubr.f32.gmra.mrb[0].mxu0 %v331
    %v1796 = vpop.f32.mrb[0].mxu0
    %v1797 = vadd.f32 0.0, %v1796
    %v1798 = vpop.f32.mrb[0].mxu0
    %1799 = vmatprep.mubr.f32.mxu0 %v502
    %1800 = vmatmul.mubr.f32.gmra.mrb[0].mxu0 %v333
    %v1801 = vpop.f32.mrb[0].mxu0
    %v1802 = vadd.f32 0.0, %v1801
    %v1803 = vpop.f32.mrb[0].mxu0
    %1804 = vmatprep.mubr.f32.mxu0 %v505
    %1805 = vmatmul.mubr.f32.gmra.mrb[0].mxu0 %v335
    %v1806 = vpop.f32.mrb[0].mxu0
    %v1807 = vadd.f32 0.0, %v1806
    %v1808 = vpop.f32.mrb[0].mxu0
    %1809 = vmatprep.mubr.f32.mxu0 %v508
    %1810 = vmatmul.mubr.f32.gmra.mrb[0].mxu0 %v337
    %v1811 = vpop.f32.mrb[0].mxu0
    %v1812 = vadd.f32 0.0, %v1811
    %v1813 = vpop.f32.mrb[0].mxu0
    %1814 = vmatprep.mubr.f32.mxu0 %v511
    %1815 = vmatmul.mubr.f32.gmra.mrb[0].mxu0 %v339
    %v1816 = vpop.f32.mrb[0].mxu0
    %v1817 = vadd.f32 0.0, %v1816
    %v1818 = vpop.f32.mrb[0].mxu0
    %1819 = vmatprep.mubr.f32.mxu0 %v514
    %1820 = vmatmul.mubr.f32.gmra.mrb[0].mxu0 %v341
    %v1821 = vpop.f32.mrb[0].mxu0
    %v1822 = vadd.f32 0.0, %v1821
    %v1823 = vpop.f32.mrb[0].mxu0
    %1824 = vmatprep.mubr.f32.mxu0 %v517
    %1825 = vmatmul.mubr.f32.gmra.mrb[0].mxu0 %v343
    %v1826 = vpop.f32.mrb[0].mxu0
    %v1827 = vadd.f32 0.0, %v1826
    %v1828 = vpop.f32.mrb[0].mxu0
    %1829 = vmatprep.mubr.f32.mxu0 %v520
    %1830 = vmatmul.mubr.f32.gmra.mrb[0].mxu0 %v345
    %v1831 = vpop.f32.mrb[0].mxu0
    %v1832 = vadd.f32 0.0, %v1831
    %v1833 = vpop.f32.mrb[0].mxu0
    %1834 = vmatprep.mubr.f32.mxu0 %v523
    %1835 = vmatmul.mubr.f32.gmra.mrb[0].mxu0 %v347
    %v1836 = vpop.f32.mrb[0].mxu0
    %v1837 = vadd.f32 0.0, %v1836
    %v1838 = vpop.f32.mrb[0].mxu0
    %1839 = vmatprep.mubr.f32.mxu0 %v526
    %1840 = vmatmul.mubr.f32.gmra.mrb[0].mxu0 %v349
    %v1841 = vpop.f32.mrb[0].mxu0
    %v1842 = vadd.f32 0.0, %v1841
    %v1843 = vpop.f32.mrb[0].mxu0
    %1844 = vmatprep.mubr.f32.mxu0 %v529
    %1845 = vmatmul.mubr.f32.gmra.mrb[0].mxu0 %v351
    %v1846 = vpop.f32.mrb[0].mxu0
    %v1847 = vadd.f32 0.0, %v1846
    %v1848 = vpop.f32.mrb[0].mxu0
    %1849 = vdwg.mxu0
    %v1851 = vsel %vm357, %v1767, 0
    %v1854 = vsel %vm357, %v1772, 0
    %v1857 = vsel %vm357, %v1777, 0
    %v1860 = vsel %vm357, %v1782, 0
    %v1863 = vsel %vm357, %v1787, 0
    %v1866 = vsel %vm357, %v1792, 0
    %v1869 = vsel %vm357, %v1797, 0
    %v1872 = vsel %vm357, %v1802, 0
    %v1875 = vsel %vm357, %v1807, 0
    %v1878 = vsel %vm357, %v1812, 0
    %v1881 = vsel %vm357, %v1817, 0
    %v1884 = vsel %vm357, %v1822, 0
    %v1887 = vsel %vm357, %v1827, 0
    %v1890 = vsel %vm357, %v1832, 0
    %v1893 = vsel %vm357, %v1837, 0
    %v1896 = vsel %vm357, %v1842, 0
    %v1899 = vsel %vm357, %v1847, 0
    %1901 = vmatprep.subr.mxu0 0.0
    %1902 = vmatpush1.msra.mxu0 %v353
    %1903 = vmatprep.subr.mxu0 0.0
    %1904 = vmatpush1.msra.mxu0 %v354
    %1905 = vmatprep.subr.mxu0 0.0
    %1906 = vmatpush1.msra.mxu0 %v355
    %1907 = vmatprep.subr.mxu0 0.0
    %1908 = vmatpush1.msra.mxu0 %v356
    %1909 = vmatprep.subr.mxu0 0.0
    %1910 = vmatpush1.msra.mxu0 0.0
    %1911 = vmatprep.subr.mxu0 0.0
    %1912 = vmatpush1.msra.mxu0 0.0
    %1913 = vmatprep.subr.mxu0 0.0
    %1914 = vmatpush1.msra.mxu0 0.0
    %1915 = vmatprep.subr.mxu0 0.0
    %1916 = vmatpush1.msra.mxu0 0.0
    %1917 = vmatprep.subr.mxu0 0.0
    %1918 = vmatpush1.msra.mxu0 0.0
    %1919 = vmatprep.subr.mxu0 0.0
    %1920 = vmatpush1.msra.mxu0 0.0
    %1921 = vmatprep.subr.mxu0 0.0
    %1922 = vmatpush1.msra.mxu0 0.0
    %1923 = vmatprep.subr.mxu0 0.0
    %1924 = vmatpush1.msra.mxu0 0.0
    %1925 = vmatprep.subr.mxu0 0.0
    %1926 = vmatpush1.msra.mxu0 0.0
    %1927 = vmatprep.subr.mxu0 0.0
    %1928 = vmatpush1.msra.mxu0 0.0
    %1929 = vmatprep.subr.mxu0 0.0
    %1930 = vmatpush1.msra.mxu0 0.0
    %1931 = vmatprep.subr.mxu0 0.0
    %1932 = vmatpush1.msra.mxu0 0.0
    %1933 = vmatprep.subr.mxu0 0.0
    %1934 = vmatpush1.msra.mxu0 0.0
    %1935 = vmatprep.subr.mxu0 0.0
    %1936 = vmatpush1.msra.mxu0 0.0
    %1937 = vmatprep.subr.mxu0 0.0
    %1938 = vmatpush1.msra.mxu0 0.0
    %1939 = vmatprep.subr.mxu0 0.0
    %1940 = vmatpush1.msra.mxu0 0.0
    %1941 = vmatprep.subr.mxu0 0.0
    %1942 = vmatpush1.msra.mxu0 0.0
    %1943 = vmatprep.subr.mxu0 0.0
    %1944 = vmatpush1.msra.mxu0 0.0
    %1945 = vmatprep.subr.mxu0 0.0
    %1946 = vmatpush1.msra.mxu0 0.0
    %1947 = vmatprep.subr.mxu0 0.0
    %1948 = vmatpush1.msra.mxu0 0.0
    %1949 = vmatprep.subr.mxu0 0.0
    %1950 = vmatpush1.msra.mxu0 0.0
    %1951 = vmatprep.subr.mxu0 0.0
    %1952 = vmatpush1.msra.mxu0 0.0
    %1953 = vmatprep.subr.mxu0 0.0
    %1954 = vmatpush1.msra.mxu0 0.0
    %1955 = vmatprep.subr.mxu0 0.0
    %1956 = vmatpush1.msra.mxu0 0.0
    %1957 = vmatprep.subr.mxu0 0.0
    %1958 = vmatpush1.msra.mxu0 0.0
    %1959 = vmatprep.subr.mxu0 0.0
    %1960 = vmatpush1.msra.mxu0 0.0
    %1961 = vmatprep.subr.mxu0 0.0
    %1962 = vmatpush1.msra.mxu0 0.0
    %1963 = vmatprep.subr.mxu0 0.0
    %1964 = vmatpush1.msra.mxu0 0.0
    %1965 = vmatprep.mubr.f32.mxu0 0.0
    %1966 = vmatmul.mubr.f32.gmra.mrb[0].mxu0 %v1851
    %v1967 = vpop.f32.mrb[0].mxu0
    %v1968 = vadd.f32 0.0, %v1967
    %v1969 = vpop.f32.mrb[0].mxu0
    %1970 = vmatprep.mubr.f32.mxu0 0.0
    %1971 = vmatmul.mubr.f32.gmra.mrb[0].mxu0 %v1854
    %v1972 = vpop.f32.mrb[0].mxu0
    %v1973 = vadd.f32 0.0, %v1972
    %v1974 = vpop.f32.mrb[0].mxu0
    %1975 = vmatprep.mubr.f32.mxu0 0.0
    %1976 = vmatmul.mubr.f32.gmra.mrb[0].mxu0 %v1857
    %v1977 = vpop.f32.mrb[0].mxu0
    %v1978 = vadd.f32 0.0, %v1977
    %v1979 = vpop.f32.mrb[0].mxu0
    %1980 = vmatprep.mubr.f32.mxu0 0.0
    %1981 = vmatmul.mubr.f32.gmra.mrb[0].mxu0 %v1860
    %v1982 = vpop.f32.mrb[0].mxu0
    %v1983 = vadd.f32 0.0, %v1982
    %v1984 = vpop.f32.mrb[0].mxu0
    %1985 = vmatprep.mubr.f32.mxu0 0.0
    %1986 = vmatmul.mubr.f32.gmra.mrb[0].mxu0 %v1863
    %v1987 = vpop.f32.mrb[0].mxu0
    %v1988 = vadd.f32 0.0, %v1987
    %v1989 = vpop.f32.mrb[0].mxu0
    %1990 = vmatprep.mubr.f32.mxu0 0.0
    %1991 = vmatmul.mubr.f32.gmra.mrb[0].mxu0 %v1866
    %v1992 = vpop.f32.mrb[0].mxu0
    %v1993 = vadd.f32 0.0, %v1992
    %v1994 = vpop.f32.mrb[0].mxu0
    %1995 = vmatprep.mubr.f32.mxu0 0.0
    %1996 = vmatmul.mubr.f32.gmra.mrb[0].mxu0 %v1869
    %v1997 = vpop.f32.mrb[0].mxu0
    %v1998 = vadd.f32 0.0, %v1997
    %v1999 = vpop.f32.mrb[0].mxu0
    %2000 = vmatprep.mubr.f32.mxu0 0.0
    %2001 = vmatmul.mubr.f32.gmra.mrb[0].mxu0 %v1872
    %v2002 = vpop.f32.mrb[0].mxu0
    %v2003 = vadd.f32 0.0, %v2002
    %v2004 = vpop.f32.mrb[0].mxu0
    %2005 = vmatprep.mubr.f32.mxu0 0.0
    %2006 = vmatmul.mubr.f32.gmra.mrb[0].mxu0 %v1875
    %v2007 = vpop.f32.mrb[0].mxu0
    %v2008 = vadd.f32 0.0, %v2007
    %v2009 = vpop.f32.mrb[0].mxu0
    %2010 = vmatprep.mubr.f32.mxu0 0.0
    %2011 = vmatmul.mubr.f32.gmra.mrb[0].mxu0 %v1878
    %v2012 = vpop.f32.mrb[0].mxu0
    %v2013 = vadd.f32 0.0, %v2012
    %v2014 = vpop.f32.mrb[0].mxu0
    %2015 = vmatprep.mubr.f32.mxu0 0.0
    %2016 = vmatmul.mubr.f32.gmra.mrb[0].mxu0 %v1881
    %v2017 = vpop.f32.mrb[0].mxu0
    %v2018 = vadd.f32 0.0, %v2017
    %v2019 = vpop.f32.mrb[0].mxu0
    %2020 = vmatprep.mubr.f32.mxu0 0.0
    %2021 = vmatmul.mubr.f32.gmra.mrb[0].mxu0 %v1884
    %v2022 = vpop.f32.mrb[0].mxu0
    %v2023 = vadd.f32 0.0, %v2022
    %v2024 = vpop.f32.mrb[0].mxu0
    %2025 = vmatprep.mubr.f32.mxu0 0.0
    %2026 = vmatmul.mubr.f32.gmra.mrb[0].mxu0 %v1887
    %v2027 = vpop.f32.mrb[0].mxu0
    %v2028 = vadd.f32 0.0, %v2027
    %v2029 = vpop.f32.mrb[0].mxu0
    %2030 = vmatprep.mubr.f32.mxu0 0.0
    %2031 = vmatmul.mubr.f32.gmra.mrb[0].mxu0 %v1890
    %v2032 = vpop.f32.mrb[0].mxu0
    %v2033 = vadd.f32 0.0, %v2032
    %v2034 = vpop.f32.mrb[0].mxu0
    %2035 = vmatprep.mubr.f32.mxu0 0.0
    %2036 = vmatmul.mubr.f32.gmra.mrb[0].mxu0 %v1893
    %v2037 = vpop.f32.mrb[0].mxu0
    %v2038 = vadd.f32 0.0, %v2037
    %v2039 = vpop.f32.mrb[0].mxu0
    %2040 = vmatprep.mubr.f32.mxu0 0.0
    %2041 = vmatmul.mubr.f32.gmra.mrb[0].mxu0 %v1896
    %v2042 = vpop.f32.mrb[0].mxu0
    %v2043 = vadd.f32 0.0, %v2042
    %v2044 = vpop.f32.mrb[0].mxu0
    %2045 = vmatprep.mubr.f32.mxu0 0.0
    %2046 = vmatmul.mubr.f32.gmra.mrb[0].mxu0 %v1899
    %v2047 = vpop.f32.mrb[0].mxu0
    %v2048 = vadd.f32 0.0, %v2047
    %v2049 = vpop.f32.mrb[0].mxu0
    %2050 = vdwg.mxu0
    %v2051 = vsub.f32 %v1968, %v1250
    %v2052 = vsub.f32 %v1973, %v1251
    %v2053 = vsub.f32 %v1978, %v1252
    %v2054 = vsub.f32 %v1983, %v1253
    %v2055 = vsub.f32 %v1988, %v1254
    %v2056 = vsub.f32 %v1993, %v1255
    %v2057 = vsub.f32 %v1998, %v1256
    %v2058 = vsub.f32 %v2003, %v1257
    %v2059 = vsub.f32 %v2008, %v1258
    %v2060 = vsub.f32 %v2013, %v1259
    %v2061 = vsub.f32 %v2018, %v1260
    %v2062 = vsub.f32 %v2023, %v1261
    %v2063 = vsub.f32 %v2028, %v1262
    %v2064 = vsub.f32 %v2033, %v1263
    %v2065 = vsub.f32 %v2038, %v1264
    %v2066 = vsub.f32 %v2043, %v1265
    %v2067 = vsub.f32 %v2048, %v1266
    %v2068 = vmul.f32 %v271, %v295
    %v2069 = vmul.f32 %v272, %v296
    %v2070 = vmul.f32 %v273, %v297
    %v2071 = vmul.f32 %v274, %v298
    %v2072 = vmul.f32 %v275, %v299
    %v2073 = vmul.f32 %v276, %v300
    %v2074 = vmul.f32 %v277, %v301
    %v2075 = vmul.f32 %v278, %v302
    %v2076 = vmul.f32 %v279, %v303
    %v2077 = vmul.f32 %v280, %v304
    %v2078 = vmul.f32 %v281, %v305
    %v2079 = vmul.f32 %v282, %v306
    %v2080 = vmul.f32 %v283, %v307
    %v2081 = vmul.f32 %v284, %v308
    %v2082 = vmul.f32 %v285, %v309
    %v2083 = vmul.f32 %v286, %v310
    %v2084 = vmul.f32 %v287, %v311
    %v2085 = vmul.f32 %v288, %v312
    %v2086 = vmul.f32 %v289, %v313
    %v2087 = vmul.f32 %v290, %v314
    %v2088 = vmul.f32 %v291, %v315
    %v2089 = vmul.f32 %v292, %v316
    %v2090 = vmul.f32 %v293, %v317
    %v2091 = vmul.f32 %v294, %v318
    %2092 = vmatprep.subr.mxu0 0.0
    %2093 = vmatpush1.msra.mxu0 %v2068
    %2094 = vmatprep.subr.mxu0 0.0
    %2095 = vmatpush1.msra.mxu0 %v2069
    %2096 = vmatprep.subr.mxu0 0.0
    %2097 = vmatpush1.msra.mxu0 %v2070
    %2098 = vmatprep.subr.mxu0 0.0
    %2099 = vmatpush1.msra.mxu0 %v2071
    %2100 = vmatprep.subr.mxu0 0.0
    %2101 = vmatpush1.msra.mxu0 %v2072
    %2102 = vmatprep.subr.mxu0 0.0
    %2103 = vmatpush1.msra.mxu0 %v2073
    %2104 = vmatprep.subr.mxu0 0.0
    %2105 = vmatpush1.msra.mxu0 %v2074
    %2106 = vmatprep.subr.mxu0 0.0
    %2107 = vmatpush1.msra.mxu0 %v2075
    %2108 = vmatprep.subr.mxu0 0.0
    %2109 = vmatpush1.msra.mxu0 %v2076
    %2110 = vmatprep.subr.mxu0 0.0
    %2111 = vmatpush1.msra.mxu0 %v2077
    %2112 = vmatprep.subr.mxu0 0.0
    %2113 = vmatpush1.msra.mxu0 %v2078
    %2114 = vmatprep.subr.mxu0 0.0
    %2115 = vmatpush1.msra.mxu0 %v2079
    %2116 = vmatprep.subr.mxu0 0.0
    %2117 = vmatpush1.msra.mxu0 %v2080
    %2118 = vmatprep.subr.mxu0 0.0
    %2119 = vmatpush1.msra.mxu0 %v2081
    %2120 = vmatprep.subr.mxu0 0.0
    %2121 = vmatpush1.msra.mxu0 %v2082
    %2122 = vmatprep.subr.mxu0 0.0
    %2123 = vmatpush1.msra.mxu0 %v2083
    %2124 = vmatprep.subr.mxu0 0.0
    %2125 = vmatpush1.msra.mxu0 %v2084
    %2126 = vmatprep.subr.mxu0 0.0
    %2127 = vmatpush1.msra.mxu0 %v2085
    %2128 = vmatprep.subr.mxu0 0.0
    %2129 = vmatpush1.msra.mxu0 %v2086
    %2130 = vmatprep.subr.mxu0 0.0
    %2131 = vmatpush1.msra.mxu0 %v2087
    %2132 = vmatprep.subr.mxu0 0.0
    %2133 = vmatpush1.msra.mxu0 %v2088
    %2134 = vmatprep.subr.mxu0 0.0
    %2135 = vmatpush1.msra.mxu0 %v2089
    %2136 = vmatprep.subr.mxu0 0.0
    %2137 = vmatpush1.msra.mxu0 %v2090
    %2138 = vmatprep.subr.mxu0 0.0
    %2139 = vmatpush1.msra.mxu0 %v2091
    %2140 = vmatprep.subr.mxu0 0.0
    %2141 = vmatpush1.msra.mxu0 0.0
    %2142 = vmatprep.subr.mxu0 0.0
    %2143 = vmatpush1.msra.mxu0 0.0
    %2144 = vmatprep.subr.mxu0 0.0
    %2145 = vmatpush1.msra.mxu0 0.0
    %2146 = vmatprep.subr.mxu0 0.0
    %2147 = vmatpush1.msra.mxu0 0.0
    %2148 = vmatprep.subr.mxu0 0.0
    %2149 = vmatpush1.msra.mxu0 0.0
    %2150 = vmatprep.subr.mxu0 0.0
    %2151 = vmatpush1.msra.mxu0 0.0
    %2152 = vmatprep.subr.mxu0 0.0
    %2153 = vmatpush1.msra.mxu0 0.0
    %2154 = vmatprep.subr.mxu0 0.0
    %2155 = vmatpush1.msra.mxu0 0.0
    %2156 = vmatprep.mubr.f32.mxu0 %v481
    %2157 = vmatmul.mubr.f32.gmra.mrb[0].mxu0 %v319
    %v2158 = vpop.f32.mrb[0].mxu0
    %v2159 = vadd.f32 0.0, %v2158
    %v2160 = vpop.f32.mrb[0].mxu0
    %2161 = vmatprep.mubr.f32.mxu0 %v484
    %2162 = vmatmul.mubr.f32.gmra.mrb[0].mxu0 %v321
    %v2163 = vpop.f32.mrb[0].mxu0
    %v2164 = vadd.f32 0.0, %v2163
    %v2165 = vpop.f32.mrb[0].mxu0
    %2166 = vmatprep.mubr.f32.mxu0 %v487
    %2167 = vmatmul.mubr.f32.gmra.mrb[0].mxu0 %v323
    %v2168 = vpop.f32.mrb[0].mxu0
    %v2169 = vadd.f32 0.0, %v2168
    %v2170 = vpop.f32.mrb[0].mxu0
    %2171 = vmatprep.mubr.f32.mxu0 %v490
    %2172 = vmatmul.mubr.f32.gmra.mrb[0].mxu0 %v325
    %v2173 = vpop.f32.mrb[0].mxu0
    %v2174 = vadd.f32 0.0, %v2173
    %v2175 = vpop.f32.mrb[0].mxu0
    %2176 = vmatprep.mubr.f32.mxu0 %v493
    %2177 = vmatmul.mubr.f32.gmra.mrb[0].mxu0 %v327
    %v2178 = vpop.f32.mrb[0].mxu0
    %v2179 = vadd.f32 0.0, %v2178
    %v2180 = vpop.f32.mrb[0].mxu0
    %2181 = vmatprep.mubr.f32.mxu0 %v496
    %2182 = vmatmul.mubr.f32.gmra.mrb[0].mxu0 %v329
    %v2183 = vpop.f32.mrb[0].mxu0
    %v2184 = vadd.f32 0.0, %v2183
    %v2185 = vpop.f32.mrb[0].mxu0
    %2186 = vmatprep.mubr.f32.mxu0 %v499
    %2187 = vmatmul.mubr.f32.gmra.mrb[0].mxu0 %v331
    %v2188 = vpop.f32.mrb[0].mxu0
    %v2189 = vadd.f32 0.0, %v2188
    %v2190 = vpop.f32.mrb[0].mxu0
    %2191 = vmatprep.mubr.f32.mxu0 %v502
    %2192 = vmatmul.mubr.f32.gmra.mrb[0].mxu0 %v333
    %v2193 = vpop.f32.mrb[0].mxu0
    %v2194 = vadd.f32 0.0, %v2193
    %v2195 = vpop.f32.mrb[0].mxu0
    %2196 = vmatprep.mubr.f32.mxu0 %v505
    %2197 = vmatmul.mubr.f32.gmra.mrb[0].mxu0 %v335
    %v2198 = vpop.f32.mrb[0].mxu0
    %v2199 = vadd.f32 0.0, %v2198
    %v2200 = vpop.f32.mrb[0].mxu0
    %2201 = vmatprep.mubr.f32.mxu0 %v508
    %2202 = vmatmul.mubr.f32.gmra.mrb[0].mxu0 %v337
    %v2203 = vpop.f32.mrb[0].mxu0
    %v2204 = vadd.f32 0.0, %v2203
    %v2205 = vpop.f32.mrb[0].mxu0
    %2206 = vmatprep.mubr.f32.mxu0 %v511
    %2207 = vmatmul.mubr.f32.gmra.mrb[0].mxu0 %v339
    %v2208 = vpop.f32.mrb[0].mxu0
    %v2209 = vadd.f32 0.0, %v2208
    %v2210 = vpop.f32.mrb[0].mxu0
    %2211 = vmatprep.mubr.f32.mxu0 %v514
    %2212 = vmatmul.mubr.f32.gmra.mrb[0].mxu0 %v341
    %v2213 = vpop.f32.mrb[0].mxu0
    %v2214 = vadd.f32 0.0, %v2213
    %v2215 = vpop.f32.mrb[0].mxu0
    %2216 = vmatprep.mubr.f32.mxu0 %v517
    %2217 = vmatmul.mubr.f32.gmra.mrb[0].mxu0 %v343
    %v2218 = vpop.f32.mrb[0].mxu0
    %v2219 = vadd.f32 0.0, %v2218
    %v2220 = vpop.f32.mrb[0].mxu0
    %2221 = vmatprep.mubr.f32.mxu0 %v520
    %2222 = vmatmul.mubr.f32.gmra.mrb[0].mxu0 %v345
    %v2223 = vpop.f32.mrb[0].mxu0
    %v2224 = vadd.f32 0.0, %v2223
    %v2225 = vpop.f32.mrb[0].mxu0
    %2226 = vmatprep.mubr.f32.mxu0 %v523
    %2227 = vmatmul.mubr.f32.gmra.mrb[0].mxu0 %v347
    %v2228 = vpop.f32.mrb[0].mxu0
    %v2229 = vadd.f32 0.0, %v2228
    %v2230 = vpop.f32.mrb[0].mxu0
    %2231 = vmatprep.mubr.f32.mxu0 %v526
    %2232 = vmatmul.mubr.f32.gmra.mrb[0].mxu0 %v349
    %v2233 = vpop.f32.mrb[0].mxu0
    %v2234 = vadd.f32 0.0, %v2233
    %v2235 = vpop.f32.mrb[0].mxu0
    %2236 = vmatprep.mubr.f32.mxu0 %v529
    %2237 = vmatmul.mubr.f32.gmra.mrb[0].mxu0 %v351
    %v2238 = vpop.f32.mrb[0].mxu0
    %v2239 = vadd.f32 0.0, %v2238
    %v2240 = vpop.f32.mrb[0].mxu0
    %2241 = vdwg.mxu0
    %v2243 = vsel %vm357, %v2159, 0
    %v2246 = vsel %vm357, %v2164, 0
    %v2249 = vsel %vm357, %v2169, 0
    %v2252 = vsel %vm357, %v2174, 0
    %v2255 = vsel %vm357, %v2179, 0
    %v2258 = vsel %vm357, %v2184, 0
    %v2261 = vsel %vm357, %v2189, 0
    %v2264 = vsel %vm357, %v2194, 0
    %v2267 = vsel %vm357, %v2199, 0
    %v2270 = vsel %vm357, %v2204, 0
    %v2273 = vsel %vm357, %v2209, 0
    %v2276 = vsel %vm357, %v2214, 0
    %v2279 = vsel %vm357, %v2219, 0
    %v2282 = vsel %vm357, %v2224, 0
    %v2285 = vsel %vm357, %v2229, 0
    %v2288 = vsel %vm357, %v2234, 0
    %v2291 = vsel %vm357, %v2239, 0
    %2293 = vmatprep.subr.mxu0 0.0
    %2294 = vmatpush1.msra.mxu0 %v353
    %2295 = vmatprep.subr.mxu0 0.0
    %2296 = vmatpush1.msra.mxu0 %v354
    %2297 = vmatprep.subr.mxu0 0.0
    %2298 = vmatpush1.msra.mxu0 %v355
    %2299 = vmatprep.subr.mxu0 0.0
    %2300 = vmatpush1.msra.mxu0 %v356
    %2301 = vmatprep.subr.mxu0 0.0
    %2302 = vmatpush1.msra.mxu0 0.0
    %2303 = vmatprep.subr.mxu0 0.0
    %2304 = vmatpush1.msra.mxu0 0.0
    %2305 = vmatprep.subr.mxu0 0.0
    %2306 = vmatpush1.msra.mxu0 0.0
    %2307 = vmatprep.subr.mxu0 0.0
    %2308 = vmatpush1.msra.mxu0 0.0
    %2309 = vmatprep.subr.mxu0 0.0
    %2310 = vmatpush1.msra.mxu0 0.0
    %2311 = vmatprep.subr.mxu0 0.0
    %2312 = vmatpush1.msra.mxu0 0.0
    %2313 = vmatprep.subr.mxu0 0.0
    %2314 = vmatpush1.msra.mxu0 0.0
    %2315 = vmatprep.subr.mxu0 0.0
    %2316 = vmatpush1.msra.mxu0 0.0
    %2317 = vmatprep.subr.mxu0 0.0
    %2318 = vmatpush1.msra.mxu0 0.0
    %2319 = vmatprep.subr.mxu0 0.0
    %2320 = vmatpush1.msra.mxu0 0.0
    %2321 = vmatprep.subr.mxu0 0.0
    %2322 = vmatpush1.msra.mxu0 0.0
    %2323 = vmatprep.subr.mxu0 0.0
    %2324 = vmatpush1.msra.mxu0 0.0
    %2325 = vmatprep.subr.mxu0 0.0
    %2326 = vmatpush1.msra.mxu0 0.0
    %2327 = vmatprep.subr.mxu0 0.0
    %2328 = vmatpush1.msra.mxu0 0.0
    %2329 = vmatprep.subr.mxu0 0.0
    %2330 = vmatpush1.msra.mxu0 0.0
    %2331 = vmatprep.subr.mxu0 0.0
    %2332 = vmatpush1.msra.mxu0 0.0
    %2333 = vmatprep.subr.mxu0 0.0
    %2334 = vmatpush1.msra.mxu0 0.0
    %2335 = vmatprep.subr.mxu0 0.0
    %2336 = vmatpush1.msra.mxu0 0.0
    %2337 = vmatprep.subr.mxu0 0.0
    %2338 = vmatpush1.msra.mxu0 0.0
    %2339 = vmatprep.subr.mxu0 0.0
    %2340 = vmatpush1.msra.mxu0 0.0
    %2341 = vmatprep.subr.mxu0 0.0
    %2342 = vmatpush1.msra.mxu0 0.0
    %2343 = vmatprep.subr.mxu0 0.0
    %2344 = vmatpush1.msra.mxu0 0.0
    %2345 = vmatprep.subr.mxu0 0.0
    %2346 = vmatpush1.msra.mxu0 0.0
    %2347 = vmatprep.subr.mxu0 0.0
    %2348 = vmatpush1.msra.mxu0 0.0
    %2349 = vmatprep.subr.mxu0 0.0
    %2350 = vmatpush1.msra.mxu0 0.0
    %2351 = vmatprep.subr.mxu0 0.0
    %2352 = vmatpush1.msra.mxu0 0.0
    %2353 = vmatprep.subr.mxu0 0.0
    %2354 = vmatpush1.msra.mxu0 0.0
    %2355 = vmatprep.subr.mxu0 0.0
    %2356 = vmatpush1.msra.mxu0 0.0
    %2357 = vmatprep.mubr.f32.mxu0 0.0
    %2358 = vmatmul.mubr.f32.gmra.mrb[0].mxu0 %v2243
    %v2359 = vpop.f32.mrb[0].mxu0
    %v2360 = vadd.f32 0.0, %v2359
    %v2361 = vpop.f32.mrb[0].mxu0
    %2362 = vmatprep.mubr.f32.mxu0 0.0
    %2363 = vmatmul.mubr.f32.gmra.mrb[0].mxu0 %v2246
    %v2364 = vpop.f32.mrb[0].mxu0
    %v2365 = vadd.f32 0.0, %v2364
    %v2366 = vpop.f32.mrb[0].mxu0
    %2367 = vmatprep.mubr.f32.mxu0 0.0
    %2368 = vmatmul.mubr.f32.gmra.mrb[0].mxu0 %v2249
    %v2369 = vpop.f32.mrb[0].mxu0
    %v2370 = vadd.f32 0.0, %v2369
    %v2371 = vpop.f32.mrb[0].mxu0
    %2372 = vmatprep.mubr.f32.mxu0 0.0
    %2373 = vmatmul.mubr.f32.gmra.mrb[0].mxu0 %v2252
    %v2374 = vpop.f32.mrb[0].mxu0
    %v2375 = vadd.f32 0.0, %v2374
    %v2376 = vpop.f32.mrb[0].mxu0
    %2377 = vmatprep.mubr.f32.mxu0 0.0
    %2378 = vmatmul.mubr.f32.gmra.mrb[0].mxu0 %v2255
    %v2379 = vpop.f32.mrb[0].mxu0
    %v2380 = vadd.f32 0.0, %v2379
    %v2381 = vpop.f32.mrb[0].mxu0
    %2382 = vmatprep.mubr.f32.mxu0 0.0
    %2383 = vmatmul.mubr.f32.gmra.mrb[0].mxu0 %v2258
    %v2384 = vpop.f32.mrb[0].mxu0
    %v2385 = vadd.f32 0.0, %v2384
    %v2386 = vpop.f32.mrb[0].mxu0
    %2387 = vmatprep.mubr.f32.mxu0 0.0
    %2388 = vmatmul.mubr.f32.gmra.mrb[0].mxu0 %v2261
    %v2389 = vpop.f32.mrb[0].mxu0
    %v2390 = vadd.f32 0.0, %v2389
    %v2391 = vpop.f32.mrb[0].mxu0
    %2392 = vmatprep.mubr.f32.mxu0 0.0
    %2393 = vmatmul.mubr.f32.gmra.mrb[0].mxu0 %v2264
    %v2394 = vpop.f32.mrb[0].mxu0
    %v2395 = vadd.f32 0.0, %v2394
    %v2396 = vpop.f32.mrb[0].mxu0
    %2397 = vmatprep.mubr.f32.mxu0 0.0
    %2398 = vmatmul.mubr.f32.gmra.mrb[0].mxu0 %v2267
    %v2399 = vpop.f32.mrb[0].mxu0
    %v2400 = vadd.f32 0.0, %v2399
    %v2401 = vpop.f32.mrb[0].mxu0
    %2402 = vmatprep.mubr.f32.mxu0 0.0
    %2403 = vmatmul.mubr.f32.gmra.mrb[0].mxu0 %v2270
    %v2404 = vpop.f32.mrb[0].mxu0
    %v2405 = vadd.f32 0.0, %v2404
    %v2406 = vpop.f32.mrb[0].mxu0
    %2407 = vmatprep.mubr.f32.mxu0 0.0
    %2408 = vmatmul.mubr.f32.gmra.mrb[0].mxu0 %v2273
    %v2409 = vpop.f32.mrb[0].mxu0
    %v2410 = vadd.f32 0.0, %v2409
    %v2411 = vpop.f32.mrb[0].mxu0
    %2412 = vmatprep.mubr.f32.mxu0 0.0
    %2413 = vmatmul.mubr.f32.gmra.mrb[0].mxu0 %v2276
    %v2414 = vpop.f32.mrb[0].mxu0
    %v2415 = vadd.f32 0.0, %v2414
    %v2416 = vpop.f32.mrb[0].mxu0
    %2417 = vmatprep.mubr.f32.mxu0 0.0
    %2418 = vmatmul.mubr.f32.gmra.mrb[0].mxu0 %v2279
    %v2419 = vpop.f32.mrb[0].mxu0
    %v2420 = vadd.f32 0.0, %v2419
    %v2421 = vpop.f32.mrb[0].mxu0
    %2422 = vmatprep.mubr.f32.mxu0 0.0
    %2423 = vmatmul.mubr.f32.gmra.mrb[0].mxu0 %v2282
    %v2424 = vpop.f32.mrb[0].mxu0
    %v2425 = vadd.f32 0.0, %v2424
    %v2426 = vpop.f32.mrb[0].mxu0
    %2427 = vmatprep.mubr.f32.mxu0 0.0
    %2428 = vmatmul.mubr.f32.gmra.mrb[0].mxu0 %v2285
    %v2429 = vpop.f32.mrb[0].mxu0
    %v2430 = vadd.f32 0.0, %v2429
    %v2431 = vpop.f32.mrb[0].mxu0
    %2432 = vmatprep.mubr.f32.mxu0 0.0
    %2433 = vmatmul.mubr.f32.gmra.mrb[0].mxu0 %v2288
    %v2434 = vpop.f32.mrb[0].mxu0
    %v2435 = vadd.f32 0.0, %v2434
    %v2436 = vpop.f32.mrb[0].mxu0
    %2437 = vmatprep.mubr.f32.mxu0 0.0
    %2438 = vmatmul.mubr.f32.gmra.mrb[0].mxu0 %v2291
    %v2439 = vpop.f32.mrb[0].mxu0
    %v2440 = vadd.f32 0.0, %v2439
    %v2441 = vpop.f32.mrb[0].mxu0
    %2442 = vdwg.mxu0
    %v2443 = vsub.f32 %v2360, %v1267
    %v2444 = vsub.f32 %v2365, %v1268
    %v2445 = vsub.f32 %v2370, %v1269
    %v2446 = vsub.f32 %v2375, %v1270
    %v2447 = vsub.f32 %v2380, %v1271
    %v2448 = vsub.f32 %v2385, %v1272
    %v2449 = vsub.f32 %v2390, %v1273
    %v2450 = vsub.f32 %v2395, %v1274
    %v2451 = vsub.f32 %v2400, %v1275
    %v2452 = vsub.f32 %v2405, %v1276
    %v2453 = vsub.f32 %v2410, %v1277
    %v2454 = vsub.f32 %v2415, %v1278
    %v2455 = vsub.f32 %v2420, %v1279
    %v2456 = vsub.f32 %v2425, %v1280
    %v2457 = vsub.f32 %v2430, %v1281
    %v2458 = vsub.f32 %v2435, %v1282
    %v2459 = vsub.f32 %v2440, %v1283
    %v2460 = vmul.f32 %v2443, 2.0
    %v2461 = vmul.f32 %v2444, 2.0
    %v2462 = vmul.f32 %v2445, 2.0
    %v2463 = vmul.f32 %v2446, 2.0
    %v2464 = vmul.f32 %v2447, 2.0
    %v2465 = vmul.f32 %v2448, 2.0
    %v2466 = vmul.f32 %v2449, 2.0
    %v2467 = vmul.f32 %v2450, 2.0
    %v2468 = vmul.f32 %v2451, 2.0
    %v2469 = vmul.f32 %v2452, 2.0
    %v2470 = vmul.f32 %v2453, 2.0
    %v2471 = vmul.f32 %v2454, 2.0
    %v2472 = vmul.f32 %v2455, 2.0
    %v2473 = vmul.f32 %v2456, 2.0
    %v2474 = vmul.f32 %v2457, 2.0
    %v2475 = vmul.f32 %v2458, 2.0
    %v2476 = vmul.f32 %v2459, 2.0
    %v2477 = vstv %s478
    %v2478 = vadd.f32 %v2460, %v2477
    %v2479 = vadd.f32 %v2461, %v2477
    %v2480 = vadd.f32 %v2462, %v2477
    %v2481 = vadd.f32 %v2463, %v2477
    %v2482 = vadd.f32 %v2464, %v2477
    %v2483 = vadd.f32 %v2465, %v2477
    %v2484 = vadd.f32 %v2466, %v2477
    %v2485 = vadd.f32 %v2467, %v2477
    %v2486 = vadd.f32 %v2468, %v2477
    %v2487 = vadd.f32 %v2469, %v2477
    %v2488 = vadd.f32 %v2470, %v2477
    %v2489 = vadd.f32 %v2471, %v2477
    %v2490 = vadd.f32 %v2472, %v2477
    %v2491 = vadd.f32 %v2473, %v2477
    %v2492 = vadd.f32 %v2474, %v2477
    %v2493 = vadd.f32 %v2475, %v2477
    %v2494 = vadd.f32 %v2476, %v2477
    %v2495 = vadd.f32 %v1659, %v2051
    %v2496 = vadd.f32 %v1660, %v2052
    %v2497 = vadd.f32 %v1661, %v2053
    %v2498 = vadd.f32 %v1662, %v2054
    %v2499 = vadd.f32 %v1663, %v2055
    %v2500 = vadd.f32 %v1664, %v2056
    %v2501 = vadd.f32 %v1665, %v2057
    %v2502 = vadd.f32 %v1666, %v2058
    %v2503 = vadd.f32 %v1667, %v2059
    %v2504 = vadd.f32 %v1668, %v2060
    %v2505 = vadd.f32 %v1669, %v2061
    %v2506 = vadd.f32 %v1670, %v2062
    %v2507 = vadd.f32 %v1671, %v2063
    %v2508 = vadd.f32 %v1672, %v2064
    %v2509 = vadd.f32 %v1673, %v2065
    %v2510 = vadd.f32 %v1674, %v2066
    %v2511 = vadd.f32 %v1675, %v2067
    %v2512 = vadd.f32 %v2495, %v2477
    %v2513 = vadd.f32 %v2496, %v2477
    %v2514 = vadd.f32 %v2497, %v2477
    %v2515 = vadd.f32 %v2498, %v2477
    %v2516 = vadd.f32 %v2499, %v2477
    %v2517 = vadd.f32 %v2500, %v2477
    %v2518 = vadd.f32 %v2501, %v2477
    %v2519 = vadd.f32 %v2502, %v2477
    %v2520 = vadd.f32 %v2503, %v2477
    %v2521 = vadd.f32 %v2504, %v2477
    %v2522 = vadd.f32 %v2505, %v2477
    %v2523 = vadd.f32 %v2506, %v2477
    %v2524 = vadd.f32 %v2507, %v2477
    %v2525 = vadd.f32 %v2508, %v2477
    %v2526 = vadd.f32 %v2509, %v2477
    %v2527 = vadd.f32 %v2510, %v2477
    %v2528 = vadd.f32 %v2511, %v2477
    %v2529 = vrcp.pop %v2512
    %v2530 = vmul.f32 %v2478, %v2529
    %v2531 = vrcp.pop %v2513
    %v2532 = vmul.f32 %v2479, %v2531
    %v2533 = vrcp.pop %v2514
    %v2534 = vmul.f32 %v2480, %v2533
    %v2535 = vrcp.pop %v2515
    %v2536 = vmul.f32 %v2481, %v2535
    %v2537 = vrcp.pop %v2516
    %v2538 = vmul.f32 %v2482, %v2537
    %v2539 = vrcp.pop %v2517
    %v2540 = vmul.f32 %v2483, %v2539
    %v2541 = vrcp.pop %v2518
    %v2542 = vmul.f32 %v2484, %v2541
    %v2543 = vrcp.pop %v2519
    %v2544 = vmul.f32 %v2485, %v2543
    %v2545 = vrcp.pop %v2520
    %v2546 = vmul.f32 %v2486, %v2545
    %v2547 = vrcp.pop %v2521
    %v2548 = vmul.f32 %v2487, %v2547
    %v2549 = vrcp.pop %v2522
    %v2550 = vmul.f32 %v2488, %v2549
    %v2551 = vrcp.pop %v2523
    %v2552 = vmul.f32 %v2489, %v2551
    %v2553 = vrcp.pop %v2524
    %v2554 = vmul.f32 %v2490, %v2553
    %v2555 = vrcp.pop %v2525
    %v2556 = vmul.f32 %v2491, %v2555
    %v2557 = vrcp.pop %v2526
    %v2558 = vmul.f32 %v2492, %v2557
    %v2559 = vrcp.pop %v2527
    %v2560 = vmul.f32 %v2493, %v2559
    %v2561 = vrcp.pop %v2528
    %v2562 = vmul.f32 %v2494, %v2561
    %vm2563 = vcmask 179200
    %v2564 = vsel %vm2563, %v2530, 0.0
    %v2565 = vsel %vm2563, %v2532, 0.0
    %v2566 = vadd.f32 %v2564, %v2565
    %v2567 = vsel %vm2563, %v2534, 0.0
    %v2568 = vadd.f32 %v2566, %v2567
    %v2569 = vsel %vm2563, %v2536, 0.0
    %v2570 = vadd.f32 %v2568, %v2569
    %v2571 = vsel %vm2563, %v2538, 0.0
    %v2572 = vadd.f32 %v2570, %v2571
    %v2573 = vsel %vm2563, %v2540, 0.0
    %v2574 = vadd.f32 %v2572, %v2573
    %v2575 = vsel %vm2563, %v2542, 0.0
    %v2576 = vadd.f32 %v2574, %v2575
    %v2577 = vsel %vm2563, %v2544, 0.0
    %v2578 = vadd.f32 %v2576, %v2577
    %v2579 = vsel %vm2563, %v2546, 0.0
    %v2580 = vadd.f32 %v2578, %v2579
    %v2581 = vsel %vm2563, %v2548, 0.0
    %v2582 = vadd.f32 %v2580, %v2581
    %v2583 = vsel %vm2563, %v2550, 0.0
    %v2584 = vadd.f32 %v2582, %v2583
    %v2585 = vsel %vm2563, %v2552, 0.0
    %v2586 = vadd.f32 %v2584, %v2585
    %v2587 = vsel %vm2563, %v2554, 0.0
    %v2588 = vadd.f32 %v2586, %v2587
    %v2589 = vsel %vm2563, %v2556, 0.0
    %v2590 = vadd.f32 %v2588, %v2589
    %v2591 = vsel %vm2563, %v2558, 0.0
    %v2592 = vadd.f32 %v2590, %v2591
    %v2593 = vsel %vm2563, %v2560, 0.0
    %v2594 = vadd.f32 %v2592, %v2593
    %vm2595 = vcmask 175104
    %v2596 = vsel %vm2595, %v2562, 0.0
    %v2597 = vadd.f32 %v2594, %v2596
    %2598 = vadd.xlane.f32.xlu0 %v2597
    %v2599 = vpop.xlane.xlu0 %2598
    %v2600 = vrot.slane %v2599, 4
    %v2601 = vadd.f32 %v2599, %v2600
    %v2602 = vrot.slane %v2601, 2
    %v2603 = vadd.f32 %v2601, %v2602
    %v2604 = vrot.slane %v2603, 1
    %v2605 = vadd.f32 %v2603, %v2604
    %s2606 = vtos %v2605
    %s2607 = smul.f32 %s2606, 0.00034435262
    %s2608 = sadd.f32 %s2607, 1e-15
    %v2609 = vmul.f32 %v1267, 2.0
    %v2610 = vmul.f32 %v1268, 2.0
    %v2611 = vmul.f32 %v1269, 2.0
    %v2612 = vmul.f32 %v1270, 2.0
    %v2613 = vmul.f32 %v1271, 2.0
    %v2614 = vmul.f32 %v1272, 2.0
    %v2615 = vmul.f32 %v1273, 2.0
    %v2616 = vmul.f32 %v1274, 2.0
    %v2617 = vmul.f32 %v1275, 2.0
    %v2618 = vmul.f32 %v1276, 2.0
    %v2619 = vmul.f32 %v1277, 2.0
    %v2620 = vmul.f32 %v1278, 2.0
    %v2621 = vmul.f32 %v1279, 2.0
    %v2622 = vmul.f32 %v1280, 2.0
    %v2623 = vmul.f32 %v1281, 2.0
    %v2624 = vmul.f32 %v1282, 2.0
    %v2625 = vmul.f32 %v1283, 2.0
    %v2626 = vstv %s476
    %v2627 = vadd.f32 %v2609, %v2626
    %v2628 = vadd.f32 %v2610, %v2626
    %v2629 = vadd.f32 %v2611, %v2626
    %v2630 = vadd.f32 %v2612, %v2626
    %v2631 = vadd.f32 %v2613, %v2626
    %v2632 = vadd.f32 %v2614, %v2626
    %v2633 = vadd.f32 %v2615, %v2626
    %v2634 = vadd.f32 %v2616, %v2626
    %v2635 = vadd.f32 %v2617, %v2626
    %v2636 = vadd.f32 %v2618, %v2626
    %v2637 = vadd.f32 %v2619, %v2626
    %v2638 = vadd.f32 %v2620, %v2626
    %v2639 = vadd.f32 %v2621, %v2626
    %v2640 = vadd.f32 %v2622, %v2626
    %v2641 = vadd.f32 %v2623, %v2626
    %v2642 = vadd.f32 %v2624, %v2626
    %v2643 = vadd.f32 %v2625, %v2626
    %v2644 = vmul.f32 %v2627, %v2478
    %v2645 = vmul.f32 %v2628, %v2479
    %v2646 = vmul.f32 %v2629, %v2480
    %v2647 = vmul.f32 %v2630, %v2481
    %v2648 = vmul.f32 %v2631, %v2482
    %v2649 = vmul.f32 %v2632, %v2483
    %v2650 = vmul.f32 %v2633, %v2484
    %v2651 = vmul.f32 %v2634, %v2485
    %v2652 = vmul.f32 %v2635, %v2486
    %v2653 = vmul.f32 %v2636, %v2487
    %v2654 = vmul.f32 %v2637, %v2488
    %v2655 = vmul.f32 %v2638, %v2489
    %v2656 = vmul.f32 %v2639, %v2490
    %v2657 = vmul.f32 %v2640, %v2491
    %v2658 = vmul.f32 %v2641, %v2492
    %v2659 = vmul.f32 %v2642, %v2493
    %v2660 = vmul.f32 %v2643, %v2494
    %v2661 = vadd.f32 %v1233, %v1250
    %v2662 = vadd.f32 %v1234, %v1251
    %v2663 = vadd.f32 %v1235, %v1252
    %v2664 = vadd.f32 %v1236, %v1253
    %v2665 = vadd.f32 %v1237, %v1254
    %v2666 = vadd.f32 %v1238, %v1255
    %v2667 = vadd.f32 %v1239, %v1256
    %v2668 = vadd.f32 %v1240, %v1257
    %v2669 = vadd.f32 %v1241, %v1258
    %v2670 = vadd.f32 %v1242, %v1259
    %v2671 = vadd.f32 %v1243, %v1260
    %v2672 = vadd.f32 %v1244, %v1261
    %v2673 = vadd.f32 %v1245, %v1262
    %v2674 = vadd.f32 %v1246, %v1263
    %v2675 = vadd.f32 %v1247, %v1264
    %v2676 = vadd.f32 %v1248, %v1265
    %v2677 = vadd.f32 %v1249, %v1266
    %v2678 = vadd.f32 %v2661, %v2626
    %v2679 = vadd.f32 %v2662, %v2626
    %v2680 = vadd.f32 %v2663, %v2626
    %v2681 = vadd.f32 %v2664, %v2626
    %v2682 = vadd.f32 %v2665, %v2626
    %v2683 = vadd.f32 %v2666, %v2626
    %v2684 = vadd.f32 %v2667, %v2626
    %v2685 = vadd.f32 %v2668, %v2626
    %v2686 = vadd.f32 %v2669, %v2626
    %v2687 = vadd.f32 %v2670, %v2626
    %v2688 = vadd.f32 %v2671, %v2626
    %v2689 = vadd.f32 %v2672, %v2626
    %v2690 = vadd.f32 %v2673, %v2626
    %v2691 = vadd.f32 %v2674, %v2626
    %v2692 = vadd.f32 %v2675, %v2626
    %v2693 = vadd.f32 %v2676, %v2626
    %v2694 = vadd.f32 %v2677, %v2626
    %v2695 = vmul.f32 %v2678, %v2512
    %v2696 = vmul.f32 %v2679, %v2513
    %v2697 = vmul.f32 %v2680, %v2514
    %v2698 = vmul.f32 %v2681, %v2515
    %v2699 = vmul.f32 %v2682, %v2516
    %v2700 = vmul.f32 %v2683, %v2517
    %v2701 = vmul.f32 %v2684, %v2518
    %v2702 = vmul.f32 %v2685, %v2519
    %v2703 = vmul.f32 %v2686, %v2520
    %v2704 = vmul.f32 %v2687, %v2521
    %v2705 = vmul.f32 %v2688, %v2522
    %v2706 = vmul.f32 %v2689, %v2523
    %v2707 = vmul.f32 %v2690, %v2524
    %v2708 = vmul.f32 %v2691, %v2525
    %v2709 = vmul.f32 %v2692, %v2526
    %v2710 = vmul.f32 %v2693, %v2527
    %v2711 = vmul.f32 %v2694, %v2528
    %v2712 = vadd.f32 %v2695, 1e-15
    %v2713 = vadd.f32 %v2696, 1e-15
    %v2714 = vadd.f32 %v2697, 1e-15
    %v2715 = vadd.f32 %v2698, 1e-15
    %v2716 = vadd.f32 %v2699, 1e-15
    %v2717 = vadd.f32 %v2700, 1e-15
    %v2718 = vadd.f32 %v2701, 1e-15
    %v2719 = vadd.f32 %v2702, 1e-15
    %v2720 = vadd.f32 %v2703, 1e-15
    %v2721 = vadd.f32 %v2704, 1e-15
    %v2722 = vadd.f32 %v2705, 1e-15
    %v2723 = vadd.f32 %v2706, 1e-15
    %v2724 = vadd.f32 %v2707, 1e-15
    %v2725 = vadd.f32 %v2708, 1e-15
    %v2726 = vadd.f32 %v2709, 1e-15
    %v2727 = vadd.f32 %v2710, 1e-15
    %v2728 = vadd.f32 %v2711, 1e-15
    %v2729 = vrcp.pop %v2712
    %v2730 = vmul.f32 %v2644, %v2729
    %v2731 = vrcp.pop %v2713
    %v2732 = vmul.f32 %v2645, %v2731
    %v2733 = vrcp.pop %v2714
    %v2734 = vmul.f32 %v2646, %v2733
    %v2735 = vrcp.pop %v2715
    %v2736 = vmul.f32 %v2647, %v2735
    %v2737 = vrcp.pop %v2716
    %v2738 = vmul.f32 %v2648, %v2737
    %v2739 = vrcp.pop %v2717
    %v2740 = vmul.f32 %v2649, %v2739
    %v2741 = vrcp.pop %v2718
    %v2742 = vmul.f32 %v2650, %v2741
    %v2743 = vrcp.pop %v2719
    %v2744 = vmul.f32 %v2651, %v2743
    %v2745 = vrcp.pop %v2720
    %v2746 = vmul.f32 %v2652, %v2745
    %v2747 = vrcp.pop %v2721
    %v2748 = vmul.f32 %v2653, %v2747
    %v2749 = vrcp.pop %v2722
    %v2750 = vmul.f32 %v2654, %v2749
    %v2751 = vrcp.pop %v2723
    %v2752 = vmul.f32 %v2655, %v2751
    %v2753 = vrcp.pop %v2724
    %v2754 = vmul.f32 %v2656, %v2753
    %v2755 = vrcp.pop %v2725
    %v2756 = vmul.f32 %v2657, %v2755
    %v2757 = vrcp.pop %v2726
    %v2758 = vmul.f32 %v2658, %v2757
    %v2759 = vrcp.pop %v2727
    %v2760 = vmul.f32 %v2659, %v2759
    %v2761 = vrcp.pop %v2728
    %v2762 = vmul.f32 %v2660, %v2761
    %v2763 = vsel %vm2563, %v2730, 0.0
    %v2764 = vsel %vm2563, %v2732, 0.0
    %v2765 = vadd.f32 %v2763, %v2764
    %v2766 = vsel %vm2563, %v2734, 0.0
    %v2767 = vadd.f32 %v2765, %v2766
    %v2768 = vsel %vm2563, %v2736, 0.0
    %v2769 = vadd.f32 %v2767, %v2768
    %v2770 = vsel %vm2563, %v2738, 0.0
    %v2771 = vadd.f32 %v2769, %v2770
    %v2772 = vsel %vm2563, %v2740, 0.0
    %v2773 = vadd.f32 %v2771, %v2772
    %v2774 = vsel %vm2563, %v2742, 0.0
    %v2775 = vadd.f32 %v2773, %v2774
    %v2776 = vsel %vm2563, %v2744, 0.0
    %v2777 = vadd.f32 %v2775, %v2776
    %v2778 = vsel %vm2563, %v2746, 0.0
    %v2779 = vadd.f32 %v2777, %v2778
    %v2780 = vsel %vm2563, %v2748, 0.0
    %v2781 = vadd.f32 %v2779, %v2780
    %v2782 = vsel %vm2563, %v2750, 0.0
    %v2783 = vadd.f32 %v2781, %v2782
    %v2784 = vsel %vm2563, %v2752, 0.0
    %v2785 = vadd.f32 %v2783, %v2784
    %v2786 = vsel %vm2563, %v2754, 0.0
    %v2787 = vadd.f32 %v2785, %v2786
    %v2788 = vsel %vm2563, %v2756, 0.0
    %v2789 = vadd.f32 %v2787, %v2788
    %v2790 = vsel %vm2563, %v2758, 0.0
    %v2791 = vadd.f32 %v2789, %v2790
    %v2792 = vsel %vm2563, %v2760, 0.0
    %v2793 = vadd.f32 %v2791, %v2792
    %v2794 = vsel %vm2595, %v2762, 0.0
    %v2795 = vadd.f32 %v2793, %v2794
    %2796 = vadd.xlane.f32.xlu0 %v2795
    %v2797 = vpop.xlane.xlu0 %2796
    %v2798 = vrot.slane %v2797, 4
    %v2799 = vadd.f32 %v2797, %v2798
    %v2800 = vrot.slane %v2799, 2
    %v2801 = vadd.f32 %v2799, %v2800
    %v2802 = vrot.slane %v2801, 1
    %v2803 = vadd.f32 %v2801, %v2802
    %s2804 = vtos %v2803
    %s2805 = smul.f32 %s2804, 0.00034435262
    %s2806 = scalar_lea.smem [#allocation28], 0
    %2807 = sst [smem:[%s2806]] %s2805
    %s2808 = scalar_lea.smem [#allocation28], 1
    %2809 = sst [smem:[%s2808]] %s2608
    %v2810 = vld [vmem:[#allocation22] sm:$0xff]
    %v2811 = vld [vmem:[#allocation22 + $0x8] sm:$0xff]
    %v2812 = vld [vmem:[#allocation22 + $0x10] sm:$0xff]
    %v2813 = vld [vmem:[#allocation22 + $0x18] sm:$0xff]
    %v2814 = vld [vmem:[#allocation22 + $0x20] sm:$0xff]
    %v2815 = vld [vmem:[#allocation22 + $0x28] sm:$0xff]
    %v2816 = vld [vmem:[#allocation22 + $0x30] sm:$0xff]
    %v2817 = vld [vmem:[#allocation22 + $0x38] sm:$0xff]
    %v2818 = vld [vmem:[#allocation22 + $0x40] sm:$0xff]
    %v2819 = vld [vmem:[#allocation22 + $0x48] sm:$0xff]
    %v2820 = vld [vmem:[#allocation22 + $0x50] sm:$0xff]
    %v2821 = vld [vmem:[#allocation22 + $0x58] sm:$0xff]
    %v2822 = vld [vmem:[#allocation22 + $0x60] sm:$0xff]
    %v2823 = vld [vmem:[#allocation22 + $0x68] sm:$0xff]
    %v2824 = vld [vmem:[#allocation22 + $0x70] sm:$0xff]
    %v2825 = vld [vmem:[#allocation22 + $0x78] sm:$0xff]
    %v2826 = vld [vmem:[#allocation22 + $0x80] sm:$0xff]
    %v2827 = vld [vmem:[#allocation22 + $0x88] sm:$0xff]
    %v2828 = vld [vmem:[#allocation22 + $0x90] sm:$0xff]
    %v2829 = vld [vmem:[#allocation22 + $0x98] sm:$0xff]
    %v2830 = vld [vmem:[#allocation22 + $0xa0] sm:$0xff]
    %v2831 = vld [vmem:[#allocation22 + $0xa8] sm:$0xff]
    %v2832 = vld [vmem:[#allocation22 + $0xb0] sm:$0xff]
    %v2833 = vld [vmem:[#allocation22 + $0xb8] sm:$0xff]
    %v2834 = vld [vmem:[#allocation23] sm:$0xff]
    %v2835 = vld [vmem:[#allocation23 + $0x8] sm:$0xff]
    %v2836 = vld [vmem:[#allocation23 + $0x10] sm:$0xff]
    %v2837 = vld [vmem:[#allocation23 + $0x18] sm:$0xff]
    %v2839 = vsel %vm479, %v2811, 0
    %v2842 = vsel %vm479, %v2813, 0
    %v2845 = vsel %vm479, %v2815, 0
    %v2848 = vsel %vm479, %v2817, 0
    %v2851 = vsel %vm479, %v2819, 0
    %v2854 = vsel %vm479, %v2821, 0
    %v2857 = vsel %vm479, %v2823, 0
    %v2860 = vsel %vm479, %v2825, 0
    %v2863 = vsel %vm479, %v2827, 0
    %v2866 = vsel %vm479, %v2829, 0
    %v2869 = vsel %vm479, %v2831, 0
    %v2872 = vsel %vm479, %v2833, 0
    %2874 = vmatprep.subr.mxu0 0.0
    %2875 = vmatpush1.msra.mxu0 %v271
    %2876 = vmatprep.subr.mxu0 0.0
    %2877 = vmatpush1.msra.mxu0 %v272
    %2878 = vmatprep.subr.mxu0 0.0
    %2879 = vmatpush1.msra.mxu0 %v273
    %2880 = vmatprep.subr.mxu0 0.0
    %2881 = vmatpush1.msra.mxu0 %v274
    %2882 = vmatprep.subr.mxu0 0.0
    %2883 = vmatpush1.msra.mxu0 %v275
    %2884 = vmatprep.subr.mxu0 0.0
    %2885 = vmatpush1.msra.mxu0 %v276
    %2886 = vmatprep.subr.mxu0 0.0
    %2887 = vmatpush1.msra.mxu0 %v277
    %2888 = vmatprep.subr.mxu0 0.0
    %2889 = vmatpush1.msra.mxu0 %v278
    %2890 = vmatprep.subr.mxu0 0.0
    %2891 = vmatpush1.msra.mxu0 %v279
    %2892 = vmatprep.subr.mxu0 0.0
    %2893 = vmatpush1.msra.mxu0 %v280
    %2894 = vmatprep.subr.mxu0 0.0
    %2895 = vmatpush1.msra.mxu0 %v281
    %2896 = vmatprep.subr.mxu0 0.0
    %2897 = vmatpush1.msra.mxu0 %v282
    %2898 = vmatprep.subr.mxu0 0.0
    %2899 = vmatpush1.msra.mxu0 %v283
    %2900 = vmatprep.subr.mxu0 0.0
    %2901 = vmatpush1.msra.mxu0 %v284
    %2902 = vmatprep.subr.mxu0 0.0
    %2903 = vmatpush1.msra.mxu0 %v285
    %2904 = vmatprep.subr.mxu0 0.0
    %2905 = vmatpush1.msra.mxu0 %v286
    %2906 = vmatprep.subr.mxu0 0.0
    %2907 = vmatpush1.msra.mxu0 %v287
    %2908 = vmatprep.subr.mxu0 0.0
    %2909 = vmatpush1.msra.mxu0 %v288
    %2910 = vmatprep.subr.mxu0 0.0
    %2911 = vmatpush1.msra.mxu0 %v289
    %2912 = vmatprep.subr.mxu0 0.0
    %2913 = vmatpush1.msra.mxu0 %v290
    %2914 = vmatprep.subr.mxu0 0.0
    %2915 = vmatpush1.msra.mxu0 %v291
    %2916 = vmatprep.subr.mxu0 0.0
    %2917 = vmatpush1.msra.mxu0 %v292
    %2918 = vmatprep.subr.mxu0 0.0
    %2919 = vmatpush1.msra.mxu0 %v293
    %2920 = vmatprep.subr.mxu0 0.0
    %2921 = vmatpush1.msra.mxu0 %v294
    %2922 = vmatprep.subr.mxu0 0.0
    %2923 = vmatpush1.msra.mxu0 0.0
    %2924 = vmatprep.subr.mxu0 0.0
    %2925 = vmatpush1.msra.mxu0 0.0
    %2926 = vmatprep.subr.mxu0 0.0
    %2927 = vmatpush1.msra.mxu0 0.0
    %2928 = vmatprep.subr.mxu0 0.0
    %2929 = vmatpush1.msra.mxu0 0.0
    %2930 = vmatprep.subr.mxu0 0.0
    %2931 = vmatpush1.msra.mxu0 0.0
    %2932 = vmatprep.subr.mxu0 0.0
    %2933 = vmatpush1.msra.mxu0 0.0
    %2934 = vmatprep.subr.mxu0 0.0
    %2935 = vmatpush1.msra.mxu0 0.0
    %2936 = vmatprep.subr.mxu0 0.0
    %2937 = vmatpush1.msra.mxu0 0.0
    %2938 = vmatprep.mubr.f32.mxu0 %v2839
    %2939 = vmatmul.mubr.f32.gmra.mrb[0].mxu0 %v2810
    %v2940 = vpop.f32.mrb[0].mxu0
    %v2941 = vadd.f32 0.0, %v2940
    %v2942 = vpop.f32.mrb[0].mxu0
    %2943 = vmatprep.mubr.f32.mxu0 %v2842
    %2944 = vmatmul.mubr.f32.gmra.mrb[0].mxu0 %v2812
    %v2945 = vpop.f32.mrb[0].mxu0
    %v2946 = vadd.f32 0.0, %v2945
    %v2947 = vpop.f32.mrb[0].mxu0
    %2948 = vmatprep.mubr.f32.mxu0 %v2845
    %2949 = vmatmul.mubr.f32.gmra.mrb[0].mxu0 %v2814
    %v2950 = vpop.f32.mrb[0].mxu0
    %v2951 = vadd.f32 0.0, %v2950
    %v2952 = vpop.f32.mrb[0].mxu0
    %2953 = vmatprep.mubr.f32.mxu0 %v2848
    %2954 = vmatmul.mubr.f32.gmra.mrb[0].mxu0 %v2816
    %v2955 = vpop.f32.mrb[0].mxu0
    %v2956 = vadd.f32 0.0, %v2955
    %v2957 = vpop.f32.mrb[0].mxu0
    %2958 = vmatprep.mubr.f32.mxu0 %v2851
    %2959 = vmatmul.mubr.f32.gmra.mrb[0].mxu0 %v2818
    %v2960 = vpop.f32.mrb[0].mxu0
    %v2961 = vadd.f32 0.0, %v2960
    %v2962 = vpop.f32.mrb[0].mxu0
    %2963 = vmatprep.mubr.f32.mxu0 %v2854
    %2964 = vmatmul.mubr.f32.gmra.mrb[0].mxu0 %v2820
    %v2965 = vpop.f32.mrb[0].mxu0
    %v2966 = vadd.f32 0.0, %v2965
    %v2967 = vpop.f32.mrb[0].mxu0
    %2968 = vmatprep.mubr.f32.mxu0 %v2857
    %2969 = vmatmul.mubr.f32.gmra.mrb[0].mxu0 %v2822
    %v2970 = vpop.f32.mrb[0].mxu0
    %v2971 = vadd.f32 0.0, %v2970
    %v2972 = vpop.f32.mrb[0].mxu0
    %2973 = vmatprep.mubr.f32.mxu0 %v2860
    %2974 = vmatmul.mubr.f32.gmra.mrb[0].mxu0 %v2824
    %v2975 = vpop.f32.mrb[0].mxu0
    %v2976 = vadd.f32 0.0, %v2975
    %v2977 = vpop.f32.mrb[0].mxu0
    %2978 = vmatprep.mubr.f32.mxu0 %v2863
    %2979 = vmatmul.mubr.f32.gmra.mrb[0].mxu0 %v2826
    %v2980 = vpop.f32.mrb[0].mxu0
    %v2981 = vadd.f32 0.0, %v2980
    %v2982 = vpop.f32.mrb[0].mxu0
    %2983 = vmatprep.mubr.f32.mxu0 %v2866
    %2984 = vmatmul.mubr.f32.gmra.mrb[0].mxu0 %v2828
    %v2985 = vpop.f32.mrb[0].mxu0
    %v2986 = vadd.f32 0.0, %v2985
    %v2987 = vpop.f32.mrb[0].mxu0
    %2988 = vmatprep.mubr.f32.mxu0 %v2869
    %2989 = vmatmul.mubr.f32.gmra.mrb[0].mxu0 %v2830
    %v2990 = vpop.f32.mrb[0].mxu0
    %v2991 = vadd.f32 0.0, %v2990
    %v2992 = vpop.f32.mrb[0].mxu0
    %2993 = vmatprep.mubr.f32.mxu0 %v2872
    %2994 = vmatmul.mubr.f32.gmra.mrb[0].mxu0 %v2832
    %v2995 = vpop.f32.mrb[0].mxu0
    %v2996 = vadd.f32 0.0, %v2995
    %v2997 = vpop.f32.mrb[0].mxu0
    %2998 = vdwg.mxu0
    %v3000 = vsel %vm357, %v2941, 0
    %v3003 = vsel %vm357, %v2946, 0
    %v3006 = vsel %vm357, %v2951, 0
    %v3009 = vsel %vm357, %v2956, 0
    %v3012 = vsel %vm357, %v2961, 0
    %v3015 = vsel %vm357, %v2966, 0
    %v3018 = vsel %vm357, %v2971, 0
    %v3021 = vsel %vm357, %v2976, 0
    %v3024 = vsel %vm357, %v2981, 0
    %v3027 = vsel %vm357, %v2986, 0
    %v3030 = vsel %vm357, %v2991, 0
    %v3033 = vsel %vm357, %v2996, 0
    %3035 = vmatprep.subr.mxu0 0.0
    %3036 = vmatpush1.msra.mxu0 %v2834
    %3037 = vmatprep.subr.mxu0 0.0
    %3038 = vmatpush1.msra.mxu0 %v2835
    %3039 = vmatprep.subr.mxu0 0.0
    %3040 = vmatpush1.msra.mxu0 %v2836
    %3041 = vmatprep.subr.mxu0 0.0
    %3042 = vmatpush1.msra.mxu0 %v2837
    %3043 = vmatprep.subr.mxu0 0.0
    %3044 = vmatpush1.msra.mxu0 0.0
    %3045 = vmatprep.subr.mxu0 0.0
    %3046 = vmatpush1.msra.mxu0 0.0
    %3047 = vmatprep.subr.mxu0 0.0
    %3048 = vmatpush1.msra.mxu0 0.0
    %3049 = vmatprep.subr.mxu0 0.0
    %3050 = vmatpush1.msra.mxu0 0.0
    %3051 = vmatprep.subr.mxu0 0.0
    %3052 = vmatpush1.msra.mxu0 0.0
    %3053 = vmatprep.subr.mxu0 0.0
    %3054 = vmatpush1.msra.mxu0 0.0
    %3055 = vmatprep.subr.mxu0 0.0
    %3056 = vmatpush1.msra.mxu0 0.0
    %3057 = vmatprep.subr.mxu0 0.0
    %3058 = vmatpush1.msra.mxu0 0.0
    %3059 = vmatprep.subr.mxu0 0.0
    %3060 = vmatpush1.msra.mxu0 0.0
    %3061 = vmatprep.subr.mxu0 0.0
    %3062 = vmatpush1.msra.mxu0 0.0
    %3063 = vmatprep.subr.mxu0 0.0
    %3064 = vmatpush1.msra.mxu0 0.0
    %3065 = vmatprep.subr.mxu0 0.0
    %3066 = vmatpush1.msra.mxu0 0.0
    %3067 = vmatprep.subr.mxu0 0.0
    %3068 = vmatpush1.msra.mxu0 0.0
    %3069 = vmatprep.subr.mxu0 0.0
    %3070 = vmatpush1.msra.mxu0 0.0
    %3071 = vmatprep.subr.mxu0 0.0
    %3072 = vmatpush1.msra.mxu0 0.0
    %3073 = vmatprep.subr.mxu0 0.0
    %3074 = vmatpush1.msra.mxu0 0.0
    %3075 = vmatprep.subr.mxu0 0.0
    %3076 = vmatpush1.msra.mxu0 0.0
    %3077 = vmatprep.subr.mxu0 0.0
    %3078 = vmatpush1.msra.mxu0 0.0
    %3079 = vmatprep.subr.mxu0 0.0
    %3080 = vmatpush1.msra.mxu0 0.0
    %3081 = vmatprep.subr.mxu0 0.0
    %3082 = vmatpush1.msra.mxu0 0.0
    %3083 = vmatprep.subr.mxu0 0.0
    %3084 = vmatpush1.msra.mxu0 0.0
    %3085 = vmatprep.subr.mxu0 0.0
    %3086 = vmatpush1.msra.mxu0 0.0
    %3087 = vmatprep.subr.mxu0 0.0
    %3088 = vmatpush1.msra.mxu0 0.0
    %3089 = vmatprep.subr.mxu0 0.0
    %3090 = vmatpush1.msra.mxu0 0.0
    %3091 = vmatprep.subr.mxu0 0.0
    %3092 = vmatpush1.msra.mxu0 0.0
    %3093 = vmatprep.subr.mxu0 0.0
    %3094 = vmatpush1.msra.mxu0 0.0
    %3095 = vmatprep.subr.mxu0 0.0
    %3096 = vmatpush1.msra.mxu0 0.0
    %3097 = vmatprep.subr.mxu0 0.0
    %3098 = vmatpush1.msra.mxu0 0.0
    %3099 = vmatprep.mubr.f32.mxu0 0.0
    %3100 = vmatmul.mubr.f32.gmra.mrb[0].mxu0 %v3000
    %v3101 = vpop.f32.mrb[0].mxu0
    %v3102 = vadd.f32 0.0, %v3101
    %v3103 = vpop.f32.mrb[0].mxu0
    %3104 = vmatprep.mubr.f32.mxu0 0.0
    %3105 = vmatmul.mubr.f32.gmra.mrb[0].mxu0 %v3003
    %v3106 = vpop.f32.mrb[0].mxu0
    %v3107 = vadd.f32 0.0, %v3106
    %v3108 = vpop.f32.mrb[0].mxu0
    %3109 = vmatprep.mubr.f32.mxu0 0.0
    %3110 = vmatmul.mubr.f32.gmra.mrb[0].mxu0 %v3006
    %v3111 = vpop.f32.mrb[0].mxu0
    %v3112 = vadd.f32 0.0, %v3111
    %v3113 = vpop.f32.mrb[0].mxu0
    %3114 = vmatprep.mubr.f32.mxu0 0.0
    %3115 = vmatmul.mubr.f32.gmra.mrb[0].mxu0 %v3009
    %v3116 = vpop.f32.mrb[0].mxu0
    %v3117 = vadd.f32 0.0, %v3116
    %v3118 = vpop.f32.mrb[0].mxu0
    %3119 = vmatprep.mubr.f32.mxu0 0.0
    %3120 = vmatmul.mubr.f32.gmra.mrb[0].mxu0 %v3012
    %v3121 = vpop.f32.mrb[0].mxu0
    %v3122 = vadd.f32 0.0, %v3121
    %v3123 = vpop.f32.mrb[0].mxu0
    %3124 = vmatprep.mubr.f32.mxu0 0.0
    %3125 = vmatmul.mubr.f32.gmra.mrb[0].mxu0 %v3015
    %v3126 = vpop.f32.mrb[0].mxu0
    %v3127 = vadd.f32 0.0, %v3126
    %v3128 = vpop.f32.mrb[0].mxu0
    %3129 = vmatprep.mubr.f32.mxu0 0.0
    %3130 = vmatmul.mubr.f32.gmra.mrb[0].mxu0 %v3018
    %v3131 = vpop.f32.mrb[0].mxu0
    %v3132 = vadd.f32 0.0, %v3131
    %v3133 = vpop.f32.mrb[0].mxu0
    %3134 = vmatprep.mubr.f32.mxu0 0.0
    %3135 = vmatmul.mubr.f32.gmra.mrb[0].mxu0 %v3021
    %v3136 = vpop.f32.mrb[0].mxu0
    %v3137 = vadd.f32 0.0, %v3136
    %v3138 = vpop.f32.mrb[0].mxu0
    %3139 = vmatprep.mubr.f32.mxu0 0.0
    %3140 = vmatmul.mubr.f32.gmra.mrb[0].mxu0 %v3024
    %v3141 = vpop.f32.mrb[0].mxu0
    %v3142 = vadd.f32 0.0, %v3141
    %v3143 = vpop.f32.mrb[0].mxu0
    %3144 = vmatprep.mubr.f32.mxu0 0.0
    %3145 = vmatmul.mubr.f32.gmra.mrb[0].mxu0 %v3027
    %v3146 = vpop.f32.mrb[0].mxu0
    %v3147 = vadd.f32 0.0, %v3146
    %v3148 = vpop.f32.mrb[0].mxu0
    %3149 = vmatprep.mubr.f32.mxu0 0.0
    %3150 = vmatmul.mubr.f32.gmra.mrb[0].mxu0 %v3030
    %v3151 = vpop.f32.mrb[0].mxu0
    %v3152 = vadd.f32 0.0, %v3151
    %v3153 = vpop.f32.mrb[0].mxu0
    %3154 = vmatprep.mubr.f32.mxu0 0.0
    %3155 = vmatmul.mubr.f32.gmra.mrb[0].mxu0 %v3033
    %v3156 = vpop.f32.mrb[0].mxu0
    %v3157 = vadd.f32 0.0, %v3156
    %v3158 = vpop.f32.mrb[0].mxu0
    %3159 = vdwg.mxu0
    %3160 = vmatprep.subr.mxu0 0.0
    %3161 = vmatpush1.msra.mxu0 %v295
    %3162 = vmatprep.subr.mxu0 0.0
    %3163 = vmatpush1.msra.mxu0 %v296
    %3164 = vmatprep.subr.mxu0 0.0
    %3165 = vmatpush1.msra.mxu0 %v297
    %3166 = vmatprep.subr.mxu0 0.0
    %3167 = vmatpush1.msra.mxu0 %v298
    %3168 = vmatprep.subr.mxu0 0.0
    %3169 = vmatpush1.msra.mxu0 %v299
    %3170 = vmatprep.subr.mxu0 0.0
    %3171 = vmatpush1.msra.mxu0 %v300
    %3172 = vmatprep.subr.mxu0 0.0
    %3173 = vmatpush1.msra.mxu0 %v301
    %3174 = vmatprep.subr.mxu0 0.0
    %3175 = vmatpush1.msra.mxu0 %v302
    %3176 = vmatprep.subr.mxu0 0.0
    %3177 = vmatpush1.msra.mxu0 %v303
    %3178 = vmatprep.subr.mxu0 0.0
    %3179 = vmatpush1.msra.mxu0 %v304
    %3180 = vmatprep.subr.mxu0 0.0
    %3181 = vmatpush1.msra.mxu0 %v305
    %3182 = vmatprep.subr.mxu0 0.0
    %3183 = vmatpush1.msra.mxu0 %v306
    %3184 = vmatprep.subr.mxu0 0.0
    %3185 = vmatpush1.msra.mxu0 %v307
    %3186 = vmatprep.subr.mxu0 0.0
    %3187 = vmatpush1.msra.mxu0 %v308
    %3188 = vmatprep.subr.mxu0 0.0
    %3189 = vmatpush1.msra.mxu0 %v309
    %3190 = vmatprep.subr.mxu0 0.0
    %3191 = vmatpush1.msra.mxu0 %v310
    %3192 = vmatprep.subr.mxu0 0.0
    %3193 = vmatpush1.msra.mxu0 %v311
    %3194 = vmatprep.subr.mxu0 0.0
    %3195 = vmatpush1.msra.mxu0 %v312
    %3196 = vmatprep.subr.mxu0 0.0
    %3197 = vmatpush1.msra.mxu0 %v313
    %3198 = vmatprep.subr.mxu0 0.0
    %3199 = vmatpush1.msra.mxu0 %v314
    %3200 = vmatprep.subr.mxu0 0.0
    %3201 = vmatpush1.msra.mxu0 %v315
    %3202 = vmatprep.subr.mxu0 0.0
    %3203 = vmatpush1.msra.mxu0 %v316
    %3204 = vmatprep.subr.mxu0 0.0
    %3205 = vmatpush1.msra.mxu0 %v317
    %3206 = vmatprep.subr.mxu0 0.0
    %3207 = vmatpush1.msra.mxu0 %v318
    %3208 = vmatprep.subr.mxu0 0.0
    %3209 = vmatpush1.msra.mxu0 0.0
    %3210 = vmatprep.subr.mxu0 0.0
    %3211 = vmatpush1.msra.mxu0 0.0
    %3212 = vmatprep.subr.mxu0 0.0
    %3213 = vmatpush1.msra.mxu0 0.0
    %3214 = vmatprep.subr.mxu0 0.0
    %3215 = vmatpush1.msra.mxu0 0.0
    %3216 = vmatprep.subr.mxu0 0.0
    %3217 = vmatpush1.msra.mxu0 0.0
    %3218 = vmatprep.subr.mxu0 0.0
    %3219 = vmatpush1.msra.mxu0 0.0
    %3220 = vmatprep.subr.mxu0 0.0
    %3221 = vmatpush1.msra.mxu0 0.0
    %3222 = vmatprep.subr.mxu0 0.0
    %3223 = vmatpush1.msra.mxu0 0.0
    %3224 = vmatprep.mubr.f32.mxu0 %v2839
    %3225 = vmatmul.mubr.f32.gmra.mrb[0].mxu0 %v2810
    %v3226 = vpop.f32.mrb[0].mxu0
    %v3227 = vadd.f32 0.0, %v3226
    %v3228 = vpop.f32.mrb[0].mxu0
    %3229 = vmatprep.mubr.f32.mxu0 %v2842
    %3230 = vmatmul.mubr.f32.gmra.mrb[0].mxu0 %v2812
    %v3231 = vpop.f32.mrb[0].mxu0
    %v3232 = vadd.f32 0.0, %v3231
    %v3233 = vpop.f32.mrb[0].mxu0
    %3234 = vmatprep.mubr.f32.mxu0 %v2845
    %3235 = vmatmul.mubr.f32.gmra.mrb[0].mxu0 %v2814
    %v3236 = vpop.f32.mrb[0].mxu0
    %v3237 = vadd.f32 0.0, %v3236
    %v3238 = vpop.f32.mrb[0].mxu0
    %3239 = vmatprep.mubr.f32.mxu0 %v2848
    %3240 = vmatmul.mubr.f32.gmra.mrb[0].mxu0 %v2816
    %v3241 = vpop.f32.mrb[0].mxu0
    %v3242 = vadd.f32 0.0, %v3241
    %v3243 = vpop.f32.mrb[0].mxu0
    %3244 = vmatprep.mubr.f32.mxu0 %v2851
    %3245 = vmatmul.mubr.f32.gmra.mrb[0].mxu0 %v2818
    %v3246 = vpop.f32.mrb[0].mxu0
    %v3247 = vadd.f32 0.0, %v3246
    %v3248 = vpop.f32.mrb[0].mxu0
    %3249 = vmatprep.mubr.f32.mxu0 %v2854
    %3250 = vmatmul.mubr.f32.gmra.mrb[0].mxu0 %v2820
    %v3251 = vpop.f32.mrb[0].mxu0
    %v3252 = vadd.f32 0.0, %v3251
    %v3253 = vpop.f32.mrb[0].mxu0
    %3254 = vmatprep.mubr.f32.mxu0 %v2857
    %3255 = vmatmul.mubr.f32.gmra.mrb[0].mxu0 %v2822
    %v3256 = vpop.f32.mrb[0].mxu0
    %v3257 = vadd.f32 0.0, %v3256
    %v3258 = vpop.f32.mrb[0].mxu0
    %3259 = vmatprep.mubr.f32.mxu0 %v2860
    %3260 = vmatmul.mubr.f32.gmra.mrb[0].mxu0 %v2824
    %v3261 = vpop.f32.mrb[0].mxu0
    %v3262 = vadd.f32 0.0, %v3261
    %v3263 = vpop.f32.mrb[0].mxu0
    %3264 = vmatprep.mubr.f32.mxu0 %v2863
    %3265 = vmatmul.mubr.f32.gmra.mrb[0].mxu0 %v2826
    %v3266 = vpop.f32.mrb[0].mxu0
    %v3267 = vadd.f32 0.0, %v3266
    %v3268 = vpop.f32.mrb[0].mxu0
    %3269 = vmatprep.mubr.f32.mxu0 %v2866
    %3270 = vmatmul.mubr.f32.gmra.mrb[0].mxu0 %v2828
    %v3271 = vpop.f32.mrb[0].mxu0
    %v3272 = vadd.f32 0.0, %v3271
    %v3273 = vpop.f32.mrb[0].mxu0
    %3274 = vmatprep.mubr.f32.mxu0 %v2869
    %3275 = vmatmul.mubr.f32.gmra.mrb[0].mxu0 %v2830
    %v3276 = vpop.f32.mrb[0].mxu0
    %v3277 = vadd.f32 0.0, %v3276
    %v3278 = vpop.f32.mrb[0].mxu0
    %3279 = vmatprep.mubr.f32.mxu0 %v2872
    %3280 = vmatmul.mubr.f32.gmra.mrb[0].mxu0 %v2832
    %v3281 = vpop.f32.mrb[0].mxu0
    %v3282 = vadd.f32 0.0, %v3281
    %v3283 = vpop.f32.mrb[0].mxu0
    %3284 = vdwg.mxu0
    %v3286 = vsel %vm357, %v3227, 0
    %v3289 = vsel %vm357, %v3232, 0
    %v3292 = vsel %vm357, %v3237, 0
    %v3295 = vsel %vm357, %v3242, 0
    %v3298 = vsel %vm357, %v3247, 0
    %v3301 = vsel %vm357, %v3252, 0
    %v3304 = vsel %vm357, %v3257, 0
    %v3307 = vsel %vm357, %v3262, 0
    %v3310 = vsel %vm357, %v3267, 0
    %v3313 = vsel %vm357, %v3272, 0
    %v3316 = vsel %vm357, %v3277, 0
    %v3319 = vsel %vm357, %v3282, 0
    %3321 = vmatprep.subr.mxu0 0.0
    %3322 = vmatpush1.msra.mxu0 %v2834
    %3323 = vmatprep.subr.mxu0 0.0
    %3324 = vmatpush1.msra.mxu0 %v2835
    %3325 = vmatprep.subr.mxu0 0.0
    %3326 = vmatpush1.msra.mxu0 %v2836
    %3327 = vmatprep.subr.mxu0 0.0
    %3328 = vmatpush1.msra.mxu0 %v2837
    %3329 = vmatprep.subr.mxu0 0.0
    %3330 = vmatpush1.msra.mxu0 0.0
    %3331 = vmatprep.subr.mxu0 0.0
    %3332 = vmatpush1.msra.mxu0 0.0
    %3333 = vmatprep.subr.mxu0 0.0
    %3334 = vmatpush1.msra.mxu0 0.0
    %3335 = vmatprep.subr.mxu0 0.0
    %3336 = vmatpush1.msra.mxu0 0.0
    %3337 = vmatprep.subr.mxu0 0.0
    %3338 = vmatpush1.msra.mxu0 0.0
    %3339 = vmatprep.subr.mxu0 0.0
    %3340 = vmatpush1.msra.mxu0 0.0
    %3341 = vmatprep.subr.mxu0 0.0
    %3342 = vmatpush1.msra.mxu0 0.0
    %3343 = vmatprep.subr.mxu0 0.0
    %3344 = vmatpush1.msra.mxu0 0.0
    %3345 = vmatprep.subr.mxu0 0.0
    %3346 = vmatpush1.msra.mxu0 0.0
    %3347 = vmatprep.subr.mxu0 0.0
    %3348 = vmatpush1.msra.mxu0 0.0
    %3349 = vmatprep.subr.mxu0 0.0
    %3350 = vmatpush1.msra.mxu0 0.0
    %3351 = vmatprep.subr.mxu0 0.0
    %3352 = vmatpush1.msra.mxu0 0.0
    %3353 = vmatprep.subr.mxu0 0.0
    %3354 = vmatpush1.msra.mxu0 0.0
    %3355 = vmatprep.subr.mxu0 0.0
    %3356 = vmatpush1.msra.mxu0 0.0
    %3357 = vmatprep.subr.mxu0 0.0
    %3358 = vmatpush1.msra.mxu0 0.0
    %3359 = vmatprep.subr.mxu0 0.0
    %3360 = vmatpush1.msra.mxu0 0.0
    %3361 = vmatprep.subr.mxu0 0.0
    %3362 = vmatpush1.msra.mxu0 0.0
    %3363 = vmatprep.subr.mxu0 0.0
    %3364 = vmatpush1.msra.mxu0 0.0
    %3365 = vmatprep.subr.mxu0 0.0
    %3366 = vmatpush1.msra.mxu0 0.0
    %3367 = vmatprep.subr.mxu0 0.0
    %3368 = vmatpush1.msra.mxu0 0.0
    %3369 = vmatprep.subr.mxu0 0.0
    %3370 = vmatpush1.msra.mxu0 0.0
    %3371 = vmatprep.subr.mxu0 0.0
    %3372 = vmatpush1.msra.mxu0 0.0
    %3373 = vmatprep.subr.mxu0 0.0
    %3374 = vmatpush1.msra.mxu0 0.0
    %3375 = vmatprep.subr.mxu0 0.0
    %3376 = vmatpush1.msra.mxu0 0.0
    %3377 = vmatprep.subr.mxu0 0.0
    %3378 = vmatpush1.msra.mxu0 0.0
    %3379 = vmatprep.subr.mxu0 0.0
    %3380 = vmatpush1.msra.mxu0 0.0
    %3381 = vmatprep.subr.mxu0 0.0
    %3382 = vmatpush1.msra.mxu0 0.0
    %3383 = vmatprep.subr.mxu0 0.0
    %3384 = vmatpush1.msra.mxu0 0.0
    %3385 = vmatprep.mubr.f32.mxu0 0.0
    %3386 = vmatmul.mubr.f32.gmra.mrb[0].mxu0 %v3286
    %v3387 = vpop.f32.mrb[0].mxu0
    %v3388 = vadd.f32 0.0, %v3387
    %v3389 = vpop.f32.mrb[0].mxu0
    %3390 = vmatprep.mubr.f32.mxu0 0.0
    %3391 = vmatmul.mubr.f32.gmra.mrb[0].mxu0 %v3289
    %v3392 = vpop.f32.mrb[0].mxu0
    %v3393 = vadd.f32 0.0, %v3392
    %v3394 = vpop.f32.mrb[0].mxu0
    %3395 = vmatprep.mubr.f32.mxu0 0.0
    %3396 = vmatmul.mubr.f32.gmra.mrb[0].mxu0 %v3292
    %v3397 = vpop.f32.mrb[0].mxu0
    %v3398 = vadd.f32 0.0, %v3397
    %v3399 = vpop.f32.mrb[0].mxu0
    %3400 = vmatprep.mubr.f32.mxu0 0.0
    %3401 = vmatmul.mubr.f32.gmra.mrb[0].mxu0 %v3295
    %v3402 = vpop.f32.mrb[0].mxu0
    %v3403 = vadd.f32 0.0, %v3402
    %v3404 = vpop.f32.mrb[0].mxu0
    %3405 = vmatprep.mubr.f32.mxu0 0.0
    %3406 = vmatmul.mubr.f32.gmra.mrb[0].mxu0 %v3298
    %v3407 = vpop.f32.mrb[0].mxu0
    %v3408 = vadd.f32 0.0, %v3407
    %v3409 = vpop.f32.mrb[0].mxu0
    %3410 = vmatprep.mubr.f32.mxu0 0.0
    %3411 = vmatmul.mubr.f32.gmra.mrb[0].mxu0 %v3301
    %v3412 = vpop.f32.mrb[0].mxu0
    %v3413 = vadd.f32 0.0, %v3412
    %v3414 = vpop.f32.mrb[0].mxu0
    %3415 = vmatprep.mubr.f32.mxu0 0.0
    %3416 = vmatmul.mubr.f32.gmra.mrb[0].mxu0 %v3304
    %v3417 = vpop.f32.mrb[0].mxu0
    %v3418 = vadd.f32 0.0, %v3417
    %v3419 = vpop.f32.mrb[0].mxu0
    %3420 = vmatprep.mubr.f32.mxu0 0.0
    %3421 = vmatmul.mubr.f32.gmra.mrb[0].mxu0 %v3307
    %v3422 = vpop.f32.mrb[0].mxu0
    %v3423 = vadd.f32 0.0, %v3422
    %v3424 = vpop.f32.mrb[0].mxu0
    %3425 = vmatprep.mubr.f32.mxu0 0.0
    %3426 = vmatmul.mubr.f32.gmra.mrb[0].mxu0 %v3310
    %v3427 = vpop.f32.mrb[0].mxu0
    %v3428 = vadd.f32 0.0, %v3427
    %v3429 = vpop.f32.mrb[0].mxu0
    %3430 = vmatprep.mubr.f32.mxu0 0.0
    %3431 = vmatmul.mubr.f32.gmra.mrb[0].mxu0 %v3313
    %v3432 = vpop.f32.mrb[0].mxu0
    %v3433 = vadd.f32 0.0, %v3432
    %v3434 = vpop.f32.mrb[0].mxu0
    %3435 = vmatprep.mubr.f32.mxu0 0.0
    %3436 = vmatmul.mubr.f32.gmra.mrb[0].mxu0 %v3316
    %v3437 = vpop.f32.mrb[0].mxu0
    %v3438 = vadd.f32 0.0, %v3437
    %v3439 = vpop.f32.mrb[0].mxu0
    %3440 = vmatprep.mubr.f32.mxu0 0.0
    %3441 = vmatmul.mubr.f32.gmra.mrb[0].mxu0 %v3319
    %v3442 = vpop.f32.mrb[0].mxu0
    %v3443 = vadd.f32 0.0, %v3442
    %v3444 = vpop.f32.mrb[0].mxu0
    %3445 = vdwg.mxu0
    %v3446 = vld [vmem:[#allocation10] sm:$0xff]
    %v3447 = vld [vmem:[#allocation10 + $0x8] sm:$0xff]
    %v3448 = vld [vmem:[#allocation10 + $0x10] sm:$0xff]
    %v3449 = vld [vmem:[#allocation10 + $0x18] sm:$0xff]
    %v3450 = vld [vmem:[#allocation10 + $0x20] sm:$0xf]
    %v3451 = vld [vmem:[#allocation11] sm:$0xff]
    %v3452 = vld [vmem:[#allocation11 + $0x8] sm:$0xff]
    %vm3453 = vcmask 130048
    %v3454 = vsel %vm3453, %v3102, -inf
    %v3455 = vsel %vm3453, %v3107, -inf
    %v3456 = vsel %vm3453, %v3112, -inf
    %v3457 = vsel %vm3453, %v3117, -inf
    %v3458 = vsel %vm3453, %v3122, -inf
    %v3459 = vmax.f32 %v3454, %v3458
    %v3460 = vsel %vm3453, %v3127, -inf
    %v3461 = vmax.f32 %v3455, %v3460
    %v3462 = vsel %vm3453, %v3132, -inf
    %v3463 = vmax.f32 %v3456, %v3462
    %v3464 = vsel %vm3453, %v3137, -inf
    %v3465 = vmax.f32 %v3457, %v3464
    %v3466 = vsel %vm3453, %v3142, -inf
    %v3467 = vmax.f32 %v3459, %v3466
    %v3468 = vsel %vm3453, %v3147, -inf
    %v3469 = vmax.f32 %v3461, %v3468
    %v3470 = vsel %vm3453, %v3152, -inf
    %v3471 = vmax.f32 %v3463, %v3470
    %v3472 = vsel %vm3453, %v3157, -inf
    %v3473 = vmax.f32 %v3465, %v3472
    %v3474 = vmax.f32 %v3467, %v3469
    %v3475 = vmax.f32 %v3471, %v3473
    %v3476 = vmax.f32 %v3474, %v3475
    %3477 = vmax.xlane.f32.xlu0 %v3476
    %v3478 = vpop.xlane.xlu0 %3477
    %v3479 = vrot.slane %v3478, 4
    %v3480 = vmax.f32 %v3478, %v3479
    %v3481 = vrot.slane %v3480, 2
    %v3482 = vmax.f32 %v3480, %v3481
    %v3483 = vrot.slane %v3482, 1
    %v3484 = vmax.f32 %v3482, %v3483
    %s3485 = vtos %v3484
    %v3486 = vsel %vm3453, %v3102, inf
    %v3487 = vsel %vm3453, %v3107, inf
    %v3488 = vsel %vm3453, %v3112, inf
    %v3489 = vsel %vm3453, %v3117, inf
    %v3490 = vsel %vm3453, %v3122, inf
    %v3491 = vmin.f32 %v3486, %v3490
    %v3492 = vsel %vm3453, %v3127, inf
    %v3493 = vmin.f32 %v3487, %v3492
    %v3494 = vsel %vm3453, %v3132, inf
    %v3495 = vmin.f32 %v3488, %v3494
    %v3496 = vsel %vm3453, %v3137, inf
    %v3497 = vmin.f32 %v3489, %v3496
    %v3498 = vsel %vm3453, %v3142, inf
    %v3499 = vmin.f32 %v3491, %v3498
    %v3500 = vsel %vm3453, %v3147, inf
    %v3501 = vmin.f32 %v3493, %v3500
    %v3502 = vsel %vm3453, %v3152, inf
    %v3503 = vmin.f32 %v3495, %v3502
    %v3504 = vsel %vm3453, %v3157, inf
    %v3505 = vmin.f32 %v3497, %v3504
    %v3506 = vmin.f32 %v3499, %v3501
    %v3507 = vmin.f32 %v3503, %v3505
    %v3508 = vmin.f32 %v3506, %v3507
    %3509 = vmin.xlane.f32.xlu0 %v3508
    %v3510 = vpop.xlane.xlu0 %3509
    %v3511 = vrot.slane %v3510, 4
    %v3512 = vmin.f32 %v3510, %v3511
    %v3513 = vrot.slane %v3512, 2
    %v3514 = vmin.f32 %v3512, %v3513
    %v3515 = vrot.slane %v3514, 1
    %v3516 = vmin.f32 %v3514, %v3515
    %s3517 = vtos %v3516
    %p3518 = scmp.gt.f32.partialorder %s3485, 128.0
    %s3519 = scalar_select %p3518, 255.0, 1.0
    %p3520 = scmp.lt.f32.partialorder %s3517, -0.5
    %s3521 = scalar_select %p3520, -1.0, 0.0
    %s3522 = ssub.f32 %s3519, %s3521
    %s3523 = smul.f32 %s3522, 0.01
    %s3524 = smul.f32 %s3523, %s3523
    %s3525 = smul.f32 %s3522, 0.03
    %s3526 = smul.f32 %s3525, %s3525
    %vm3527 = vcmask 785408
    %v3529 = vsel %vm3527, %v3446, 0
    %v3532 = vsel %vm3527, %v3447, 0
    %v3535 = vsel %vm3527, %v3448, 0
    %v3538 = vsel %vm3527, %v3449, 0
    %v3541 = vsel %vm3527, %v3450, 0
    %3543 = vmatprep.subr.mxu0 0.0
    %3544 = vmatpush1.msra.mxu0 %v3102
    %3545 = vmatprep.subr.mxu0 0.0
    %3546 = vmatpush1.msra.mxu0 %v3107
    %3547 = vmatprep.subr.mxu0 0.0
    %3548 = vmatpush1.msra.mxu0 %v3112
    %3549 = vmatprep.subr.mxu0 0.0
    %3550 = vmatpush1.msra.mxu0 %v3117
    %3551 = vmatprep.subr.mxu0 0.0
    %3552 = vmatpush1.msra.mxu0 %v3122
    %3553 = vmatprep.subr.mxu0 0.0
    %3554 = vmatpush1.msra.mxu0 %v3127
    %3555 = vmatprep.subr.mxu0 0.0
    %3556 = vmatpush1.msra.mxu0 %v3132
    %3557 = vmatprep.subr.mxu0 0.0
    %3558 = vmatpush1.msra.mxu0 %v3137
    %3559 = vmatprep.subr.mxu0 0.0
    %3560 = vmatpush1.msra.mxu0 %v3142
    %3561 = vmatprep.subr.mxu0 0.0
    %3562 = vmatpush1.msra.mxu0 %v3147
    %3563 = vmatprep.subr.mxu0 0.0
    %3564 = vmatpush1.msra.mxu0 %v3152
    %3565 = vmatprep.subr.mxu0 0.0
    %3566 = vmatpush1.msra.mxu0 %v3157
    %3567 = vmatprep.subr.mxu0 0.0
    %3568 = vmatpush1.msra.mxu0 0.0
    %3569 = vmatprep.subr.mxu0 0.0
    %3570 = vmatpush1.msra.mxu0 0.0
    %3571 = vmatprep.subr.mxu0 0.0
    %3572 = vmatpush1.msra.mxu0 0.0
    %3573 = vmatprep.subr.mxu0 0.0
    %3574 = vmatpush1.msra.mxu0 0.0
    %3575 = vmatprep.subr.mxu0 0.0
    %3576 = vmatpush1.msra.mxu0 0.0
    %3577 = vmatprep.subr.mxu0 0.0
    %3578 = vmatpush1.msra.mxu0 0.0
    %3579 = vmatprep.subr.mxu0 0.0
    %3580 = vmatpush1.msra.mxu0 0.0
    %3581 = vmatprep.subr.mxu0 0.0
    %3582 = vmatpush1.msra.mxu0 0.0
    %3583 = vmatprep.subr.mxu0 0.0
    %3584 = vmatpush1.msra.mxu0 0.0
    %3585 = vmatprep.subr.mxu0 0.0
    %3586 = vmatpush1.msra.mxu0 0.0
    %3587 = vmatprep.subr.mxu0 0.0
    %3588 = vmatpush1.msra.mxu0 0.0
    %3589 = vmatprep.subr.mxu0 0.0
    %3590 = vmatpush1.msra.mxu0 0.0
    %3591 = vmatprep.subr.mxu0 0.0
    %3592 = vmatpush1.msra.mxu0 0.0
    %3593 = vmatprep.subr.mxu0 0.0
    %3594 = vmatpush1.msra.mxu0 0.0
    %3595 = vmatprep.subr.mxu0 0.0
    %3596 = vmatpush1.msra.mxu0 0.0
    %3597 = vmatprep.subr.mxu0 0.0
    %3598 = vmatpush1.msra.mxu0 0.0
    %3599 = vmatprep.subr.mxu0 0.0
    %3600 = vmatpush1.msra.mxu0 0.0
    %3601 = vmatprep.subr.mxu0 0.0
    %3602 = vmatpush1.msra.mxu0 0.0
    %3603 = vmatprep.subr.mxu0 0.0
    %3604 = vmatpush1.msra.mxu0 0.0
    %3605 = vmatprep.subr.mxu0 0.0
    %3606 = vmatpush1.msra.mxu0 0.0
    %3607 = vmatprep.mubr.f32.mxu0 0.0
    %3608 = vmatmul.mubr.f32.gmra.mrb[0].mxu0 %v3529
    %v3609 = vpop.f32.mrb[0].mxu0
    %v3610 = vadd.f32 0.0, %v3609
    %v3611 = vpop.f32.mrb[0].mxu0
    %3612 = vmatprep.mubr.f32.mxu0 0.0
    %3613 = vmatmul.mubr.f32.gmra.mrb[0].mxu0 %v3532
    %v3614 = vpop.f32.mrb[0].mxu0
    %v3615 = vadd.f32 0.0, %v3614
    %v3616 = vpop.f32.mrb[0].mxu0
    %3617 = vmatprep.mubr.f32.mxu0 0.0
    %3618 = vmatmul.mubr.f32.gmra.mrb[0].mxu0 %v3535
    %v3619 = vpop.f32.mrb[0].mxu0
    %v3620 = vadd.f32 0.0, %v3619
    %v3621 = vpop.f32.mrb[0].mxu0
    %3622 = vmatprep.mubr.f32.mxu0 0.0
    %3623 = vmatmul.mubr.f32.gmra.mrb[0].mxu0 %v3538
    %v3624 = vpop.f32.mrb[0].mxu0
    %v3625 = vadd.f32 0.0, %v3624
    %v3626 = vpop.f32.mrb[0].mxu0
    %3627 = vmatprep.mubr.f32.mxu0 0.0
    %3628 = vmatmul.mubr.f32.gmra.mrb[0].mxu0 %v3541
    %v3629 = vpop.f32.mrb[0].mxu0
    %v3630 = vadd.f32 0.0, %v3629
    %v3631 = vpop.f32.mrb[0].mxu0
    %3632 = vdwg.mxu0
    %v3634 = vsel %vm3453, %v3610, 0
    %v3637 = vsel %vm3453, %v3615, 0
    %v3640 = vsel %vm3453, %v3620, 0
    %v3643 = vsel %vm3453, %v3625, 0
    %v3646 = vsel %vm3453, %v3630, 0
    %3648 = vmatprep.subr.mxu0 0.0
    %3649 = vmatpush1.msra.mxu0 %v3451
    %3650 = vmatprep.subr.mxu0 0.0
    %3651 = vmatpush1.msra.mxu0 %v3452
    %3652 = vmatprep.subr.mxu0 0.0
    %3653 = vmatpush1.msra.mxu0 0.0
    %3654 = vmatprep.subr.mxu0 0.0
    %3655 = vmatpush1.msra.mxu0 0.0
    %3656 = vmatprep.subr.mxu0 0.0
    %3657 = vmatpush1.msra.mxu0 0.0
    %3658 = vmatprep.subr.mxu0 0.0
    %3659 = vmatpush1.msra.mxu0 0.0
    %3660 = vmatprep.subr.mxu0 0.0
    %3661 = vmatpush1.msra.mxu0 0.0
    %3662 = vmatprep.subr.mxu0 0.0
    %3663 = vmatpush1.msra.mxu0 0.0
    %3664 = vmatprep.subr.mxu0 0.0
    %3665 = vmatpush1.msra.mxu0 0.0
    %3666 = vmatprep.subr.mxu0 0.0
    %3667 = vmatpush1.msra.mxu0 0.0
    %3668 = vmatprep.subr.mxu0 0.0
    %3669 = vmatpush1.msra.mxu0 0.0
    %3670 = vmatprep.subr.mxu0 0.0
    %3671 = vmatpush1.msra.mxu0 0.0
    %3672 = vmatprep.subr.mxu0 0.0
    %3673 = vmatpush1.msra.mxu0 0.0
    %3674 = vmatprep.subr.mxu0 0.0
    %3675 = vmatpush1.msra.mxu0 0.0
    %3676 = vmatprep.subr.mxu0 0.0
    %3677 = vmatpush1.msra.mxu0 0.0
    %3678 = vmatprep.subr.mxu0 0.0
    %3679 = vmatpush1.msra.mxu0 0.0
    %3680 = vmatprep.subr.mxu0 0.0
    %3681 = vmatpush1.msra.mxu0 0.0
    %3682 = vmatprep.subr.mxu0 0.0
    %3683 = vmatpush1.msra.mxu0 0.0
    %3684 = vmatprep.subr.mxu0 0.0
    %3685 = vmatpush1.msra.mxu0 0.0
    %3686 = vmatprep.subr.mxu0 0.0
    %3687 = vmatpush1.msra.mxu0 0.0
    %3688 = vmatprep.subr.mxu0 0.0
    %3689 = vmatpush1.msra.mxu0 0.0
    %3690 = vmatprep.subr.mxu0 0.0
    %3691 = vmatpush1.msra.mxu0 0.0
    %3692 = vmatprep.subr.mxu0 0.0
    %3693 = vmatpush1.msra.mxu0 0.0
    %3694 = vmatprep.subr.mxu0 0.0
    %3695 = vmatpush1.msra.mxu0 0.0
    %3696 = vmatprep.subr.mxu0 0.0
    %3697 = vmatpush1.msra.mxu0 0.0
    %3698 = vmatprep.subr.mxu0 0.0
    %3699 = vmatpush1.msra.mxu0 0.0
    %3700 = vmatprep.subr.mxu0 0.0
    %3701 = vmatpush1.msra.mxu0 0.0
    %3702 = vmatprep.subr.mxu0 0.0
    %3703 = vmatpush1.msra.mxu0 0.0
    %3704 = vmatprep.subr.mxu0 0.0
    %3705 = vmatpush1.msra.mxu0 0.0
    %3706 = vmatprep.subr.mxu0 0.0
    %3707 = vmatpush1.msra.mxu0 0.0
    %3708 = vmatprep.subr.mxu0 0.0
    %3709 = vmatpush1.msra.mxu0 0.0
    %3710 = vmatprep.subr.mxu0 0.0
    %3711 = vmatpush1.msra.mxu0 0.0
    %3712 = vmatprep.mubr.f32.mxu0 0.0
    %3713 = vmatmul.mubr.f32.gmra.mrb[0].mxu0 %v3634
    %v3714 = vpop.f32.mrb[0].mxu0
    %v3715 = vadd.f32 0.0, %v3714
    %v3716 = vpop.f32.mrb[0].mxu0
    %3717 = vmatprep.mubr.f32.mxu0 0.0
    %3718 = vmatmul.mubr.f32.gmra.mrb[0].mxu0 %v3637
    %v3719 = vpop.f32.mrb[0].mxu0
    %v3720 = vadd.f32 0.0, %v3719
    %v3721 = vpop.f32.mrb[0].mxu0
    %3722 = vmatprep.mubr.f32.mxu0 0.0
    %3723 = vmatmul.mubr.f32.gmra.mrb[0].mxu0 %v3640
    %v3724 = vpop.f32.mrb[0].mxu0
    %v3725 = vadd.f32 0.0, %v3724
    %v3726 = vpop.f32.mrb[0].mxu0
    %3727 = vmatprep.mubr.f32.mxu0 0.0
    %3728 = vmatmul.mubr.f32.gmra.mrb[0].mxu0 %v3643
    %v3729 = vpop.f32.mrb[0].mxu0
    %v3730 = vadd.f32 0.0, %v3729
    %v3731 = vpop.f32.mrb[0].mxu0
    %3732 = vmatprep.mubr.f32.mxu0 0.0
    %3733 = vmatmul.mubr.f32.gmra.mrb[0].mxu0 %v3646
    %v3734 = vpop.f32.mrb[0].mxu0
    %v3735 = vadd.f32 0.0, %v3734
    %v3736 = vpop.f32.mrb[0].mxu0
    %3737 = vdwg.mxu0
    %3738 = vmatprep.subr.mxu0 0.0
    %3739 = vmatpush1.msra.mxu0 %v3388
    %3740 = vmatprep.subr.mxu0 0.0
    %3741 = vmatpush1.msra.mxu0 %v3393
    %3742 = vmatprep.subr.mxu0 0.0
    %3743 = vmatpush1.msra.mxu0 %v3398
    %3744 = vmatprep.subr.mxu0 0.0
    %3745 = vmatpush1.msra.mxu0 %v3403
    %3746 = vmatprep.subr.mxu0 0.0
    %3747 = vmatpush1.msra.mxu0 %v3408
    %3748 = vmatprep.subr.mxu0 0.0
    %3749 = vmatpush1.msra.mxu0 %v3413
    %3750 = vmatprep.subr.mxu0 0.0
    %3751 = vmatpush1.msra.mxu0 %v3418
    %3752 = vmatprep.subr.mxu0 0.0
    %3753 = vmatpush1.msra.mxu0 %v3423
    %3754 = vmatprep.subr.mxu0 0.0
    %3755 = vmatpush1.msra.mxu0 %v3428
    %3756 = vmatprep.subr.mxu0 0.0
    %3757 = vmatpush1.msra.mxu0 %v3433
    %3758 = vmatprep.subr.mxu0 0.0
    %3759 = vmatpush1.msra.mxu0 %v3438
    %3760 = vmatprep.subr.mxu0 0.0
    %3761 = vmatpush1.msra.mxu0 %v3443
    %3762 = vmatprep.subr.mxu0 0.0
    %3763 = vmatpush1.msra.mxu0 0.0
    %3764 = vmatprep.subr.mxu0 0.0
    %3765 = vmatpush1.msra.mxu0 0.0
    %3766 = vmatprep.subr.mxu0 0.0
    %3767 = vmatpush1.msra.mxu0 0.0
    %3768 = vmatprep.subr.mxu0 0.0
    %3769 = vmatpush1.msra.mxu0 0.0
    %3770 = vmatprep.subr.mxu0 0.0
    %3771 = vmatpush1.msra.mxu0 0.0
    %3772 = vmatprep.subr.mxu0 0.0
    %3773 = vmatpush1.msra.mxu0 0.0
    %3774 = vmatprep.subr.mxu0 0.0
    %3775 = vmatpush1.msra.mxu0 0.0
    %3776 = vmatprep.subr.mxu0 0.0
    %3777 = vmatpush1.msra.mxu0 0.0
    %3778 = vmatprep.subr.mxu0 0.0
    %3779 = vmatpush1.msra.mxu0 0.0
    %3780 = vmatprep.subr.mxu0 0.0
    %3781 = vmatpush1.msra.mxu0 0.0
    %3782 = vmatprep.subr.mxu0 0.0
    %3783 = vmatpush1.msra.mxu0 0.0
    %3784 = vmatprep.subr.mxu0 0.0
    %3785 = vmatpush1.msra.mxu0 0.0
    %3786 = vmatprep.subr.mxu0 0.0
    %3787 = vmatpush1.msra.mxu0 0.0
    %3788 = vmatprep.subr.mxu0 0.0
    %3789 = vmatpush1.msra.mxu0 0.0
    %3790 = vmatprep.subr.mxu0 0.0
    %3791 = vmatpush1.msra.mxu0 0.0
    %3792 = vmatprep.subr.mxu0 0.0
    %3793 = vmatpush1.msra.mxu0 0.0
    %3794 = vmatprep.subr.mxu0 0.0
    %3795 = vmatpush1.msra.mxu0 0.0
    %3796 = vmatprep.subr.mxu0 0.0
    %3797 = vmatpush1.msra.mxu0 0.0
    %3798 = vmatprep.subr.mxu0 0.0
    %3799 = vmatpush1.msra.mxu0 0.0
    %3800 = vmatprep.subr.mxu0 0.0
    %3801 = vmatpush1.msra.mxu0 0.0
    %3802 = vmatprep.mubr.f32.mxu0 0.0
    %3803 = vmatmul.mubr.f32.gmra.mrb[0].mxu0 %v3529
    %v3804 = vpop.f32.mrb[0].mxu0
    %v3805 = vadd.f32 0.0, %v3804
    %v3806 = vpop.f32.mrb[0].mxu0
    %3807 = vmatprep.mubr.f32.mxu0 0.0
    %3808 = vmatmul.mubr.f32.gmra.mrb[0].mxu0 %v3532
    %v3809 = vpop.f32.mrb[0].mxu0
    %v3810 = vadd.f32 0.0, %v3809
    %v3811 = vpop.f32.mrb[0].mxu0
    %3812 = vmatprep.mubr.f32.mxu0 0.0
    %3813 = vmatmul.mubr.f32.gmra.mrb[0].mxu0 %v3535
    %v3814 = vpop.f32.mrb[0].mxu0
    %v3815 = vadd.f32 0.0, %v3814
    %v3816 = vpop.f32.mrb[0].mxu0
    %3817 = vmatprep.mubr.f32.mxu0 0.0
    %3818 = vmatmul.mubr.f32.gmra.mrb[0].mxu0 %v3538
    %v3819 = vpop.f32.mrb[0].mxu0
    %v3820 = vadd.f32 0.0, %v3819
    %v3821 = vpop.f32.mrb[0].mxu0
    %3822 = vmatprep.mubr.f32.mxu0 0.0
    %3823 = vmatmul.mubr.f32.gmra.mrb[0].mxu0 %v3541
    %v3824 = vpop.f32.mrb[0].mxu0
    %v3825 = vadd.f32 0.0, %v3824
    %v3826 = vpop.f32.mrb[0].mxu0
    %3827 = vdwg.mxu0
    %v3829 = vsel %vm3453, %v3805, 0
    %v3832 = vsel %vm3453, %v3810, 0
    %v3835 = vsel %vm3453, %v3815, 0
    %v3838 = vsel %vm3453, %v3820, 0
    %v3841 = vsel %vm3453, %v3825, 0
    %3843 = vmatprep.subr.mxu0 0.0
    %3844 = vmatpush1.msra.mxu0 %v3451
    %3845 = vmatprep.subr.mxu0 0.0
    %3846 = vmatpush1.msra.mxu0 %v3452
    %3847 = vmatprep.subr.mxu0 0.0
    %3848 = vmatpush1.msra.mxu0 0.0
    %3849 = vmatprep.subr.mxu0 0.0
    %3850 = vmatpush1.msra.mxu0 0.0
    %3851 = vmatprep.subr.mxu0 0.0
    %3852 = vmatpush1.msra.mxu0 0.0
    %3853 = vmatprep.subr.mxu0 0.0
    %3854 = vmatpush1.msra.mxu0 0.0
    %3855 = vmatprep.subr.mxu0 0.0
    %3856 = vmatpush1.msra.mxu0 0.0
    %3857 = vmatprep.subr.mxu0 0.0
    %3858 = vmatpush1.msra.mxu0 0.0
    %3859 = vmatprep.subr.mxu0 0.0
    %3860 = vmatpush1.msra.mxu0 0.0
    %3861 = vmatprep.subr.mxu0 0.0
    %3862 = vmatpush1.msra.mxu0 0.0
    %3863 = vmatprep.subr.mxu0 0.0
    %3864 = vmatpush1.msra.mxu0 0.0
    %3865 = vmatprep.subr.mxu0 0.0
    %3866 = vmatpush1.msra.mxu0 0.0
    %3867 = vmatprep.subr.mxu0 0.0
    %3868 = vmatpush1.msra.mxu0 0.0
    %3869 = vmatprep.subr.mxu0 0.0
    %3870 = vmatpush1.msra.mxu0 0.0
    %3871 = vmatprep.subr.mxu0 0.0
    %3872 = vmatpush1.msra.mxu0 0.0
    %3873 = vmatprep.subr.mxu0 0.0
    %3874 = vmatpush1.msra.mxu0 0.0
    %3875 = vmatprep.subr.mxu0 0.0
    %3876 = vmatpush1.msra.mxu0 0.0
    %3877 = vmatprep.subr.mxu0 0.0
    %3878 = vmatpush1.msra.mxu0 0.0
    %3879 = vmatprep.subr.mxu0 0.0
    %3880 = vmatpush1.msra.mxu0 0.0
    %3881 = vmatprep.subr.mxu0 0.0
    %3882 = vmatpush1.msra.mxu0 0.0
    %3883 = vmatprep.subr.mxu0 0.0
    %3884 = vmatpush1.msra.mxu0 0.0
    %3885 = vmatprep.subr.mxu0 0.0
    %3886 = vmatpush1.msra.mxu0 0.0
    %3887 = vmatprep.subr.mxu0 0.0
    %3888 = vmatpush1.msra.mxu0 0.0
    %3889 = vmatprep.subr.mxu0 0.0
    %3890 = vmatpush1.msra.mxu0 0.0
    %3891 = vmatprep.subr.mxu0 0.0
    %3892 = vmatpush1.msra.mxu0 0.0
    %3893 = vmatprep.subr.mxu0 0.0
    %3894 = vmatpush1.msra.mxu0 0.0
    %3895 = vmatprep.subr.mxu0 0.0
    %3896 = vmatpush1.msra.mxu0 0.0
    %3897 = vmatprep.subr.mxu0 0.0
    %3898 = vmatpush1.msra.mxu0 0.0
    %3899 = vmatprep.subr.mxu0 0.0
    %3900 = vmatpush1.msra.mxu0 0.0
    %3901 = vmatprep.subr.mxu0 0.0
    %3902 = vmatpush1.msra.mxu0 0.0
    %3903 = vmatprep.subr.mxu0 0.0
    %3904 = vmatpush1.msra.mxu0 0.0
    %3905 = vmatprep.subr.mxu0 0.0
    %3906 = vmatpush1.msra.mxu0 0.0
    %3907 = vmatprep.mubr.f32.mxu0 0.0
    %3908 = vmatmul.mubr.f32.gmra.mrb[0].mxu0 %v3829
    %v3909 = vpop.f32.mrb[0].mxu0
    %v3910 = vadd.f32 0.0, %v3909
    %v3911 = vpop.f32.mrb[0].mxu0
    %3912 = vmatprep.mubr.f32.mxu0 0.0
    %3913 = vmatmul.mubr.f32.gmra.mrb[0].mxu0 %v3832
    %v3914 = vpop.f32.mrb[0].mxu0
    %v3915 = vadd.f32 0.0, %v3914
    %v3916 = vpop.f32.mrb[0].mxu0
    %3917 = vmatprep.mubr.f32.mxu0 0.0
    %3918 = vmatmul.mubr.f32.gmra.mrb[0].mxu0 %v3835
    %v3919 = vpop.f32.mrb[0].mxu0
    %v3920 = vadd.f32 0.0, %v3919
    %v3921 = vpop.f32.mrb[0].mxu0
    %3922 = vmatprep.mubr.f32.mxu0 0.0
    %3923 = vmatmul.mubr.f32.gmra.mrb[0].mxu0 %v3838
    %v3924 = vpop.f32.mrb[0].mxu0
    %v3925 = vadd.f32 0.0, %v3924
    %v3926 = vpop.f32.mrb[0].mxu0
    %3927 = vmatprep.mubr.f32.mxu0 0.0
    %3928 = vmatmul.mubr.f32.gmra.mrb[0].mxu0 %v3841
    %v3929 = vpop.f32.mrb[0].mxu0
    %v3930 = vadd.f32 0.0, %v3929
    %v3931 = vpop.f32.mrb[0].mxu0
    %3932 = vdwg.mxu0
    %v3933 = vmul.f32 %v3715, %v3715
    %v3934 = vmul.f32 %v3720, %v3720
    %v3935 = vmul.f32 %v3725, %v3725
    %v3936 = vmul.f32 %v3730, %v3730
    %v3937 = vmul.f32 %v3735, %v3735
    %v3938 = vmul.f32 %v3910, %v3910
    %v3939 = vmul.f32 %v3915, %v3915
    %v3940 = vmul.f32 %v3920, %v3920
    %v3941 = vmul.f32 %v3925, %v3925
    %v3942 = vmul.f32 %v3930, %v3930
    %v3943 = vmul.f32 %v3715, %v3910
    %v3944 = vmul.f32 %v3720, %v3915
    %v3945 = vmul.f32 %v3725, %v3920
    %v3946 = vmul.f32 %v3730, %v3925
    %v3947 = vmul.f32 %v3735, %v3930
    %v3948 = vmul.f32 %v3102, %v3102
    %v3949 = vmul.f32 %v3107, %v3107
    %v3950 = vmul.f32 %v3112, %v3112
    %v3951 = vmul.f32 %v3117, %v3117
    %v3952 = vmul.f32 %v3122, %v3122
    %v3953 = vmul.f32 %v3127, %v3127
    %v3954 = vmul.f32 %v3132, %v3132
    %v3955 = vmul.f32 %v3137, %v3137
    %v3956 = vmul.f32 %v3142, %v3142
    %v3957 = vmul.f32 %v3147, %v3147
    %v3958 = vmul.f32 %v3152, %v3152
    %v3959 = vmul.f32 %v3157, %v3157
    %3960 = vmatprep.subr.mxu0 0.0
    %3961 = vmatpush1.msra.mxu0 %v3948
    %3962 = vmatprep.subr.mxu0 0.0
    %3963 = vmatpush1.msra.mxu0 %v3949
    %3964 = vmatprep.subr.mxu0 0.0
    %3965 = vmatpush1.msra.mxu0 %v3950
    %3966 = vmatprep.subr.mxu0 0.0
    %3967 = vmatpush1.msra.mxu0 %v3951
    %3968 = vmatprep.subr.mxu0 0.0
    %3969 = vmatpush1.msra.mxu0 %v3952
    %3970 = vmatprep.subr.mxu0 0.0
    %3971 = vmatpush1.msra.mxu0 %v3953
    %3972 = vmatprep.subr.mxu0 0.0
    %3973 = vmatpush1.msra.mxu0 %v3954
    %3974 = vmatprep.subr.mxu0 0.0
    %3975 = vmatpush1.msra.mxu0 %v3955
    %3976 = vmatprep.subr.mxu0 0.0
    %3977 = vmatpush1.msra.mxu0 %v3956
    %3978 = vmatprep.subr.mxu0 0.0
    %3979 = vmatpush1.msra.mxu0 %v3957
    %3980 = vmatprep.subr.mxu0 0.0
    %3981 = vmatpush1.msra.mxu0 %v3958
    %3982 = vmatprep.subr.mxu0 0.0
    %3983 = vmatpush1.msra.mxu0 %v3959
    %3984 = vmatprep.subr.mxu0 0.0
    %3985 = vmatpush1.msra.mxu0 0.0
    %3986 = vmatprep.subr.mxu0 0.0
    %3987 = vmatpush1.msra.mxu0 0.0
    %3988 = vmatprep.subr.mxu0 0.0
    %3989 = vmatpush1.msra.mxu0 0.0
    %3990 = vmatprep.subr.mxu0 0.0
    %3991 = vmatpush1.msra.mxu0 0.0
    %3992 = vmatprep.subr.mxu0 0.0
    %3993 = vmatpush1.msra.mxu0 0.0
    %3994 = vmatprep.subr.mxu0 0.0
    %3995 = vmatpush1.msra.mxu0 0.0
    %3996 = vmatprep.subr.mxu0 0.0
    %3997 = vmatpush1.msra.mxu0 0.0
    %3998 = vmatprep.subr.mxu0 0.0
    %3999 = vmatpush1.msra.mxu0 0.0
    %4000 = vmatprep.subr.mxu0 0.0
    %4001 = vmatpush1.msra.mxu0 0.0
    %4002 = vmatprep.subr.mxu0 0.0
    %4003 = vmatpush1.msra.mxu0 0.0
    %4004 = vmatprep.subr.mxu0 0.0
    %4005 = vmatpush1.msra.mxu0 0.0
    %4006 = vmatprep.subr.mxu0 0.0
    %4007 = vmatpush1.msra.mxu0 0.0
    %4008 = vmatprep.subr.mxu0 0.0
    %4009 = vmatpush1.msra.mxu0 0.0
    %4010 = vmatprep.subr.mxu0 0.0
    %4011 = vmatpush1.msra.mxu0 0.0
    %4012 = vmatprep.subr.mxu0 0.0
    %4013 = vmatpush1.msra.mxu0 0.0
    %4014 = vmatprep.subr.mxu0 0.0
    %4015 = vmatpush1.msra.mxu0 0.0
    %4016 = vmatprep.subr.mxu0 0.0
    %4017 = vmatpush1.msra.mxu0 0.0
    %4018 = vmatprep.subr.mxu0 0.0
    %4019 = vmatpush1.msra.mxu0 0.0
    %4020 = vmatprep.subr.mxu0 0.0
    %4021 = vmatpush1.msra.mxu0 0.0
    %4022 = vmatprep.subr.mxu0 0.0
    %4023 = vmatpush1.msra.mxu0 0.0
    %4024 = vmatprep.mubr.f32.mxu0 0.0
    %4025 = vmatmul.mubr.f32.gmra.mrb[0].mxu0 %v3529
    %v4026 = vpop.f32.mrb[0].mxu0
    %v4027 = vadd.f32 0.0, %v4026
    %v4028 = vpop.f32.mrb[0].mxu0
    %4029 = vmatprep.mubr.f32.mxu0 0.0
    %4030 = vmatmul.mubr.f32.gmra.mrb[0].mxu0 %v3532
    %v4031 = vpop.f32.mrb[0].mxu0
    %v4032 = vadd.f32 0.0, %v4031
    %v4033 = vpop.f32.mrb[0].mxu0
    %4034 = vmatprep.mubr.f32.mxu0 0.0
    %4035 = vmatmul.mubr.f32.gmra.mrb[0].mxu0 %v3535
    %v4036 = vpop.f32.mrb[0].mxu0
    %v4037 = vadd.f32 0.0, %v4036
    %v4038 = vpop.f32.mrb[0].mxu0
    %4039 = vmatprep.mubr.f32.mxu0 0.0
    %4040 = vmatmul.mubr.f32.gmra.mrb[0].mxu0 %v3538
    %v4041 = vpop.f32.mrb[0].mxu0
    %v4042 = vadd.f32 0.0, %v4041
    %v4043 = vpop.f32.mrb[0].mxu0
    %4044 = vmatprep.mubr.f32.mxu0 0.0
    %4045 = vmatmul.mubr.f32.gmra.mrb[0].mxu0 %v3541
    %v4046 = vpop.f32.mrb[0].mxu0
    %v4047 = vadd.f32 0.0, %v4046
    %v4048 = vpop.f32.mrb[0].mxu0
    %4049 = vdwg.mxu0
    %v4051 = vsel %vm3453, %v4027, 0
    %v4054 = vsel %vm3453, %v4032, 0
    %v4057 = vsel %vm3453, %v4037, 0
    %v4060 = vsel %vm3453, %v4042, 0
    %v4063 = vsel %vm3453, %v4047, 0
    %4065 = vmatprep.subr.mxu0 0.0
    %4066 = vmatpush1.msra.mxu0 %v3451
    %4067 = vmatprep.subr.mxu0 0.0
    %4068 = vmatpush1.msra.mxu0 %v3452
    %4069 = vmatprep.subr.mxu0 0.0
    %4070 = vmatpush1.msra.mxu0 0.0
    %4071 = vmatprep.subr.mxu0 0.0
    %4072 = vmatpush1.msra.mxu0 0.0
    %4073 = vmatprep.subr.mxu0 0.0
    %4074 = vmatpush1.msra.mxu0 0.0
    %4075 = vmatprep.subr.mxu0 0.0
    %4076 = vmatpush1.msra.mxu0 0.0
    %4077 = vmatprep.subr.mxu0 0.0
    %4078 = vmatpush1.msra.mxu0 0.0
    %4079 = vmatprep.subr.mxu0 0.0
    %4080 = vmatpush1.msra.mxu0 0.0
    %4081 = vmatprep.subr.mxu0 0.0
    %4082 = vmatpush1.msra.mxu0 0.0
    %4083 = vmatprep.subr.mxu0 0.0
    %4084 = vmatpush1.msra.mxu0 0.0
    %4085 = vmatprep.subr.mxu0 0.0
    %4086 = vmatpush1.msra.mxu0 0.0
    %4087 = vmatprep.subr.mxu0 0.0
    %4088 = vmatpush1.msra.mxu0 0.0
    %4089 = vmatprep.subr.mxu0 0.0
    %4090 = vmatpush1.msra.mxu0 0.0
    %4091 = vmatprep.subr.mxu0 0.0
    %4092 = vmatpush1.msra.mxu0 0.0
    %4093 = vmatprep.subr.mxu0 0.0
    %4094 = vmatpush1.msra.mxu0 0.0
    %4095 = vmatprep.subr.mxu0 0.0
    %4096 = vmatpush1.msra.mxu0 0.0
    %4097 = vmatprep.subr.mxu0 0.0
    %4098 = vmatpush1.msra.mxu0 0.0
    %4099 = vmatprep.subr.mxu0 0.0
    %4100 = vmatpush1.msra.mxu0 0.0
    %4101 = vmatprep.subr.mxu0 0.0
    %4102 = vmatpush1.msra.mxu0 0.0
    %4103 = vmatprep.subr.mxu0 0.0
    %4104 = vmatpush1.msra.mxu0 0.0
    %4105 = vmatprep.subr.mxu0 0.0
    %4106 = vmatpush1.msra.mxu0 0.0
    %4107 = vmatprep.subr.mxu0 0.0
    %4108 = vmatpush1.msra.mxu0 0.0
    %4109 = vmatprep.subr.mxu0 0.0
    %4110 = vmatpush1.msra.mxu0 0.0
    %4111 = vmatprep.subr.mxu0 0.0
    %4112 = vmatpush1.msra.mxu0 0.0
    %4113 = vmatprep.subr.mxu0 0.0
    %4114 = vmatpush1.msra.mxu0 0.0
    %4115 = vmatprep.subr.mxu0 0.0
    %4116 = vmatpush1.msra.mxu0 0.0
    %4117 = vmatprep.subr.mxu0 0.0
    %4118 = vmatpush1.msra.mxu0 0.0
    %4119 = vmatprep.subr.mxu0 0.0
    %4120 = vmatpush1.msra.mxu0 0.0
    %4121 = vmatprep.subr.mxu0 0.0
    %4122 = vmatpush1.msra.mxu0 0.0
    %4123 = vmatprep.subr.mxu0 0.0
    %4124 = vmatpush1.msra.mxu0 0.0
    %4125 = vmatprep.subr.mxu0 0.0
    %4126 = vmatpush1.msra.mxu0 0.0
    %4127 = vmatprep.subr.mxu0 0.0
    %4128 = vmatpush1.msra.mxu0 0.0
    %4129 = vmatprep.mubr.f32.mxu0 0.0
    %4130 = vmatmul.mubr.f32.gmra.mrb[0].mxu0 %v4051
    %v4131 = vpop.f32.mrb[0].mxu0
    %v4132 = vadd.f32 0.0, %v4131
    %v4133 = vpop.f32.mrb[0].mxu0
    %4134 = vmatprep.mubr.f32.mxu0 0.0
    %4135 = vmatmul.mubr.f32.gmra.mrb[0].mxu0 %v4054
    %v4136 = vpop.f32.mrb[0].mxu0
    %v4137 = vadd.f32 0.0, %v4136
    %v4138 = vpop.f32.mrb[0].mxu0
    %4139 = vmatprep.mubr.f32.mxu0 0.0
    %4140 = vmatmul.mubr.f32.gmra.mrb[0].mxu0 %v4057
    %v4141 = vpop.f32.mrb[0].mxu0
    %v4142 = vadd.f32 0.0, %v4141
    %v4143 = vpop.f32.mrb[0].mxu0
    %4144 = vmatprep.mubr.f32.mxu0 0.0
    %4145 = vmatmul.mubr.f32.gmra.mrb[0].mxu0 %v4060
    %v4146 = vpop.f32.mrb[0].mxu0
    %v4147 = vadd.f32 0.0, %v4146
    %v4148 = vpop.f32.mrb[0].mxu0
    %4149 = vmatprep.mubr.f32.mxu0 0.0
    %4150 = vmatmul.mubr.f32.gmra.mrb[0].mxu0 %v4063
    %v4151 = vpop.f32.mrb[0].mxu0
    %v4152 = vadd.f32 0.0, %v4151
    %v4153 = vpop.f32.mrb[0].mxu0
    %4154 = vdwg.mxu0
    %v4155 = vsub.f32 %v4132, %v3933
    %v4156 = vsub.f32 %v4137, %v3934
    %v4157 = vsub.f32 %v4142, %v3935
    %v4158 = vsub.f32 %v4147, %v3936
    %v4159 = vsub.f32 %v4152, %v3937
    %v4160 = vmul.f32 %v3388, %v3388
    %v4161 = vmul.f32 %v3393, %v3393
    %v4162 = vmul.f32 %v3398, %v3398
    %v4163 = vmul.f32 %v3403, %v3403
    %v4164 = vmul.f32 %v3408, %v3408
    %v4165 = vmul.f32 %v3413, %v3413
    %v4166 = vmul.f32 %v3418, %v3418
    %v4167 = vmul.f32 %v3423, %v3423
    %v4168 = vmul.f32 %v3428, %v3428
    %v4169 = vmul.f32 %v3433, %v3433
    %v4170 = vmul.f32 %v3438, %v3438
    %v4171 = vmul.f32 %v3443, %v3443
    %4172 = vmatprep.subr.mxu0 0.0
    %4173 = vmatpush1.msra.mxu0 %v4160
    %4174 = vmatprep.subr.mxu0 0.0
    %4175 = vmatpush1.msra.mxu0 %v4161
    %4176 = vmatprep.subr.mxu0 0.0
    %4177 = vmatpush1.msra.mxu0 %v4162
    %4178 = vmatprep.subr.mxu0 0.0
    %4179 = vmatpush1.msra.mxu0 %v4163
    %4180 = vmatprep.subr.mxu0 0.0
    %4181 = vmatpush1.msra.mxu0 %v4164
    %4182 = vmatprep.subr.mxu0 0.0
    %4183 = vmatpush1.msra.mxu0 %v4165
    %4184 = vmatprep.subr.mxu0 0.0
    %4185 = vmatpush1.msra.mxu0 %v4166
    %4186 = vmatprep.subr.mxu0 0.0
    %4187 = vmatpush1.msra.mxu0 %v4167
    %4188 = vmatprep.subr.mxu0 0.0
    %4189 = vmatpush1.msra.mxu0 %v4168
    %4190 = vmatprep.subr.mxu0 0.0
    %4191 = vmatpush1.msra.mxu0 %v4169
    %4192 = vmatprep.subr.mxu0 0.0
    %4193 = vmatpush1.msra.mxu0 %v4170
    %4194 = vmatprep.subr.mxu0 0.0
    %4195 = vmatpush1.msra.mxu0 %v4171
    %4196 = vmatprep.subr.mxu0 0.0
    %4197 = vmatpush1.msra.mxu0 0.0
    %4198 = vmatprep.subr.mxu0 0.0
    %4199 = vmatpush1.msra.mxu0 0.0
    %4200 = vmatprep.subr.mxu0 0.0
    %4201 = vmatpush1.msra.mxu0 0.0
    %4202 = vmatprep.subr.mxu0 0.0
    %4203 = vmatpush1.msra.mxu0 0.0
    %4204 = vmatprep.subr.mxu0 0.0
    %4205 = vmatpush1.msra.mxu0 0.0
    %4206 = vmatprep.subr.mxu0 0.0
    %4207 = vmatpush1.msra.mxu0 0.0
    %4208 = vmatprep.subr.mxu0 0.0
    %4209 = vmatpush1.msra.mxu0 0.0
    %4210 = vmatprep.subr.mxu0 0.0
    %4211 = vmatpush1.msra.mxu0 0.0
    %4212 = vmatprep.subr.mxu0 0.0
    %4213 = vmatpush1.msra.mxu0 0.0
    %4214 = vmatprep.subr.mxu0 0.0
    %4215 = vmatpush1.msra.mxu0 0.0
    %4216 = vmatprep.subr.mxu0 0.0
    %4217 = vmatpush1.msra.mxu0 0.0
    %4218 = vmatprep.subr.mxu0 0.0
    %4219 = vmatpush1.msra.mxu0 0.0
    %4220 = vmatprep.subr.mxu0 0.0
    %4221 = vmatpush1.msra.mxu0 0.0
    %4222 = vmatprep.subr.mxu0 0.0
    %4223 = vmatpush1.msra.mxu0 0.0
    %4224 = vmatprep.subr.mxu0 0.0
    %4225 = vmatpush1.msra.mxu0 0.0
    %4226 = vmatprep.subr.mxu0 0.0
    %4227 = vmatpush1.msra.mxu0 0.0
    %4228 = vmatprep.subr.mxu0 0.0
    %4229 = vmatpush1.msra.mxu0 0.0
    %4230 = vmatprep.subr.mxu0 0.0
    %4231 = vmatpush1.msra.mxu0 0.0
    %4232 = vmatprep.subr.mxu0 0.0
    %4233 = vmatpush1.msra.mxu0 0.0
    %4234 = vmatprep.subr.mxu0 0.0
    %4235 = vmatpush1.msra.mxu0 0.0
    %4236 = vmatprep.mubr.f32.mxu0 0.0
    %4237 = vmatmul.mubr.f32.gmra.mrb[0].mxu0 %v3529
    %v4238 = vpop.f32.mrb[0].mxu0
    %v4239 = vadd.f32 0.0, %v4238
    %v4240 = vpop.f32.mrb[0].mxu0
    %4241 = vmatprep.mubr.f32.mxu0 0.0
    %4242 = vmatmul.mubr.f32.gmra.mrb[0].mxu0 %v3532
    %v4243 = vpop.f32.mrb[0].mxu0
    %v4244 = vadd.f32 0.0, %v4243
    %v4245 = vpop.f32.mrb[0].mxu0
    %4246 = vmatprep.mubr.f32.mxu0 0.0
    %4247 = vmatmul.mubr.f32.gmra.mrb[0].mxu0 %v3535
    %v4248 = vpop.f32.mrb[0].mxu0
    %v4249 = vadd.f32 0.0, %v4248
    %v4250 = vpop.f32.mrb[0].mxu0
    %4251 = vmatprep.mubr.f32.mxu0 0.0
    %4252 = vmatmul.mubr.f32.gmra.mrb[0].mxu0 %v3538
    %v4253 = vpop.f32.mrb[0].mxu0
    %v4254 = vadd.f32 0.0, %v4253
    %v4255 = vpop.f32.mrb[0].mxu0
    %4256 = vmatprep.mubr.f32.mxu0 0.0
    %4257 = vmatmul.mubr.f32.gmra.mrb[0].mxu0 %v3541
    %v4258 = vpop.f32.mrb[0].mxu0
    %v4259 = vadd.f32 0.0, %v4258
    %v4260 = vpop.f32.mrb[0].mxu0
    %4261 = vdwg.mxu0
    %v4263 = vsel %vm3453, %v4239, 0
    %v4266 = vsel %vm3453, %v4244, 0
    %v4269 = vsel %vm3453, %v4249, 0
    %v4272 = vsel %vm3453, %v4254, 0
    %v4275 = vsel %vm3453, %v4259, 0
    %4277 = vmatprep.subr.mxu0 0.0
    %4278 = vmatpush1.msra.mxu0 %v3451
    %4279 = vmatprep.subr.mxu0 0.0
    %4280 = vmatpush1.msra.mxu0 %v3452
    %4281 = vmatprep.subr.mxu0 0.0
    %4282 = vmatpush1.msra.mxu0 0.0
    %4283 = vmatprep.subr.mxu0 0.0
    %4284 = vmatpush1.msra.mxu0 0.0
    %4285 = vmatprep.subr.mxu0 0.0
    %4286 = vmatpush1.msra.mxu0 0.0
    %4287 = vmatprep.subr.mxu0 0.0
    %4288 = vmatpush1.msra.mxu0 0.0
    %4289 = vmatprep.subr.mxu0 0.0
    %4290 = vmatpush1.msra.mxu0 0.0
    %4291 = vmatprep.subr.mxu0 0.0
    %4292 = vmatpush1.msra.mxu0 0.0
    %4293 = vmatprep.subr.mxu0 0.0
    %4294 = vmatpush1.msra.mxu0 0.0
    %4295 = vmatprep.subr.mxu0 0.0
    %4296 = vmatpush1.msra.mxu0 0.0
    %4297 = vmatprep.subr.mxu0 0.0
    %4298 = vmatpush1.msra.mxu0 0.0
    %4299 = vmatprep.subr.mxu0 0.0
    %4300 = vmatpush1.msra.mxu0 0.0
    %4301 = vmatprep.subr.mxu0 0.0
    %4302 = vmatpush1.msra.mxu0 0.0
    %4303 = vmatprep.subr.mxu0 0.0
    %4304 = vmatpush1.msra.mxu0 0.0
    %4305 = vmatprep.subr.mxu0 0.0
    %4306 = vmatpush1.msra.mxu0 0.0
    %4307 = vmatprep.subr.mxu0 0.0
    %4308 = vmatpush1.msra.mxu0 0.0
    %4309 = vmatprep.subr.mxu0 0.0
    %4310 = vmatpush1.msra.mxu0 0.0
    %4311 = vmatprep.subr.mxu0 0.0
    %4312 = vmatpush1.msra.mxu0 0.0
    %4313 = vmatprep.subr.mxu0 0.0
    %4314 = vmatpush1.msra.mxu0 0.0
    %4315 = vmatprep.subr.mxu0 0.0
    %4316 = vmatpush1.msra.mxu0 0.0
    %4317 = vmatprep.subr.mxu0 0.0
    %4318 = vmatpush1.msra.mxu0 0.0
    %4319 = vmatprep.subr.mxu0 0.0
    %4320 = vmatpush1.msra.mxu0 0.0
    %4321 = vmatprep.subr.mxu0 0.0
    %4322 = vmatpush1.msra.mxu0 0.0
    %4323 = vmatprep.subr.mxu0 0.0
    %4324 = vmatpush1.msra.mxu0 0.0
    %4325 = vmatprep.subr.mxu0 0.0
    %4326 = vmatpush1.msra.mxu0 0.0
    %4327 = vmatprep.subr.mxu0 0.0
    %4328 = vmatpush1.msra.mxu0 0.0
    %4329 = vmatprep.subr.mxu0 0.0
    %4330 = vmatpush1.msra.mxu0 0.0
    %4331 = vmatprep.subr.mxu0 0.0
    %4332 = vmatpush1.msra.mxu0 0.0
    %4333 = vmatprep.subr.mxu0 0.0
    %4334 = vmatpush1.msra.mxu0 0.0
    %4335 = vmatprep.subr.mxu0 0.0
    %4336 = vmatpush1.msra.mxu0 0.0
    %4337 = vmatprep.subr.mxu0 0.0
    %4338 = vmatpush1.msra.mxu0 0.0
    %4339 = vmatprep.subr.mxu0 0.0
    %4340 = vmatpush1.msra.mxu0 0.0
    %4341 = vmatprep.mubr.f32.mxu0 0.0
    %4342 = vmatmul.mubr.f32.gmra.mrb[0].mxu0 %v4263
    %v4343 = vpop.f32.mrb[0].mxu0
    %v4344 = vadd.f32 0.0, %v4343
    %v4345 = vpop.f32.mrb[0].mxu0
    %4346 = vmatprep.mubr.f32.mxu0 0.0
    %4347 = vmatmul.mubr.f32.gmra.mrb[0].mxu0 %v4266
    %v4348 = vpop.f32.mrb[0].mxu0
    %v4349 = vadd.f32 0.0, %v4348
    %v4350 = vpop.f32.mrb[0].mxu0
    %4351 = vmatprep.mubr.f32.mxu0 0.0
    %4352 = vmatmul.mubr.f32.gmra.mrb[0].mxu0 %v4269
    %v4353 = vpop.f32.mrb[0].mxu0
    %v4354 = vadd.f32 0.0, %v4353
    %v4355 = vpop.f32.mrb[0].mxu0
    %4356 = vmatprep.mubr.f32.mxu0 0.0
    %4357 = vmatmul.mubr.f32.gmra.mrb[0].mxu0 %v4272
    %v4358 = vpop.f32.mrb[0].mxu0
    %v4359 = vadd.f32 0.0, %v4358
    %v4360 = vpop.f32.mrb[0].mxu0
    %4361 = vmatprep.mubr.f32.mxu0 0.0
    %4362 = vmatmul.mubr.f32.gmra.mrb[0].mxu0 %v4275
    %v4363 = vpop.f32.mrb[0].mxu0
    %v4364 = vadd.f32 0.0, %v4363
    %v4365 = vpop.f32.mrb[0].mxu0
    %4366 = vdwg.mxu0
    %v4367 = vsub.f32 %v4344, %v3938
    %v4368 = vsub.f32 %v4349, %v3939
    %v4369 = vsub.f32 %v4354, %v3940
    %v4370 = vsub.f32 %v4359, %v3941
    %v4371 = vsub.f32 %v4364, %v3942
    %v4372 = vmul.f32 %v3102, %v3388
    %v4373 = vmul.f32 %v3107, %v3393
    %v4374 = vmul.f32 %v3112, %v3398
    %v4375 = vmul.f32 %v3117, %v3403
    %v4376 = vmul.f32 %v3122, %v3408
    %v4377 = vmul.f32 %v3127, %v3413
    %v4378 = vmul.f32 %v3132, %v3418
    %v4379 = vmul.f32 %v3137, %v3423
    %v4380 = vmul.f32 %v3142, %v3428
    %v4381 = vmul.f32 %v3147, %v3433
    %v4382 = vmul.f32 %v3152, %v3438
    %v4383 = vmul.f32 %v3157, %v3443
    %4384 = vmatprep.subr.mxu0 0.0
    %4385 = vmatpush1.msra.mxu0 %v4372
    %4386 = vmatprep.subr.mxu0 0.0
    %4387 = vmatpush1.msra.mxu0 %v4373
    %4388 = vmatprep.subr.mxu0 0.0
    %4389 = vmatpush1.msra.mxu0 %v4374
    %4390 = vmatprep.subr.mxu0 0.0
    %4391 = vmatpush1.msra.mxu0 %v4375
    %4392 = vmatprep.subr.mxu0 0.0
    %4393 = vmatpush1.msra.mxu0 %v4376
    %4394 = vmatprep.subr.mxu0 0.0
    %4395 = vmatpush1.msra.mxu0 %v4377
    %4396 = vmatprep.subr.mxu0 0.0
    %4397 = vmatpush1.msra.mxu0 %v4378
    %4398 = vmatprep.subr.mxu0 0.0
    %4399 = vmatpush1.msra.mxu0 %v4379
    %4400 = vmatprep.subr.mxu0 0.0
    %4401 = vmatpush1.msra.mxu0 %v4380
    %4402 = vmatprep.subr.mxu0 0.0
    %4403 = vmatpush1.msra.mxu0 %v4381
    %4404 = vmatprep.subr.mxu0 0.0
    %4405 = vmatpush1.msra.mxu0 %v4382
    %4406 = vmatprep.subr.mxu0 0.0
    %4407 = vmatpush1.msra.mxu0 %v4383
    %4408 = vmatprep.subr.mxu0 0.0
    %4409 = vmatpush1.msra.mxu0 0.0
    %4410 = vmatprep.subr.mxu0 0.0
    %4411 = vmatpush1.msra.mxu0 0.0
    %4412 = vmatprep.subr.mxu0 0.0
    %4413 = vmatpush1.msra.mxu0 0.0
    %4414 = vmatprep.subr.mxu0 0.0
    %4415 = vmatpush1.msra.mxu0 0.0
    %4416 = vmatprep.subr.mxu0 0.0
    %4417 = vmatpush1.msra.mxu0 0.0
    %4418 = vmatprep.subr.mxu0 0.0
    %4419 = vmatpush1.msra.mxu0 0.0
    %4420 = vmatprep.subr.mxu0 0.0
    %4421 = vmatpush1.msra.mxu0 0.0
    %4422 = vmatprep.subr.mxu0 0.0
    %4423 = vmatpush1.msra.mxu0 0.0
    %4424 = vmatprep.subr.mxu0 0.0
    %4425 = vmatpush1.msra.mxu0 0.0
    %4426 = vmatprep.subr.mxu0 0.0
    %4427 = vmatpush1.msra.mxu0 0.0
    %4428 = vmatprep.subr.mxu0 0.0
    %4429 = vmatpush1.msra.mxu0 0.0
    %4430 = vmatprep.subr.mxu0 0.0
    %4431 = vmatpush1.msra.mxu0 0.0
    %4432 = vmatprep.subr.mxu0 0.0
    %4433 = vmatpush1.msra.mxu0 0.0
    %4434 = vmatprep.subr.mxu0 0.0
    %4435 = vmatpush1.msra.mxu0 0.0
    %4436 = vmatprep.subr.mxu0 0.0
    %4437 = vmatpush1.msra.mxu0 0.0
    %4438 = vmatprep.subr.mxu0 0.0
    %4439 = vmatpush1.msra.mxu0 0.0
    %4440 = vmatprep.subr.mxu0 0.0
    %4441 = vmatpush1.msra.mxu0 0.0
    %4442 = vmatprep.subr.mxu0 0.0
    %4443 = vmatpush1.msra.mxu0 0.0
    %4444 = vmatprep.subr.mxu0 0.0
    %4445 = vmatpush1.msra.mxu0 0.0
    %4446 = vmatprep.subr.mxu0 0.0
    %4447 = vmatpush1.msra.mxu0 0.0
    %4448 = vmatprep.mubr.f32.mxu0 0.0
    %4449 = vmatmul.mubr.f32.gmra.mrb[0].mxu0 %v3529
    %v4450 = vpop.f32.mrb[0].mxu0
    %v4451 = vadd.f32 0.0, %v4450
    %v4452 = vpop.f32.mrb[0].mxu0
    %4453 = vmatprep.mubr.f32.mxu0 0.0
    %4454 = vmatmul.mubr.f32.gmra.mrb[0].mxu0 %v3532
    %v4455 = vpop.f32.mrb[0].mxu0
    %v4456 = vadd.f32 0.0, %v4455
    %v4457 = vpop.f32.mrb[0].mxu0
    %4458 = vmatprep.mubr.f32.mxu0 0.0
    %4459 = vmatmul.mubr.f32.gmra.mrb[0].mxu0 %v3535
    %v4460 = vpop.f32.mrb[0].mxu0
    %v4461 = vadd.f32 0.0, %v4460
    %v4462 = vpop.f32.mrb[0].mxu0
    %4463 = vmatprep.mubr.f32.mxu0 0.0
    %4464 = vmatmul.mubr.f32.gmra.mrb[0].mxu0 %v3538
    %v4465 = vpop.f32.mrb[0].mxu0
    %v4466 = vadd.f32 0.0, %v4465
    %v4467 = vpop.f32.mrb[0].mxu0
    %4468 = vmatprep.mubr.f32.mxu0 0.0
    %4469 = vmatmul.mubr.f32.gmra.mrb[0].mxu0 %v3541
    %v4470 = vpop.f32.mrb[0].mxu0
    %v4471 = vadd.f32 0.0, %v4470
    %v4472 = vpop.f32.mrb[0].mxu0
    %4473 = vdwg.mxu0
    %v4475 = vsel %vm3453, %v4451, 0
    %v4478 = vsel %vm3453, %v4456, 0
    %v4481 = vsel %vm3453, %v4461, 0
    %v4484 = vsel %vm3453, %v4466, 0
    %v4487 = vsel %vm3453, %v4471, 0
    %4489 = vmatprep.subr.mxu0 0.0
    %4490 = vmatpush1.msra.mxu0 %v3451
    %4491 = vmatprep.subr.mxu0 0.0
    %4492 = vmatpush1.msra.mxu0 %v3452
    %4493 = vmatprep.subr.mxu0 0.0
    %4494 = vmatpush1.msra.mxu0 0.0
    %4495 = vmatprep.subr.mxu0 0.0
    %4496 = vmatpush1.msra.mxu0 0.0
    %4497 = vmatprep.subr.mxu0 0.0
    %4498 = vmatpush1.msra.mxu0 0.0
    %4499 = vmatprep.subr.mxu0 0.0
    %4500 = vmatpush1.msra.mxu0 0.0
    %4501 = vmatprep.subr.mxu0 0.0
    %4502 = vmatpush1.msra.mxu0 0.0
    %4503 = vmatprep.subr.mxu0 0.0
    %4504 = vmatpush1.msra.mxu0 0.0
    %4505 = vmatprep.subr.mxu0 0.0
    %4506 = vmatpush1.msra.mxu0 0.0
    %4507 = vmatprep.subr.mxu0 0.0
    %4508 = vmatpush1.msra.mxu0 0.0
    %4509 = vmatprep.subr.mxu0 0.0
    %4510 = vmatpush1.msra.mxu0 0.0
    %4511 = vmatprep.subr.mxu0 0.0
    %4512 = vmatpush1.msra.mxu0 0.0
    %4513 = vmatprep.subr.mxu0 0.0
    %4514 = vmatpush1.msra.mxu0 0.0
    %4515 = vmatprep.subr.mxu0 0.0
    %4516 = vmatpush1.msra.mxu0 0.0
    %4517 = vmatprep.subr.mxu0 0.0
    %4518 = vmatpush1.msra.mxu0 0.0
    %4519 = vmatprep.subr.mxu0 0.0
    %4520 = vmatpush1.msra.mxu0 0.0
    %4521 = vmatprep.subr.mxu0 0.0
    %4522 = vmatpush1.msra.mxu0 0.0
    %4523 = vmatprep.subr.mxu0 0.0
    %4524 = vmatpush1.msra.mxu0 0.0
    %4525 = vmatprep.subr.mxu0 0.0
    %4526 = vmatpush1.msra.mxu0 0.0
    %4527 = vmatprep.subr.mxu0 0.0
    %4528 = vmatpush1.msra.mxu0 0.0
    %4529 = vmatprep.subr.mxu0 0.0
    %4530 = vmatpush1.msra.mxu0 0.0
    %4531 = vmatprep.subr.mxu0 0.0
    %4532 = vmatpush1.msra.mxu0 0.0
    %4533 = vmatprep.subr.mxu0 0.0
    %4534 = vmatpush1.msra.mxu0 0.0
    %4535 = vmatprep.subr.mxu0 0.0
    %4536 = vmatpush1.msra.mxu0 0.0
    %4537 = vmatprep.subr.mxu0 0.0
    %4538 = vmatpush1.msra.mxu0 0.0
    %4539 = vmatprep.subr.mxu0 0.0
    %4540 = vmatpush1.msra.mxu0 0.0
    %4541 = vmatprep.subr.mxu0 0.0
    %4542 = vmatpush1.msra.mxu0 0.0
    %4543 = vmatprep.subr.mxu0 0.0
    %4544 = vmatpush1.msra.mxu0 0.0
    %4545 = vmatprep.subr.mxu0 0.0
    %4546 = vmatpush1.msra.mxu0 0.0
    %4547 = vmatprep.subr.mxu0 0.0
    %4548 = vmatpush1.msra.mxu0 0.0
    %4549 = vmatprep.subr.mxu0 0.0
    %4550 = vmatpush1.msra.mxu0 0.0
    %4551 = vmatprep.subr.mxu0 0.0
    %4552 = vmatpush1.msra.mxu0 0.0
    %4553 = vmatprep.mubr.f32.mxu0 0.0
    %4554 = vmatmul.mubr.f32.gmra.mrb[0].mxu0 %v4475
    %v4555 = vpop.f32.mrb[0].mxu0
    %v4556 = vadd.f32 0.0, %v4555
    %v4557 = vpop.f32.mrb[0].mxu0
    %4558 = vmatprep.mubr.f32.mxu0 0.0
    %4559 = vmatmul.mubr.f32.gmra.mrb[0].mxu0 %v4478
    %v4560 = vpop.f32.mrb[0].mxu0
    %v4561 = vadd.f32 0.0, %v4560
    %v4562 = vpop.f32.mrb[0].mxu0
    %4563 = vmatprep.mubr.f32.mxu0 0.0
    %4564 = vmatmul.mubr.f32.gmra.mrb[0].mxu0 %v4481
    %v4565 = vpop.f32.mrb[0].mxu0
    %v4566 = vadd.f32 0.0, %v4565
    %v4567 = vpop.f32.mrb[0].mxu0
    %4568 = vmatprep.mubr.f32.mxu0 0.0
    %4569 = vmatmul.mubr.f32.gmra.mrb[0].mxu0 %v4484
    %v4570 = vpop.f32.mrb[0].mxu0
    %v4571 = vadd.f32 0.0, %v4570
    %v4572 = vpop.f32.mrb[0].mxu0
    %4573 = vmatprep.mubr.f32.mxu0 0.0
    %4574 = vmatmul.mubr.f32.gmra.mrb[0].mxu0 %v4487
    %v4575 = vpop.f32.mrb[0].mxu0
    %v4576 = vadd.f32 0.0, %v4575
    %v4577 = vpop.f32.mrb[0].mxu0
    %4578 = vdwg.mxu0
    %v4579 = vsub.f32 %v4556, %v3943
    %v4580 = vsub.f32 %v4561, %v3944
    %v4581 = vsub.f32 %v4566, %v3945
    %v4582 = vsub.f32 %v4571, %v3946
    %v4583 = vsub.f32 %v4576, %v3947
    %v4584 = vmul.f32 %v4579, 2.0
    %v4585 = vmul.f32 %v4580, 2.0
    %v4586 = vmul.f32 %v4581, 2.0
    %v4587 = vmul.f32 %v4582, 2.0
    %v4588 = vmul.f32 %v4583, 2.0
    %v4589 = vstv %s3526
    %v4590 = vadd.f32 %v4584, %v4589
    %v4591 = vadd.f32 %v4585, %v4589
    %v4592 = vadd.f32 %v4586, %v4589
    %v4593 = vadd.f32 %v4587, %v4589
    %v4594 = vadd.f32 %v4588, %v4589
    %v4595 = vadd.f32 %v4155, %v4367
    %v4596 = vadd.f32 %v4156, %v4368
    %v4597 = vadd.f32 %v4157, %v4369
    %v4598 = vadd.f32 %v4158, %v4370
    %v4599 = vadd.f32 %v4159, %v4371
    %v4600 = vadd.f32 %v4595, %v4589
    %v4601 = vadd.f32 %v4596, %v4589
    %v4602 = vadd.f32 %v4597, %v4589
    %v4603 = vadd.f32 %v4598, %v4589
    %v4604 = vadd.f32 %v4599, %v4589
    %v4605 = vrcp.pop %v4600
    %v4606 = vmul.f32 %v4590, %v4605
    %v4607 = vrcp.pop %v4601
    %v4608 = vmul.f32 %v4591, %v4607
    %v4609 = vrcp.pop %v4602
    %v4610 = vmul.f32 %v4592, %v4609
    %v4611 = vrcp.pop %v4603
    %v4612 = vmul.f32 %v4593, %v4611
    %v4613 = vrcp.pop %v4604
    %v4614 = vmul.f32 %v4594, %v4613
    %vm4615 = vcmask 48128
    %v4616 = vsel %vm4615, %v4606, 0.0
    %v4617 = vsel %vm4615, %v4608, 0.0
    %v4618 = vadd.f32 %v4616, %v4617
    %v4619 = vsel %vm4615, %v4610, 0.0
    %v4620 = vadd.f32 %v4618, %v4619
    %v4621 = vsel %vm4615, %v4612, 0.0
    %v4622 = vadd.f32 %v4620, %v4621
    %vm4623 = vcmask 44032
    %v4624 = vsel %vm4623, %v4614, 0.0
    %v4625 = vadd.f32 %v4622, %v4624
    %4626 = vadd.xlane.f32.xlu0 %v4625
    %v4627 = vpop.xlane.xlu0 %4626
    %v4628 = vrot.slane %v4627, 4
    %v4629 = vadd.f32 %v4627, %v4628
    %v4630 = vrot.slane %v4629, 2
    %v4631 = vadd.f32 %v4629, %v4630
    %v4632 = vrot.slane %v4631, 1
    %v4633 = vadd.f32 %v4631, %v4632
    %s4634 = vtos %v4633
    %s4635 = smul.f32 %s4634, 0.0046296297
    %s4636 = sadd.f32 %s4635, 1e-15
    %v4637 = vmul.f32 %v3943, 2.0
    %v4638 = vmul.f32 %v3944, 2.0
    %v4639 = vmul.f32 %v3945, 2.0
    %v4640 = vmul.f32 %v3946, 2.0
    %v4641 = vmul.f32 %v3947, 2.0
    %v4642 = vstv %s3524
    %v4643 = vadd.f32 %v4637, %v4642
    %v4644 = vadd.f32 %v4638, %v4642
    %v4645 = vadd.f32 %v4639, %v4642
    %v4646 = vadd.f32 %v4640, %v4642
    %v4647 = vadd.f32 %v4641, %v4642
    %v4648 = vmul.f32 %v4643, %v4590
    %v4649 = vmul.f32 %v4644, %v4591
    %v4650 = vmul.f32 %v4645, %v4592
    %v4651 = vmul.f32 %v4646, %v4593
    %v4652 = vmul.f32 %v4647, %v4594
    %v4653 = vadd.f32 %v3933, %v3938
    %v4654 = vadd.f32 %v3934, %v3939
    %v4655 = vadd.f32 %v3935, %v3940
    %v4656 = vadd.f32 %v3936, %v3941
    %v4657 = vadd.f32 %v3937, %v3942
    %v4658 = vadd.f32 %v4653, %v4642
    %v4659 = vadd.f32 %v4654, %v4642
    %v4660 = vadd.f32 %v4655, %v4642
    %v4661 = vadd.f32 %v4656, %v4642
    %v4662 = vadd.f32 %v4657, %v4642
    %v4663 = vmul.f32 %v4658, %v4600
    %v4664 = vmul.f32 %v4659, %v4601
    %v4665 = vmul.f32 %v4660, %v4602
    %v4666 = vmul.f32 %v4661, %v4603
    %v4667 = vmul.f32 %v4662, %v4604
    %v4668 = vadd.f32 %v4663, 1e-15
    %v4669 = vadd.f32 %v4664, 1e-15
    %v4670 = vadd.f32 %v4665, 1e-15
    %v4671 = vadd.f32 %v4666, 1e-15
    %v4672 = vadd.f32 %v4667, 1e-15
    %v4673 = vrcp.pop %v4668
    %v4674 = vmul.f32 %v4648, %v4673
    %v4675 = vrcp.pop %v4669
    %v4676 = vmul.f32 %v4649, %v4675
    %v4677 = vrcp.pop %v4670
    %v4678 = vmul.f32 %v4650, %v4677
    %v4679 = vrcp.pop %v4671
    %v4680 = vmul.f32 %v4651, %v4679
    %v4681 = vrcp.pop %v4672
    %v4682 = vmul.f32 %v4652, %v4681
    %v4683 = vsel %vm4615, %v4674, 0.0
    %v4684 = vsel %vm4615, %v4676, 0.0
    %v4685 = vadd.f32 %v4683, %v4684
    %v4686 = vsel %vm4615, %v4678, 0.0
    %v4687 = vadd.f32 %v4685, %v4686
    %v4688 = vsel %vm4615, %v4680, 0.0
    %v4689 = vadd.f32 %v4687, %v4688
    %v4690 = vsel %vm4623, %v4682, 0.0
    %v4691 = vadd.f32 %v4689, %v4690
    %4692 = vadd.xlane.f32.xlu0 %v4691
    %v4693 = vpop.xlane.xlu0 %4692
    %v4694 = vrot.slane %v4693, 4
    %v4695 = vadd.f32 %v4693, %v4694
    %v4696 = vrot.slane %v4695, 2
    %v4697 = vadd.f32 %v4695, %v4696
    %v4698 = vrot.slane %v4697, 1
    %v4699 = vadd.f32 %v4697, %v4698
    %s4700 = vtos %v4699
    %s4701 = smul.f32 %s4700, 0.0046296297
    %s4702 = scalar_lea.smem [#allocation28], 128
    %4703 = sst [smem:[%s4702]] %s4701
    %s4704 = scalar_lea.smem [#allocation28], 129
    %4705 = sst [smem:[%s4704]] %s4636
    %v4706 = vld [vmem:[%s14] sm:$0xff]
    %v4707 = vld [vmem:[%s14 + $0x8] sm:$0xff]
    %v4708 = vld [vmem:[%s14 + $0x10] sm:$0xff]
    %v4709 = vld [vmem:[%s14 + $0x18] sm:$0xff]
    %v4710 = vld [vmem:[%s14 + $0x20] sm:$0xff]
    %v4711 = vld [vmem:[%s14 + $0x28] sm:$0xff]
    %v4712 = vld [vmem:[#allocation25] sm:$0xff]
    %v4713 = vld [vmem:[#allocation25 + $0x8] sm:$0xff]
    %v4715 = vsel %vm3527, %v4706, 0
    %v4718 = vsel %vm3527, %v4707, 0
    %v4721 = vsel %vm3527, %v4708, 0
    %v4724 = vsel %vm3527, %v4709, 0
    %v4727 = vsel %vm3527, %v4710, 0
    %v4730 = vsel %vm3527, %v4711, 0
    %4732 = vmatprep.subr.mxu0 0.0
    %4733 = vmatpush1.msra.mxu0 %v3102
    %4734 = vmatprep.subr.mxu0 0.0
    %4735 = vmatpush1.msra.mxu0 %v3107
    %4736 = vmatprep.subr.mxu0 0.0
    %4737 = vmatpush1.msra.mxu0 %v3112
    %4738 = vmatprep.subr.mxu0 0.0
    %4739 = vmatpush1.msra.mxu0 %v3117
    %4740 = vmatprep.subr.mxu0 0.0
    %4741 = vmatpush1.msra.mxu0 %v3122
    %4742 = vmatprep.subr.mxu0 0.0
    %4743 = vmatpush1.msra.mxu0 %v3127
    %4744 = vmatprep.subr.mxu0 0.0
    %4745 = vmatpush1.msra.mxu0 %v3132
    %4746 = vmatprep.subr.mxu0 0.0
    %4747 = vmatpush1.msra.mxu0 %v3137
    %4748 = vmatprep.subr.mxu0 0.0
    %4749 = vmatpush1.msra.mxu0 %v3142
    %4750 = vmatprep.subr.mxu0 0.0
    %4751 = vmatpush1.msra.mxu0 %v3147
    %4752 = vmatprep.subr.mxu0 0.0
    %4753 = vmatpush1.msra.mxu0 %v3152
    %4754 = vmatprep.subr.mxu0 0.0
    %4755 = vmatpush1.msra.mxu0 %v3157
    %4756 = vmatprep.subr.mxu0 0.0
    %4757 = vmatpush1.msra.mxu0 0.0
    %4758 = vmatprep.subr.mxu0 0.0
    %4759 = vmatpush1.msra.mxu0 0.0
    %4760 = vmatprep.subr.mxu0 0.0
    %4761 = vmatpush1.msra.mxu0 0.0
    %4762 = vmatprep.subr.mxu0 0.0
    %4763 = vmatpush1.msra.mxu0 0.0
    %4764 = vmatprep.subr.mxu0 0.0
    %4765 = vmatpush1.msra.mxu0 0.0
    %4766 = vmatprep.subr.mxu0 0.0
    %4767 = vmatpush1.msra.mxu0 0.0
    %4768 = vmatprep.subr.mxu0 0.0
    %4769 = vmatpush1.msra.mxu0 0.0
    %4770 = vmatprep.subr.mxu0 0.0
    %4771 = vmatpush1.msra.mxu0 0.0
    %4772 = vmatprep.subr.mxu0 0.0
    %4773 = vmatpush1.msra.mxu0 0.0
    %4774 = vmatprep.subr.mxu0 0.0
    %4775 = vmatpush1.msra.mxu0 0.0
    %4776 = vmatprep.subr.mxu0 0.0
    %4777 = vmatpush1.msra.mxu0 0.0
    %4778 = vmatprep.subr.mxu0 0.0
    %4779 = vmatpush1.msra.mxu0 0.0
    %4780 = vmatprep.subr.mxu0 0.0
    %4781 = vmatpush1.msra.mxu0 0.0
    %4782 = vmatprep.subr.mxu0 0.0
    %4783 = vmatpush1.msra.mxu0 0.0
    %4784 = vmatprep.subr.mxu0 0.0
    %4785 = vmatpush1.msra.mxu0 0.0
    %4786 = vmatprep.subr.mxu0 0.0
    %4787 = vmatpush1.msra.mxu0 0.0
    %4788 = vmatprep.subr.mxu0 0.0
    %4789 = vmatpush1.msra.mxu0 0.0
    %4790 = vmatprep.subr.mxu0 0.0
    %4791 = vmatpush1.msra.mxu0 0.0
    %4792 = vmatprep.subr.mxu0 0.0
    %4793 = vmatpush1.msra.mxu0 0.0
    %4794 = vmatprep.subr.mxu0 0.0
    %4795 = vmatpush1.msra.mxu0 0.0
    %4796 = vmatprep.mubr.f32.mxu0 0.0
    %4797 = vmatmul.mubr.f32.gmra.mrb[0].mxu0 %v4715
    %v4798 = vpop.f32.mrb[0].mxu0
    %v4799 = vadd.f32 0.0, %v4798
    %v4800 = vpop.f32.mrb[0].mxu0
    %4801 = vmatprep.mubr.f32.mxu0 0.0
    %4802 = vmatmul.mubr.f32.gmra.mrb[0].mxu0 %v4718
    %v4803 = vpop.f32.mrb[0].mxu0
    %v4804 = vadd.f32 0.0, %v4803
    %v4805 = vpop.f32.mrb[0].mxu0
    %4806 = vmatprep.mubr.f32.mxu0 0.0
    %4807 = vmatmul.mubr.f32.gmra.mrb[0].mxu0 %v4721
    %v4808 = vpop.f32.mrb[0].mxu0
    %v4809 = vadd.f32 0.0, %v4808
    %v4810 = vpop.f32.mrb[0].mxu0
    %4811 = vmatprep.mubr.f32.mxu0 0.0
    %4812 = vmatmul.mubr.f32.gmra.mrb[0].mxu0 %v4724
    %v4813 = vpop.f32.mrb[0].mxu0
    %v4814 = vadd.f32 0.0, %v4813
    %v4815 = vpop.f32.mrb[0].mxu0
    %4816 = vmatprep.mubr.f32.mxu0 0.0
    %4817 = vmatmul.mubr.f32.gmra.mrb[0].mxu0 %v4727
    %v4818 = vpop.f32.mrb[0].mxu0
    %v4819 = vadd.f32 0.0, %v4818
    %v4820 = vpop.f32.mrb[0].mxu0
    %4821 = vmatprep.mubr.f32.mxu0 0.0
    %4822 = vmatmul.mubr.f32.gmra.mrb[0].mxu0 %v4730
    %v4823 = vpop.f32.mrb[0].mxu0
    %v4824 = vadd.f32 0.0, %v4823
    %v4825 = vpop.f32.mrb[0].mxu0
    %4826 = vdwg.mxu0
    %v4828 = vsel %vm3453, %v4799, 0
    %v4831 = vsel %vm3453, %v4804, 0
    %v4834 = vsel %vm3453, %v4809, 0
    %v4837 = vsel %vm3453, %v4814, 0
    %v4840 = vsel %vm3453, %v4819, 0
    %v4843 = vsel %vm3453, %v4824, 0
    %4845 = vmatprep.subr.mxu0 0.0
    %4846 = vmatpush1.msra.mxu0 %v4712
    %4847 = vmatprep.subr.mxu0 0.0
    %4848 = vmatpush1.msra.mxu0 %v4713
    %4849 = vmatprep.subr.mxu0 0.0
    %4850 = vmatpush1.msra.mxu0 0.0
    %4851 = vmatprep.subr.mxu0 0.0
    %4852 = vmatpush1.msra.mxu0 0.0
    %4853 = vmatprep.subr.mxu0 0.0
    %4854 = vmatpush1.msra.mxu0 0.0
    %4855 = vmatprep.subr.mxu0 0.0
    %4856 = vmatpush1.msra.mxu0 0.0
    %4857 = vmatprep.subr.mxu0 0.0
    %4858 = vmatpush1.msra.mxu0 0.0
    %4859 = vmatprep.subr.mxu0 0.0
    %4860 = vmatpush1.msra.mxu0 0.0
    %4861 = vmatprep.subr.mxu0 0.0
    %4862 = vmatpush1.msra.mxu0 0.0
    %4863 = vmatprep.subr.mxu0 0.0
    %4864 = vmatpush1.msra.mxu0 0.0
    %4865 = vmatprep.subr.mxu0 0.0
    %4866 = vmatpush1.msra.mxu0 0.0
    %4867 = vmatprep.subr.mxu0 0.0
    %4868 = vmatpush1.msra.mxu0 0.0
    %4869 = vmatprep.subr.mxu0 0.0
    %4870 = vmatpush1.msra.mxu0 0.0
    %4871 = vmatprep.subr.mxu0 0.0
    %4872 = vmatpush1.msra.mxu0 0.0
    %4873 = vmatprep.subr.mxu0 0.0
    %4874 = vmatpush1.msra.mxu0 0.0
    %4875 = vmatprep.subr.mxu0 0.0
    %4876 = vmatpush1.msra.mxu0 0.0
    %4877 = vmatprep.subr.mxu0 0.0
    %4878 = vmatpush1.msra.mxu0 0.0
    %4879 = vmatprep.subr.mxu0 0.0
    %4880 = vmatpush1.msra.mxu0 0.0
    %4881 = vmatprep.subr.mxu0 0.0
    %4882 = vmatpush1.msra.mxu0 0.0
    %4883 = vmatprep.subr.mxu0 0.0
    %4884 = vmatpush1.msra.mxu0 0.0
    %4885 = vmatprep.subr.mxu0 0.0
    %4886 = vmatpush1.msra.mxu0 0.0
    %4887 = vmatprep.subr.mxu0 0.0
    %4888 = vmatpush1.msra.mxu0 0.0
    %4889 = vmatprep.subr.mxu0 0.0
    %4890 = vmatpush1.msra.mxu0 0.0
    %4891 = vmatprep.subr.mxu0 0.0
    %4892 = vmatpush1.msra.mxu0 0.0
    %4893 = vmatprep.subr.mxu0 0.0
    %4894 = vmatpush1.msra.mxu0 0.0
    %4895 = vmatprep.subr.mxu0 0.0
    %4896 = vmatpush1.msra.mxu0 0.0
    %4897 = vmatprep.subr.mxu0 0.0
    %4898 = vmatpush1.msra.mxu0 0.0
    %4899 = vmatprep.subr.mxu0 0.0
    %4900 = vmatpush1.msra.mxu0 0.0
    %4901 = vmatprep.subr.mxu0 0.0
    %4902 = vmatpush1.msra.mxu0 0.0
    %4903 = vmatprep.subr.mxu0 0.0
    %4904 = vmatpush1.msra.mxu0 0.0
    %4905 = vmatprep.subr.mxu0 0.0
    %4906 = vmatpush1.msra.mxu0 0.0
    %4907 = vmatprep.subr.mxu0 0.0
    %4908 = vmatpush1.msra.mxu0 0.0
    %4909 = vmatprep.mubr.f32.mxu0 0.0
    %4910 = vmatmul.mubr.f32.gmra.mrb[0].mxu0 %v4828
    %v4911 = vpop.f32.mrb[0].mxu0
    %v4912 = vadd.f32 0.0, %v4911
    %v4913 = vpop.f32.mrb[0].mxu0
    %4914 = vmatprep.mubr.f32.mxu0 0.0
    %4915 = vmatmul.mubr.f32.gmra.mrb[0].mxu0 %v4831
    %v4916 = vpop.f32.mrb[0].mxu0
    %v4917 = vadd.f32 0.0, %v4916
    %v4918 = vpop.f32.mrb[0].mxu0
    %4919 = vmatprep.mubr.f32.mxu0 0.0
    %4920 = vmatmul.mubr.f32.gmra.mrb[0].mxu0 %v4834
    %v4921 = vpop.f32.mrb[0].mxu0
    %v4922 = vadd.f32 0.0, %v4921
    %v4923 = vpop.f32.mrb[0].mxu0
    %4924 = vmatprep.mubr.f32.mxu0 0.0
    %4925 = vmatmul.mubr.f32.gmra.mrb[0].mxu0 %v4837
    %v4926 = vpop.f32.mrb[0].mxu0
    %v4927 = vadd.f32 0.0, %v4926
    %v4928 = vpop.f32.mrb[0].mxu0
    %4929 = vmatprep.mubr.f32.mxu0 0.0
    %4930 = vmatmul.mubr.f32.gmra.mrb[0].mxu0 %v4840
    %v4931 = vpop.f32.mrb[0].mxu0
    %v4932 = vadd.f32 0.0, %v4931
    %v4933 = vpop.f32.mrb[0].mxu0
    %4934 = vmatprep.mubr.f32.mxu0 0.0
    %4935 = vmatmul.mubr.f32.gmra.mrb[0].mxu0 %v4843
    %v4936 = vpop.f32.mrb[0].mxu0
    %v4937 = vadd.f32 0.0, %v4936
    %v4938 = vpop.f32.mrb[0].mxu0
    %4939 = vdwg.mxu0
    %4940 = vmatprep.subr.mxu0 0.0
    %4941 = vmatpush1.msra.mxu0 %v3388
    %4942 = vmatprep.subr.mxu0 0.0
    %4943 = vmatpush1.msra.mxu0 %v3393
    %4944 = vmatprep.subr.mxu0 0.0
    %4945 = vmatpush1.msra.mxu0 %v3398
    %4946 = vmatprep.subr.mxu0 0.0
    %4947 = vmatpush1.msra.mxu0 %v3403
    %4948 = vmatprep.subr.mxu0 0.0
    %4949 = vmatpush1.msra.mxu0 %v3408
    %4950 = vmatprep.subr.mxu0 0.0
    %4951 = vmatpush1.msra.mxu0 %v3413
    %4952 = vmatprep.subr.mxu0 0.0
    %4953 = vmatpush1.msra.mxu0 %v3418
    %4954 = vmatprep.subr.mxu0 0.0
    %4955 = vmatpush1.msra.mxu0 %v3423
    %4956 = vmatprep.subr.mxu0 0.0
    %4957 = vmatpush1.msra.mxu0 %v3428
    %4958 = vmatprep.subr.mxu0 0.0
    %4959 = vmatpush1.msra.mxu0 %v3433
    %4960 = vmatprep.subr.mxu0 0.0
    %4961 = vmatpush1.msra.mxu0 %v3438
    %4962 = vmatprep.subr.mxu0 0.0
    %4963 = vmatpush1.msra.mxu0 %v3443
    %4964 = vmatprep.subr.mxu0 0.0
    %4965 = vmatpush1.msra.mxu0 0.0
    %4966 = vmatprep.subr.mxu0 0.0
    %4967 = vmatpush1.msra.mxu0 0.0
    %4968 = vmatprep.subr.mxu0 0.0
    %4969 = vmatpush1.msra.mxu0 0.0
    %4970 = vmatprep.subr.mxu0 0.0
    %4971 = vmatpush1.msra.mxu0 0.0
    %4972 = vmatprep.subr.mxu0 0.0
    %4973 = vmatpush1.msra.mxu0 0.0
    %4974 = vmatprep.subr.mxu0 0.0
    %4975 = vmatpush1.msra.mxu0 0.0
    %4976 = vmatprep.subr.mxu0 0.0
    %4977 = vmatpush1.msra.mxu0 0.0
    %4978 = vmatprep.subr.mxu0 0.0
    %4979 = vmatpush1.msra.mxu0 0.0
    %4980 = vmatprep.subr.mxu0 0.0
    %4981 = vmatpush1.msra.mxu0 0.0
    %4982 = vmatprep.subr.mxu0 0.0
    %4983 = vmatpush1.msra.mxu0 0.0
    %4984 = vmatprep.subr.mxu0 0.0
    %4985 = vmatpush1.msra.mxu0 0.0
    %4986 = vmatprep.subr.mxu0 0.0
    %4987 = vmatpush1.msra.mxu0 0.0
    %4988 = vmatprep.subr.mxu0 0.0
    %4989 = vmatpush1.msra.mxu0 0.0
    %4990 = vmatprep.subr.mxu0 0.0
    %4991 = vmatpush1.msra.mxu0 0.0
    %4992 = vmatprep.subr.mxu0 0.0
    %4993 = vmatpush1.msra.mxu0 0.0
    %4994 = vmatprep.subr.mxu0 0.0
    %4995 = vmatpush1.msra.mxu0 0.0
    %4996 = vmatprep.subr.mxu0 0.0
    %4997 = vmatpush1.msra.mxu0 0.0
    %4998 = vmatprep.subr.mxu0 0.0
    %4999 = vmatpush1.msra.mxu0 0.0
    %5000 = vmatprep.subr.mxu0 0.0
    %5001 = vmatpush1.msra.mxu0 0.0
    %5002 = vmatprep.subr.mxu0 0.0
    %5003 = vmatpush1.msra.mxu0 0.0
    %5004 = vmatprep.mubr.f32.mxu0 0.0
    %5005 = vmatmul.mubr.f32.gmra.mrb[0].mxu0 %v4715
    %v5006 = vpop.f32.mrb[0].mxu0
    %v5007 = vadd.f32 0.0, %v5006
    %v5008 = vpop.f32.mrb[0].mxu0
    %5009 = vmatprep.mubr.f32.mxu0 0.0
    %5010 = vmatmul.mubr.f32.gmra.mrb[0].mxu0 %v4718
    %v5011 = vpop.f32.mrb[0].mxu0
    %v5012 = vadd.f32 0.0, %v5011
    %v5013 = vpop.f32.mrb[0].mxu0
    %5014 = vmatprep.mubr.f32.mxu0 0.0
    %5015 = vmatmul.mubr.f32.gmra.mrb[0].mxu0 %v4721
    %v5016 = vpop.f32.mrb[0].mxu0
    %v5017 = vadd.f32 0.0, %v5016
    %v5018 = vpop.f32.mrb[0].mxu0
    %5019 = vmatprep.mubr.f32.mxu0 0.0
    %5020 = vmatmul.mubr.f32.gmra.mrb[0].mxu0 %v4724
    %v5021 = vpop.f32.mrb[0].mxu0
    %v5022 = vadd.f32 0.0, %v5021
    %v5023 = vpop.f32.mrb[0].mxu0
    %5024 = vmatprep.mubr.f32.mxu0 0.0
    %5025 = vmatmul.mubr.f32.gmra.mrb[0].mxu0 %v4727
    %v5026 = vpop.f32.mrb[0].mxu0
    %v5027 = vadd.f32 0.0, %v5026
    %v5028 = vpop.f32.mrb[0].mxu0
    %5029 = vmatprep.mubr.f32.mxu0 0.0
    %5030 = vmatmul.mubr.f32.gmra.mrb[0].mxu0 %v4730
    %v5031 = vpop.f32.mrb[0].mxu0
    %v5032 = vadd.f32 0.0, %v5031
    %v5033 = vpop.f32.mrb[0].mxu0
    %5034 = vdwg.mxu0
    %v5036 = vsel %vm3453, %v5007, 0
    %v5039 = vsel %vm3453, %v5012, 0
    %v5042 = vsel %vm3453, %v5017, 0
    %v5045 = vsel %vm3453, %v5022, 0
    %v5048 = vsel %vm3453, %v5027, 0
    %v5051 = vsel %vm3453, %v5032, 0
    %5053 = vmatprep.subr.mxu0 0.0
    %5054 = vmatpush1.msra.mxu0 %v4712
    %5055 = vmatprep.subr.mxu0 0.0
    %5056 = vmatpush1.msra.mxu0 %v4713
    %5057 = vmatprep.subr.mxu0 0.0
    %5058 = vmatpush1.msra.mxu0 0.0
    %5059 = vmatprep.subr.mxu0 0.0
    %5060 = vmatpush1.msra.mxu0 0.0
    %5061 = vmatprep.subr.mxu0 0.0
    %5062 = vmatpush1.msra.mxu0 0.0
    %5063 = vmatprep.subr.mxu0 0.0
    %5064 = vmatpush1.msra.mxu0 0.0
    %5065 = vmatprep.subr.mxu0 0.0
    %5066 = vmatpush1.msra.mxu0 0.0
    %5067 = vmatprep.subr.mxu0 0.0
    %5068 = vmatpush1.msra.mxu0 0.0
    %5069 = vmatprep.subr.mxu0 0.0
    %5070 = vmatpush1.msra.mxu0 0.0
    %5071 = vmatprep.subr.mxu0 0.0
    %5072 = vmatpush1.msra.mxu0 0.0
    %5073 = vmatprep.subr.mxu0 0.0
    %5074 = vmatpush1.msra.mxu0 0.0
    %5075 = vmatprep.subr.mxu0 0.0
    %5076 = vmatpush1.msra.mxu0 0.0
    %5077 = vmatprep.subr.mxu0 0.0
    %5078 = vmatpush1.msra.mxu0 0.0
    %5079 = vmatprep.subr.mxu0 0.0
    %5080 = vmatpush1.msra.mxu0 0.0
    %5081 = vmatprep.subr.mxu0 0.0
    %5082 = vmatpush1.msra.mxu0 0.0
    %5083 = vmatprep.subr.mxu0 0.0
    %5084 = vmatpush1.msra.mxu0 0.0
    %5085 = vmatprep.subr.mxu0 0.0
    %5086 = vmatpush1.msra.mxu0 0.0
    %5087 = vmatprep.subr.mxu0 0.0
    %5088 = vmatpush1.msra.mxu0 0.0
    %5089 = vmatprep.subr.mxu0 0.0
    %5090 = vmatpush1.msra.mxu0 0.0
    %5091 = vmatprep.subr.mxu0 0.0
    %5092 = vmatpush1.msra.mxu0 0.0
    %5093 = vmatprep.subr.mxu0 0.0
    %5094 = vmatpush1.msra.mxu0 0.0
    %5095 = vmatprep.subr.mxu0 0.0
    %5096 = vmatpush1.msra.mxu0 0.0
    %5097 = vmatprep.subr.mxu0 0.0
    %5098 = vmatpush1.msra.mxu0 0.0
    %5099 = vmatprep.subr.mxu0 0.0
    %5100 = vmatpush1.msra.mxu0 0.0
    %5101 = vmatprep.subr.mxu0 0.0
    %5102 = vmatpush1.msra.mxu0 0.0
    %5103 = vmatprep.subr.mxu0 0.0
    %5104 = vmatpush1.msra.mxu0 0.0
    %5105 = vmatprep.subr.mxu0 0.0
    %5106 = vmatpush1.msra.mxu0 0.0
    %5107 = vmatprep.subr.mxu0 0.0
    %5108 = vmatpush1.msra.mxu0 0.0
    %5109 = vmatprep.subr.mxu0 0.0
    %5110 = vmatpush1.msra.mxu0 0.0
    %5111 = vmatprep.subr.mxu0 0.0
    %5112 = vmatpush1.msra.mxu0 0.0
    %5113 = vmatprep.subr.mxu0 0.0
    %5114 = vmatpush1.msra.mxu0 0.0
    %5115 = vmatprep.subr.mxu0 0.0
    %5116 = vmatpush1.msra.mxu0 0.0
    %5117 = vmatprep.mubr.f32.mxu0 0.0
    %5118 = vmatmul.mubr.f32.gmra.mrb[0].mxu0 %v5036
    %v5119 = vpop.f32.mrb[0].mxu0
    %v5120 = vadd.f32 0.0, %v5119
    %v5121 = vpop.f32.mrb[0].mxu0
    %5122 = vmatprep.mubr.f32.mxu0 0.0
    %5123 = vmatmul.mubr.f32.gmra.mrb[0].mxu0 %v5039
    %v5124 = vpop.f32.mrb[0].mxu0
    %v5125 = vadd.f32 0.0, %v5124
    %v5126 = vpop.f32.mrb[0].mxu0
    %5127 = vmatprep.mubr.f32.mxu0 0.0
    %5128 = vmatmul.mubr.f32.gmra.mrb[0].mxu0 %v5042
    %v5129 = vpop.f32.mrb[0].mxu0
    %v5130 = vadd.f32 0.0, %v5129
    %v5131 = vpop.f32.mrb[0].mxu0
    %5132 = vmatprep.mubr.f32.mxu0 0.0
    %5133 = vmatmul.mubr.f32.gmra.mrb[0].mxu0 %v5045
    %v5134 = vpop.f32.mrb[0].mxu0
    %v5135 = vadd.f32 0.0, %v5134
    %v5136 = vpop.f32.mrb[0].mxu0
    %5137 = vmatprep.mubr.f32.mxu0 0.0
    %5138 = vmatmul.mubr.f32.gmra.mrb[0].mxu0 %v5048
    %v5139 = vpop.f32.mrb[0].mxu0
    %v5140 = vadd.f32 0.0, %v5139
    %v5141 = vpop.f32.mrb[0].mxu0
    %5142 = vmatprep.mubr.f32.mxu0 0.0
    %5143 = vmatmul.mubr.f32.gmra.mrb[0].mxu0 %v5051
    %v5144 = vpop.f32.mrb[0].mxu0
    %v5145 = vadd.f32 0.0, %v5144
    %v5146 = vpop.f32.mrb[0].mxu0
    %5147 = vdwg.mxu0
    %v5148 = vld [vmem:[#allocation13] sm:$0x3f]
    %v5149 = vld [vmem:[#allocation14] sm:$0xff]
    %vm5150 = vcmask 64512
    %v5151 = vsel %vm5150, %v4912, -inf
    %v5152 = vsel %vm5150, %v4917, -inf
    %v5153 = vsel %vm5150, %v4922, -inf
    %v5154 = vsel %vm5150, %v4927, -inf
    %v5155 = vsel %vm5150, %v4932, -inf
    %v5156 = vmax.f32 %v5151, %v5155
    %v5157 = vsel %vm5150, %v4937, -inf
    %v5158 = vmax.f32 %v5152, %v5157
    %v5159 = vmax.f32 %v5156, %v5158
    %v5160 = vmax.f32 %v5153, %v5154
    %v5161 = vmax.f32 %v5159, %v5160
    %5162 = vmax.xlane.f32.xlu0 %v5161
    %v5163 = vpop.xlane.xlu0 %5162
    %v5164 = vrot.slane %v5163, 4
    %v5165 = vmax.f32 %v5163, %v5164
    %v5166 = vrot.slane %v5165, 2
    %v5167 = vmax.f32 %v5165, %v5166
    %v5168 = vrot.slane %v5167, 1
    %v5169 = vmax.f32 %v5167, %v5168
    %s5170 = vtos %v5169
    %v5171 = vsel %vm5150, %v4912, inf
    %v5172 = vsel %vm5150, %v4917, inf
    %v5173 = vsel %vm5150, %v4922, inf
    %v5174 = vsel %vm5150, %v4927, inf
    %v5175 = vsel %vm5150, %v4932, inf
    %v5176 = vmin.f32 %v5171, %v5175
    %v5177 = vsel %vm5150, %v4937, inf
    %v5178 = vmin.f32 %v5172, %v5177
    %v5179 = vmin.f32 %v5176, %v5178
    %v5180 = vmin.f32 %v5173, %v5174
    %v5181 = vmin.f32 %v5179, %v5180
    %5182 = vmin.xlane.f32.xlu0 %v5181
    %v5183 = vpop.xlane.xlu0 %5182
    %v5184 = vrot.slane %v5183, 4
    %v5185 = vmin.f32 %v5183, %v5184
    %v5186 = vrot.slane %v5185, 2
    %v5187 = vmin.f32 %v5185, %v5186
    %v5188 = vrot.slane %v5187, 1
    %v5189 = vmin.f32 %v5187, %v5188
    %s5190 = vtos %v5189
    %p5191 = scmp.gt.f32.partialorder %s5170, 128.0
    %s5192 = scalar_select %p5191, 255.0, 1.0
    %p5193 = scmp.lt.f32.partialorder %s5190, -0.5
    %s5194 = scalar_select %p5193, -1.0, 0.0
    %s5195 = ssub.f32 %s5192, %s5194
    %s5196 = smul.f32 %s5195, 0.01
    %s5197 = smul.f32 %s5196, %s5196
    %s5198 = smul.f32 %s5195, 0.03
    %s5199 = smul.f32 %s5198, %s5198
    %vm5200 = vcmask 392192
    %v5202 = vsel %vm5200, %v5148, 0
    %5204 = vmatprep.subr.mxu0 0.0
    %5205 = vmatpush1.msra.mxu0 %v4912
    %5206 = vmatprep.subr.mxu0 0.0
    %5207 = vmatpush1.msra.mxu0 %v4917
    %5208 = vmatprep.subr.mxu0 0.0
    %5209 = vmatpush1.msra.mxu0 %v4922
    %5210 = vmatprep.subr.mxu0 0.0
    %5211 = vmatpush1.msra.mxu0 %v4927
    %5212 = vmatprep.subr.mxu0 0.0
    %5213 = vmatpush1.msra.mxu0 %v4932
    %5214 = vmatprep.subr.mxu0 0.0
    %5215 = vmatpush1.msra.mxu0 %v4937
    %5216 = vmatprep.subr.mxu0 0.0
    %5217 = vmatpush1.msra.mxu0 0.0
    %5218 = vmatprep.subr.mxu0 0.0
    %5219 = vmatpush1.msra.mxu0 0.0
    %5220 = vmatprep.subr.mxu0 0.0
    %5221 = vmatpush1.msra.mxu0 0.0
    %5222 = vmatprep.subr.mxu0 0.0
    %5223 = vmatpush1.msra.mxu0 0.0
    %5224 = vmatprep.subr.mxu0 0.0
    %5225 = vmatpush1.msra.mxu0 0.0
    %5226 = vmatprep.subr.mxu0 0.0
    %5227 = vmatpush1.msra.mxu0 0.0
    %5228 = vmatprep.subr.mxu0 0.0
    %5229 = vmatpush1.msra.mxu0 0.0
    %5230 = vmatprep.subr.mxu0 0.0
    %5231 = vmatpush1.msra.mxu0 0.0
    %5232 = vmatprep.subr.mxu0 0.0
    %5233 = vmatpush1.msra.mxu0 0.0
    %5234 = vmatprep.subr.mxu0 0.0
    %5235 = vmatpush1.msra.mxu0 0.0
    %5236 = vmatprep.subr.mxu0 0.0
    %5237 = vmatpush1.msra.mxu0 0.0
    %5238 = vmatprep.subr.mxu0 0.0
    %5239 = vmatpush1.msra.mxu0 0.0
    %5240 = vmatprep.subr.mxu0 0.0
    %5241 = vmatpush1.msra.mxu0 0.0
    %5242 = vmatprep.subr.mxu0 0.0
    %5243 = vmatpush1.msra.mxu0 0.0
    %5244 = vmatprep.subr.mxu0 0.0
    %5245 = vmatpush1.msra.mxu0 0.0
    %5246 = vmatprep.subr.mxu0 0.0
    %5247 = vmatpush1.msra.mxu0 0.0
    %5248 = vmatprep.subr.mxu0 0.0
    %5249 = vmatpush1.msra.mxu0 0.0
    %5250 = vmatprep.subr.mxu0 0.0
    %5251 = vmatpush1.msra.mxu0 0.0
    %5252 = vmatprep.subr.mxu0 0.0
    %5253 = vmatpush1.msra.mxu0 0.0
    %5254 = vmatprep.subr.mxu0 0.0
    %5255 = vmatpush1.msra.mxu0 0.0
    %5256 = vmatprep.subr.mxu0 0.0
    %5257 = vmatpush1.msra.mxu0 0.0
    %5258 = vmatprep.subr.mxu0 0.0
    %5259 = vmatpush1.msra.mxu0 0.0
    %5260 = vmatprep.subr.mxu0 0.0
    %5261 = vmatpush1.msra.mxu0 0.0
    %5262 = vmatprep.subr.mxu0 0.0
    %5263 = vmatpush1.msra.mxu0 0.0
    %5264 = vmatprep.subr.mxu0 0.0
    %5265 = vmatpush1.msra.mxu0 0.0
    %5266 = vmatprep.subr.mxu0 0.0
    %5267 = vmatpush1.msra.mxu0 0.0
    %5268 = vmatprep.mubr.f32.mxu0 0.0
    %5269 = vmatmul.mubr.f32.gmra.mrb[0].mxu0 %v5202
    %v5270 = vpop.f32.mrb[0].mxu0
    %v5271 = vadd.f32 0.0, %v5270
    %v5272 = vpop.f32.mrb[0].mxu0
    %5273 = vdwg.mxu0
    %v5275 = vsel %vm5150, %v5271, 0
    %5277 = vmatprep.subr.mxu0 0.0
    %5278 = vmatpush1.msra.mxu0 %v5149
    %5279 = vmatprep.subr.mxu0 0.0
    %5280 = vmatpush1.msra.mxu0 0.0
    %5281 = vmatprep.subr.mxu0 0.0
    %5282 = vmatpush1.msra.mxu0 0.0
    %5283 = vmatprep.subr.mxu0 0.0
    %5284 = vmatpush1.msra.mxu0 0.0
    %5285 = vmatprep.subr.mxu0 0.0
    %5286 = vmatpush1.msra.mxu0 0.0
    %5287 = vmatprep.subr.mxu0 0.0
    %5288 = vmatpush1.msra.mxu0 0.0
    %5289 = vmatprep.subr.mxu0 0.0
    %5290 = vmatpush1.msra.mxu0 0.0
    %5291 = vmatprep.subr.mxu0 0.0
    %5292 = vmatpush1.msra.mxu0 0.0
    %5293 = vmatprep.subr.mxu0 0.0
    %5294 = vmatpush1.msra.mxu0 0.0
    %5295 = vmatprep.subr.mxu0 0.0
    %5296 = vmatpush1.msra.mxu0 0.0
    %5297 = vmatprep.subr.mxu0 0.0
    %5298 = vmatpush1.msra.mxu0 0.0
    %5299 = vmatprep.subr.mxu0 0.0
    %5300 = vmatpush1.msra.mxu0 0.0
    %5301 = vmatprep.subr.mxu0 0.0
    %5302 = vmatpush1.msra.mxu0 0.0
    %5303 = vmatprep.subr.mxu0 0.0
    %5304 = vmatpush1.msra.mxu0 0.0
    %5305 = vmatprep.subr.mxu0 0.0
    %5306 = vmatpush1.msra.mxu0 0.0
    %5307 = vmatprep.subr.mxu0 0.0
    %5308 = vmatpush1.msra.mxu0 0.0
    %5309 = vmatprep.subr.mxu0 0.0
    %5310 = vmatpush1.msra.mxu0 0.0
    %5311 = vmatprep.subr.mxu0 0.0
    %5312 = vmatpush1.msra.mxu0 0.0
    %5313 = vmatprep.subr.mxu0 0.0
    %5314 = vmatpush1.msra.mxu0 0.0
    %5315 = vmatprep.subr.mxu0 0.0
    %5316 = vmatpush1.msra.mxu0 0.0
    %5317 = vmatprep.subr.mxu0 0.0
    %5318 = vmatpush1.msra.mxu0 0.0
    %5319 = vmatprep.subr.mxu0 0.0
    %5320 = vmatpush1.msra.mxu0 0.0
    %5321 = vmatprep.subr.mxu0 0.0
    %5322 = vmatpush1.msra.mxu0 0.0
    %5323 = vmatprep.subr.mxu0 0.0
    %5324 = vmatpush1.msra.mxu0 0.0
    %5325 = vmatprep.subr.mxu0 0.0
    %5326 = vmatpush1.msra.mxu0 0.0
    %5327 = vmatprep.subr.mxu0 0.0
    %5328 = vmatpush1.msra.mxu0 0.0
    %5329 = vmatprep.subr.mxu0 0.0
    %5330 = vmatpush1.msra.mxu0 0.0
    %5331 = vmatprep.subr.mxu0 0.0
    %5332 = vmatpush1.msra.mxu0 0.0
    %5333 = vmatprep.subr.mxu0 0.0
    %5334 = vmatpush1.msra.mxu0 0.0
    %5335 = vmatprep.subr.mxu0 0.0
    %5336 = vmatpush1.msra.mxu0 0.0
    %5337 = vmatprep.subr.mxu0 0.0
    %5338 = vmatpush1.msra.mxu0 0.0
    %5339 = vmatprep.subr.mxu0 0.0
    %5340 = vmatpush1.msra.mxu0 0.0
    %5341 = vmatprep.mubr.f32.mxu0 0.0
    %5342 = vmatmul.mubr.f32.gmra.mrb[0].mxu0 %v5275
    %v5343 = vpop.f32.mrb[0].mxu0
    %v5344 = vadd.f32 0.0, %v5343
    %v5345 = vpop.f32.mrb[0].mxu0
    %5346 = vdwg.mxu0
    %5347 = vmatprep.subr.mxu0 0.0
    %5348 = vmatpush1.msra.mxu0 %v5120
    %5349 = vmatprep.subr.mxu0 0.0
    %5350 = vmatpush1.msra.mxu0 %v5125
    %5351 = vmatprep.subr.mxu0 0.0
    %5352 = vmatpush1.msra.mxu0 %v5130
    %5353 = vmatprep.subr.mxu0 0.0
    %5354 = vmatpush1.msra.mxu0 %v5135
    %5355 = vmatprep.subr.mxu0 0.0
    %5356 = vmatpush1.msra.mxu0 %v5140
    %5357 = vmatprep.subr.mxu0 0.0
    %5358 = vmatpush1.msra.mxu0 %v5145
    %5359 = vmatprep.subr.mxu0 0.0
    %5360 = vmatpush1.msra.mxu0 0.0
    %5361 = vmatprep.subr.mxu0 0.0
    %5362 = vmatpush1.msra.mxu0 0.0
    %5363 = vmatprep.subr.mxu0 0.0
    %5364 = vmatpush1.msra.mxu0 0.0
    %5365 = vmatprep.subr.mxu0 0.0
    %5366 = vmatpush1.msra.mxu0 0.0
    %5367 = vmatprep.subr.mxu0 0.0
    %5368 = vmatpush1.msra.mxu0 0.0
    %5369 = vmatprep.subr.mxu0 0.0
    %5370 = vmatpush1.msra.mxu0 0.0
    %5371 = vmatprep.subr.mxu0 0.0
    %5372 = vmatpush1.msra.mxu0 0.0
    %5373 = vmatprep.subr.mxu0 0.0
    %5374 = vmatpush1.msra.mxu0 0.0
    %5375 = vmatprep.subr.mxu0 0.0
    %5376 = vmatpush1.msra.mxu0 0.0
    %5377 = vmatprep.subr.mxu0 0.0
    %5378 = vmatpush1.msra.mxu0 0.0
    %5379 = vmatprep.subr.mxu0 0.0
    %5380 = vmatpush1.msra.mxu0 0.0
    %5381 = vmatprep.subr.mxu0 0.0
    %5382 = vmatpush1.msra.mxu0 0.0
    %5383 = vmatprep.subr.mxu0 0.0
    %5384 = vmatpush1.msra.mxu0 0.0
    %5385 = vmatprep.subr.mxu0 0.0
    %5386 = vmatpush1.msra.mxu0 0.0
    %5387 = vmatprep.subr.mxu0 0.0
    %5388 = vmatpush1.msra.mxu0 0.0
    %5389 = vmatprep.subr.mxu0 0.0
    %5390 = vmatpush1.msra.mxu0 0.0
    %5391 = vmatprep.subr.mxu0 0.0
    %5392 = vmatpush1.msra.mxu0 0.0
    %5393 = vmatprep.subr.mxu0 0.0
    %5394 = vmatpush1.msra.mxu0 0.0
    %5395 = vmatprep.subr.mxu0 0.0
    %5396 = vmatpush1.msra.mxu0 0.0
    %5397 = vmatprep.subr.mxu0 0.0
    %5398 = vmatpush1.msra.mxu0 0.0
    %5399 = vmatprep.subr.mxu0 0.0
    %5400 = vmatpush1.msra.mxu0 0.0
    %5401 = vmatprep.subr.mxu0 0.0
    %5402 = vmatpush1.msra.mxu0 0.0
    %5403 = vmatprep.subr.mxu0 0.0
    %5404 = vmatpush1.msra.mxu0 0.0
    %5405 = vmatprep.subr.mxu0 0.0
    %5406 = vmatpush1.msra.mxu0 0.0
    %5407 = vmatprep.subr.mxu0 0.0
    %5408 = vmatpush1.msra.mxu0 0.0
    %5409 = vmatprep.subr.mxu0 0.0
    %5410 = vmatpush1.msra.mxu0 0.0
    %5411 = vmatprep.mubr.f32.mxu0 0.0
    %5412 = vmatmul.mubr.f32.gmra.mrb[0].mxu0 %v5202
    %v5413 = vpop.f32.mrb[0].mxu0
    %v5414 = vadd.f32 0.0, %v5413
    %v5415 = vpop.f32.mrb[0].mxu0
    %5416 = vdwg.mxu0
    %v5418 = vsel %vm5150, %v5414, 0
    %5420 = vmatprep.subr.mxu0 0.0
    %5421 = vmatpush1.msra.mxu0 %v5149
    %5422 = vmatprep.subr.mxu0 0.0
    %5423 = vmatpush1.msra.mxu0 0.0
    %5424 = vmatprep.subr.mxu0 0.0
    %5425 = vmatpush1.msra.mxu0 0.0
    %5426 = vmatprep.subr.mxu0 0.0
    %5427 = vmatpush1.msra.mxu0 0.0
    %5428 = vmatprep.subr.mxu0 0.0
    %5429 = vmatpush1.msra.mxu0 0.0
    %5430 = vmatprep.subr.mxu0 0.0
    %5431 = vmatpush1.msra.mxu0 0.0
    %5432 = vmatprep.subr.mxu0 0.0
    %5433 = vmatpush1.msra.mxu0 0.0
    %5434 = vmatprep.subr.mxu0 0.0
    %5435 = vmatpush1.msra.mxu0 0.0
    %5436 = vmatprep.subr.mxu0 0.0
    %5437 = vmatpush1.msra.mxu0 0.0
    %5438 = vmatprep.subr.mxu0 0.0
    %5439 = vmatpush1.msra.mxu0 0.0
    %5440 = vmatprep.subr.mxu0 0.0
    %5441 = vmatpush1.msra.mxu0 0.0
    %5442 = vmatprep.subr.mxu0 0.0
    %5443 = vmatpush1.msra.mxu0 0.0
    %5444 = vmatprep.subr.mxu0 0.0
    %5445 = vmatpush1.msra.mxu0 0.0
    %5446 = vmatprep.subr.mxu0 0.0
    %5447 = vmatpush1.msra.mxu0 0.0
    %5448 = vmatprep.subr.mxu0 0.0
    %5449 = vmatpush1.msra.mxu0 0.0
    %5450 = vmatprep.subr.mxu0 0.0
    %5451 = vmatpush1.msra.mxu0 0.0
    %5452 = vmatprep.subr.mxu0 0.0
    %5453 = vmatpush1.msra.mxu0 0.0
    %5454 = vmatprep.subr.mxu0 0.0
    %5455 = vmatpush1.msra.mxu0 0.0
    %5456 = vmatprep.subr.mxu0 0.0
    %5457 = vmatpush1.msra.mxu0 0.0
    %5458 = vmatprep.subr.mxu0 0.0
    %5459 = vmatpush1.msra.mxu0 0.0
    %5460 = vmatprep.subr.mxu0 0.0
    %5461 = vmatpush1.msra.mxu0 0.0
    %5462 = vmatprep.subr.mxu0 0.0
    %5463 = vmatpush1.msra.mxu0 0.0
    %5464 = vmatprep.subr.mxu0 0.0
    %5465 = vmatpush1.msra.mxu0 0.0
    %5466 = vmatprep.subr.mxu0 0.0
    %5467 = vmatpush1.msra.mxu0 0.0
    %5468 = vmatprep.subr.mxu0 0.0
    %5469 = vmatpush1.msra.mxu0 0.0
    %5470 = vmatprep.subr.mxu0 0.0
    %5471 = vmatpush1.msra.mxu0 0.0
    %5472 = vmatprep.subr.mxu0 0.0
    %5473 = vmatpush1.msra.mxu0 0.0
    %5474 = vmatprep.subr.mxu0 0.0
    %5475 = vmatpush1.msra.mxu0 0.0
    %5476 = vmatprep.subr.mxu0 0.0
    %5477 = vmatpush1.msra.mxu0 0.0
    %5478 = vmatprep.subr.mxu0 0.0
    %5479 = vmatpush1.msra.mxu0 0.0
    %5480 = vmatprep.subr.mxu0 0.0
    %5481 = vmatpush1.msra.mxu0 0.0
    %5482 = vmatprep.subr.mxu0 0.0
    %5483 = vmatpush1.msra.mxu0 0.0
    %5484 = vmatprep.mubr.f32.mxu0 0.0
    %5485 = vmatmul.mubr.f32.gmra.mrb[0].mxu0 %v5418
    %v5486 = vpop.f32.mrb[0].mxu0
    %v5487 = vadd.f32 0.0, %v5486
    %v5488 = vpop.f32.mrb[0].mxu0
    %5489 = vdwg.mxu0
    %v5490 = vmul.f32 %v5344, %v5344
    %v5491 = vmul.f32 %v5487, %v5487
    %v5492 = vmul.f32 %v5344, %v5487
    %v5493 = vmul.f32 %v4912, %v4912
    %v5494 = vmul.f32 %v4917, %v4917
    %v5495 = vmul.f32 %v4922, %v4922
    %v5496 = vmul.f32 %v4927, %v4927
    %v5497 = vmul.f32 %v4932, %v4932
    %v5498 = vmul.f32 %v4937, %v4937
    %5499 = vmatprep.subr.mxu0 0.0
    %5500 = vmatpush1.msra.mxu0 %v5493
    %5501 = vmatprep.subr.mxu0 0.0
    %5502 = vmatpush1.msra.mxu0 %v5494
    %5503 = vmatprep.subr.mxu0 0.0
    %5504 = vmatpush1.msra.mxu0 %v5495
    %5505 = vmatprep.subr.mxu0 0.0
    %5506 = vmatpush1.msra.mxu0 %v5496
    %5507 = vmatprep.subr.mxu0 0.0
    %5508 = vmatpush1.msra.mxu0 %v5497
    %5509 = vmatprep.subr.mxu0 0.0
    %5510 = vmatpush1.msra.mxu0 %v5498
    %5511 = vmatprep.subr.mxu0 0.0
    %5512 = vmatpush1.msra.mxu0 0.0
    %5513 = vmatprep.subr.mxu0 0.0
    %5514 = vmatpush1.msra.mxu0 0.0
    %5515 = vmatprep.subr.mxu0 0.0
    %5516 = vmatpush1.msra.mxu0 0.0
    %5517 = vmatprep.subr.mxu0 0.0
    %5518 = vmatpush1.msra.mxu0 0.0
    %5519 = vmatprep.subr.mxu0 0.0
    %5520 = vmatpush1.msra.mxu0 0.0
    %5521 = vmatprep.subr.mxu0 0.0
    %5522 = vmatpush1.msra.mxu0 0.0
    %5523 = vmatprep.subr.mxu0 0.0
    %5524 = vmatpush1.msra.mxu0 0.0
    %5525 = vmatprep.subr.mxu0 0.0
    %5526 = vmatpush1.msra.mxu0 0.0
    %5527 = vmatprep.subr.mxu0 0.0
    %5528 = vmatpush1.msra.mxu0 0.0
    %5529 = vmatprep.subr.mxu0 0.0
    %5530 = vmatpush1.msra.mxu0 0.0
    %5531 = vmatprep.subr.mxu0 0.0
    %5532 = vmatpush1.msra.mxu0 0.0
    %5533 = vmatprep.subr.mxu0 0.0
    %5534 = vmatpush1.msra.mxu0 0.0
    %5535 = vmatprep.subr.mxu0 0.0
    %5536 = vmatpush1.msra.mxu0 0.0
    %5537 = vmatprep.subr.mxu0 0.0
    %5538 = vmatpush1.msra.mxu0 0.0
    %5539 = vmatprep.subr.mxu0 0.0
    %5540 = vmatpush1.msra.mxu0 0.0
    %5541 = vmatprep.subr.mxu0 0.0
    %5542 = vmatpush1.msra.mxu0 0.0
    %5543 = vmatprep.subr.mxu0 0.0
    %5544 = vmatpush1.msra.mxu0 0.0
    %5545 = vmatprep.subr.mxu0 0.0
    %5546 = vmatpush1.msra.mxu0 0.0
    %5547 = vmatprep.subr.mxu0 0.0
    %5548 = vmatpush1.msra.mxu0 0.0
    %5549 = vmatprep.subr.mxu0 0.0
    %5550 = vmatpush1.msra.mxu0 0.0
    %5551 = vmatprep.subr.mxu0 0.0
    %5552 = vmatpush1.msra.mxu0 0.0
    %5553 = vmatprep.subr.mxu0 0.0
    %5554 = vmatpush1.msra.mxu0 0.0
    %5555 = vmatprep.subr.mxu0 0.0
    %5556 = vmatpush1.msra.mxu0 0.0
    %5557 = vmatprep.subr.mxu0 0.0
    %5558 = vmatpush1.msra.mxu0 0.0
    %5559 = vmatprep.subr.mxu0 0.0
    %5560 = vmatpush1.msra.mxu0 0.0
    %5561 = vmatprep.subr.mxu0 0.0
    %5562 = vmatpush1.msra.mxu0 0.0
    %5563 = vmatprep.mubr.f32.mxu0 0.0
    %5564 = vmatmul.mubr.f32.gmra.mrb[0].mxu0 %v5202
    %v5565 = vpop.f32.mrb[0].mxu0
    %v5566 = vadd.f32 0.0, %v5565
    %v5567 = vpop.f32.mrb[0].mxu0
    %5568 = vdwg.mxu0
    %v5570 = vsel %vm5150, %v5566, 0
    %5572 = vmatprep.subr.mxu0 0.0
    %5573 = vmatpush1.msra.mxu0 %v5149
    %5574 = vmatprep.subr.mxu0 0.0
    %5575 = vmatpush1.msra.mxu0 0.0
    %5576 = vmatprep.subr.mxu0 0.0
    %5577 = vmatpush1.msra.mxu0 0.0
    %5578 = vmatprep.subr.mxu0 0.0
    %5579 = vmatpush1.msra.mxu0 0.0
    %5580 = vmatprep.subr.mxu0 0.0
    %5581 = vmatpush1.msra.mxu0 0.0
    %5582 = vmatprep.subr.mxu0 0.0
    %5583 = vmatpush1.msra.mxu0 0.0
    %5584 = vmatprep.subr.mxu0 0.0
    %5585 = vmatpush1.msra.mxu0 0.0
    %5586 = vmatprep.subr.mxu0 0.0
    %5587 = vmatpush1.msra.mxu0 0.0
    %5588 = vmatprep.subr.mxu0 0.0
    %5589 = vmatpush1.msra.mxu0 0.0
    %5590 = vmatprep.subr.mxu0 0.0
    %5591 = vmatpush1.msra.mxu0 0.0
    %5592 = vmatprep.subr.mxu0 0.0
    %5593 = vmatpush1.msra.mxu0 0.0
    %5594 = vmatprep.subr.mxu0 0.0
    %5595 = vmatpush1.msra.mxu0 0.0
    %5596 = vmatprep.subr.mxu0 0.0
    %5597 = vmatpush1.msra.mxu0 0.0
    %5598 = vmatprep.subr.mxu0 0.0
    %5599 = vmatpush1.msra.mxu0 0.0
    %5600 = vmatprep.subr.mxu0 0.0
    %5601 = vmatpush1.msra.mxu0 0.0
    %5602 = vmatprep.subr.mxu0 0.0
    %5603 = vmatpush1.msra.mxu0 0.0
    %5604 = vmatprep.subr.mxu0 0.0
    %5605 = vmatpush1.msra.mxu0 0.0
    %5606 = vmatprep.subr.mxu0 0.0
    %5607 = vmatpush1.msra.mxu0 0.0
    %5608 = vmatprep.subr.mxu0 0.0
    %5609 = vmatpush1.msra.mxu0 0.0
    %5610 = vmatprep.subr.mxu0 0.0
    %5611 = vmatpush1.msra.mxu0 0.0
    %5612 = vmatprep.subr.mxu0 0.0
    %5613 = vmatpush1.msra.mxu0 0.0
    %5614 = vmatprep.subr.mxu0 0.0
    %5615 = vmatpush1.msra.mxu0 0.0
    %5616 = vmatprep.subr.mxu0 0.0
    %5617 = vmatpush1.msra.mxu0 0.0
    %5618 = vmatprep.subr.mxu0 0.0
    %5619 = vmatpush1.msra.mxu0 0.0
    %5620 = vmatprep.subr.mxu0 0.0
    %5621 = vmatpush1.msra.mxu0 0.0
    %5622 = vmatprep.subr.mxu0 0.0
    %5623 = vmatpush1.msra.mxu0 0.0
    %5624 = vmatprep.subr.mxu0 0.0
    %5625 = vmatpush1.msra.mxu0 0.0
    %5626 = vmatprep.subr.mxu0 0.0
    %5627 = vmatpush1.msra.mxu0 0.0
    %5628 = vmatprep.subr.mxu0 0.0
    %5629 = vmatpush1.msra.mxu0 0.0
    %5630 = vmatprep.subr.mxu0 0.0
    %5631 = vmatpush1.msra.mxu0 0.0
    %5632 = vmatprep.subr.mxu0 0.0
    %5633 = vmatpush1.msra.mxu0 0.0
    %5634 = vmatprep.subr.mxu0 0.0
    %5635 = vmatpush1.msra.mxu0 0.0
    %5636 = vmatprep.mubr.f32.mxu0 0.0
    %5637 = vmatmul.mubr.f32.gmra.mrb[0].mxu0 %v5570
    %v5638 = vpop.f32.mrb[0].mxu0
    %v5639 = vadd.f32 0.0, %v5638
    %v5640 = vpop.f32.mrb[0].mxu0
    %5641 = vdwg.mxu0
    %v5642 = vsub.f32 %v5639, %v5490
    %v5643 = vmul.f32 %v5120, %v5120
    %v5644 = vmul.f32 %v5125, %v5125
    %v5645 = vmul.f32 %v5130, %v5130
    %v5646 = vmul.f32 %v5135, %v5135
    %v5647 = vmul.f32 %v5140, %v5140
    %v5648 = vmul.f32 %v5145, %v5145
    %5649 = vmatprep.subr.mxu0 0.0
    %5650 = vmatpush1.msra.mxu0 %v5643
    %5651 = vmatprep.subr.mxu0 0.0
    %5652 = vmatpush1.msra.mxu0 %v5644
    %5653 = vmatprep.subr.mxu0 0.0
    %5654 = vmatpush1.msra.mxu0 %v5645
    %5655 = vmatprep.subr.mxu0 0.0
    %5656 = vmatpush1.msra.mxu0 %v5646
    %5657 = vmatprep.subr.mxu0 0.0
    %5658 = vmatpush1.msra.mxu0 %v5647
    %5659 = vmatprep.subr.mxu0 0.0
    %5660 = vmatpush1.msra.mxu0 %v5648
    %5661 = vmatprep.subr.mxu0 0.0
    %5662 = vmatpush1.msra.mxu0 0.0
    %5663 = vmatprep.subr.mxu0 0.0
    %5664 = vmatpush1.msra.mxu0 0.0
    %5665 = vmatprep.subr.mxu0 0.0
    %5666 = vmatpush1.msra.mxu0 0.0
    %5667 = vmatprep.subr.mxu0 0.0
    %5668 = vmatpush1.msra.mxu0 0.0
    %5669 = vmatprep.subr.mxu0 0.0
    %5670 = vmatpush1.msra.mxu0 0.0
    %5671 = vmatprep.subr.mxu0 0.0
    %5672 = vmatpush1.msra.mxu0 0.0
    %5673 = vmatprep.subr.mxu0 0.0
    %5674 = vmatpush1.msra.mxu0 0.0
    %5675 = vmatprep.subr.mxu0 0.0
    %5676 = vmatpush1.msra.mxu0 0.0
    %5677 = vmatprep.subr.mxu0 0.0
    %5678 = vmatpush1.msra.mxu0 0.0
    %5679 = vmatprep.subr.mxu0 0.0
    %5680 = vmatpush1.msra.mxu0 0.0
    %5681 = vmatprep.subr.mxu0 0.0
    %5682 = vmatpush1.msra.mxu0 0.0
    %5683 = vmatprep.subr.mxu0 0.0
    %5684 = vmatpush1.msra.mxu0 0.0
    %5685 = vmatprep.subr.mxu0 0.0
    %5686 = vmatpush1.msra.mxu0 0.0
    %5687 = vmatprep.subr.mxu0 0.0
    %5688 = vmatpush1.msra.mxu0 0.0
    %5689 = vmatprep.subr.mxu0 0.0
    %5690 = vmatpush1.msra.mxu0 0.0
    %5691 = vmatprep.subr.mxu0 0.0
    %5692 = vmatpush1.msra.mxu0 0.0
    %5693 = vmatprep.subr.mxu0 0.0
    %5694 = vmatpush1.msra.mxu0 0.0
    %5695 = vmatprep.subr.mxu0 0.0
    %5696 = vmatpush1.msra.mxu0 0.0
    %5697 = vmatprep.subr.mxu0 0.0
    %5698 = vmatpush1.msra.mxu0 0.0
    %5699 = vmatprep.subr.mxu0 0.0
    %5700 = vmatpush1.msra.mxu0 0.0
    %5701 = vmatprep.subr.mxu0 0.0
    %5702 = vmatpush1.msra.mxu0 0.0
    %5703 = vmatprep.subr.mxu0 0.0
    %5704 = vmatpush1.msra.mxu0 0.0
    %5705 = vmatprep.subr.mxu0 0.0
    %5706 = vmatpush1.msra.mxu0 0.0
    %5707 = vmatprep.subr.mxu0 0.0
    %5708 = vmatpush1.msra.mxu0 0.0
    %5709 = vmatprep.subr.mxu0 0.0
    %5710 = vmatpush1.msra.mxu0 0.0
    %5711 = vmatprep.subr.mxu0 0.0
    %5712 = vmatpush1.msra.mxu0 0.0
    %5713 = vmatprep.mubr.f32.mxu0 0.0
    %5714 = vmatmul.mubr.f32.gmra.mrb[0].mxu0 %v5202
    %v5715 = vpop.f32.mrb[0].mxu0
    %v5716 = vadd.f32 0.0, %v5715
    %v5717 = vpop.f32.mrb[0].mxu0
    %5718 = vdwg.mxu0
    %v5720 = vsel %vm5150, %v5716, 0
    %5722 = vmatprep.subr.mxu0 0.0
    %5723 = vmatpush1.msra.mxu0 %v5149
    %5724 = vmatprep.subr.mxu0 0.0
    %5725 = vmatpush1.msra.mxu0 0.0
    %5726 = vmatprep.subr.mxu0 0.0
    %5727 = vmatpush1.msra.mxu0 0.0
    %5728 = vmatprep.subr.mxu0 0.0
    %5729 = vmatpush1.msra.mxu0 0.0
    %5730 = vmatprep.subr.mxu0 0.0
    %5731 = vmatpush1.msra.mxu0 0.0
    %5732 = vmatprep.subr.mxu0 0.0
    %5733 = vmatpush1.msra.mxu0 0.0
    %5734 = vmatprep.subr.mxu0 0.0
    %5735 = vmatpush1.msra.mxu0 0.0
    %5736 = vmatprep.subr.mxu0 0.0
    %5737 = vmatpush1.msra.mxu0 0.0
    %5738 = vmatprep.subr.mxu0 0.0
    %5739 = vmatpush1.msra.mxu0 0.0
    %5740 = vmatprep.subr.mxu0 0.0
    %5741 = vmatpush1.msra.mxu0 0.0
    %5742 = vmatprep.subr.mxu0 0.0
    %5743 = vmatpush1.msra.mxu0 0.0
    %5744 = vmatprep.subr.mxu0 0.0
    %5745 = vmatpush1.msra.mxu0 0.0
    %5746 = vmatprep.subr.mxu0 0.0
    %5747 = vmatpush1.msra.mxu0 0.0
    %5748 = vmatprep.subr.mxu0 0.0
    %5749 = vmatpush1.msra.mxu0 0.0
    %5750 = vmatprep.subr.mxu0 0.0
    %5751 = vmatpush1.msra.mxu0 0.0
    %5752 = vmatprep.subr.mxu0 0.0
    %5753 = vmatpush1.msra.mxu0 0.0
    %5754 = vmatprep.subr.mxu0 0.0
    %5755 = vmatpush1.msra.mxu0 0.0
    %5756 = vmatprep.subr.mxu0 0.0
    %5757 = vmatpush1.msra.mxu0 0.0
    %5758 = vmatprep.subr.mxu0 0.0
    %5759 = vmatpush1.msra.mxu0 0.0
    %5760 = vmatprep.subr.mxu0 0.0
    %5761 = vmatpush1.msra.mxu0 0.0
    %5762 = vmatprep.subr.mxu0 0.0
    %5763 = vmatpush1.msra.mxu0 0.0
    %5764 = vmatprep.subr.mxu0 0.0
    %5765 = vmatpush1.msra.mxu0 0.0
    %5766 = vmatprep.subr.mxu0 0.0
    %5767 = vmatpush1.msra.mxu0 0.0
    %5768 = vmatprep.subr.mxu0 0.0
    %5769 = vmatpush1.msra.mxu0 0.0
    %5770 = vmatprep.subr.mxu0 0.0
    %5771 = vmatpush1.msra.mxu0 0.0
    %5772 = vmatprep.subr.mxu0 0.0
    %5773 = vmatpush1.msra.mxu0 0.0
    %5774 = vmatprep.subr.mxu0 0.0
    %5775 = vmatpush1.msra.mxu0 0.0
    %5776 = vmatprep.subr.mxu0 0.0
    %5777 = vmatpush1.msra.mxu0 0.0
    %5778 = vmatprep.subr.mxu0 0.0
    %5779 = vmatpush1.msra.mxu0 0.0
    %5780 = vmatprep.subr.mxu0 0.0
    %5781 = vmatpush1.msra.mxu0 0.0
    %5782 = vmatprep.subr.mxu0 0.0
    %5783 = vmatpush1.msra.mxu0 0.0
    %5784 = vmatprep.subr.mxu0 0.0
    %5785 = vmatpush1.msra.mxu0 0.0
    %5786 = vmatprep.mubr.f32.mxu0 0.0
    %5787 = vmatmul.mubr.f32.gmra.mrb[0].mxu0 %v5720
    %v5788 = vpop.f32.mrb[0].mxu0
    %v5789 = vadd.f32 0.0, %v5788
    %v5790 = vpop.f32.mrb[0].mxu0
    %5791 = vdwg.mxu0
    %v5792 = vsub.f32 %v5789, %v5491
    %v5793 = vmul.f32 %v4912, %v5120
    %v5794 = vmul.f32 %v4917, %v5125
    %v5795 = vmul.f32 %v4922, %v5130
    %v5796 = vmul.f32 %v4927, %v5135
    %v5797 = vmul.f32 %v4932, %v5140
    %v5798 = vmul.f32 %v4937, %v5145
    %5799 = vmatprep.subr.mxu0 0.0
    %5800 = vmatpush1.msra.mxu0 %v5793
    %5801 = vmatprep.subr.mxu0 0.0
    %5802 = vmatpush1.msra.mxu0 %v5794
    %5803 = vmatprep.subr.mxu0 0.0
    %5804 = vmatpush1.msra.mxu0 %v5795
    %5805 = vmatprep.subr.mxu0 0.0
    %5806 = vmatpush1.msra.mxu0 %v5796
    %5807 = vmatprep.subr.mxu0 0.0
    %5808 = vmatpush1.msra.mxu0 %v5797
    %5809 = vmatprep.subr.mxu0 0.0
    %5810 = vmatpush1.msra.mxu0 %v5798
    %5811 = vmatprep.subr.mxu0 0.0
    %5812 = vmatpush1.msra.mxu0 0.0
    %5813 = vmatprep.subr.mxu0 0.0
    %5814 = vmatpush1.msra.mxu0 0.0
    %5815 = vmatprep.subr.mxu0 0.0
    %5816 = vmatpush1.msra.mxu0 0.0
    %5817 = vmatprep.subr.mxu0 0.0
    %5818 = vmatpush1.msra.mxu0 0.0
    %5819 = vmatprep.subr.mxu0 0.0
    %5820 = vmatpush1.msra.mxu0 0.0
    %5821 = vmatprep.subr.mxu0 0.0
    %5822 = vmatpush1.msra.mxu0 0.0
    %5823 = vmatprep.subr.mxu0 0.0
    %5824 = vmatpush1.msra.mxu0 0.0
    %5825 = vmatprep.subr.mxu0 0.0
    %5826 = vmatpush1.msra.mxu0 0.0
    %5827 = vmatprep.subr.mxu0 0.0
    %5828 = vmatpush1.msra.mxu0 0.0
    %5829 = vmatprep.subr.mxu0 0.0
    %5830 = vmatpush1.msra.mxu0 0.0
    %5831 = vmatprep.subr.mxu0 0.0
    %5832 = vmatpush1.msra.mxu0 0.0
    %5833 = vmatprep.subr.mxu0 0.0
    %5834 = vmatpush1.msra.mxu0 0.0
    %5835 = vmatprep.subr.mxu0 0.0
    %5836 = vmatpush1.msra.mxu0 0.0
    %5837 = vmatprep.subr.mxu0 0.0
    %5838 = vmatpush1.msra.mxu0 0.0
    %5839 = vmatprep.subr.mxu0 0.0
    %5840 = vmatpush1.msra.mxu0 0.0
    %5841 = vmatprep.subr.mxu0 0.0
    %5842 = vmatpush1.msra.mxu0 0.0
    %5843 = vmatprep.subr.mxu0 0.0
    %5844 = vmatpush1.msra.mxu0 0.0
    %5845 = vmatprep.subr.mxu0 0.0
    %5846 = vmatpush1.msra.mxu0 0.0
    %5847 = vmatprep.subr.mxu0 0.0
    %5848 = vmatpush1.msra.mxu0 0.0
    %5849 = vmatprep.subr.mxu0 0.0
    %5850 = vmatpush1.msra.mxu0 0.0
    %5851 = vmatprep.subr.mxu0 0.0
    %5852 = vmatpush1.msra.mxu0 0.0
    %5853 = vmatprep.subr.mxu0 0.0
    %5854 = vmatpush1.msra.mxu0 0.0
    %5855 = vmatprep.subr.mxu0 0.0
    %5856 = vmatpush1.msra.mxu0 0.0
    %5857 = vmatprep.subr.mxu0 0.0
    %5858 = vmatpush1.msra.mxu0 0.0
    %5859 = vmatprep.subr.mxu0 0.0
    %5860 = vmatpush1.msra.mxu0 0.0
    %5861 = vmatprep.subr.mxu0 0.0
    %5862 = vmatpush1.msra.mxu0 0.0
    %5863 = vmatprep.mubr.f32.mxu0 0.0
    %5864 = vmatmul.mubr.f32.gmra.mrb[0].mxu0 %v5202
    %v5865 = vpop.f32.mrb[0].mxu0
    %v5866 = vadd.f32 0.0, %v5865
    %v5867 = vpop.f32.mrb[0].mxu0
    %5868 = vdwg.mxu0
    %v5870 = vsel %vm5150, %v5866, 0
    %5872 = vmatprep.subr.mxu0 0.0
    %5873 = vmatpush1.msra.mxu0 %v5149
    %5874 = vmatprep.subr.mxu0 0.0
    %5875 = vmatpush1.msra.mxu0 0.0
    %5876 = vmatprep.subr.mxu0 0.0
    %5877 = vmatpush1.msra.mxu0 0.0
    %5878 = vmatprep.subr.mxu0 0.0
    %5879 = vmatpush1.msra.mxu0 0.0
    %5880 = vmatprep.subr.mxu0 0.0
    %5881 = vmatpush1.msra.mxu0 0.0
    %5882 = vmatprep.subr.mxu0 0.0
    %5883 = vmatpush1.msra.mxu0 0.0
    %5884 = vmatprep.subr.mxu0 0.0
    %5885 = vmatpush1.msra.mxu0 0.0
    %5886 = vmatprep.subr.mxu0 0.0
    %5887 = vmatpush1.msra.mxu0 0.0
    %5888 = vmatprep.subr.mxu0 0.0
    %5889 = vmatpush1.msra.mxu0 0.0
    %5890 = vmatprep.subr.mxu0 0.0
    %5891 = vmatpush1.msra.mxu0 0.0
    %5892 = vmatprep.subr.mxu0 0.0
    %5893 = vmatpush1.msra.mxu0 0.0
    %5894 = vmatprep.subr.mxu0 0.0
    %5895 = vmatpush1.msra.mxu0 0.0
    %5896 = vmatprep.subr.mxu0 0.0
    %5897 = vmatpush1.msra.mxu0 0.0
    %5898 = vmatprep.subr.mxu0 0.0
    %5899 = vmatpush1.msra.mxu0 0.0
    %5900 = vmatprep.subr.mxu0 0.0
    %5901 = vmatpush1.msra.mxu0 0.0
    %5902 = vmatprep.subr.mxu0 0.0
    %5903 = vmatpush1.msra.mxu0 0.0
    %5904 = vmatprep.subr.mxu0 0.0
    %5905 = vmatpush1.msra.mxu0 0.0
    %5906 = vmatprep.subr.mxu0 0.0
    %5907 = vmatpush1.msra.mxu0 0.0
    %5908 = vmatprep.subr.mxu0 0.0
    %5909 = vmatpush1.msra.mxu0 0.0
    %5910 = vmatprep.subr.mxu0 0.0
    %5911 = vmatpush1.msra.mxu0 0.0
    %5912 = vmatprep.subr.mxu0 0.0
    %5913 = vmatpush1.msra.mxu0 0.0
    %5914 = vmatprep.subr.mxu0 0.0
    %5915 = vmatpush1.msra.mxu0 0.0
    %5916 = vmatprep.subr.mxu0 0.0
    %5917 = vmatpush1.msra.mxu0 0.0
    %5918 = vmatprep.subr.mxu0 0.0
    %5919 = vmatpush1.msra.mxu0 0.0
    %5920 = vmatprep.subr.mxu0 0.0
    %5921 = vmatpush1.msra.mxu0 0.0
    %5922 = vmatprep.subr.mxu0 0.0
    %5923 = vmatpush1.msra.mxu0 0.0
    %5924 = vmatprep.subr.mxu0 0.0
    %5925 = vmatpush1.msra.mxu0 0.0
    %5926 = vmatprep.subr.mxu0 0.0
    %5927 = vmatpush1.msra.mxu0 0.0
    %5928 = vmatprep.subr.mxu0 0.0
    %5929 = vmatpush1.msra.mxu0 0.0
    %5930 = vmatprep.subr.mxu0 0.0
    %5931 = vmatpush1.msra.mxu0 0.0
    %5932 = vmatprep.subr.mxu0 0.0
    %5933 = vmatpush1.msra.mxu0 0.0
    %5934 = vmatprep.subr.mxu0 0.0
    %5935 = vmatpush1.msra.mxu0 0.0
    %5936 = vmatprep.mubr.f32.mxu0 0.0
    %5937 = vmatmul.mubr.f32.gmra.mrb[0].mxu0 %v5870
    %v5938 = vpop.f32.mrb[0].mxu0
    %v5939 = vadd.f32 0.0, %v5938
    %v5940 = vpop.f32.mrb[0].mxu0
    %5941 = vdwg.mxu0
    %v5942 = vsub.f32 %v5939, %v5492
    %v5943 = vmul.f32 %v5942, 2.0
    %v5944 = vstv %s5199
    %v5945 = vadd.f32 %v5943, %v5944
    %v5946 = vadd.f32 %v5642, %v5792
    %v5947 = vadd.f32 %v5946, %v5944
    %v5948 = vrcp.pop %v5947
    %v5949 = vmul.f32 %v5945, %v5948
    %vm5950 = vcmask 5120
    %v5951 = vsel %vm5950, %v5949, 0.0
    %5952 = vadd.xlane.f32.xlu0 %v5951
    %v5953 = vpop.xlane.xlu0 %5952
    %v5954 = vrot.slane %v5953, 4
    %v5955 = vadd.f32 %v5953, %v5954
    %v5956 = vrot.slane %v5955, 2
    %v5957 = vadd.f32 %v5955, %v5956
    %v5958 = vrot.slane %v5957, 1
    %v5959 = vadd.f32 %v5957, %v5958
    %s5960 = vtos %v5959
    %s5961 = smul.f32 %s5960, 0.16666667
    %s5962 = sadd.f32 %s5961, 1e-15
    %v5963 = vmul.f32 %v5492, 2.0
    %v5964 = vstv %s5197
    %v5965 = vadd.f32 %v5963, %v5964
    %v5966 = vmul.f32 %v5965, %v5945
    %v5967 = vadd.f32 %v5490, %v5491
    %v5968 = vadd.f32 %v5967, %v5964
    %v5969 = vmul.f32 %v5968, %v5947
    %v5970 = vadd.f32 %v5969, 1e-15
    %v5971 = vrcp.pop %v5970
    %v5972 = vmul.f32 %v5966, %v5971
    %v5973 = vsel %vm5950, %v5972, 0.0
    %5974 = vadd.xlane.f32.xlu0 %v5973
    %v5975 = vpop.xlane.xlu0 %5974
    %v5976 = vrot.slane %v5975, 4
    %v5977 = vadd.f32 %v5975, %v5976
    %v5978 = vrot.slane %v5977, 2
    %v5979 = vadd.f32 %v5977, %v5978
    %v5980 = vrot.slane %v5979, 1
    %v5981 = vadd.f32 %v5979, %v5980
    %s5982 = vtos %v5981
    %s5983 = smul.f32 %s5982, 0.16666667
    %s5984 = scalar_lea.smem [#allocation28], 256
    %5985 = sst [smem:[%s5984]] %s5983
    %s5986 = scalar_lea.smem [#allocation28], 257
    %5987 = sst [smem:[%s5986]] %s5962
    %v5988 = vld [vmem:[#allocation26] sm:$0xff]
    %v5989 = vld [vmem:[#allocation26 + $0x8] sm:$0xff]
    %v5990 = vld [vmem:[#allocation26 + $0x10] sm:$0xff]
    %v5991 = vld [vmem:[%s17] sm:$0xff]
    %v5993 = vsel %vm5200, %v5988, 0
    %v5996 = vsel %vm5200, %v5989, 0
    %v5999 = vsel %vm5200, %v5990, 0
    %6001 = vmatprep.subr.mxu0 0.0
    %6002 = vmatpush1.msra.mxu0 %v4912
    %6003 = vmatprep.subr.mxu0 0.0
    %6004 = vmatpush1.msra.mxu0 %v4917
    %6005 = vmatprep.subr.mxu0 0.0
    %6006 = vmatpush1.msra.mxu0 %v4922
    %6007 = vmatprep.subr.mxu0 0.0
    %6008 = vmatpush1.msra.mxu0 %v4927
    %6009 = vmatprep.subr.mxu0 0.0
    %6010 = vmatpush1.msra.mxu0 %v4932
    %6011 = vmatprep.subr.mxu0 0.0
    %6012 = vmatpush1.msra.mxu0 %v4937
    %6013 = vmatprep.subr.mxu0 0.0
    %6014 = vmatpush1.msra.mxu0 0.0
    %6015 = vmatprep.subr.mxu0 0.0
    %6016 = vmatpush1.msra.mxu0 0.0
    %6017 = vmatprep.subr.mxu0 0.0
    %6018 = vmatpush1.msra.mxu0 0.0
    %6019 = vmatprep.subr.mxu0 0.0
    %6020 = vmatpush1.msra.mxu0 0.0
    %6021 = vmatprep.subr.mxu0 0.0
    %6022 = vmatpush1.msra.mxu0 0.0
    %6023 = vmatprep.subr.mxu0 0.0
    %6024 = vmatpush1.msra.mxu0 0.0
    %6025 = vmatprep.subr.mxu0 0.0
    %6026 = vmatpush1.msra.mxu0 0.0
    %6027 = vmatprep.subr.mxu0 0.0
    %6028 = vmatpush1.msra.mxu0 0.0
    %6029 = vmatprep.subr.mxu0 0.0
    %6030 = vmatpush1.msra.mxu0 0.0
    %6031 = vmatprep.subr.mxu0 0.0
    %6032 = vmatpush1.msra.mxu0 0.0
    %6033 = vmatprep.subr.mxu0 0.0
    %6034 = vmatpush1.msra.mxu0 0.0
    %6035 = vmatprep.subr.mxu0 0.0
    %6036 = vmatpush1.msra.mxu0 0.0
    %6037 = vmatprep.subr.mxu0 0.0
    %6038 = vmatpush1.msra.mxu0 0.0
    %6039 = vmatprep.subr.mxu0 0.0
    %6040 = vmatpush1.msra.mxu0 0.0
    %6041 = vmatprep.subr.mxu0 0.0
    %6042 = vmatpush1.msra.mxu0 0.0
    %6043 = vmatprep.subr.mxu0 0.0
    %6044 = vmatpush1.msra.mxu0 0.0
    %6045 = vmatprep.subr.mxu0 0.0
    %6046 = vmatpush1.msra.mxu0 0.0
    %6047 = vmatprep.subr.mxu0 0.0
    %6048 = vmatpush1.msra.mxu0 0.0
    %6049 = vmatprep.subr.mxu0 0.0
    %6050 = vmatpush1.msra.mxu0 0.0
    %6051 = vmatprep.subr.mxu0 0.0
    %6052 = vmatpush1.msra.mxu0 0.0
    %6053 = vmatprep.subr.mxu0 0.0
    %6054 = vmatpush1.msra.mxu0 0.0
    %6055 = vmatprep.subr.mxu0 0.0
    %6056 = vmatpush1.msra.mxu0 0.0
    %6057 = vmatprep.subr.mxu0 0.0
    %6058 = vmatpush1.msra.mxu0 0.0
    %6059 = vmatprep.subr.mxu0 0.0
    %6060 = vmatpush1.msra.mxu0 0.0
    %6061 = vmatprep.subr.mxu0 0.0
    %6062 = vmatpush1.msra.mxu0 0.0
    %6063 = vmatprep.subr.mxu0 0.0
    %6064 = vmatpush1.msra.mxu0 0.0
    %6065 = vmatprep.mubr.f32.mxu0 0.0
    %6066 = vmatmul.mubr.f32.gmra.mrb[0].mxu0 %v5993
    %v6067 = vpop.f32.mrb[0].mxu0
    %v6068 = vadd.f32 0.0, %v6067
    %v6069 = vpop.f32.mrb[0].mxu0
    %6070 = vmatprep.mubr.f32.mxu0 0.0
    %6071 = vmatmul.mubr.f32.gmra.mrb[0].mxu0 %v5996
    %v6072 = vpop.f32.mrb[0].mxu0
    %v6073 = vadd.f32 0.0, %v6072
    %v6074 = vpop.f32.mrb[0].mxu0
    %6075 = vmatprep.mubr.f32.mxu0 0.0
    %6076 = vmatmul.mubr.f32.gmra.mrb[0].mxu0 %v5999
    %v6077 = vpop.f32.mrb[0].mxu0
    %v6078 = vadd.f32 0.0, %v6077
    %v6079 = vpop.f32.mrb[0].mxu0
    %6080 = vdwg.mxu0
    %v6082 = vsel %vm5150, %v6068, 0
    %v6085 = vsel %vm5150, %v6073, 0
    %v6088 = vsel %vm5150, %v6078, 0
    %6090 = vmatprep.subr.mxu0 0.0
    %6091 = vmatpush1.msra.mxu0 %v5991
    %6092 = vmatprep.subr.mxu0 0.0
    %6093 = vmatpush1.msra.mxu0 0.0
    %6094 = vmatprep.subr.mxu0 0.0
    %6095 = vmatpush1.msra.mxu0 0.0
    %6096 = vmatprep.subr.mxu0 0.0
    %6097 = vmatpush1.msra.mxu0 0.0
    %6098 = vmatprep.subr.mxu0 0.0
    %6099 = vmatpush1.msra.mxu0 0.0
    %6100 = vmatprep.subr.mxu0 0.0
    %6101 = vmatpush1.msra.mxu0 0.0
    %6102 = vmatprep.subr.mxu0 0.0
    %6103 = vmatpush1.msra.mxu0 0.0
    %6104 = vmatprep.subr.mxu0 0.0
    %6105 = vmatpush1.msra.mxu0 0.0
    %6106 = vmatprep.subr.mxu0 0.0
    %6107 = vmatpush1.msra.mxu0 0.0
    %6108 = vmatprep.subr.mxu0 0.0
    %6109 = vmatpush1.msra.mxu0 0.0
    %6110 = vmatprep.subr.mxu0 0.0
    %6111 = vmatpush1.msra.mxu0 0.0
    %6112 = vmatprep.subr.mxu0 0.0
    %6113 = vmatpush1.msra.mxu0 0.0
    %6114 = vmatprep.subr.mxu0 0.0
    %6115 = vmatpush1.msra.mxu0 0.0
    %6116 = vmatprep.subr.mxu0 0.0
    %6117 = vmatpush1.msra.mxu0 0.0
    %6118 = vmatprep.subr.mxu0 0.0
    %6119 = vmatpush1.msra.mxu0 0.0
    %6120 = vmatprep.subr.mxu0 0.0
    %6121 = vmatpush1.msra.mxu0 0.0
    %6122 = vmatprep.subr.mxu0 0.0
    %6123 = vmatpush1.msra.mxu0 0.0
    %6124 = vmatprep.subr.mxu0 0.0
    %6125 = vmatpush1.msra.mxu0 0.0
    %6126 = vmatprep.subr.mxu0 0.0
    %6127 = vmatpush1.msra.mxu0 0.0
    %6128 = vmatprep.subr.mxu0 0.0
    %6129 = vmatpush1.msra.mxu0 0.0
    %6130 = vmatprep.subr.mxu0 0.0
    %6131 = vmatpush1.msra.mxu0 0.0
    %6132 = vmatprep.subr.mxu0 0.0
    %6133 = vmatpush1.msra.mxu0 0.0
    %6134 = vmatprep.subr.mxu0 0.0
    %6135 = vmatpush1.msra.mxu0 0.0
    %6136 = vmatprep.subr.mxu0 0.0
    %6137 = vmatpush1.msra.mxu0 0.0
    %6138 = vmatprep.subr.mxu0 0.0
    %6139 = vmatpush1.msra.mxu0 0.0
    %6140 = vmatprep.subr.mxu0 0.0
    %6141 = vmatpush1.msra.mxu0 0.0
    %6142 = vmatprep.subr.mxu0 0.0
    %6143 = vmatpush1.msra.mxu0 0.0
    %6144 = vmatprep.subr.mxu0 0.0
    %6145 = vmatpush1.msra.mxu0 0.0
    %6146 = vmatprep.subr.mxu0 0.0
    %6147 = vmatpush1.msra.mxu0 0.0
    %6148 = vmatprep.subr.mxu0 0.0
    %6149 = vmatpush1.msra.mxu0 0.0
    %6150 = vmatprep.subr.mxu0 0.0
    %6151 = vmatpush1.msra.mxu0 0.0
    %6152 = vmatprep.subr.mxu0 0.0
    %6153 = vmatpush1.msra.mxu0 0.0
    %6154 = vmatprep.mubr.f32.mxu0 0.0
    %6155 = vmatmul.mubr.f32.gmra.mrb[0].mxu0 %v6082
    %v6156 = vpop.f32.mrb[0].mxu0
    %v6157 = vadd.f32 0.0, %v6156
    %v6158 = vpop.f32.mrb[0].mxu0
    %6159 = vmatprep.mubr.f32.mxu0 0.0
    %6160 = vmatmul.mubr.f32.gmra.mrb[0].mxu0 %v6085
    %v6161 = vpop.f32.mrb[0].mxu0
    %v6162 = vadd.f32 0.0, %v6161
    %v6163 = vpop.f32.mrb[0].mxu0
    %6164 = vmatprep.mubr.f32.mxu0 0.0
    %6165 = vmatmul.mubr.f32.gmra.mrb[0].mxu0 %v6088
    %v6166 = vpop.f32.mrb[0].mxu0
    %v6167 = vadd.f32 0.0, %v6166
    %v6168 = vpop.f32.mrb[0].mxu0
    %6169 = vdwg.mxu0
    %6170 = vmatprep.subr.mxu0 0.0
    %6171 = vmatpush1.msra.mxu0 %v5120
    %6172 = vmatprep.subr.mxu0 0.0
    %6173 = vmatpush1.msra.mxu0 %v5125
    %6174 = vmatprep.subr.mxu0 0.0
    %6175 = vmatpush1.msra.mxu0 %v5130
    %6176 = vmatprep.subr.mxu0 0.0
    %6177 = vmatpush1.msra.mxu0 %v5135
    %6178 = vmatprep.subr.mxu0 0.0
    %6179 = vmatpush1.msra.mxu0 %v5140
    %6180 = vmatprep.subr.mxu0 0.0
    %6181 = vmatpush1.msra.mxu0 %v5145
    %6182 = vmatprep.subr.mxu0 0.0
    %6183 = vmatpush1.msra.mxu0 0.0
    %6184 = vmatprep.subr.mxu0 0.0
    %6185 = vmatpush1.msra.mxu0 0.0
    %6186 = vmatprep.subr.mxu0 0.0
    %6187 = vmatpush1.msra.mxu0 0.0
    %6188 = vmatprep.subr.mxu0 0.0
    %6189 = vmatpush1.msra.mxu0 0.0
    %6190 = vmatprep.subr.mxu0 0.0
    %6191 = vmatpush1.msra.mxu0 0.0
    %6192 = vmatprep.subr.mxu0 0.0
    %6193 = vmatpush1.msra.mxu0 0.0
    %6194 = vmatprep.subr.mxu0 0.0
    %6195 = vmatpush1.msra.mxu0 0.0
    %6196 = vmatprep.subr.mxu0 0.0
    %6197 = vmatpush1.msra.mxu0 0.0
    %6198 = vmatprep.subr.mxu0 0.0
    %6199 = vmatpush1.msra.mxu0 0.0
    %6200 = vmatprep.subr.mxu0 0.0
    %6201 = vmatpush1.msra.mxu0 0.0
    %6202 = vmatprep.subr.mxu0 0.0
    %6203 = vmatpush1.msra.mxu0 0.0
    %6204 = vmatprep.subr.mxu0 0.0
    %6205 = vmatpush1.msra.mxu0 0.0
    %6206 = vmatprep.subr.mxu0 0.0
    %6207 = vmatpush1.msra.mxu0 0.0
    %6208 = vmatprep.subr.mxu0 0.0
    %6209 = vmatpush1.msra.mxu0 0.0
    %6210 = vmatprep.subr.mxu0 0.0
    %6211 = vmatpush1.msra.mxu0 0.0
    %6212 = vmatprep.subr.mxu0 0.0
    %6213 = vmatpush1.msra.mxu0 0.0
    %6214 = vmatprep.subr.mxu0 0.0
    %6215 = vmatpush1.msra.mxu0 0.0
    %6216 = vmatprep.subr.mxu0 0.0
    %6217 = vmatpush1.msra.mxu0 0.0
    %6218 = vmatprep.subr.mxu0 0.0
    %6219 = vmatpush1.msra.mxu0 0.0
    %6220 = vmatprep.subr.mxu0 0.0
    %6221 = vmatpush1.msra.mxu0 0.0
    %6222 = vmatprep.subr.mxu0 0.0
    %6223 = vmatpush1.msra.mxu0 0.0
    %6224 = vmatprep.subr.mxu0 0.0
    %6225 = vmatpush1.msra.mxu0 0.0
    %6226 = vmatprep.subr.mxu0 0.0
    %6227 = vmatpush1.msra.mxu0 0.0
    %6228 = vmatprep.subr.mxu0 0.0
    %6229 = vmatpush1.msra.mxu0 0.0
    %6230 = vmatprep.subr.mxu0 0.0
    %6231 = vmatpush1.msra.mxu0 0.0
    %6232 = vmatprep.subr.mxu0 0.0
    %6233 = vmatpush1.msra.mxu0 0.0
    %6234 = vmatprep.mubr.f32.mxu0 0.0
    %6235 = vmatmul.mubr.f32.gmra.mrb[0].mxu0 %v5993
    %v6236 = vpop.f32.mrb[0].mxu0
    %v6237 = vadd.f32 0.0, %v6236
    %v6238 = vpop.f32.mrb[0].mxu0
    %6239 = vmatprep.mubr.f32.mxu0 0.0
    %6240 = vmatmul.mubr.f32.gmra.mrb[0].mxu0 %v5996
    %v6241 = vpop.f32.mrb[0].mxu0
    %v6242 = vadd.f32 0.0, %v6241
    %v6243 = vpop.f32.mrb[0].mxu0
    %6244 = vmatprep.mubr.f32.mxu0 0.0
    %6245 = vmatmul.mubr.f32.gmra.mrb[0].mxu0 %v5999
    %v6246 = vpop.f32.mrb[0].mxu0
    %v6247 = vadd.f32 0.0, %v6246
    %v6248 = vpop.f32.mrb[0].mxu0
    %6249 = vdwg.mxu0
    %v6251 = vsel %vm5150, %v6237, 0
    %v6254 = vsel %vm5150, %v6242, 0
    %v6257 = vsel %vm5150, %v6247, 0
    %6259 = vmatprep.subr.mxu0 0.0
    %6260 = vmatpush1.msra.mxu0 %v5991
    %6261 = vmatprep.subr.mxu0 0.0
    %6262 = vmatpush1.msra.mxu0 0.0
    %6263 = vmatprep.subr.mxu0 0.0
    %6264 = vmatpush1.msra.mxu0 0.0
    %6265 = vmatprep.subr.mxu0 0.0
    %6266 = vmatpush1.msra.mxu0 0.0
    %6267 = vmatprep.subr.mxu0 0.0
    %6268 = vmatpush1.msra.mxu0 0.0
    %6269 = vmatprep.subr.mxu0 0.0
    %6270 = vmatpush1.msra.mxu0 0.0
    %6271 = vmatprep.subr.mxu0 0.0
    %6272 = vmatpush1.msra.mxu0 0.0
    %6273 = vmatprep.subr.mxu0 0.0
    %6274 = vmatpush1.msra.mxu0 0.0
    %6275 = vmatprep.subr.mxu0 0.0
    %6276 = vmatpush1.msra.mxu0 0.0
    %6277 = vmatprep.subr.mxu0 0.0
    %6278 = vmatpush1.msra.mxu0 0.0
    %6279 = vmatprep.subr.mxu0 0.0
    %6280 = vmatpush1.msra.mxu0 0.0
    %6281 = vmatprep.subr.mxu0 0.0
    %6282 = vmatpush1.msra.mxu0 0.0
    %6283 = vmatprep.subr.mxu0 0.0
    %6284 = vmatpush1.msra.mxu0 0.0
    %6285 = vmatprep.subr.mxu0 0.0
    %6286 = vmatpush1.msra.mxu0 0.0
    %6287 = vmatprep.subr.mxu0 0.0
    %6288 = vmatpush1.msra.mxu0 0.0
    %6289 = vmatprep.subr.mxu0 0.0
    %6290 = vmatpush1.msra.mxu0 0.0
    %6291 = vmatprep.subr.mxu0 0.0
    %6292 = vmatpush1.msra.mxu0 0.0
    %6293 = vmatprep.subr.mxu0 0.0
    %6294 = vmatpush1.msra.mxu0 0.0
    %6295 = vmatprep.subr.mxu0 0.0
    %6296 = vmatpush1.msra.mxu0 0.0
    %6297 = vmatprep.subr.mxu0 0.0
    %6298 = vmatpush1.msra.mxu0 0.0
    %6299 = vmatprep.subr.mxu0 0.0
    %6300 = vmatpush1.msra.mxu0 0.0
    %6301 = vmatprep.subr.mxu0 0.0
    %6302 = vmatpush1.msra.mxu0 0.0
    %6303 = vmatprep.subr.mxu0 0.0
    %6304 = vmatpush1.msra.mxu0 0.0
    %6305 = vmatprep.subr.mxu0 0.0
    %6306 = vmatpush1.msra.mxu0 0.0
    %6307 = vmatprep.subr.mxu0 0.0
    %6308 = vmatpush1.msra.mxu0 0.0
    %6309 = vmatprep.subr.mxu0 0.0
    %6310 = vmatpush1.msra.mxu0 0.0
    %6311 = vmatprep.subr.mxu0 0.0
    %6312 = vmatpush1.msra.mxu0 0.0
    %6313 = vmatprep.subr.mxu0 0.0
    %6314 = vmatpush1.msra.mxu0 0.0
    %6315 = vmatprep.subr.mxu0 0.0
    %6316 = vmatpush1.msra.mxu0 0.0
    %6317 = vmatprep.subr.mxu0 0.0
    %6318 = vmatpush1.msra.mxu0 0.0
    %6319 = vmatprep.subr.mxu0 0.0
    %6320 = vmatpush1.msra.mxu0 0.0
    %6321 = vmatprep.subr.mxu0 0.0
    %6322 = vmatpush1.msra.mxu0 0.0
    %6323 = vmatprep.mubr.f32.mxu0 0.0
    %6324 = vmatmul.mubr.f32.gmra.mrb[0].mxu0 %v6251
    %v6325 = vpop.f32.mrb[0].mxu0
    %v6326 = vadd.f32 0.0, %v6325
    %v6327 = vpop.f32.mrb[0].mxu0
    %6328 = vmatprep.mubr.f32.mxu0 0.0
    %6329 = vmatmul.mubr.f32.gmra.mrb[0].mxu0 %v6254
    %v6330 = vpop.f32.mrb[0].mxu0
    %v6331 = vadd.f32 0.0, %v6330
    %v6332 = vpop.f32.mrb[0].mxu0
    %6333 = vmatprep.mubr.f32.mxu0 0.0
    %6334 = vmatmul.mubr.f32.gmra.mrb[0].mxu0 %v6257
    %v6335 = vpop.f32.mrb[0].mxu0
    %v6336 = vadd.f32 0.0, %v6335
    %v6337 = vpop.f32.mrb[0].mxu0
    %6338 = vdwg.mxu0
    %v6339 = vld [vmem:[#allocation16] sm:$0x3f]
    %v6340 = vld [vmem:[#allocation17] sm:$0xf]
    %vm6341 = vcmask 31744
    %v6342 = vsel %vm6341, %v6157, -inf
    %v6343 = vsel %vm6341, %v6162, -inf
    %v6344 = vsel %vm6341, %v6167, -inf
    %v6345 = vmax.f32 %v6342, %v6343
    %v6346 = vmax.f32 %v6345, %v6344
    %6347 = vmax.xlane.f32.xlu0 %v6346
    %v6348 = vpop.xlane.xlu0 %6347
    %v6349 = vrot.slane %v6348, 4
    %v6350 = vmax.f32 %v6348, %v6349
    %v6351 = vrot.slane %v6350, 2
    %v6352 = vmax.f32 %v6350, %v6351
    %v6353 = vrot.slane %v6352, 1
    %v6354 = vmax.f32 %v6352, %v6353
    %s6355 = vtos %v6354
    %v6356 = vsel %vm6341, %v6157, inf
    %v6357 = vsel %vm6341, %v6162, inf
    %v6358 = vsel %vm6341, %v6167, inf
    %v6359 = vmin.f32 %v6356, %v6357
    %v6360 = vmin.f32 %v6359, %v6358
    %6361 = vmin.xlane.f32.xlu0 %v6360
    %v6362 = vpop.xlane.xlu0 %6361
    %v6363 = vrot.slane %v6362, 4
    %v6364 = vmin.f32 %v6362, %v6363
    %v6365 = vrot.slane %v6364, 2
    %v6366 = vmin.f32 %v6364, %v6365
    %v6367 = vrot.slane %v6366, 1
    %v6368 = vmin.f32 %v6366, %v6367
    %s6369 = vtos %v6368
    %p6370 = scmp.gt.f32.partialorder %s6355, 128.0
    %s6371 = scalar_select %p6370, 255.0, 1.0
    %p6372 = scmp.lt.f32.partialorder %s6369, -0.5
    %s6373 = scalar_select %p6372, -1.0, 0.0
    %s6374 = ssub.f32 %s6371, %s6373
    %s6375 = smul.f32 %s6374, 0.01
    %s6376 = smul.f32 %s6375, %s6375
    %s6377 = smul.f32 %s6374, 0.03
    %s6378 = smul.f32 %s6377, %s6377
    %vm6379 = vcmask 195584
    %v6381 = vsel %vm6379, %v6339, 0
    %6383 = vmatprep.subr.mxu0 0.0
    %6384 = vmatpush1.msra.mxu0 %v6157
    %6385 = vmatprep.subr.mxu0 0.0
    %6386 = vmatpush1.msra.mxu0 %v6162
    %6387 = vmatprep.subr.mxu0 0.0
    %6388 = vmatpush1.msra.mxu0 %v6167
    %6389 = vmatprep.subr.mxu0 0.0
    %6390 = vmatpush1.msra.mxu0 0.0
    %6391 = vmatprep.subr.mxu0 0.0
    %6392 = vmatpush1.msra.mxu0 0.0
    %6393 = vmatprep.subr.mxu0 0.0
    %6394 = vmatpush1.msra.mxu0 0.0
    %6395 = vmatprep.subr.mxu0 0.0
    %6396 = vmatpush1.msra.mxu0 0.0
    %6397 = vmatprep.subr.mxu0 0.0
    %6398 = vmatpush1.msra.mxu0 0.0
    %6399 = vmatprep.subr.mxu0 0.0
    %6400 = vmatpush1.msra.mxu0 0.0
    %6401 = vmatprep.subr.mxu0 0.0
    %6402 = vmatpush1.msra.mxu0 0.0
    %6403 = vmatprep.subr.mxu0 0.0
    %6404 = vmatpush1.msra.mxu0 0.0
    %6405 = vmatprep.subr.mxu0 0.0
    %6406 = vmatpush1.msra.mxu0 0.0
    %6407 = vmatprep.subr.mxu0 0.0
    %6408 = vmatpush1.msra.mxu0 0.0
    %6409 = vmatprep.subr.mxu0 0.0
    %6410 = vmatpush1.msra.mxu0 0.0
    %6411 = vmatprep.subr.mxu0 0.0
    %6412 = vmatpush1.msra.mxu0 0.0
    %6413 = vmatprep.subr.mxu0 0.0
    %6414 = vmatpush1.msra.mxu0 0.0
    %6415 = vmatprep.subr.mxu0 0.0
    %6416 = vmatpush1.msra.mxu0 0.0
    %6417 = vmatprep.subr.mxu0 0.0
    %6418 = vmatpush1.msra.mxu0 0.0
    %6419 = vmatprep.subr.mxu0 0.0
    %6420 = vmatpush1.msra.mxu0 0.0
    %6421 = vmatprep.subr.mxu0 0.0
    %6422 = vmatpush1.msra.mxu0 0.0
    %6423 = vmatprep.subr.mxu0 0.0
    %6424 = vmatpush1.msra.mxu0 0.0
    %6425 = vmatprep.subr.mxu0 0.0
    %6426 = vmatpush1.msra.mxu0 0.0
    %6427 = vmatprep.subr.mxu0 0.0
    %6428 = vmatpush1.msra.mxu0 0.0
    %6429 = vmatprep.subr.mxu0 0.0
    %6430 = vmatpush1.msra.mxu0 0.0
    %6431 = vmatprep.subr.mxu0 0.0
    %6432 = vmatpush1.msra.mxu0 0.0
    %6433 = vmatprep.subr.mxu0 0.0
    %6434 = vmatpush1.msra.mxu0 0.0
    %6435 = vmatprep.subr.mxu0 0.0
    %6436 = vmatpush1.msra.mxu0 0.0
    %6437 = vmatprep.subr.mxu0 0.0
    %6438 = vmatpush1.msra.mxu0 0.0
    %6439 = vmatprep.subr.mxu0 0.0
    %6440 = vmatpush1.msra.mxu0 0.0
    %6441 = vmatprep.subr.mxu0 0.0
    %6442 = vmatpush1.msra.mxu0 0.0
    %6443 = vmatprep.subr.mxu0 0.0
    %6444 = vmatpush1.msra.mxu0 0.0
    %6445 = vmatprep.subr.mxu0 0.0
    %6446 = vmatpush1.msra.mxu0 0.0
    %6447 = vmatprep.mubr.f32.mxu0 0.0
    %6448 = vmatmul.mubr.f32.gmra.mrb[0].mxu0 %v6381
    %v6449 = vpop.f32.mrb[0].mxu0
    %v6450 = vadd.f32 0.0, %v6449
    %v6451 = vpop.f32.mrb[0].mxu0
    %6452 = vdwg.mxu0
    %v6454 = vsel %vm6341, %v6450, 0
    %vm6456 = vcmask 1043456
    %v6458 = vsel %vm6456, %v6340, 0
    %6460 = vmatprep.subr.mxu0 0.0
    %6461 = vmatpush1.msra.mxu0 %v6458
    %6462 = vmatprep.subr.mxu0 0.0
    %6463 = vmatpush1.msra.mxu0 0.0
    %6464 = vmatprep.subr.mxu0 0.0
    %6465 = vmatpush1.msra.mxu0 0.0
    %6466 = vmatprep.subr.mxu0 0.0
    %6467 = vmatpush1.msra.mxu0 0.0
    %6468 = vmatprep.subr.mxu0 0.0
    %6469 = vmatpush1.msra.mxu0 0.0
    %6470 = vmatprep.subr.mxu0 0.0
    %6471 = vmatpush1.msra.mxu0 0.0
    %6472 = vmatprep.subr.mxu0 0.0
    %6473 = vmatpush1.msra.mxu0 0.0
    %6474 = vmatprep.subr.mxu0 0.0
    %6475 = vmatpush1.msra.mxu0 0.0
    %6476 = vmatprep.subr.mxu0 0.0
    %6477 = vmatpush1.msra.mxu0 0.0
    %6478 = vmatprep.subr.mxu0 0.0
    %6479 = vmatpush1.msra.mxu0 0.0
    %6480 = vmatprep.subr.mxu0 0.0
    %6481 = vmatpush1.msra.mxu0 0.0
    %6482 = vmatprep.subr.mxu0 0.0
    %6483 = vmatpush1.msra.mxu0 0.0
    %6484 = vmatprep.subr.mxu0 0.0
    %6485 = vmatpush1.msra.mxu0 0.0
    %6486 = vmatprep.subr.mxu0 0.0
    %6487 = vmatpush1.msra.mxu0 0.0
    %6488 = vmatprep.subr.mxu0 0.0
    %6489 = vmatpush1.msra.mxu0 0.0
    %6490 = vmatprep.subr.mxu0 0.0
    %6491 = vmatpush1.msra.mxu0 0.0
    %6492 = vmatprep.subr.mxu0 0.0
    %6493 = vmatpush1.msra.mxu0 0.0
    %6494 = vmatprep.subr.mxu0 0.0
    %6495 = vmatpush1.msra.mxu0 0.0
    %6496 = vmatprep.subr.mxu0 0.0
    %6497 = vmatpush1.msra.mxu0 0.0
    %6498 = vmatprep.subr.mxu0 0.0
    %6499 = vmatpush1.msra.mxu0 0.0
    %6500 = vmatprep.subr.mxu0 0.0
    %6501 = vmatpush1.msra.mxu0 0.0
    %6502 = vmatprep.subr.mxu0 0.0
    %6503 = vmatpush1.msra.mxu0 0.0
    %6504 = vmatprep.subr.mxu0 0.0
    %6505 = vmatpush1.msra.mxu0 0.0
    %6506 = vmatprep.subr.mxu0 0.0
    %6507 = vmatpush1.msra.mxu0 0.0
    %6508 = vmatprep.subr.mxu0 0.0
    %6509 = vmatpush1.msra.mxu0 0.0
    %6510 = vmatprep.subr.mxu0 0.0
    %6511 = vmatpush1.msra.mxu0 0.0
    %6512 = vmatprep.subr.mxu0 0.0
    %6513 = vmatpush1.msra.mxu0 0.0
    %6514 = vmatprep.subr.mxu0 0.0
    %6515 = vmatpush1.msra.mxu0 0.0
    %6516 = vmatprep.subr.mxu0 0.0
    %6517 = vmatpush1.msra.mxu0 0.0
    %6518 = vmatprep.subr.mxu0 0.0
    %6519 = vmatpush1.msra.mxu0 0.0
    %6520 = vmatprep.subr.mxu0 0.0
    %6521 = vmatpush1.msra.mxu0 0.0
    %6522 = vmatprep.subr.mxu0 0.0
    %6523 = vmatpush1.msra.mxu0 0.0
    %6524 = vmatprep.mubr.f32.mxu0 0.0
    %6525 = vmatmul.mubr.f32.gmra.mrb[0].mxu0 %v6454
    %v6526 = vpop.f32.mrb[0].mxu0
    %v6527 = vadd.f32 0.0, %v6526
    %v6528 = vpop.f32.mrb[0].mxu0
    %6529 = vdwg.mxu0
    %6530 = vmatprep.subr.mxu0 0.0
    %6531 = vmatpush1.msra.mxu0 %v6326
    %6532 = vmatprep.subr.mxu0 0.0
    %6533 = vmatpush1.msra.mxu0 %v6331
    %6534 = vmatprep.subr.mxu0 0.0
    %6535 = vmatpush1.msra.mxu0 %v6336
    %6536 = vmatprep.subr.mxu0 0.0
    %6537 = vmatpush1.msra.mxu0 0.0
    %6538 = vmatprep.subr.mxu0 0.0
    %6539 = vmatpush1.msra.mxu0 0.0
    %6540 = vmatprep.subr.mxu0 0.0
    %6541 = vmatpush1.msra.mxu0 0.0
    %6542 = vmatprep.subr.mxu0 0.0
    %6543 = vmatpush1.msra.mxu0 0.0
    %6544 = vmatprep.subr.mxu0 0.0
    %6545 = vmatpush1.msra.mxu0 0.0
    %6546 = vmatprep.subr.mxu0 0.0
    %6547 = vmatpush1.msra.mxu0 0.0
    %6548 = vmatprep.subr.mxu0 0.0
    %6549 = vmatpush1.msra.mxu0 0.0
    %6550 = vmatprep.subr.mxu0 0.0
    %6551 = vmatpush1.msra.mxu0 0.0
    %6552 = vmatprep.subr.mxu0 0.0
    %6553 = vmatpush1.msra.mxu0 0.0
    %6554 = vmatprep.subr.mxu0 0.0
    %6555 = vmatpush1.msra.mxu0 0.0
    %6556 = vmatprep.subr.mxu0 0.0
    %6557 = vmatpush1.msra.mxu0 0.0
    %6558 = vmatprep.subr.mxu0 0.0
    %6559 = vmatpush1.msra.mxu0 0.0
    %6560 = vmatprep.subr.mxu0 0.0
    %6561 = vmatpush1.msra.mxu0 0.0
    %6562 = vmatprep.subr.mxu0 0.0
    %6563 = vmatpush1.msra.mxu0 0.0
    %6564 = vmatprep.subr.mxu0 0.0
    %6565 = vmatpush1.msra.mxu0 0.0
    %6566 = vmatprep.subr.mxu0 0.0
    %6567 = vmatpush1.msra.mxu0 0.0
    %6568 = vmatprep.subr.mxu0 0.0
    %6569 = vmatpush1.msra.mxu0 0.0
    %6570 = vmatprep.subr.mxu0 0.0
    %6571 = vmatpush1.msra.mxu0 0.0
    %6572 = vmatprep.subr.mxu0 0.0
    %6573 = vmatpush1.msra.mxu0 0.0
    %6574 = vmatprep.subr.mxu0 0.0
    %6575 = vmatpush1.msra.mxu0 0.0
    %6576 = vmatprep.subr.mxu0 0.0
    %6577 = vmatpush1.msra.mxu0 0.0
    %6578 = vmatprep.subr.mxu0 0.0
    %6579 = vmatpush1.msra.mxu0 0.0
    %6580 = vmatprep.subr.mxu0 0.0
    %6581 = vmatpush1.msra.mxu0 0.0
    %6582 = vmatprep.subr.mxu0 0.0
    %6583 = vmatpush1.msra.mxu0 0.0
    %6584 = vmatprep.subr.mxu0 0.0
    %6585 = vmatpush1.msra.mxu0 0.0
    %6586 = vmatprep.subr.mxu0 0.0
    %6587 = vmatpush1.msra.mxu0 0.0
    %6588 = vmatprep.subr.mxu0 0.0
    %6589 = vmatpush1.msra.mxu0 0.0
    %6590 = vmatprep.subr.mxu0 0.0
    %6591 = vmatpush1.msra.mxu0 0.0
    %6592 = vmatprep.subr.mxu0 0.0
    %6593 = vmatpush1.msra.mxu0 0.0
    %6594 = vmatprep.mubr.f32.mxu0 0.0
    %6595 = vmatmul.mubr.f32.gmra.mrb[0].mxu0 %v6381
    %v6596 = vpop.f32.mrb[0].mxu0
    %v6597 = vadd.f32 0.0, %v6596
    %v6598 = vpop.f32.mrb[0].mxu0
    %6599 = vdwg.mxu0
    %v6601 = vsel %vm6341, %v6597, 0
    %6603 = vmatprep.subr.mxu0 0.0
    %6604 = vmatpush1.msra.mxu0 %v6458
    %6605 = vmatprep.subr.mxu0 0.0
    %6606 = vmatpush1.msra.mxu0 0.0
    %6607 = vmatprep.subr.mxu0 0.0
    %6608 = vmatpush1.msra.mxu0 0.0
    %6609 = vmatprep.subr.mxu0 0.0
    %6610 = vmatpush1.msra.mxu0 0.0
    %6611 = vmatprep.subr.mxu0 0.0
    %6612 = vmatpush1.msra.mxu0 0.0
    %6613 = vmatprep.subr.mxu0 0.0
    %6614 = vmatpush1.msra.mxu0 0.0
    %6615 = vmatprep.subr.mxu0 0.0
    %6616 = vmatpush1.msra.mxu0 0.0
    %6617 = vmatprep.subr.mxu0 0.0
    %6618 = vmatpush1.msra.mxu0 0.0
    %6619 = vmatprep.subr.mxu0 0.0
    %6620 = vmatpush1.msra.mxu0 0.0
    %6621 = vmatprep.subr.mxu0 0.0
    %6622 = vmatpush1.msra.mxu0 0.0
    %6623 = vmatprep.subr.mxu0 0.0
    %6624 = vmatpush1.msra.mxu0 0.0
    %6625 = vmatprep.subr.mxu0 0.0
    %6626 = vmatpush1.msra.mxu0 0.0
    %6627 = vmatprep.subr.mxu0 0.0
    %6628 = vmatpush1.msra.mxu0 0.0
    %6629 = vmatprep.subr.mxu0 0.0
    %6630 = vmatpush1.msra.mxu0 0.0
    %6631 = vmatprep.subr.mxu0 0.0
    %6632 = vmatpush1.msra.mxu0 0.0
    %6633 = vmatprep.subr.mxu0 0.0
    %6634 = vmatpush1.msra.mxu0 0.0
    %6635 = vmatprep.subr.mxu0 0.0
    %6636 = vmatpush1.msra.mxu0 0.0
    %6637 = vmatprep.subr.mxu0 0.0
    %6638 = vmatpush1.msra.mxu0 0.0
    %6639 = vmatprep.subr.mxu0 0.0
    %6640 = vmatpush1.msra.mxu0 0.0
    %6641 = vmatprep.subr.mxu0 0.0
    %6642 = vmatpush1.msra.mxu0 0.0
    %6643 = vmatprep.subr.mxu0 0.0
    %6644 = vmatpush1.msra.mxu0 0.0
    %6645 = vmatprep.subr.mxu0 0.0
    %6646 = vmatpush1.msra.mxu0 0.0
    %6647 = vmatprep.subr.mxu0 0.0
    %6648 = vmatpush1.msra.mxu0 0.0
    %6649 = vmatprep.subr.mxu0 0.0
    %6650 = vmatpush1.msra.mxu0 0.0
    %6651 = vmatprep.subr.mxu0 0.0
    %6652 = vmatpush1.msra.mxu0 0.0
    %6653 = vmatprep.subr.mxu0 0.0
    %6654 = vmatpush1.msra.mxu0 0.0
    %6655 = vmatprep.subr.mxu0 0.0
    %6656 = vmatpush1.msra.mxu0 0.0
    %6657 = vmatprep.subr.mxu0 0.0
    %6658 = vmatpush1.msra.mxu0 0.0
    %6659 = vmatprep.subr.mxu0 0.0
    %6660 = vmatpush1.msra.mxu0 0.0
    %6661 = vmatprep.subr.mxu0 0.0
    %6662 = vmatpush1.msra.mxu0 0.0
    %6663 = vmatprep.subr.mxu0 0.0
    %6664 = vmatpush1.msra.mxu0 0.0
    %6665 = vmatprep.subr.mxu0 0.0
    %6666 = vmatpush1.msra.mxu0 0.0
    %6667 = vmatprep.mubr.f32.mxu0 0.0
    %6668 = vmatmul.mubr.f32.gmra.mrb[0].mxu0 %v6601
    %v6669 = vpop.f32.mrb[0].mxu0
    %v6670 = vadd.f32 0.0, %v6669
    %v6671 = vpop.f32.mrb[0].mxu0
    %6672 = vdwg.mxu0
    %v6673 = vmul.f32 %v6527, %v6527
    %v6674 = vmul.f32 %v6670, %v6670
    %v6675 = vmul.f32 %v6527, %v6670
    %v6676 = vmul.f32 %v6157, %v6157
    %v6677 = vmul.f32 %v6162, %v6162
    %v6678 = vmul.f32 %v6167, %v6167
    %6679 = vmatprep.subr.mxu0 0.0
    %6680 = vmatpush1.msra.mxu0 %v6676
    %6681 = vmatprep.subr.mxu0 0.0
    %6682 = vmatpush1.msra.mxu0 %v6677
    %6683 = vmatprep.subr.mxu0 0.0
    %6684 = vmatpush1.msra.mxu0 %v6678
    %6685 = vmatprep.subr.mxu0 0.0
    %6686 = vmatpush1.msra.mxu0 0.0
    %6687 = vmatprep.subr.mxu0 0.0
    %6688 = vmatpush1.msra.mxu0 0.0
    %6689 = vmatprep.subr.mxu0 0.0
    %6690 = vmatpush1.msra.mxu0 0.0
    %6691 = vmatprep.subr.mxu0 0.0
    %6692 = vmatpush1.msra.mxu0 0.0
    %6693 = vmatprep.subr.mxu0 0.0
    %6694 = vmatpush1.msra.mxu0 0.0
    %6695 = vmatprep.subr.mxu0 0.0
    %6696 = vmatpush1.msra.mxu0 0.0
    %6697 = vmatprep.subr.mxu0 0.0
    %6698 = vmatpush1.msra.mxu0 0.0
    %6699 = vmatprep.subr.mxu0 0.0
    %6700 = vmatpush1.msra.mxu0 0.0
    %6701 = vmatprep.subr.mxu0 0.0
    %6702 = vmatpush1.msra.mxu0 0.0
    %6703 = vmatprep.subr.mxu0 0.0
    %6704 = vmatpush1.msra.mxu0 0.0
    %6705 = vmatprep.subr.mxu0 0.0
    %6706 = vmatpush1.msra.mxu0 0.0
    %6707 = vmatprep.subr.mxu0 0.0
    %6708 = vmatpush1.msra.mxu0 0.0
    %6709 = vmatprep.subr.mxu0 0.0
    %6710 = vmatpush1.msra.mxu0 0.0
    %6711 = vmatprep.subr.mxu0 0.0
    %6712 = vmatpush1.msra.mxu0 0.0
    %6713 = vmatprep.subr.mxu0 0.0
    %6714 = vmatpush1.msra.mxu0 0.0
    %6715 = vmatprep.subr.mxu0 0.0
    %6716 = vmatpush1.msra.mxu0 0.0
    %6717 = vmatprep.subr.mxu0 0.0
    %6718 = vmatpush1.msra.mxu0 0.0
    %6719 = vmatprep.subr.mxu0 0.0
    %6720 = vmatpush1.msra.mxu0 0.0
    %6721 = vmatprep.subr.mxu0 0.0
    %6722 = vmatpush1.msra.mxu0 0.0
    %6723 = vmatprep.subr.mxu0 0.0
    %6724 = vmatpush1.msra.mxu0 0.0
    %6725 = vmatprep.subr.mxu0 0.0
    %6726 = vmatpush1.msra.mxu0 0.0
    %6727 = vmatprep.subr.mxu0 0.0
    %6728 = vmatpush1.msra.mxu0 0.0
    %6729 = vmatprep.subr.mxu0 0.0
    %6730 = vmatpush1.msra.mxu0 0.0
    %6731 = vmatprep.subr.mxu0 0.0
    %6732 = vmatpush1.msra.mxu0 0.0
    %6733 = vmatprep.subr.mxu0 0.0
    %6734 = vmatpush1.msra.mxu0 0.0
    %6735 = vmatprep.subr.mxu0 0.0
    %6736 = vmatpush1.msra.mxu0 0.0
    %6737 = vmatprep.subr.mxu0 0.0
    %6738 = vmatpush1.msra.mxu0 0.0
    %6739 = vmatprep.subr.mxu0 0.0
    %6740 = vmatpush1.msra.mxu0 0.0
    %6741 = vmatprep.subr.mxu0 0.0
    %6742 = vmatpush1.msra.mxu0 0.0
    %6743 = vmatprep.mubr.f32.mxu0 0.0
    %6744 = vmatmul.mubr.f32.gmra.mrb[0].mxu0 %v6381
    %v6745 = vpop.f32.mrb[0].mxu0
    %v6746 = vadd.f32 0.0, %v6745
    %v6747 = vpop.f32.mrb[0].mxu0
    %6748 = vdwg.mxu0
    %v6750 = vsel %vm6341, %v6746, 0
    %6752 = vmatprep.subr.mxu0 0.0
    %6753 = vmatpush1.msra.mxu0 %v6458
    %6754 = vmatprep.subr.mxu0 0.0
    %6755 = vmatpush1.msra.mxu0 0.0
    %6756 = vmatprep.subr.mxu0 0.0
    %6757 = vmatpush1.msra.mxu0 0.0
    %6758 = vmatprep.subr.mxu0 0.0
    %6759 = vmatpush1.msra.mxu0 0.0
    %6760 = vmatprep.subr.mxu0 0.0
    %6761 = vmatpush1.msra.mxu0 0.0
    %6762 = vmatprep.subr.mxu0 0.0
    %6763 = vmatpush1.msra.mxu0 0.0
    %6764 = vmatprep.subr.mxu0 0.0
    %6765 = vmatpush1.msra.mxu0 0.0
    %6766 = vmatprep.subr.mxu0 0.0
    %6767 = vmatpush1.msra.mxu0 0.0
    %6768 = vmatprep.subr.mxu0 0.0
    %6769 = vmatpush1.msra.mxu0 0.0
    %6770 = vmatprep.subr.mxu0 0.0
    %6771 = vmatpush1.msra.mxu0 0.0
    %6772 = vmatprep.subr.mxu0 0.0
    %6773 = vmatpush1.msra.mxu0 0.0
    %6774 = vmatprep.subr.mxu0 0.0
    %6775 = vmatpush1.msra.mxu0 0.0
    %6776 = vmatprep.subr.mxu0 0.0
    %6777 = vmatpush1.msra.mxu0 0.0
    %6778 = vmatprep.subr.mxu0 0.0
    %6779 = vmatpush1.msra.mxu0 0.0
    %6780 = vmatprep.subr.mxu0 0.0
    %6781 = vmatpush1.msra.mxu0 0.0
    %6782 = vmatprep.subr.mxu0 0.0
    %6783 = vmatpush1.msra.mxu0 0.0
    %6784 = vmatprep.subr.mxu0 0.0
    %6785 = vmatpush1.msra.mxu0 0.0
    %6786 = vmatprep.subr.mxu0 0.0
    %6787 = vmatpush1.msra.mxu0 0.0
    %6788 = vmatprep.subr.mxu0 0.0
    %6789 = vmatpush1.msra.mxu0 0.0
    %6790 = vmatprep.subr.mxu0 0.0
    %6791 = vmatpush1.msra.mxu0 0.0
    %6792 = vmatprep.subr.mxu0 0.0
    %6793 = vmatpush1.msra.mxu0 0.0
    %6794 = vmatprep.subr.mxu0 0.0
    %6795 = vmatpush1.msra.mxu0 0.0
    %6796 = vmatprep.subr.mxu0 0.0
    %6797 = vmatpush1.msra.mxu0 0.0
    %6798 = vmatprep.subr.mxu0 0.0
    %6799 = vmatpush1.msra.mxu0 0.0
    %6800 = vmatprep.subr.mxu0 0.0
    %6801 = vmatpush1.msra.mxu0 0.0
    %6802 = vmatprep.subr.mxu0 0.0
    %6803 = vmatpush1.msra.mxu0 0.0
    %6804 = vmatprep.subr.mxu0 0.0
    %6805 = vmatpush1.msra.mxu0 0.0
    %6806 = vmatprep.subr.mxu0 0.0
    %6807 = vmatpush1.msra.mxu0 0.0
    %6808 = vmatprep.subr.mxu0 0.0
    %6809 = vmatpush1.msra.mxu0 0.0
    %6810 = vmatprep.subr.mxu0 0.0
    %6811 = vmatpush1.msra.mxu0 0.0
    %6812 = vmatprep.subr.mxu0 0.0
    %6813 = vmatpush1.msra.mxu0 0.0
    %6814 = vmatprep.subr.mxu0 0.0
    %6815 = vmatpush1.msra.mxu0 0.0
    %6816 = vmatprep.mubr.f32.mxu0 0.0
    %6817 = vmatmul.mubr.f32.gmra.mrb[0].mxu0 %v6750
    %v6818 = vpop.f32.mrb[0].mxu0
    %v6819 = vadd.f32 0.0, %v6818
    %v6820 = vpop.f32.mrb[0].mxu0
    %6821 = vdwg.mxu0
    %v6822 = vsub.f32 %v6819, %v6673
    %v6823 = vmul.f32 %v6326, %v6326
    %v6824 = vmul.f32 %v6331, %v6331
    %v6825 = vmul.f32 %v6336, %v6336
    %6826 = vmatprep.subr.mxu0 0.0
    %6827 = vmatpush1.msra.mxu0 %v6823
    %6828 = vmatprep.subr.mxu0 0.0
    %6829 = vmatpush1.msra.mxu0 %v6824
    %6830 = vmatprep.subr.mxu0 0.0
    %6831 = vmatpush1.msra.mxu0 %v6825
    %6832 = vmatprep.subr.mxu0 0.0
    %6833 = vmatpush1.msra.mxu0 0.0
    %6834 = vmatprep.subr.mxu0 0.0
    %6835 = vmatpush1.msra.mxu0 0.0
    %6836 = vmatprep.subr.mxu0 0.0
    %6837 = vmatpush1.msra.mxu0 0.0
    %6838 = vmatprep.subr.mxu0 0.0
    %6839 = vmatpush1.msra.mxu0 0.0
    %6840 = vmatprep.subr.mxu0 0.0
    %6841 = vmatpush1.msra.mxu0 0.0
    %6842 = vmatprep.subr.mxu0 0.0
    %6843 = vmatpush1.msra.mxu0 0.0
    %6844 = vmatprep.subr.mxu0 0.0
    %6845 = vmatpush1.msra.mxu0 0.0
    %6846 = vmatprep.subr.mxu0 0.0
    %6847 = vmatpush1.msra.mxu0 0.0
    %6848 = vmatprep.subr.mxu0 0.0
    %6849 = vmatpush1.msra.mxu0 0.0
    %6850 = vmatprep.subr.mxu0 0.0
    %6851 = vmatpush1.msra.mxu0 0.0
    %6852 = vmatprep.subr.mxu0 0.0
    %6853 = vmatpush1.msra.mxu0 0.0
    %6854 = vmatprep.subr.mxu0 0.0
    %6855 = vmatpush1.msra.mxu0 0.0
    %6856 = vmatprep.subr.mxu0 0.0
    %6857 = vmatpush1.msra.mxu0 0.0
    %6858 = vmatprep.subr.mxu0 0.0
    %6859 = vmatpush1.msra.mxu0 0.0
    %6860 = vmatprep.subr.mxu0 0.0
    %6861 = vmatpush1.msra.mxu0 0.0
    %6862 = vmatprep.subr.mxu0 0.0
    %6863 = vmatpush1.msra.mxu0 0.0
    %6864 = vmatprep.subr.mxu0 0.0
    %6865 = vmatpush1.msra.mxu0 0.0
    %6866 = vmatprep.subr.mxu0 0.0
    %6867 = vmatpush1.msra.mxu0 0.0
    %6868 = vmatprep.subr.mxu0 0.0
    %6869 = vmatpush1.msra.mxu0 0.0
    %6870 = vmatprep.subr.mxu0 0.0
    %6871 = vmatpush1.msra.mxu0 0.0
    %6872 = vmatprep.subr.mxu0 0.0
    %6873 = vmatpush1.msra.mxu0 0.0
    %6874 = vmatprep.subr.mxu0 0.0
    %6875 = vmatpush1.msra.mxu0 0.0
    %6876 = vmatprep.subr.mxu0 0.0
    %6877 = vmatpush1.msra.mxu0 0.0
    %6878 = vmatprep.subr.mxu0 0.0
    %6879 = vmatpush1.msra.mxu0 0.0
    %6880 = vmatprep.subr.mxu0 0.0
    %6881 = vmatpush1.msra.mxu0 0.0
    %6882 = vmatprep.subr.mxu0 0.0
    %6883 = vmatpush1.msra.mxu0 0.0
    %6884 = vmatprep.subr.mxu0 0.0
    %6885 = vmatpush1.msra.mxu0 0.0
    %6886 = vmatprep.subr.mxu0 0.0
    %6887 = vmatpush1.msra.mxu0 0.0
    %6888 = vmatprep.subr.mxu0 0.0
    %6889 = vmatpush1.msra.mxu0 0.0
    %6890 = vmatprep.mubr.f32.mxu0 0.0
    %6891 = vmatmul.mubr.f32.gmra.mrb[0].mxu0 %v6381
    %v6892 = vpop.f32.mrb[0].mxu0
    %v6893 = vadd.f32 0.0, %v6892
    %v6894 = vpop.f32.mrb[0].mxu0
    %6895 = vdwg.mxu0
    %v6897 = vsel %vm6341, %v6893, 0
    %6899 = vmatprep.subr.mxu0 0.0
    %6900 = vmatpush1.msra.mxu0 %v6458
    %6901 = vmatprep.subr.mxu0 0.0
    %6902 = vmatpush1.msra.mxu0 0.0
    %6903 = vmatprep.subr.mxu0 0.0
    %6904 = vmatpush1.msra.mxu0 0.0
    %6905 = vmatprep.subr.mxu0 0.0
    %6906 = vmatpush1.msra.mxu0 0.0
    %6907 = vmatprep.subr.mxu0 0.0
    %6908 = vmatpush1.msra.mxu0 0.0
    %6909 = vmatprep.subr.mxu0 0.0
    %6910 = vmatpush1.msra.mxu0 0.0
    %6911 = vmatprep.subr.mxu0 0.0
    %6912 = vmatpush1.msra.mxu0 0.0
    %6913 = vmatprep.subr.mxu0 0.0
    %6914 = vmatpush1.msra.mxu0 0.0
    %6915 = vmatprep.subr.mxu0 0.0
    %6916 = vmatpush1.msra.mxu0 0.0
    %6917 = vmatprep.subr.mxu0 0.0
    %6918 = vmatpush1.msra.mxu0 0.0
    %6919 = vmatprep.subr.mxu0 0.0
    %6920 = vmatpush1.msra.mxu0 0.0
    %6921 = vmatprep.subr.mxu0 0.0
    %6922 = vmatpush1.msra.mxu0 0.0
    %6923 = vmatprep.subr.mxu0 0.0
    %6924 = vmatpush1.msra.mxu0 0.0
    %6925 = vmatprep.subr.mxu0 0.0
    %6926 = vmatpush1.msra.mxu0 0.0
    %6927 = vmatprep.subr.mxu0 0.0
    %6928 = vmatpush1.msra.mxu0 0.0
    %6929 = vmatprep.subr.mxu0 0.0
    %6930 = vmatpush1.msra.mxu0 0.0
    %6931 = vmatprep.subr.mxu0 0.0
    %6932 = vmatpush1.msra.mxu0 0.0
    %6933 = vmatprep.subr.mxu0 0.0
    %6934 = vmatpush1.msra.mxu0 0.0
    %6935 = vmatprep.subr.mxu0 0.0
    %6936 = vmatpush1.msra.mxu0 0.0
    %6937 = vmatprep.subr.mxu0 0.0
    %6938 = vmatpush1.msra.mxu0 0.0
    %6939 = vmatprep.subr.mxu0 0.0
    %6940 = vmatpush1.msra.mxu0 0.0
    %6941 = vmatprep.subr.mxu0 0.0
    %6942 = vmatpush1.msra.mxu0 0.0
    %6943 = vmatprep.subr.mxu0 0.0
    %6944 = vmatpush1.msra.mxu0 0.0
    %6945 = vmatprep.subr.mxu0 0.0
    %6946 = vmatpush1.msra.mxu0 0.0
    %6947 = vmatprep.subr.mxu0 0.0
    %6948 = vmatpush1.msra.mxu0 0.0
    %6949 = vmatprep.subr.mxu0 0.0
    %6950 = vmatpush1.msra.mxu0 0.0
    %6951 = vmatprep.subr.mxu0 0.0
    %6952 = vmatpush1.msra.mxu0 0.0
    %6953 = vmatprep.subr.mxu0 0.0
    %6954 = vmatpush1.msra.mxu0 0.0
    %6955 = vmatprep.subr.mxu0 0.0
    %6956 = vmatpush1.msra.mxu0 0.0
    %6957 = vmatprep.subr.mxu0 0.0
    %6958 = vmatpush1.msra.mxu0 0.0
    %6959 = vmatprep.subr.mxu0 0.0
    %6960 = vmatpush1.msra.mxu0 0.0
    %6961 = vmatprep.subr.mxu0 0.0
    %6962 = vmatpush1.msra.mxu0 0.0
    %6963 = vmatprep.mubr.f32.mxu0 0.0
    %6964 = vmatmul.mubr.f32.gmra.mrb[0].mxu0 %v6897
    %v6965 = vpop.f32.mrb[0].mxu0
    %v6966 = vadd.f32 0.0, %v6965
    %v6967 = vpop.f32.mrb[0].mxu0
    %6968 = vdwg.mxu0
    %v6969 = vsub.f32 %v6966, %v6674
    %v6970 = vmul.f32 %v6157, %v6326
    %v6971 = vmul.f32 %v6162, %v6331
    %v6972 = vmul.f32 %v6167, %v6336
    %6973 = vmatprep.subr.mxu0 0.0
    %6974 = vmatpush1.msra.mxu0 %v6970
    %6975 = vmatprep.subr.mxu0 0.0
    %6976 = vmatpush1.msra.mxu0 %v6971
    %6977 = vmatprep.subr.mxu0 0.0
    %6978 = vmatpush1.msra.mxu0 %v6972
    %6979 = vmatprep.subr.mxu0 0.0
    %6980 = vmatpush1.msra.mxu0 0.0
    %6981 = vmatprep.subr.mxu0 0.0
    %6982 = vmatpush1.msra.mxu0 0.0
    %6983 = vmatprep.subr.mxu0 0.0
    %6984 = vmatpush1.msra.mxu0 0.0
    %6985 = vmatprep.subr.mxu0 0.0
    %6986 = vmatpush1.msra.mxu0 0.0
    %6987 = vmatprep.subr.mxu0 0.0
    %6988 = vmatpush1.msra.mxu0 0.0
    %6989 = vmatprep.subr.mxu0 0.0
    %6990 = vmatpush1.msra.mxu0 0.0
    %6991 = vmatprep.subr.mxu0 0.0
    %6992 = vmatpush1.msra.mxu0 0.0
    %6993 = vmatprep.subr.mxu0 0.0
    %6994 = vmatpush1.msra.mxu0 0.0
    %6995 = vmatprep.subr.mxu0 0.0
    %6996 = vmatpush1.msra.mxu0 0.0
    %6997 = vmatprep.subr.mxu0 0.0
    %6998 = vmatpush1.msra.mxu0 0.0
    %6999 = vmatprep.subr.mxu0 0.0
    %7000 = vmatpush1.msra.mxu0 0.0
    %7001 = vmatprep.subr.mxu0 0.0
    %7002 = vmatpush1.msra.mxu0 0.0
    %7003 = vmatprep.subr.mxu0 0.0
    %7004 = vmatpush1.msra.mxu0 0.0
    %7005 = vmatprep.subr.mxu0 0.0
    %7006 = vmatpush1.msra.mxu0 0.0
    %7007 = vmatprep.subr.mxu0 0.0
    %7008 = vmatpush1.msra.mxu0 0.0
    %7009 = vmatprep.subr.mxu0 0.0
    %7010 = vmatpush1.msra.mxu0 0.0
    %7011 = vmatprep.subr.mxu0 0.0
    %7012 = vmatpush1.msra.mxu0 0.0
    %7013 = vmatprep.subr.mxu0 0.0
    %7014 = vmatpush1.msra.mxu0 0.0
    %7015 = vmatprep.subr.mxu0 0.0
    %7016 = vmatpush1.msra.mxu0 0.0
    %7017 = vmatprep.subr.mxu0 0.0
    %7018 = vmatpush1.msra.mxu0 0.0
    %7019 = vmatprep.subr.mxu0 0.0
    %7020 = vmatpush1.msra.mxu0 0.0
    %7021 = vmatprep.subr.mxu0 0.0
    %7022 = vmatpush1.msra.mxu0 0.0
    %7023 = vmatprep.subr.mxu0 0.0
    %7024 = vmatpush1.msra.mxu0 0.0
    %7025 = vmatprep.subr.mxu0 0.0
    %7026 = vmatpush1.msra.mxu0 0.0
    %7027 = vmatprep.subr.mxu0 0.0
    %7028 = vmatpush1.msra.mxu0 0.0
    %7029 = vmatprep.subr.mxu0 0.0
    %7030 = vmatpush1.msra.mxu0 0.0
    %7031 = vmatprep.subr.mxu0 0.0
    %7032 = vmatpush1.msra.mxu0 0.0
    %7033 = vmatprep.subr.mxu0 0.0
    %7034 = vmatpush1.msra.mxu0 0.0
    %7035 = vmatprep.subr.mxu0 0.0
    %7036 = vmatpush1.msra.mxu0 0.0
    %7037 = vmatprep.mubr.f32.mxu0 0.0
    %7038 = vmatmul.mubr.f32.gmra.mrb[0].mxu0 %v6381
    %v7039 = vpop.f32.mrb[0].mxu0
    %v7040 = vadd.f32 0.0, %v7039
    %v7041 = vpop.f32.mrb[0].mxu0
    %7042 = vdwg.mxu0
    %v7044 = vsel %vm6341, %v7040, 0
    %7046 = vmatprep.subr.mxu0 0.0
    %7047 = vmatpush1.msra.mxu0 %v6458
    %7048 = vmatprep.subr.mxu0 0.0
    %7049 = vmatpush1.msra.mxu0 0.0
    %7050 = vmatprep.subr.mxu0 0.0
    %7051 = vmatpush1.msra.mxu0 0.0
    %7052 = vmatprep.subr.mxu0 0.0
    %7053 = vmatpush1.msra.mxu0 0.0
    %7054 = vmatprep.subr.mxu0 0.0
    %7055 = vmatpush1.msra.mxu0 0.0
    %7056 = vmatprep.subr.mxu0 0.0
    %7057 = vmatpush1.msra.mxu0 0.0
    %7058 = vmatprep.subr.mxu0 0.0
    %7059 = vmatpush1.msra.mxu0 0.0
    %7060 = vmatprep.subr.mxu0 0.0
    %7061 = vmatpush1.msra.mxu0 0.0
    %7062 = vmatprep.subr.mxu0 0.0
    %7063 = vmatpush1.msra.mxu0 0.0
    %7064 = vmatprep.subr.mxu0 0.0
    %7065 = vmatpush1.msra.mxu0 0.0
    %7066 = vmatprep.subr.mxu0 0.0
    %7067 = vmatpush1.msra.mxu0 0.0
    %7068 = vmatprep.subr.mxu0 0.0
    %7069 = vmatpush1.msra.mxu0 0.0
    %7070 = vmatprep.subr.mxu0 0.0
    %7071 = vmatpush1.msra.mxu0 0.0
    %7072 = vmatprep.subr.mxu0 0.0
    %7073 = vmatpush1.msra.mxu0 0.0
    %7074 = vmatprep.subr.mxu0 0.0
    %7075 = vmatpush1.msra.mxu0 0.0
    %7076 = vmatprep.subr.mxu0 0.0
    %7077 = vmatpush1.msra.mxu0 0.0
    %7078 = vmatprep.subr.mxu0 0.0
    %7079 = vmatpush1.msra.mxu0 0.0
    %7080 = vmatprep.subr.mxu0 0.0
    %7081 = vmatpush1.msra.mxu0 0.0
    %7082 = vmatprep.subr.mxu0 0.0
    %7083 = vmatpush1.msra.mxu0 0.0
    %7084 = vmatprep.subr.mxu0 0.0
    %7085 = vmatpush1.msra.mxu0 0.0
    %7086 = vmatprep.subr.mxu0 0.0
    %7087 = vmatpush1.msra.mxu0 0.0
    %7088 = vmatprep.subr.mxu0 0.0
    %7089 = vmatpush1.msra.mxu0 0.0
    %7090 = vmatprep.subr.mxu0 0.0
    %7091 = vmatpush1.msra.mxu0 0.0
    %7092 = vmatprep.subr.mxu0 0.0
    %7093 = vmatpush1.msra.mxu0 0.0
    %7094 = vmatprep.subr.mxu0 0.0
    %7095 = vmatpush1.msra.mxu0 0.0
    %7096 = vmatprep.subr.mxu0 0.0
    %7097 = vmatpush1.msra.mxu0 0.0
    %7098 = vmatprep.subr.mxu0 0.0
    %7099 = vmatpush1.msra.mxu0 0.0
    %7100 = vmatprep.subr.mxu0 0.0
    %7101 = vmatpush1.msra.mxu0 0.0
    %7102 = vmatprep.subr.mxu0 0.0
    %7103 = vmatpush1.msra.mxu0 0.0
    %7104 = vmatprep.subr.mxu0 0.0
    %7105 = vmatpush1.msra.mxu0 0.0
    %7106 = vmatprep.subr.mxu0 0.0
    %7107 = vmatpush1.msra.mxu0 0.0
    %7108 = vmatprep.subr.mxu0 0.0
    %7109 = vmatpush1.msra.mxu0 0.0
    %7110 = vmatprep.mubr.f32.mxu0 0.0
    %7111 = vmatmul.mubr.f32.gmra.mrb[0].mxu0 %v7044
    %v7112 = vpop.f32.mrb[0].mxu0
    %v7113 = vadd.f32 0.0, %v7112
    %v7114 = vpop.f32.mrb[0].mxu0
    %7115 = vdwg.mxu0
    %v7116 = vsub.f32 %v7113, %v6675
    %v7117 = vmul.f32 %v7116, 2.0
    %v7118 = vstv %s6378
    %v7119 = vadd.f32 %v7117, %v7118
    %v7120 = vadd.f32 %v6822, %v6969
    %v7121 = vadd.f32 %v7120, %v7118
    %v7122 = vrcp.pop %v7121
    %v7123 = vmul.f32 %v7119, %v7122
    %v7124 = vsel %vm5950, %v7123, 0.0
    %7125 = vadd.xlane.f32.xlu0 %v7124
    %v7126 = vpop.xlane.xlu0 %7125
    %v7127 = vrot.slane %v7126, 4
    %v7128 = vadd.f32 %v7126, %v7127
    %v7129 = vrot.slane %v7128, 2
    %v7130 = vadd.f32 %v7128, %v7129
    %v7131 = vrot.slane %v7130, 1
    %v7132 = vadd.f32 %v7130, %v7131
    %s7133 = vtos %v7132
    %s7134 = smul.f32 %s7133, 0.16666667
    %s7135 = sadd.f32 %s7134, 1e-15
    %v7136 = vmul.f32 %v6675, 2.0
    %v7137 = vstv %s6376
    %v7138 = vadd.f32 %v7136, %v7137
    %v7139 = vmul.f32 %v7138, %v7119
    %v7140 = vadd.f32 %v6673, %v6674
    %v7141 = vadd.f32 %v7140, %v7137
    %v7142 = vmul.f32 %v7141, %v7121
    %v7143 = vadd.f32 %v7142, 1e-15
    %v7144 = vrcp.pop %v7143
    %v7145 = vmul.f32 %v7139, %v7144
    %v7146 = vsel %vm5950, %v7145, 0.0
    %7147 = vadd.xlane.f32.xlu0 %v7146
    %v7148 = vpop.xlane.xlu0 %7147
    %v7149 = vrot.slane %v7148, 4
    %v7150 = vadd.f32 %v7148, %v7149
    %v7151 = vrot.slane %v7150, 2
    %v7152 = vadd.f32 %v7150, %v7151
    %v7153 = vrot.slane %v7152, 1
    %v7154 = vadd.f32 %v7152, %v7153
    %s7155 = vtos %v7154
    %s7156 = smul.f32 %s7155, 0.16666667
    %s7157 = scalar_lea.smem [#allocation28], 384
    %7158 = sst [smem:[%s7157]] %s7156
    %s7159 = scalar_lea.smem [#allocation28], 385
    %7160 = sst [smem:[%s7159]] %s7135
    %v7161 = vld [vmem:[%s18] sm:$0xff]
    %v7162 = vld [vmem:[%s18 + $0x8] sm:$0xf]
    %v7163 = vld [vmem:[%s19] sm:$0xf]
    %v7165 = vsel %vm6379, %v7161, 0
    %v7168 = vsel %vm6379, %v7162, 0
    %7170 = vmatprep.subr.mxu0 0.0
    %7171 = vmatpush1.msra.mxu0 %v6157
    %7172 = vmatprep.subr.mxu0 0.0
    %7173 = vmatpush1.msra.mxu0 %v6162
    %7174 = vmatprep.subr.mxu0 0.0
    %7175 = vmatpush1.msra.mxu0 %v6167
    %7176 = vmatprep.subr.mxu0 0.0
    %7177 = vmatpush1.msra.mxu0 0.0
    %7178 = vmatprep.subr.mxu0 0.0
    %7179 = vmatpush1.msra.mxu0 0.0
    %7180 = vmatprep.subr.mxu0 0.0
    %7181 = vmatpush1.msra.mxu0 0.0
    %7182 = vmatprep.subr.mxu0 0.0
    %7183 = vmatpush1.msra.mxu0 0.0
    %7184 = vmatprep.subr.mxu0 0.0
    %7185 = vmatpush1.msra.mxu0 0.0
    %7186 = vmatprep.subr.mxu0 0.0
    %7187 = vmatpush1.msra.mxu0 0.0
    %7188 = vmatprep.subr.mxu0 0.0
    %7189 = vmatpush1.msra.mxu0 0.0
    %7190 = vmatprep.subr.mxu0 0.0
    %7191 = vmatpush1.msra.mxu0 0.0
    %7192 = vmatprep.subr.mxu0 0.0
    %7193 = vmatpush1.msra.mxu0 0.0
    %7194 = vmatprep.subr.mxu0 0.0
    %7195 = vmatpush1.msra.mxu0 0.0
    %7196 = vmatprep.subr.mxu0 0.0
    %7197 = vmatpush1.msra.mxu0 0.0
    %7198 = vmatprep.subr.mxu0 0.0
    %7199 = vmatpush1.msra.mxu0 0.0
    %7200 = vmatprep.subr.mxu0 0.0
    %7201 = vmatpush1.msra.mxu0 0.0
    %7202 = vmatprep.subr.mxu0 0.0
    %7203 = vmatpush1.msra.mxu0 0.0
    %7204 = vmatprep.subr.mxu0 0.0
    %7205 = vmatpush1.msra.mxu0 0.0
    %7206 = vmatprep.subr.mxu0 0.0
    %7207 = vmatpush1.msra.mxu0 0.0
    %7208 = vmatprep.subr.mxu0 0.0
    %7209 = vmatpush1.msra.mxu0 0.0
    %7210 = vmatprep.subr.mxu0 0.0
    %7211 = vmatpush1.msra.mxu0 0.0
    %7212 = vmatprep.subr.mxu0 0.0
    %7213 = vmatpush1.msra.mxu0 0.0
    %7214 = vmatprep.subr.mxu0 0.0
    %7215 = vmatpush1.msra.mxu0 0.0
    %7216 = vmatprep.subr.mxu0 0.0
    %7217 = vmatpush1.msra.mxu0 0.0
    %7218 = vmatprep.subr.mxu0 0.0
    %7219 = vmatpush1.msra.mxu0 0.0
    %7220 = vmatprep.subr.mxu0 0.0
    %7221 = vmatpush1.msra.mxu0 0.0
    %7222 = vmatprep.subr.mxu0 0.0
    %7223 = vmatpush1.msra.mxu0 0.0
    %7224 = vmatprep.subr.mxu0 0.0
    %7225 = vmatpush1.msra.mxu0 0.0
    %7226 = vmatprep.subr.mxu0 0.0
    %7227 = vmatpush1.msra.mxu0 0.0
    %7228 = vmatprep.subr.mxu0 0.0
    %7229 = vmatpush1.msra.mxu0 0.0
    %7230 = vmatprep.subr.mxu0 0.0
    %7231 = vmatpush1.msra.mxu0 0.0
    %7232 = vmatprep.subr.mxu0 0.0
    %7233 = vmatpush1.msra.mxu0 0.0
    %7234 = vmatprep.mubr.f32.mxu0 0.0
    %7235 = vmatmul.mubr.f32.gmra.mrb[0].mxu0 %v7165
    %v7236 = vpop.f32.mrb[0].mxu0
    %v7237 = vadd.f32 0.0, %v7236
    %v7238 = vpop.f32.mrb[0].mxu0
    %7239 = vmatprep.mubr.f32.mxu0 0.0
    %7240 = vmatmul.mubr.f32.gmra.mrb[0].mxu0 %v7168
    %v7241 = vpop.f32.mrb[0].mxu0
    %v7242 = vadd.f32 0.0, %v7241
    %v7243 = vpop.f32.mrb[0].mxu0
    %7244 = vdwg.mxu0
    %v7246 = vsel %vm6341, %v7237, 0
    %v7249 = vsel %vm6341, %v7242, 0
    %v7252 = vsel %vm6456, %v7163, 0
    %7254 = vmatprep.subr.mxu0 0.0
    %7255 = vmatpush1.msra.mxu0 %v7252
    %7256 = vmatprep.subr.mxu0 0.0
    %7257 = vmatpush1.msra.mxu0 0.0
    %7258 = vmatprep.subr.mxu0 0.0
    %7259 = vmatpush1.msra.mxu0 0.0
    %7260 = vmatprep.subr.mxu0 0.0
    %7261 = vmatpush1.msra.mxu0 0.0
    %7262 = vmatprep.subr.mxu0 0.0
    %7263 = vmatpush1.msra.mxu0 0.0
    %7264 = vmatprep.subr.mxu0 0.0
    %7265 = vmatpush1.msra.mxu0 0.0
    %7266 = vmatprep.subr.mxu0 0.0
    %7267 = vmatpush1.msra.mxu0 0.0
    %7268 = vmatprep.subr.mxu0 0.0
    %7269 = vmatpush1.msra.mxu0 0.0
    %7270 = vmatprep.subr.mxu0 0.0
    %7271 = vmatpush1.msra.mxu0 0.0
    %7272 = vmatprep.subr.mxu0 0.0
    %7273 = vmatpush1.msra.mxu0 0.0
    %7274 = vmatprep.subr.mxu0 0.0
    %7275 = vmatpush1.msra.mxu0 0.0
    %7276 = vmatprep.subr.mxu0 0.0
    %7277 = vmatpush1.msra.mxu0 0.0
    %7278 = vmatprep.subr.mxu0 0.0
    %7279 = vmatpush1.msra.mxu0 0.0
    %7280 = vmatprep.subr.mxu0 0.0
    %7281 = vmatpush1.msra.mxu0 0.0
    %7282 = vmatprep.subr.mxu0 0.0
    %7283 = vmatpush1.msra.mxu0 0.0
    %7284 = vmatprep.subr.mxu0 0.0
    %7285 = vmatpush1.msra.mxu0 0.0
    %7286 = vmatprep.subr.mxu0 0.0
    %7287 = vmatpush1.msra.mxu0 0.0
    %7288 = vmatprep.subr.mxu0 0.0
    %7289 = vmatpush1.msra.mxu0 0.0
    %7290 = vmatprep.subr.mxu0 0.0
    %7291 = vmatpush1.msra.mxu0 0.0
    %7292 = vmatprep.subr.mxu0 0.0
    %7293 = vmatpush1.msra.mxu0 0.0
    %7294 = vmatprep.subr.mxu0 0.0
    %7295 = vmatpush1.msra.mxu0 0.0
    %7296 = vmatprep.subr.mxu0 0.0
    %7297 = vmatpush1.msra.mxu0 0.0
    %7298 = vmatprep.subr.mxu0 0.0
    %7299 = vmatpush1.msra.mxu0 0.0
    %7300 = vmatprep.subr.mxu0 0.0
    %7301 = vmatpush1.msra.mxu0 0.0
    %7302 = vmatprep.subr.mxu0 0.0
    %7303 = vmatpush1.msra.mxu0 0.0
    %7304 = vmatprep.subr.mxu0 0.0
    %7305 = vmatpush1.msra.mxu0 0.0
    %7306 = vmatprep.subr.mxu0 0.0
    %7307 = vmatpush1.msra.mxu0 0.0
    %7308 = vmatprep.subr.mxu0 0.0
    %7309 = vmatpush1.msra.mxu0 0.0
    %7310 = vmatprep.subr.mxu0 0.0
    %7311 = vmatpush1.msra.mxu0 0.0
    %7312 = vmatprep.subr.mxu0 0.0
    %7313 = vmatpush1.msra.mxu0 0.0
    %7314 = vmatprep.subr.mxu0 0.0
    %7315 = vmatpush1.msra.mxu0 0.0
    %7316 = vmatprep.subr.mxu0 0.0
    %7317 = vmatpush1.msra.mxu0 0.0
    %7318 = vmatprep.mubr.f32.mxu0 0.0
    %7319 = vmatmul.mubr.f32.gmra.mrb[0].mxu0 %v7246
    %v7320 = vpop.f32.mrb[0].mxu0
    %v7321 = vadd.f32 0.0, %v7320
    %v7322 = vpop.f32.mrb[0].mxu0
    %7323 = vmatprep.mubr.f32.mxu0 0.0
    %7324 = vmatmul.mubr.f32.gmra.mrb[0].mxu0 %v7249
    %v7325 = vpop.f32.mrb[0].mxu0
    %v7326 = vadd.f32 0.0, %v7325
    %v7327 = vpop.f32.mrb[0].mxu0
    %7328 = vdwg.mxu0
    %7329 = vmatprep.subr.mxu0 0.0
    %7330 = vmatpush1.msra.mxu0 %v6326
    %7331 = vmatprep.subr.mxu0 0.0
    %7332 = vmatpush1.msra.mxu0 %v6331
    %7333 = vmatprep.subr.mxu0 0.0
    %7334 = vmatpush1.msra.mxu0 %v6336
    %7335 = vmatprep.subr.mxu0 0.0
    %7336 = vmatpush1.msra.mxu0 0.0
    %7337 = vmatprep.subr.mxu0 0.0
    %7338 = vmatpush1.msra.mxu0 0.0
    %7339 = vmatprep.subr.mxu0 0.0
    %7340 = vmatpush1.msra.mxu0 0.0
    %7341 = vmatprep.subr.mxu0 0.0
    %7342 = vmatpush1.msra.mxu0 0.0
    %7343 = vmatprep.subr.mxu0 0.0
    %7344 = vmatpush1.msra.mxu0 0.0
    %7345 = vmatprep.subr.mxu0 0.0
    %7346 = vmatpush1.msra.mxu0 0.0
    %7347 = vmatprep.subr.mxu0 0.0
    %7348 = vmatpush1.msra.mxu0 0.0
    %7349 = vmatprep.subr.mxu0 0.0
    %7350 = vmatpush1.msra.mxu0 0.0
    %7351 = vmatprep.subr.mxu0 0.0
    %7352 = vmatpush1.msra.mxu0 0.0
    %7353 = vmatprep.subr.mxu0 0.0
    %7354 = vmatpush1.msra.mxu0 0.0
    %7355 = vmatprep.subr.mxu0 0.0
    %7356 = vmatpush1.msra.mxu0 0.0
    %7357 = vmatprep.subr.mxu0 0.0
    %7358 = vmatpush1.msra.mxu0 0.0
    %7359 = vmatprep.subr.mxu0 0.0
    %7360 = vmatpush1.msra.mxu0 0.0
    %7361 = vmatprep.subr.mxu0 0.0
    %7362 = vmatpush1.msra.mxu0 0.0
    %7363 = vmatprep.subr.mxu0 0.0
    %7364 = vmatpush1.msra.mxu0 0.0
    %7365 = vmatprep.subr.mxu0 0.0
    %7366 = vmatpush1.msra.mxu0 0.0
    %7367 = vmatprep.subr.mxu0 0.0
    %7368 = vmatpush1.msra.mxu0 0.0
    %7369 = vmatprep.subr.mxu0 0.0
    %7370 = vmatpush1.msra.mxu0 0.0
    %7371 = vmatprep.subr.mxu0 0.0
    %7372 = vmatpush1.msra.mxu0 0.0
    %7373 = vmatprep.subr.mxu0 0.0
    %7374 = vmatpush1.msra.mxu0 0.0
    %7375 = vmatprep.subr.mxu0 0.0
    %7376 = vmatpush1.msra.mxu0 0.0
    %7377 = vmatprep.subr.mxu0 0.0
    %7378 = vmatpush1.msra.mxu0 0.0
    %7379 = vmatprep.subr.mxu0 0.0
    %7380 = vmatpush1.msra.mxu0 0.0
    %7381 = vmatprep.subr.mxu0 0.0
    %7382 = vmatpush1.msra.mxu0 0.0
    %7383 = vmatprep.subr.mxu0 0.0
    %7384 = vmatpush1.msra.mxu0 0.0
    %7385 = vmatprep.subr.mxu0 0.0
    %7386 = vmatpush1.msra.mxu0 0.0
    %7387 = vmatprep.subr.mxu0 0.0
    %7388 = vmatpush1.msra.mxu0 0.0
    %7389 = vmatprep.subr.mxu0 0.0
    %7390 = vmatpush1.msra.mxu0 0.0
    %7391 = vmatprep.subr.mxu0 0.0
    %7392 = vmatpush1.msra.mxu0 0.0
    %7393 = vmatprep.mubr.f32.mxu0 0.0
    %7394 = vmatmul.mubr.f32.gmra.mrb[0].mxu0 %v7165
    %v7395 = vpop.f32.mrb[0].mxu0
    %v7396 = vadd.f32 0.0, %v7395
    %v7397 = vpop.f32.mrb[0].mxu0
    %7398 = vmatprep.mubr.f32.mxu0 0.0
    %7399 = vmatmul.mubr.f32.gmra.mrb[0].mxu0 %v7168
    %v7400 = vpop.f32.mrb[0].mxu0
    %v7401 = vadd.f32 0.0, %v7400
    %v7402 = vpop.f32.mrb[0].mxu0
    %7403 = vdwg.mxu0
    %v7405 = vsel %vm6341, %v7396, 0
    %v7408 = vsel %vm6341, %v7401, 0
    %7410 = vmatprep.subr.mxu0 0.0
    %7411 = vmatpush1.msra.mxu0 %v7252
    %7412 = vmatprep.subr.mxu0 0.0
    %7413 = vmatpush1.msra.mxu0 0.0
    %7414 = vmatprep.subr.mxu0 0.0
    %7415 = vmatpush1.msra.mxu0 0.0
    %7416 = vmatprep.subr.mxu0 0.0
    %7417 = vmatpush1.msra.mxu0 0.0
    %7418 = vmatprep.subr.mxu0 0.0
    %7419 = vmatpush1.msra.mxu0 0.0
    %7420 = vmatprep.subr.mxu0 0.0
    %7421 = vmatpush1.msra.mxu0 0.0
    %7422 = vmatprep.subr.mxu0 0.0
    %7423 = vmatpush1.msra.mxu0 0.0
    %7424 = vmatprep.subr.mxu0 0.0
    %7425 = vmatpush1.msra.mxu0 0.0
    %7426 = vmatprep.subr.mxu0 0.0
    %7427 = vmatpush1.msra.mxu0 0.0
    %7428 = vmatprep.subr.mxu0 0.0
    %7429 = vmatpush1.msra.mxu0 0.0
    %7430 = vmatprep.subr.mxu0 0.0
    %7431 = vmatpush1.msra.mxu0 0.0
    %7432 = vmatprep.subr.mxu0 0.0
    %7433 = vmatpush1.msra.mxu0 0.0
    %7434 = vmatprep.subr.mxu0 0.0
    %7435 = vmatpush1.msra.mxu0 0.0
    %7436 = vmatprep.subr.mxu0 0.0
    %7437 = vmatpush1.msra.mxu0 0.0
    %7438 = vmatprep.subr.mxu0 0.0
    %7439 = vmatpush1.msra.mxu0 0.0
    %7440 = vmatprep.subr.mxu0 0.0
    %7441 = vmatpush1.msra.mxu0 0.0
    %7442 = vmatprep.subr.mxu0 0.0
    %7443 = vmatpush1.msra.mxu0 0.0
    %7444 = vmatprep.subr.mxu0 0.0
    %7445 = vmatpush1.msra.mxu0 0.0
    %7446 = vmatprep.subr.mxu0 0.0
    %7447 = vmatpush1.msra.mxu0 0.0
    %7448 = vmatprep.subr.mxu0 0.0
    %7449 = vmatpush1.msra.mxu0 0.0
    %7450 = vmatprep.subr.mxu0 0.0
    %7451 = vmatpush1.msra.mxu0 0.0
    %7452 = vmatprep.subr.mxu0 0.0
    %7453 = vmatpush1.msra.mxu0 0.0
    %7454 = vmatprep.subr.mxu0 0.0
    %7455 = vmatpush1.msra.mxu0 0.0
    %7456 = vmatprep.subr.mxu0 0.0
    %7457 = vmatpush1.msra.mxu0 0.0
    %7458 = vmatprep.subr.mxu0 0.0
    %7459 = vmatpush1.msra.mxu0 0.0
    %7460 = vmatprep.subr.mxu0 0.0
    %7461 = vmatpush1.msra.mxu0 0.0
    %7462 = vmatprep.subr.mxu0 0.0
    %7463 = vmatpush1.msra.mxu0 0.0
    %7464 = vmatprep.subr.mxu0 0.0
    %7465 = vmatpush1.msra.mxu0 0.0
    %7466 = vmatprep.subr.mxu0 0.0
    %7467 = vmatpush1.msra.mxu0 0.0
    %7468 = vmatprep.subr.mxu0 0.0
    %7469 = vmatpush1.msra.mxu0 0.0
    %7470 = vmatprep.subr.mxu0 0.0
    %7471 = vmatpush1.msra.mxu0 0.0
    %7472 = vmatprep.subr.mxu0 0.0
    %7473 = vmatpush1.msra.mxu0 0.0
    %7474 = vmatprep.mubr.f32.mxu0 0.0
    %7475 = vmatmul.mubr.f32.gmra.mrb[0].mxu0 %v7405
    %v7476 = vpop.f32.mrb[0].mxu0
    %v7477 = vadd.f32 0.0, %v7476
    %v7478 = vpop.f32.mrb[0].mxu0
    %7479 = vmatprep.mubr.f32.mxu0 0.0
    %7480 = vmatmul.mubr.f32.gmra.mrb[0].mxu0 %v7408
    %v7481 = vpop.f32.mrb[0].mxu0
    %v7482 = vadd.f32 0.0, %v7481
    %v7483 = vpop.f32.mrb[0].mxu0
    %7484 = vdwg.mxu0
    %v7485 = vld [vmem:[#allocation19] sm:$0x3f]
    %v7486 = vld [vmem:[#allocation20] sm:$0x3]
    %vm7487 = vcmask 15360
    %v7488 = vsel %vm7487, %v7321, -inf
    %vm7489 = vcmask 11264
    %v7490 = vsel %vm7489, %v7326, -inf
    %v7491 = vmax.f32 %v7488, %v7490
    %7492 = vmax.xlane.f32.xlu0 %v7491
    %v7493 = vpop.xlane.xlu0 %7492
    %v7494 = vrot.slane %v7493, 4
    %v7495 = vmax.f32 %v7493, %v7494
    %v7496 = vrot.slane %v7495, 2
    %v7497 = vmax.f32 %v7495, %v7496
    %v7498 = vrot.slane %v7497, 1
    %v7499 = vmax.f32 %v7497, %v7498
    %s7500 = vtos %v7499
    %v7501 = vsel %vm7487, %v7321, inf
    %v7502 = vsel %vm7489, %v7326, inf
    %v7503 = vmin.f32 %v7501, %v7502
    %7504 = vmin.xlane.f32.xlu0 %v7503
    %v7505 = vpop.xlane.xlu0 %7504
    %v7506 = vrot.slane %v7505, 4
    %v7507 = vmin.f32 %v7505, %v7506
    %v7508 = vrot.slane %v7507, 2
    %v7509 = vmin.f32 %v7507, %v7508
    %v7510 = vrot.slane %v7509, 1
    %v7511 = vmin.f32 %v7509, %v7510
    %s7512 = vtos %v7511
    %p7513 = scmp.gt.f32.partialorder %s7500, 128.0
    %s7514 = scalar_select %p7513, 255.0, 1.0
    %p7515 = scmp.lt.f32.partialorder %s7512, -0.5
    %s7516 = scalar_select %p7515, -1.0, 0.0
    %s7517 = ssub.f32 %s7514, %s7516
    %s7518 = smul.f32 %s7517, 0.01
    %s7519 = smul.f32 %s7518, %s7518
    %s7520 = smul.f32 %s7517, 0.03
    %s7521 = smul.f32 %s7520, %s7520
    %vm7522 = vcmask 97280
    %v7524 = vsel %vm7522, %v7485, 0
    %v7527 = vsel %vm6456, %v7326, 0
    %7529 = vmatprep.subr.mxu0 0.0
    %7530 = vmatpush1.msra.mxu0 %v7321
    %7531 = vmatprep.subr.mxu0 0.0
    %7532 = vmatpush1.msra.mxu0 %v7527
    %7533 = vmatprep.subr.mxu0 0.0
    %7534 = vmatpush1.msra.mxu0 0.0
    %7535 = vmatprep.subr.mxu0 0.0
    %7536 = vmatpush1.msra.mxu0 0.0
    %7537 = vmatprep.subr.mxu0 0.0
    %7538 = vmatpush1.msra.mxu0 0.0
    %7539 = vmatprep.subr.mxu0 0.0
    %7540 = vmatpush1.msra.mxu0 0.0
    %7541 = vmatprep.subr.mxu0 0.0
    %7542 = vmatpush1.msra.mxu0 0.0
    %7543 = vmatprep.subr.mxu0 0.0
    %7544 = vmatpush1.msra.mxu0 0.0
    %7545 = vmatprep.subr.mxu0 0.0
    %7546 = vmatpush1.msra.mxu0 0.0
    %7547 = vmatprep.subr.mxu0 0.0
    %7548 = vmatpush1.msra.mxu0 0.0
    %7549 = vmatprep.subr.mxu0 0.0
    %7550 = vmatpush1.msra.mxu0 0.0
    %7551 = vmatprep.subr.mxu0 0.0
    %7552 = vmatpush1.msra.mxu0 0.0
    %7553 = vmatprep.subr.mxu0 0.0
    %7554 = vmatpush1.msra.mxu0 0.0
    %7555 = vmatprep.subr.mxu0 0.0
    %7556 = vmatpush1.msra.mxu0 0.0
    %7557 = vmatprep.subr.mxu0 0.0
    %7558 = vmatpush1.msra.mxu0 0.0
    %7559 = vmatprep.subr.mxu0 0.0
    %7560 = vmatpush1.msra.mxu0 0.0
    %7561 = vmatprep.subr.mxu0 0.0
    %7562 = vmatpush1.msra.mxu0 0.0
    %7563 = vmatprep.subr.mxu0 0.0
    %7564 = vmatpush1.msra.mxu0 0.0
    %7565 = vmatprep.subr.mxu0 0.0
    %7566 = vmatpush1.msra.mxu0 0.0
    %7567 = vmatprep.subr.mxu0 0.0
    %7568 = vmatpush1.msra.mxu0 0.0
    %7569 = vmatprep.subr.mxu0 0.0
    %7570 = vmatpush1.msra.mxu0 0.0
    %7571 = vmatprep.subr.mxu0 0.0
    %7572 = vmatpush1.msra.mxu0 0.0
    %7573 = vmatprep.subr.mxu0 0.0
    %7574 = vmatpush1.msra.mxu0 0.0
    %7575 = vmatprep.subr.mxu0 0.0
    %7576 = vmatpush1.msra.mxu0 0.0
    %7577 = vmatprep.subr.mxu0 0.0
    %7578 = vmatpush1.msra.mxu0 0.0
    %7579 = vmatprep.subr.mxu0 0.0
    %7580 = vmatpush1.msra.mxu0 0.0
    %7581 = vmatprep.subr.mxu0 0.0
    %7582 = vmatpush1.msra.mxu0 0.0
    %7583 = vmatprep.subr.mxu0 0.0
    %7584 = vmatpush1.msra.mxu0 0.0
    %7585 = vmatprep.subr.mxu0 0.0
    %7586 = vmatpush1.msra.mxu0 0.0
    %7587 = vmatprep.subr.mxu0 0.0
    %7588 = vmatpush1.msra.mxu0 0.0
    %7589 = vmatprep.subr.mxu0 0.0
    %7590 = vmatpush1.msra.mxu0 0.0
    %7591 = vmatprep.subr.mxu0 0.0
    %7592 = vmatpush1.msra.mxu0 0.0
    %7593 = vmatprep.mubr.f32.mxu0 0.0
    %7594 = vmatmul.mubr.f32.gmra.mrb[0].mxu0 %v7524
    %v7595 = vpop.f32.mrb[0].mxu0
    %v7596 = vadd.f32 0.0, %v7595
    %v7597 = vpop.f32.mrb[0].mxu0
    %7598 = vdwg.mxu0
    %v7600 = vsel %vm7487, %v7596, 0
    %vm7602 = vcmask 1041408
    %v7604 = vsel %vm7602, %v7486, 0
    %7606 = vmatprep.subr.mxu0 0.0
    %7607 = vmatpush1.msra.mxu0 %v7604
    %7608 = vmatprep.subr.mxu0 0.0
    %7609 = vmatpush1.msra.mxu0 0.0
    %7610 = vmatprep.subr.mxu0 0.0
    %7611 = vmatpush1.msra.mxu0 0.0
    %7612 = vmatprep.subr.mxu0 0.0
    %7613 = vmatpush1.msra.mxu0 0.0
    %7614 = vmatprep.subr.mxu0 0.0
    %7615 = vmatpush1.msra.mxu0 0.0
    %7616 = vmatprep.subr.mxu0 0.0
    %7617 = vmatpush1.msra.mxu0 0.0
    %7618 = vmatprep.subr.mxu0 0.0
    %7619 = vmatpush1.msra.mxu0 0.0
    %7620 = vmatprep.subr.mxu0 0.0
    %7621 = vmatpush1.msra.mxu0 0.0
    %7622 = vmatprep.subr.mxu0 0.0
    %7623 = vmatpush1.msra.mxu0 0.0
    %7624 = vmatprep.subr.mxu0 0.0
    %7625 = vmatpush1.msra.mxu0 0.0
    %7626 = vmatprep.subr.mxu0 0.0
    %7627 = vmatpush1.msra.mxu0 0.0
    %7628 = vmatprep.subr.mxu0 0.0
    %7629 = vmatpush1.msra.mxu0 0.0
    %7630 = vmatprep.subr.mxu0 0.0
    %7631 = vmatpush1.msra.mxu0 0.0
    %7632 = vmatprep.subr.mxu0 0.0
    %7633 = vmatpush1.msra.mxu0 0.0
    %7634 = vmatprep.subr.mxu0 0.0
    %7635 = vmatpush1.msra.mxu0 0.0
    %7636 = vmatprep.subr.mxu0 0.0
    %7637 = vmatpush1.msra.mxu0 0.0
    %7638 = vmatprep.subr.mxu0 0.0
    %7639 = vmatpush1.msra.mxu0 0.0
    %7640 = vmatprep.subr.mxu0 0.0
    %7641 = vmatpush1.msra.mxu0 0.0
    %7642 = vmatprep.subr.mxu0 0.0
    %7643 = vmatpush1.msra.mxu0 0.0
    %7644 = vmatprep.subr.mxu0 0.0
    %7645 = vmatpush1.msra.mxu0 0.0
    %7646 = vmatprep.subr.mxu0 0.0
    %7647 = vmatpush1.msra.mxu0 0.0
    %7648 = vmatprep.subr.mxu0 0.0
    %7649 = vmatpush1.msra.mxu0 0.0
    %7650 = vmatprep.subr.mxu0 0.0
    %7651 = vmatpush1.msra.mxu0 0.0
    %7652 = vmatprep.subr.mxu0 0.0
    %7653 = vmatpush1.msra.mxu0 0.0
    %7654 = vmatprep.subr.mxu0 0.0
    %7655 = vmatpush1.msra.mxu0 0.0
    %7656 = vmatprep.subr.mxu0 0.0
    %7657 = vmatpush1.msra.mxu0 0.0
    %7658 = vmatprep.subr.mxu0 0.0
    %7659 = vmatpush1.msra.mxu0 0.0
    %7660 = vmatprep.subr.mxu0 0.0
    %7661 = vmatpush1.msra.mxu0 0.0
    %7662 = vmatprep.subr.mxu0 0.0
    %7663 = vmatpush1.msra.mxu0 0.0
    %7664 = vmatprep.subr.mxu0 0.0
    %7665 = vmatpush1.msra.mxu0 0.0
    %7666 = vmatprep.subr.mxu0 0.0
    %7667 = vmatpush1.msra.mxu0 0.0
    %7668 = vmatprep.subr.mxu0 0.0
    %7669 = vmatpush1.msra.mxu0 0.0
    %7670 = vmatprep.mubr.f32.mxu0 0.0
    %7671 = vmatmul.mubr.f32.gmra.mrb[0].mxu0 %v7600
    %v7672 = vpop.f32.mrb[0].mxu0
    %v7673 = vadd.f32 0.0, %v7672
    %v7674 = vpop.f32.mrb[0].mxu0
    %7675 = vdwg.mxu0
    %v7677 = vsel %vm6456, %v7482, 0
    %7679 = vmatprep.subr.mxu0 0.0
    %7680 = vmatpush1.msra.mxu0 %v7477
    %7681 = vmatprep.subr.mxu0 0.0
    %7682 = vmatpush1.msra.mxu0 %v7677
    %7683 = vmatprep.subr.mxu0 0.0
    %7684 = vmatpush1.msra.mxu0 0.0
    %7685 = vmatprep.subr.mxu0 0.0
    %7686 = vmatpush1.msra.mxu0 0.0
    %7687 = vmatprep.subr.mxu0 0.0
    %7688 = vmatpush1.msra.mxu0 0.0
    %7689 = vmatprep.subr.mxu0 0.0
    %7690 = vmatpush1.msra.mxu0 0.0
    %7691 = vmatprep.subr.mxu0 0.0
    %7692 = vmatpush1.msra.mxu0 0.0
    %7693 = vmatprep.subr.mxu0 0.0
    %7694 = vmatpush1.msra.mxu0 0.0
    %7695 = vmatprep.subr.mxu0 0.0
    %7696 = vmatpush1.msra.mxu0 0.0
    %7697 = vmatprep.subr.mxu0 0.0
    %7698 = vmatpush1.msra.mxu0 0.0
    %7699 = vmatprep.subr.mxu0 0.0
    %7700 = vmatpush1.msra.mxu0 0.0
    %7701 = vmatprep.subr.mxu0 0.0
    %7702 = vmatpush1.msra.mxu0 0.0
    %7703 = vmatprep.subr.mxu0 0.0
    %7704 = vmatpush1.msra.mxu0 0.0
    %7705 = vmatprep.subr.mxu0 0.0
    %7706 = vmatpush1.msra.mxu0 0.0
    %7707 = vmatprep.subr.mxu0 0.0
    %7708 = vmatpush1.msra.mxu0 0.0
    %7709 = vmatprep.subr.mxu0 0.0
    %7710 = vmatpush1.msra.mxu0 0.0
    %7711 = vmatprep.subr.mxu0 0.0
    %7712 = vmatpush1.msra.mxu0 0.0
    %7713 = vmatprep.subr.mxu0 0.0
    %7714 = vmatpush1.msra.mxu0 0.0
    %7715 = vmatprep.subr.mxu0 0.0
    %7716 = vmatpush1.msra.mxu0 0.0
    %7717 = vmatprep.subr.mxu0 0.0
    %7718 = vmatpush1.msra.mxu0 0.0
    %7719 = vmatprep.subr.mxu0 0.0
    %7720 = vmatpush1.msra.mxu0 0.0
    %7721 = vmatprep.subr.mxu0 0.0
    %7722 = vmatpush1.msra.mxu0 0.0
    %7723 = vmatprep.subr.mxu0 0.0
    %7724 = vmatpush1.msra.mxu0 0.0
    %7725 = vmatprep.subr.mxu0 0.0
    %7726 = vmatpush1.msra.mxu0 0.0
    %7727 = vmatprep.subr.mxu0 0.0
    %7728 = vmatpush1.msra.mxu0 0.0
    %7729 = vmatprep.subr.mxu0 0.0
    %7730 = vmatpush1.msra.mxu0 0.0
    %7731 = vmatprep.subr.mxu0 0.0
    %7732 = vmatpush1.msra.mxu0 0.0
    %7733 = vmatprep.subr.mxu0 0.0
    %7734 = vmatpush1.msra.mxu0 0.0
    %7735 = vmatprep.subr.mxu0 0.0
    %7736 = vmatpush1.msra.mxu0 0.0
    %7737 = vmatprep.subr.mxu0 0.0
    %7738 = vmatpush1.msra.mxu0 0.0
    %7739 = vmatprep.subr.mxu0 0.0
    %7740 = vmatpush1.msra.mxu0 0.0
    %7741 = vmatprep.subr.mxu0 0.0
    %7742 = vmatpush1.msra.mxu0 0.0
    %7743 = vmatprep.mubr.f32.mxu0 0.0
    %7744 = vmatmul.mubr.f32.gmra.mrb[0].mxu0 %v7524
    %v7745 = vpop.f32.mrb[0].mxu0
    %v7746 = vadd.f32 0.0, %v7745
    %v7747 = vpop.f32.mrb[0].mxu0
    %7748 = vdwg.mxu0
    %v7750 = vsel %vm7487, %v7746, 0
    %7752 = vmatprep.subr.mxu0 0.0
    %7753 = vmatpush1.msra.mxu0 %v7604
    %7754 = vmatprep.subr.mxu0 0.0
    %7755 = vmatpush1.msra.mxu0 0.0
    %7756 = vmatprep.subr.mxu0 0.0
    %7757 = vmatpush1.msra.mxu0 0.0
    %7758 = vmatprep.subr.mxu0 0.0
    %7759 = vmatpush1.msra.mxu0 0.0
    %7760 = vmatprep.subr.mxu0 0.0
    %7761 = vmatpush1.msra.mxu0 0.0
    %7762 = vmatprep.subr.mxu0 0.0
    %7763 = vmatpush1.msra.mxu0 0.0
    %7764 = vmatprep.subr.mxu0 0.0
    %7765 = vmatpush1.msra.mxu0 0.0
    %7766 = vmatprep.subr.mxu0 0.0
    %7767 = vmatpush1.msra.mxu0 0.0
    %7768 = vmatprep.subr.mxu0 0.0
    %7769 = vmatpush1.msra.mxu0 0.0
    %7770 = vmatprep.subr.mxu0 0.0
    %7771 = vmatpush1.msra.mxu0 0.0
    %7772 = vmatprep.subr.mxu0 0.0
    %7773 = vmatpush1.msra.mxu0 0.0
    %7774 = vmatprep.subr.mxu0 0.0
    %7775 = vmatpush1.msra.mxu0 0.0
    %7776 = vmatprep.subr.mxu0 0.0
    %7777 = vmatpush1.msra.mxu0 0.0
    %7778 = vmatprep.subr.mxu0 0.0
    %7779 = vmatpush1.msra.mxu0 0.0
    %7780 = vmatprep.subr.mxu0 0.0
    %7781 = vmatpush1.msra.mxu0 0.0
    %7782 = vmatprep.subr.mxu0 0.0
    %7783 = vmatpush1.msra.mxu0 0.0
    %7784 = vmatprep.subr.mxu0 0.0
    %7785 = vmatpush1.msra.mxu0 0.0
    %7786 = vmatprep.subr.mxu0 0.0
    %7787 = vmatpush1.msra.mxu0 0.0
    %7788 = vmatprep.subr.mxu0 0.0
    %7789 = vmatpush1.msra.mxu0 0.0
    %7790 = vmatprep.subr.mxu0 0.0
    %7791 = vmatpush1.msra.mxu0 0.0
    %7792 = vmatprep.subr.mxu0 0.0
    %7793 = vmatpush1.msra.mxu0 0.0
    %7794 = vmatprep.subr.mxu0 0.0
    %7795 = vmatpush1.msra.mxu0 0.0
    %7796 = vmatprep.subr.mxu0 0.0
    %7797 = vmatpush1.msra.mxu0 0.0
    %7798 = vmatprep.subr.mxu0 0.0
    %7799 = vmatpush1.msra.mxu0 0.0
    %7800 = vmatprep.subr.mxu0 0.0
    %7801 = vmatpush1.msra.mxu0 0.0
    %7802 = vmatprep.subr.mxu0 0.0
    %7803 = vmatpush1.msra.mxu0 0.0
    %7804 = vmatprep.subr.mxu0 0.0
    %7805 = vmatpush1.msra.mxu0 0.0
    %7806 = vmatprep.subr.mxu0 0.0
    %7807 = vmatpush1.msra.mxu0 0.0
    %7808 = vmatprep.subr.mxu0 0.0
    %7809 = vmatpush1.msra.mxu0 0.0
    %7810 = vmatprep.subr.mxu0 0.0
    %7811 = vmatpush1.msra.mxu0 0.0
    %7812 = vmatprep.subr.mxu0 0.0
    %7813 = vmatpush1.msra.mxu0 0.0
    %7814 = vmatprep.subr.mxu0 0.0
    %7815 = vmatpush1.msra.mxu0 0.0
    %7816 = vmatprep.mubr.f32.mxu0 0.0
    %7817 = vmatmul.mubr.f32.gmra.mrb[0].mxu0 %v7750
    %v7818 = vpop.f32.mrb[0].mxu0
    %v7819 = vadd.f32 0.0, %v7818
    %v7820 = vpop.f32.mrb[0].mxu0
    %7821 = vdwg.mxu0
    %v7822 = vmul.f32 %v7673, %v7673
    %v7823 = vmul.f32 %v7819, %v7819
    %v7824 = vmul.f32 %v7673, %v7819
    %v7825 = vmul.f32 %v7321, %v7321
    %v7826 = vmul.f32 %v7326, %v7326
    %v7828 = vsel %vm6456, %v7826, 0
    %7830 = vmatprep.subr.mxu0 0.0
    %7831 = vmatpush1.msra.mxu0 %v7825
    %7832 = vmatprep.subr.mxu0 0.0
    %7833 = vmatpush1.msra.mxu0 %v7828
    %7834 = vmatprep.subr.mxu0 0.0
    %7835 = vmatpush1.msra.mxu0 0.0
    %7836 = vmatprep.subr.mxu0 0.0
    %7837 = vmatpush1.msra.mxu0 0.0
    %7838 = vmatprep.subr.mxu0 0.0
    %7839 = vmatpush1.msra.mxu0 0.0
    %7840 = vmatprep.subr.mxu0 0.0
    %7841 = vmatpush1.msra.mxu0 0.0
    %7842 = vmatprep.subr.mxu0 0.0
    %7843 = vmatpush1.msra.mxu0 0.0
    %7844 = vmatprep.subr.mxu0 0.0
    %7845 = vmatpush1.msra.mxu0 0.0
    %7846 = vmatprep.subr.mxu0 0.0
    %7847 = vmatpush1.msra.mxu0 0.0
    %7848 = vmatprep.subr.mxu0 0.0
    %7849 = vmatpush1.msra.mxu0 0.0
    %7850 = vmatprep.subr.mxu0 0.0
    %7851 = vmatpush1.msra.mxu0 0.0
    %7852 = vmatprep.subr.mxu0 0.0
    %7853 = vmatpush1.msra.mxu0 0.0
    %7854 = vmatprep.subr.mxu0 0.0
    %7855 = vmatpush1.msra.mxu0 0.0
    %7856 = vmatprep.subr.mxu0 0.0
    %7857 = vmatpush1.msra.mxu0 0.0
    %7858 = vmatprep.subr.mxu0 0.0
    %7859 = vmatpush1.msra.mxu0 0.0
    %7860 = vmatprep.subr.mxu0 0.0
    %7861 = vmatpush1.msra.mxu0 0.0
    %7862 = vmatprep.subr.mxu0 0.0
    %7863 = vmatpush1.msra.mxu0 0.0
    %7864 = vmatprep.subr.mxu0 0.0
    %7865 = vmatpush1.msra.mxu0 0.0
    %7866 = vmatprep.subr.mxu0 0.0
    %7867 = vmatpush1.msra.mxu0 0.0
    %7868 = vmatprep.subr.mxu0 0.0
    %7869 = vmatpush1.msra.mxu0 0.0
    %7870 = vmatprep.subr.mxu0 0.0
    %7871 = vmatpush1.msra.mxu0 0.0
    %7872 = vmatprep.subr.mxu0 0.0
    %7873 = vmatpush1.msra.mxu0 0.0
    %7874 = vmatprep.subr.mxu0 0.0
    %7875 = vmatpush1.msra.mxu0 0.0
    %7876 = vmatprep.subr.mxu0 0.0
    %7877 = vmatpush1.msra.mxu0 0.0
    %7878 = vmatprep.subr.mxu0 0.0
    %7879 = vmatpush1.msra.mxu0 0.0
    %7880 = vmatprep.subr.mxu0 0.0
    %7881 = vmatpush1.msra.mxu0 0.0
    %7882 = vmatprep.subr.mxu0 0.0
    %7883 = vmatpush1.msra.mxu0 0.0
    %7884 = vmatprep.subr.mxu0 0.0
    %7885 = vmatpush1.msra.mxu0 0.0
    %7886 = vmatprep.subr.mxu0 0.0
    %7887 = vmatpush1.msra.mxu0 0.0
    %7888 = vmatprep.subr.mxu0 0.0
    %7889 = vmatpush1.msra.mxu0 0.0
    %7890 = vmatprep.subr.mxu0 0.0
    %7891 = vmatpush1.msra.mxu0 0.0
    %7892 = vmatprep.subr.mxu0 0.0
    %7893 = vmatpush1.msra.mxu0 0.0
    %7894 = vmatprep.mubr.f32.mxu0 0.0
    %7895 = vmatmul.mubr.f32.gmra.mrb[0].mxu0 %v7524
    %v7896 = vpop.f32.mrb[0].mxu0
    %v7897 = vadd.f32 0.0, %v7896
    %v7898 = vpop.f32.mrb[0].mxu0
    %7899 = vdwg.mxu0
    %v7901 = vsel %vm7487, %v7897, 0
    %7903 = vmatprep.subr.mxu0 0.0
    %7904 = vmatpush1.msra.mxu0 %v7604
    %7905 = vmatprep.subr.mxu0 0.0
    %7906 = vmatpush1.msra.mxu0 0.0
    %7907 = vmatprep.subr.mxu0 0.0
    %7908 = vmatpush1.msra.mxu0 0.0
    %7909 = vmatprep.subr.mxu0 0.0
    %7910 = vmatpush1.msra.mxu0 0.0
    %7911 = vmatprep.subr.mxu0 0.0
    %7912 = vmatpush1.msra.mxu0 0.0
    %7913 = vmatprep.subr.mxu0 0.0
    %7914 = vmatpush1.msra.mxu0 0.0
    %7915 = vmatprep.subr.mxu0 0.0
    %7916 = vmatpush1.msra.mxu0 0.0
    %7917 = vmatprep.subr.mxu0 0.0
    %7918 = vmatpush1.msra.mxu0 0.0
    %7919 = vmatprep.subr.mxu0 0.0
    %7920 = vmatpush1.msra.mxu0 0.0
    %7921 = vmatprep.subr.mxu0 0.0
    %7922 = vmatpush1.msra.mxu0 0.0
    %7923 = vmatprep.subr.mxu0 0.0
    %7924 = vmatpush1.msra.mxu0 0.0
    %7925 = vmatprep.subr.mxu0 0.0
    %7926 = vmatpush1.msra.mxu0 0.0
    %7927 = vmatprep.subr.mxu0 0.0
    %7928 = vmatpush1.msra.mxu0 0.0
    %7929 = vmatprep.subr.mxu0 0.0
    %7930 = vmatpush1.msra.mxu0 0.0
    %7931 = vmatprep.subr.mxu0 0.0
    %7932 = vmatpush1.msra.mxu0 0.0
    %7933 = vmatprep.subr.mxu0 0.0
    %7934 = vmatpush1.msra.mxu0 0.0
    %7935 = vmatprep.subr.mxu0 0.0
    %7936 = vmatpush1.msra.mxu0 0.0
    %7937 = vmatprep.subr.mxu0 0.0
    %7938 = vmatpush1.msra.mxu0 0.0
    %7939 = vmatprep.subr.mxu0 0.0
    %7940 = vmatpush1.msra.mxu0 0.0
    %7941 = vmatprep.subr.mxu0 0.0
    %7942 = vmatpush1.msra.mxu0 0.0
    %7943 = vmatprep.subr.mxu0 0.0
    %7944 = vmatpush1.msra.mxu0 0.0
    %7945 = vmatprep.subr.mxu0 0.0
    %7946 = vmatpush1.msra.mxu0 0.0
    %7947 = vmatprep.subr.mxu0 0.0
    %7948 = vmatpush1.msra.mxu0 0.0
    %7949 = vmatprep.subr.mxu0 0.0
    %7950 = vmatpush1.msra.mxu0 0.0
    %7951 = vmatprep.subr.mxu0 0.0
    %7952 = vmatpush1.msra.mxu0 0.0
    %7953 = vmatprep.subr.mxu0 0.0
    %7954 = vmatpush1.msra.mxu0 0.0
    %7955 = vmatprep.subr.mxu0 0.0
    %7956 = vmatpush1.msra.mxu0 0.0
    %7957 = vmatprep.subr.mxu0 0.0
    %7958 = vmatpush1.msra.mxu0 0.0
    %7959 = vmatprep.subr.mxu0 0.0
    %7960 = vmatpush1.msra.mxu0 0.0
    %7961 = vmatprep.subr.mxu0 0.0
    %7962 = vmatpush1.msra.mxu0 0.0
    %7963 = vmatprep.subr.mxu0 0.0
    %7964 = vmatpush1.msra.mxu0 0.0
    %7965 = vmatprep.subr.mxu0 0.0
    %7966 = vmatpush1.msra.mxu0 0.0
    %7967 = vmatprep.mubr.f32.mxu0 0.0
    %7968 = vmatmul.mubr.f32.gmra.mrb[0].mxu0 %v7901
    %v7969 = vpop.f32.mrb[0].mxu0
    %v7970 = vadd.f32 0.0, %v7969
    %v7971 = vpop.f32.mrb[0].mxu0
    %7972 = vdwg.mxu0
    %v7973 = vsub.f32 %v7970, %v7822
    %v7974 = vmul.f32 %v7477, %v7477
    %v7975 = vmul.f32 %v7482, %v7482
    %v7977 = vsel %vm6456, %v7975, 0
    %7979 = vmatprep.subr.mxu0 0.0
    %7980 = vmatpush1.msra.mxu0 %v7974
    %7981 = vmatprep.subr.mxu0 0.0
    %7982 = vmatpush1.msra.mxu0 %v7977
    %7983 = vmatprep.subr.mxu0 0.0
    %7984 = vmatpush1.msra.mxu0 0.0
    %7985 = vmatprep.subr.mxu0 0.0
    %7986 = vmatpush1.msra.mxu0 0.0
    %7987 = vmatprep.subr.mxu0 0.0
    %7988 = vmatpush1.msra.mxu0 0.0
    %7989 = vmatprep.subr.mxu0 0.0
    %7990 = vmatpush1.msra.mxu0 0.0
    %7991 = vmatprep.subr.mxu0 0.0
    %7992 = vmatpush1.msra.mxu0 0.0
    %7993 = vmatprep.subr.mxu0 0.0
    %7994 = vmatpush1.msra.mxu0 0.0
    %7995 = vmatprep.subr.mxu0 0.0
    %7996 = vmatpush1.msra.mxu0 0.0
    %7997 = vmatprep.subr.mxu0 0.0
    %7998 = vmatpush1.msra.mxu0 0.0
    %7999 = vmatprep.subr.mxu0 0.0
    %8000 = vmatpush1.msra.mxu0 0.0
    %8001 = vmatprep.subr.mxu0 0.0
    %8002 = vmatpush1.msra.mxu0 0.0
    %8003 = vmatprep.subr.mxu0 0.0
    %8004 = vmatpush1.msra.mxu0 0.0
    %8005 = vmatprep.subr.mxu0 0.0
    %8006 = vmatpush1.msra.mxu0 0.0
    %8007 = vmatprep.subr.mxu0 0.0
    %8008 = vmatpush1.msra.mxu0 0.0
    %8009 = vmatprep.subr.mxu0 0.0
    %8010 = vmatpush1.msra.mxu0 0.0
    %8011 = vmatprep.subr.mxu0 0.0
    %8012 = vmatpush1.msra.mxu0 0.0
    %8013 = vmatprep.subr.mxu0 0.0
    %8014 = vmatpush1.msra.mxu0 0.0
    %8015 = vmatprep.subr.mxu0 0.0
    %8016 = vmatpush1.msra.mxu0 0.0
    %8017 = vmatprep.subr.mxu0 0.0
    %8018 = vmatpush1.msra.mxu0 0.0
    %8019 = vmatprep.subr.mxu0 0.0
    %8020 = vmatpush1.msra.mxu0 0.0
    %8021 = vmatprep.subr.mxu0 0.0
    %8022 = vmatpush1.msra.mxu0 0.0
    %8023 = vmatprep.subr.mxu0 0.0
    %8024 = vmatpush1.msra.mxu0 0.0
    %8025 = vmatprep.subr.mxu0 0.0
    %8026 = vmatpush1.msra.mxu0 0.0
    %8027 = vmatprep.subr.mxu0 0.0
    %8028 = vmatpush1.msra.mxu0 0.0
    %8029 = vmatprep.subr.mxu0 0.0
    %8030 = vmatpush1.msra.mxu0 0.0
    %8031 = vmatprep.subr.mxu0 0.0
    %8032 = vmatpush1.msra.mxu0 0.0
    %8033 = vmatprep.subr.mxu0 0.0
    %8034 = vmatpush1.msra.mxu0 0.0
    %8035 = vmatprep.subr.mxu0 0.0
    %8036 = vmatpush1.msra.mxu0 0.0
    %8037 = vmatprep.subr.mxu0 0.0
    %8038 = vmatpush1.msra.mxu0 0.0
    %8039 = vmatprep.subr.mxu0 0.0
    %8040 = vmatpush1.msra.mxu0 0.0
    %8041 = vmatprep.subr.mxu0 0.0
    %8042 = vmatpush1.msra.mxu0 0.0
    %8043 = vmatprep.mubr.f32.mxu0 0.0
    %8044 = vmatmul.mubr.f32.gmra.mrb[0].mxu0 %v7524
    %v8045 = vpop.f32.mrb[0].mxu0
    %v8046 = vadd.f32 0.0, %v8045
    %v8047 = vpop.f32.mrb[0].mxu0
    %8048 = vdwg.mxu0
    %v8050 = vsel %vm7487, %v8046, 0
    %8052 = vmatprep.subr.mxu0 0.0
    %8053 = vmatpush1.msra.mxu0 %v7604
    %8054 = vmatprep.subr.mxu0 0.0
    %8055 = vmatpush1.msra.mxu0 0.0
    %8056 = vmatprep.subr.mxu0 0.0
    %8057 = vmatpush1.msra.mxu0 0.0
    %8058 = vmatprep.subr.mxu0 0.0
    %8059 = vmatpush1.msra.mxu0 0.0
    %8060 = vmatprep.subr.mxu0 0.0
    %8061 = vmatpush1.msra.mxu0 0.0
    %8062 = vmatprep.subr.mxu0 0.0
    %8063 = vmatpush1.msra.mxu0 0.0
    %8064 = vmatprep.subr.mxu0 0.0
    %8065 = vmatpush1.msra.mxu0 0.0
    %8066 = vmatprep.subr.mxu0 0.0
    %8067 = vmatpush1.msra.mxu0 0.0
    %8068 = vmatprep.subr.mxu0 0.0
    %8069 = vmatpush1.msra.mxu0 0.0
    %8070 = vmatprep.subr.mxu0 0.0
    %8071 = vmatpush1.msra.mxu0 0.0
    %8072 = vmatprep.subr.mxu0 0.0
    %8073 = vmatpush1.msra.mxu0 0.0
    %8074 = vmatprep.subr.mxu0 0.0
    %8075 = vmatpush1.msra.mxu0 0.0
    %8076 = vmatprep.subr.mxu0 0.0
    %8077 = vmatpush1.msra.mxu0 0.0
    %8078 = vmatprep.subr.mxu0 0.0
    %8079 = vmatpush1.msra.mxu0 0.0
    %8080 = vmatprep.subr.mxu0 0.0
    %8081 = vmatpush1.msra.mxu0 0.0
    %8082 = vmatprep.subr.mxu0 0.0
    %8083 = vmatpush1.msra.mxu0 0.0
    %8084 = vmatprep.subr.mxu0 0.0
    %8085 = vmatpush1.msra.mxu0 0.0
    %8086 = vmatprep.subr.mxu0 0.0
    %8087 = vmatpush1.msra.mxu0 0.0
    %8088 = vmatprep.subr.mxu0 0.0
    %8089 = vmatpush1.msra.mxu0 0.0
    %8090 = vmatprep.subr.mxu0 0.0
    %8091 = vmatpush1.msra.mxu0 0.0
    %8092 = vmatprep.subr.mxu0 0.0
    %8093 = vmatpush1.msra.mxu0 0.0
    %8094 = vmatprep.subr.mxu0 0.0
    %8095 = vmatpush1.msra.mxu0 0.0
    %8096 = vmatprep.subr.mxu0 0.0
    %8097 = vmatpush1.msra.mxu0 0.0
    %8098 = vmatprep.subr.mxu0 0.0
    %8099 = vmatpush1.msra.mxu0 0.0
    %8100 = vmatprep.subr.mxu0 0.0
    %8101 = vmatpush1.msra.mxu0 0.0
    %8102 = vmatprep.subr.mxu0 0.0
    %8103 = vmatpush1.msra.mxu0 0.0
    %8104 = vmatprep.subr.mxu0 0.0
    %8105 = vmatpush1.msra.mxu0 0.0
    %8106 = vmatprep.subr.mxu0 0.0
    %8107 = vmatpush1.msra.mxu0 0.0
    %8108 = vmatprep.subr.mxu0 0.0
    %8109 = vmatpush1.msra.mxu0 0.0
    %8110 = vmatprep.subr.mxu0 0.0
    %8111 = vmatpush1.msra.mxu0 0.0
    %8112 = vmatprep.subr.mxu0 0.0
    %8113 = vmatpush1.msra.mxu0 0.0
    %8114 = vmatprep.subr.mxu0 0.0
    %8115 = vmatpush1.msra.mxu0 0.0
    %8116 = vmatprep.mubr.f32.mxu0 0.0
    %8117 = vmatmul.mubr.f32.gmra.mrb[0].mxu0 %v8050
    %v8118 = vpop.f32.mrb[0].mxu0
    %v8119 = vadd.f32 0.0, %v8118
    %v8120 = vpop.f32.mrb[0].mxu0
    %8121 = vdwg.mxu0
    %v8122 = vsub.f32 %v8119, %v7823
    %v8123 = vmul.f32 %v7321, %v7477
    %v8124 = vmul.f32 %v7326, %v7482
    %v8126 = vsel %vm6456, %v8124, 0
    %8128 = vmatprep.subr.mxu0 0.0
    %8129 = vmatpush1.msra.mxu0 %v8123
    %8130 = vmatprep.subr.mxu0 0.0
    %8131 = vmatpush1.msra.mxu0 %v8126
    %8132 = vmatprep.subr.mxu0 0.0
    %8133 = vmatpush1.msra.mxu0 0.0
    %8134 = vmatprep.subr.mxu0 0.0
    %8135 = vmatpush1.msra.mxu0 0.0
    %8136 = vmatprep.subr.mxu0 0.0
    %8137 = vmatpush1.msra.mxu0 0.0
    %8138 = vmatprep.subr.mxu0 0.0
    %8139 = vmatpush1.msra.mxu0 0.0
    %8140 = vmatprep.subr.mxu0 0.0
    %8141 = vmatpush1.msra.mxu0 0.0
    %8142 = vmatprep.subr.mxu0 0.0
    %8143 = vmatpush1.msra.mxu0 0.0
    %8144 = vmatprep.subr.mxu0 0.0
    %8145 = vmatpush1.msra.mxu0 0.0
    %8146 = vmatprep.subr.mxu0 0.0
    %8147 = vmatpush1.msra.mxu0 0.0
    %8148 = vmatprep.subr.mxu0 0.0
    %8149 = vmatpush1.msra.mxu0 0.0
    %8150 = vmatprep.subr.mxu0 0.0
    %8151 = vmatpush1.msra.mxu0 0.0
    %8152 = vmatprep.subr.mxu0 0.0
    %8153 = vmatpush1.msra.mxu0 0.0
    %8154 = vmatprep.subr.mxu0 0.0
    %8155 = vmatpush1.msra.mxu0 0.0
    %8156 = vmatprep.subr.mxu0 0.0
    %8157 = vmatpush1.msra.mxu0 0.0
    %8158 = vmatprep.subr.mxu0 0.0
    %8159 = vmatpush1.msra.mxu0 0.0
    %8160 = vmatprep.subr.mxu0 0.0
    %8161 = vmatpush1.msra.mxu0 0.0
    %8162 = vmatprep.subr.mxu0 0.0
    %8163 = vmatpush1.msra.mxu0 0.0
    %8164 = vmatprep.subr.mxu0 0.0
    %8165 = vmatpush1.msra.mxu0 0.0
    %8166 = vmatprep.subr.mxu0 0.0
    %8167 = vmatpush1.msra.mxu0 0.0
    %8168 = vmatprep.subr.mxu0 0.0
    %8169 = vmatpush1.msra.mxu0 0.0
    %8170 = vmatprep.subr.mxu0 0.0
    %8171 = vmatpush1.msra.mxu0 0.0
    %8172 = vmatprep.subr.mxu0 0.0
    %8173 = vmatpush1.msra.mxu0 0.0
    %8174 = vmatprep.subr.mxu0 0.0
    %8175 = vmatpush1.msra.mxu0 0.0
    %8176 = vmatprep.subr.mxu0 0.0
    %8177 = vmatpush1.msra.mxu0 0.0
    %8178 = vmatprep.subr.mxu0 0.0
    %8179 = vmatpush1.msra.mxu0 0.0
    %8180 = vmatprep.subr.mxu0 0.0
    %8181 = vmatpush1.msra.mxu0 0.0
    %8182 = vmatprep.subr.mxu0 0.0
    %8183 = vmatpush1.msra.mxu0 0.0
    %8184 = vmatprep.subr.mxu0 0.0
    %8185 = vmatpush1.msra.mxu0 0.0
    %8186 = vmatprep.subr.mxu0 0.0
    %8187 = vmatpush1.msra.mxu0 0.0
    %8188 = vmatprep.subr.mxu0 0.0
    %8189 = vmatpush1.msra.mxu0 0.0
    %8190 = vmatprep.subr.mxu0 0.0
    %8191 = vmatpush1.msra.mxu0 0.0
    %8192 = vmatprep.mubr.f32.mxu0 0.0
    %8193 = vmatmul.mubr.f32.gmra.mrb[0].mxu0 %v7524
    %v8194 = vpop.f32.mrb[0].mxu0
    %v8195 = vadd.f32 0.0, %v8194
    %v8196 = vpop.f32.mrb[0].mxu0
    %8197 = vdwg.mxu0
    %v8199 = vsel %vm7487, %v8195, 0
    %8201 = vmatprep.subr.mxu0 0.0
    %8202 = vmatpush1.msra.mxu0 %v7604
    %8203 = vmatprep.subr.mxu0 0.0
    %8204 = vmatpush1.msra.mxu0 0.0
    %8205 = vmatprep.subr.mxu0 0.0
    %8206 = vmatpush1.msra.mxu0 0.0
    %8207 = vmatprep.subr.mxu0 0.0
    %8208 = vmatpush1.msra.mxu0 0.0
    %8209 = vmatprep.subr.mxu0 0.0
    %8210 = vmatpush1.msra.mxu0 0.0
    %8211 = vmatprep.subr.mxu0 0.0
    %8212 = vmatpush1.msra.mxu0 0.0
    %8213 = vmatprep.subr.mxu0 0.0
    %8214 = vmatpush1.msra.mxu0 0.0
    %8215 = vmatprep.subr.mxu0 0.0
    %8216 = vmatpush1.msra.mxu0 0.0
    %8217 = vmatprep.subr.mxu0 0.0
    %8218 = vmatpush1.msra.mxu0 0.0
    %8219 = vmatprep.subr.mxu0 0.0
    %8220 = vmatpush1.msra.mxu0 0.0
    %8221 = vmatprep.subr.mxu0 0.0
    %8222 = vmatpush1.msra.mxu0 0.0
    %8223 = vmatprep.subr.mxu0 0.0
    %8224 = vmatpush1.msra.mxu0 0.0
    %8225 = vmatprep.subr.mxu0 0.0
    %8226 = vmatpush1.msra.mxu0 0.0
    %8227 = vmatprep.subr.mxu0 0.0
    %8228 = vmatpush1.msra.mxu0 0.0
    %8229 = vmatprep.subr.mxu0 0.0
    %8230 = vmatpush1.msra.mxu0 0.0
    %8231 = vmatprep.subr.mxu0 0.0
    %8232 = vmatpush1.msra.mxu0 0.0
    %8233 = vmatprep.subr.mxu0 0.0
    %8234 = vmatpush1.msra.mxu0 0.0
    %8235 = vmatprep.subr.mxu0 0.0
    %8236 = vmatpush1.msra.mxu0 0.0
    %8237 = vmatprep.subr.mxu0 0.0
    %8238 = vmatpush1.msra.mxu0 0.0
    %8239 = vmatprep.subr.mxu0 0.0
    %8240 = vmatpush1.msra.mxu0 0.0
    %8241 = vmatprep.subr.mxu0 0.0
    %8242 = vmatpush1.msra.mxu0 0.0
    %8243 = vmatprep.subr.mxu0 0.0
    %8244 = vmatpush1.msra.mxu0 0.0
    %8245 = vmatprep.subr.mxu0 0.0
    %8246 = vmatpush1.msra.mxu0 0.0
    %8247 = vmatprep.subr.mxu0 0.0
    %8248 = vmatpush1.msra.mxu0 0.0
    %8249 = vmatprep.subr.mxu0 0.0
    %8250 = vmatpush1.msra.mxu0 0.0
    %8251 = vmatprep.subr.mxu0 0.0
    %8252 = vmatpush1.msra.mxu0 0.0
    %8253 = vmatprep.subr.mxu0 0.0
    %8254 = vmatpush1.msra.mxu0 0.0
    %8255 = vmatprep.subr.mxu0 0.0
    %8256 = vmatpush1.msra.mxu0 0.0
    %8257 = vmatprep.subr.mxu0 0.0
    %8258 = vmatpush1.msra.mxu0 0.0
    %8259 = vmatprep.subr.mxu0 0.0
    %8260 = vmatpush1.msra.mxu0 0.0
    %8261 = vmatprep.subr.mxu0 0.0
    %8262 = vmatpush1.msra.mxu0 0.0
    %8263 = vmatprep.subr.mxu0 0.0
    %8264 = vmatpush1.msra.mxu0 0.0
    %8265 = vmatprep.mubr.f32.mxu0 0.0
    %8266 = vmatmul.mubr.f32.gmra.mrb[0].mxu0 %v8199
    %v8267 = vpop.f32.mrb[0].mxu0
    %v8268 = vadd.f32 0.0, %v8267
    %v8269 = vpop.f32.mrb[0].mxu0
    %8270 = vdwg.mxu0
    %v8271 = vsub.f32 %v8268, %v7824
    %v8272 = vmul.f32 %v8271, 2.0
    %v8273 = vstv %s7521
    %v8274 = vadd.f32 %v8272, %v8273
    %v8275 = vadd.f32 %v7973, %v8122
    %v8276 = vadd.f32 %v8275, %v8273
    %v8277 = vrcp.pop %v8276
    %v8278 = vmul.f32 %v8274, %v8277
    %v8279 = vsel %vm5950, %v8278, 0.0
    %8280 = vadd.xlane.f32.xlu0 %v8279
    %v8281 = vpop.xlane.xlu0 %8280
    %v8282 = vrot.slane %v8281, 4
    %v8283 = vadd.f32 %v8281, %v8282
    %v8284 = vrot.slane %v8283, 2
    %v8285 = vadd.f32 %v8283, %v8284
    %v8286 = vrot.slane %v8285, 1
    %v8287 = vadd.f32 %v8285, %v8286
    %s8288 = vtos %v8287
    %s8289 = smul.f32 %s8288, 0.16666667
    %s8290 = sadd.f32 %s8289, 1e-15
    %v8291 = vmul.f32 %v7824, 2.0
    %v8292 = vstv %s7519
    %v8293 = vadd.f32 %v8291, %v8292
    %v8294 = vmul.f32 %v8293, %v8274
    %v8295 = vadd.f32 %v7822, %v7823
    %v8296 = vadd.f32 %v8295, %v8292
    %v8297 = vmul.f32 %v8296, %v8276
    %v8298 = vadd.f32 %v8297, 1e-15
    %v8299 = vrcp.pop %v8298
    %v8300 = vmul.f32 %v8294, %v8299
    %v8301 = vsel %vm5950, %v8300, 0.0
    %8302 = vadd.xlane.f32.xlu0 %v8301
    %v8303 = vpop.xlane.xlu0 %8302
    %v8304 = vrot.slane %v8303, 4
    %v8305 = vadd.f32 %v8303, %v8304
    %v8306 = vrot.slane %v8305, 2
    %v8307 = vadd.f32 %v8305, %v8306
    %v8308 = vrot.slane %v8307, 1
    %v8309 = vadd.f32 %v8307, %v8308
    %s8310 = vtos %v8309
    %s8311 = smul.f32 %s8310, 0.16666667
    %s8312 = scalar_lea.smem [#allocation28], 512
    %8313 = sst [smem:[%s8312]] %s8311
    %s8314 = scalar_lea.smem [#allocation28], 513
    %8315 = sst [smem:[%s8314]] %s8290
    // Predicated region
    $region146: #{msssim_pallas.1} parent=1 // pred_check
      _
    $region147: #{msssim_pallas.1} parent=1 // pred_check_branch
      %8317 = sbr.rel (0) target = $region149
    $region148: #{msssim_pallas.1} parent=1 // pred_region
      %s8319 = ssub.s32 128, 128
      %8320 = vsyncadd [#allocation4], %s8319
      %s8322 = sshll.u32 %s20, 4
      %s8323 = int_to_ptr.vmem [resolvable:$true] %s8322
      %8325 = dma.smem_to_vmem [#allocation28], 128, %s8323, [#allocation4]
    $region149: #{msssim_pallas.1} parent=1 // pred_fallthru
      _
    // Predicated region
    $region150: #{msssim_pallas.1} parent=1 // pred_check
      _
    $region151: #{msssim_pallas.1} parent=1 // pred_check_branch
      %8327 = sbr.rel (0) target = $region153
    $region152: #{msssim_pallas.1} parent=1 // pred_region
      %8328 = dma.done [#allocation4], 128
    $region153: #{msssim_pallas.1} parent=1 // pred_fallthru
      _
    %8329 = sfence
    %8330 = vsyncpa [#allocation3], 1
    %8331 = vsyncpa [#allocation6], 1
    %8332 = vsyncpa [#allocation9], 1
    %8333 = vsyncpa [#allocation12], 1
    %8334 = vsyncpa [#allocation15], 1
    %8335 = vsyncpa [#allocation18], 1
    %8336 = vsyncpa [#allocation21], 1
    %8337 = vsyncpa [#allocation24], 1
    %8338 = vsyncpa [#allocation27], 1
    %8339 = vsyncpa [#allocation4], 1

</llo_original>
